<compile_context>
chip_gen: v7x
topology: tpu7x:2x2x1
jax: 0.10.0
libtpu: 0.0.40
codegen_flags: <defaults>
</compile_context>

<pallas_src>
import functools

import jax
import jax.numpy as jnp
from jax.experimental import pallas as pl
from jax.experimental.pallas import tpu as pltpu

EPS = 1e-5
EXPANSION = 4

# Safe scoped-VMEM limit on v5e / v6e / v7x; raise for big shapes on v5e/v6e.
_VMEM_LIMIT_BYTES = 32 * 1024 * 1024


def _cparams(kind):
    return pltpu.CompilerParams(dimension_semantics=(kind,),
                                vmem_limit_bytes=_VMEM_LIMIT_BYTES)


def _pick_tile(m, target=256):
    """Largest multiple of 8 that divides m and is <= target (else m itself)."""
    cap = min(target, m)
    t = cap - cap % 8
    while t >= 8:
        if m % t == 0:
            return t
        t -= 8
    return m


# ----------------------------- Pallas kernels ------------------------------ #

def _mm_stats_kernel(x_ref, w_ref, y_ref, ps_ref, pq_ref):
    """1x1 conv as tiled matmul; accumulates per-channel sum / sumsq for BN."""
    y = jnp.dot(x_ref[...], w_ref[...], preferred_element_type=jnp.float32)
    y_ref[...] = y

    @pl.when(pl.program_id(0) == 0)
    def _init():
        ps_ref[...] = jnp.zeros_like(ps_ref)
        pq_ref[...] = jnp.zeros_like(pq_ref)

    ps_ref[...] += jnp.sum(y, axis=0, keepdims=True)
    pq_ref[...] += jnp.sum(y * y, axis=0, keepdims=True)


def _conv3x3_fused_kernel(y1p_ref, m_ref, s1_ref, h1_ref, w2_ref,
                          y2_ref, ps_ref, pq_ref, *, stride, ho, wo):
    """bn1 + relu + 3x3 conv (9 shifted matmuls, no HBM im2col) + BN2 partials."""
    c1 = y1p_ref.shape[3]
    c2 = w2_ref.shape[2]

    yp = y1p_ref[0]                                           # (Hp, Wp, C1) f32
    # fused bn1 (scale/shift from batch stats) + relu, then re-zero the padded
    # border (m_ref is 1 in the interior, 0 on the border), then bf16 for MXU.
    a = jnp.maximum(yp * s1_ref[...] + h1_ref[...], 0.0)
    a = (a * m_ref[...]).astype(jnp.bfloat16)

    acc = jnp.zeros((ho * wo, c2), jnp.float32)
    for kh in range(3):
        for kw in range(3):
            if stride == 1:
                patch = a[kh:kh + ho, kw:kw + wo, :]
            else:
                patch = a[kh:kh + (ho - 1) * stride + 1:stride,
                          kw:kw + (wo - 1) * stride + 1:stride, :]
            acc = acc + jnp.dot(patch.reshape(ho * wo, c1),
                                w2_ref[kh * 3 + kw],
                                preferred_element_type=jnp.float32)
    y2_ref[0] = acc

    @pl.when(pl.program_id(0) == 0)
    def _init():
        ps_ref[...] = jnp.zeros_like(ps_ref)
        pq_ref[...] = jnp.zeros_like(pq_ref)

    ps_ref[...] += jnp.sum(acc, axis=0, keepdims=True)
    pq_ref[...] += jnp.sum(acc * acc, axis=0, keepdims=True)


def _conv3_proj_kernel(y2_ref, xs_ref, s2_ref, h2_ref, w3_ref, ws_ref,
                       y3_ref, ysc_ref, ps3_ref, pq3_ref, pss_ref, pqs_ref):
    """bn2+relu + conv3 (1x1) + shortcut conv (1x1), sharing one M-tile loop."""
    a2 = jnp.maximum(y2_ref[...] * s2_ref[...] + h2_ref[...], 0.0)
    a2 = a2.astype(jnp.bfloat16)
    y3 = jnp.dot(a2, w3_ref[...], preferred_element_type=jnp.float32)
    ysc = jnp.dot(xs_ref[...], ws_ref[...], preferred_element_type=jnp.float32)
    y3_ref[...] = y3
    ysc_ref[...] = ysc

    @pl.when(pl.program_id(0) == 0)
    def _init():
        ps3_ref[...] = jnp.zeros_like(ps3_ref)
        pq3_ref[...] = jnp.zeros_like(pq3_ref)
        pss_ref[...] = jnp.zeros_like(pss_ref)
        pqs_ref[...] = jnp.zeros_like(pqs_ref)

    ps3_ref[...] += jnp.sum(y3, axis=0, keepdims=True)
    pq3_ref[...] += jnp.sum(y3 * y3, axis=0, keepdims=True)
    pss_ref[...] += jnp.sum(ysc, axis=0, keepdims=True)
    pqs_ref[...] += jnp.sum(ysc * ysc, axis=0, keepdims=True)


def _conv3_id_kernel(y2_ref, s2_ref, h2_ref, w3_ref, y3_ref, ps3_ref, pq3_ref):
    """bn2+relu + conv3 (1x1) for the identity-shortcut case."""
    a2 = jnp.maximum(y2_ref[...] * s2_ref[...] + h2_ref[...], 0.0)
    y3 = jnp.dot(a2.astype(jnp.bfloat16), w3_ref[...],
                 preferred_element_type=jnp.float32)
    y3_ref[...] = y3

    @pl.when(pl.program_id(0) == 0)
    def _init():
        ps3_ref[...] = jnp.zeros_like(ps3_ref)
        pq3_ref[...] = jnp.zeros_like(pq3_ref)

    ps3_ref[...] += jnp.sum(y3, axis=0, keepdims=True)
    pq3_ref[...] += jnp.sum(y3 * y3, axis=0, keepdims=True)


def _final_proj_kernel(y3_ref, ysc_ref, s3_ref, h3_ref, ss_ref, hs_ref, o_ref):
    """bn3 + bn_shortcut + residual add + relu (elementwise, fully parallel)."""
    o_ref[...] = jnp.maximum(
        y3_ref[...] * s3_ref[...] + h3_ref[...]
        + ysc_ref[...] * ss_ref[...] + hs_ref[...], 0.0)


def _final_id_kernel(y3_ref, x_ref, s3_ref, h3_ref, o_ref):
    o_ref[...] = jnp.maximum(
        y3_ref[...] * s3_ref[...] + h3_ref[...] + x_ref[...], 0.0)


# --------------------------- pallas_call wrappers --------------------------- #

def _conv1x1_stats(x2d, w, *, tm):
    m, k = x2d.shape
    c = w.shape[1]
    tile = pl.BlockSpec((tm, c), lambda i: (i, 0))
    vec = pl.BlockSpec((1, c), lambda i: (0, 0))
    return pl.pallas_call(
        _mm_stats_kernel,
        grid=(m // tm,),
        in_specs=[pl.BlockSpec((tm, k), lambda i: (i, 0)),
                  pl.BlockSpec((k, c), lambda i: (0, 0))],
        out_specs=(tile, vec, vec),
        out_shape=(jax.ShapeDtypeStruct((m, c), jnp.float32),
                   jax.ShapeDtypeStruct((1, c), jnp.float32),
                   jax.ShapeDtypeStruct((1, c), jnp.float32)),
        compiler_params=_cparams("arbitrary"),
    )(x2d, w)


def _conv3x3(y1p, mask, scale1, shift1, w2, *, stride, ho, wo):
    n, hp, wp, c1 = y1p.shape
    c2 = w2.shape[2]
    kern = functools.partial(_conv3x3_fused_kernel, stride=stride, ho=ho, wo=wo)
    vec1 = pl.BlockSpec((1, c1), lambda i: (0, 0))
    vec2 = pl.BlockSpec((1, c2), lambda i: (0, 0))
    return pl.pallas_call(
        kern,
        grid=(n,),
        in_specs=[pl.BlockSpec((1, hp, wp, c1), lambda i: (i, 0, 0, 0)),
                  pl.BlockSpec((hp, wp, 1), lambda i: (0, 0, 0)),
                  vec1, vec1,
                  pl.BlockSpec((9, c1, c2), lambda i: (0, 0, 0))],
        out_specs=(pl.BlockSpec((1, ho * wo, c2), lambda i: (i, 0, 0)),
                   vec2, vec2),
        out_shape=(jax.ShapeDtypeStruct((n, ho * wo, c2), jnp.float32),
                   jax.ShapeDtypeStruct((1, c2), jnp.float32),
                   jax.ShapeDtypeStruct((1, c2), jnp.float32)),
        compiler_params=_cparams("arbitrary"),
    )(y1p, mask, scale1, shift1, w2)


def _conv3_proj(y2, xs, scale2, shift2, w3, ws, *, tm):
    m, c1 = y2.shape
    cin = xs.shape[1]
    c3 = w3.shape[1]
    tile3 = pl.BlockSpec((tm, c3), lambda i: (i, 0))
    vec1 = pl.BlockSpec((1, c1), lambda i: (0, 0))
    vec3 = pl.BlockSpec((1, c3), lambda i: (0, 0))
    return pl.pallas_call(
        _conv3_proj_kernel,
        grid=(m // tm,),
        in_specs=[pl.BlockSpec((tm, c1), lambda i: (i, 0)),
                  pl.BlockSpec((tm, cin), lambda i: (i, 0)),
                  vec1, vec1,
                  pl.BlockSpec((c1, c3), lambda i: (0, 0)),
                  pl.BlockSpec((cin, c3), lambda i: (0, 0))],
        out_specs=(tile3, tile3, vec3, vec3, vec3, vec3),
        out_shape=(jax.ShapeDtypeStruct((m, c3), jnp.float32),
                   jax.ShapeDtypeStruct((m, c3), jnp.float32),
                   jax.ShapeDtypeStruct((1, c3), jnp.float32),
                   jax.ShapeDtypeStruct((1, c3), jnp.float32),
                   jax.ShapeDtypeStruct((1, c3), jnp.float32),
                   jax.ShapeDtypeStruct((1, c3), jnp.float32)),
        compiler_params=_cparams("arbitrary"),
    )(y2, xs, scale2, shift2, w3, ws)


def _conv3_id(y2, scale2, shift2, w3, *, tm):
    m, c1 = y2.shape
    c3 = w3.shape[1]
    vec1 = pl.BlockSpec((1, c1), lambda i: (0, 0))
    vec3 = pl.BlockSpec((1, c3), lambda i: (0, 0))
    return pl.pallas_call(
        _conv3_id_kernel,
        grid=(m // tm,),
        in_specs=[pl.BlockSpec((tm, c1), lambda i: (i, 0)),
                  vec1, vec1,
                  pl.BlockSpec((c1, c3), lambda i: (0, 0))],
        out_specs=(pl.BlockSpec((tm, c3), lambda i: (i, 0)), vec3, vec3),
        out_shape=(jax.ShapeDtypeStruct((m, c3), jnp.float32),
                   jax.ShapeDtypeStruct((1, c3), jnp.float32),
                   jax.ShapeDtypeStruct((1, c3), jnp.float32)),
        compiler_params=_cparams("arbitrary"),
    )(y2, scale2, shift2, w3)


def _final_proj(y3, ysc, s3, h3, ss, hs, *, tm):
    m, c3 = y3.shape
    tile = pl.BlockSpec((tm, c3), lambda i: (i, 0))
    vec = pl.BlockSpec((1, c3), lambda i: (0, 0))
    return pl.pallas_call(
        _final_proj_kernel,
        grid=(m // tm,),
        in_specs=[tile, tile, vec, vec, vec, vec],
        out_specs=tile,
        out_shape=jax.ShapeDtypeStruct((m, c3), jnp.float32),
        compiler_params=_cparams("parallel"),
    )(y3, ysc, s3, h3, ss, hs)


def _final_id(y3, xid, s3, h3, *, tm):
    m, c3 = y3.shape
    tile = pl.BlockSpec((tm, c3), lambda i: (i, 0))
    vec = pl.BlockSpec((1, c3), lambda i: (0, 0))
    return pl.pallas_call(
        _final_id_kernel,
        grid=(m // tm,),
        in_specs=[tile, tile, vec, vec],
        out_specs=tile,
        out_shape=jax.ShapeDtypeStruct((m, c3), jnp.float32),
        compiler_params=_cparams("parallel"),
    )(y3, xid, s3, h3)


# ------------------------------- JAX glue ---------------------------------- #

def _bn_scale_shift(psum, psq, count, gamma, beta):
    """Finalize train-mode BN from per-channel sum / sumsq (biased variance)."""
    mean = psum / count                                   # (1, C) f32
    var = jnp.maximum(psq / count - mean * mean, 0.0)
    scale = gamma.reshape(1, -1) * jax.lax.rsqrt(var + EPS)
    shift = beta.reshape(1, -1) - mean * scale
    return scale.astype(jnp.float32), shift.astype(jnp.float32)


def bottleneck_pallas_nhwc(x, p, stride=1):
    """Core NHWC forward (no interface transposes)."""
    x = x.astype(jnp.float32)
    n, h, w, cin = x.shape
    c1 = p['w1'].shape[0]                # planes
    c3 = p['w3'].shape[0]                # 4 * planes
    ho = (h - 1) // stride + 1
    wo = (w - 1) // stride + 1
    m0 = n * h * w
    m2 = n * ho * wo
    tm0 = _pick_tile(m0)
    tm2 = _pick_tile(m2)

    # ---- conv1 (1x1) : bf16 tiled matmul + BN1 batch-stat partials ----
    x2d_bf = x.reshape(m0, cin).astype(jnp.bfloat16)
    w1 = p['w1'][:, :, 0, 0].T.astype(jnp.bfloat16)            # (Cin, planes)
    y1, p1s, p1q = _conv1x1_stats(x2d_bf, w1, tm=tm0)
    sc1, sh1 = _bn_scale_shift(p1s, p1q, m0, p['g1'], p['b1'])

    # ---- conv2 (3x3, stride, pad=1) fused with bn1+relu; no HBM im2col ----
    y1p = jnp.pad(y1.reshape(n, h, w, c1), ((0, 0), (1, 1), (1, 1), (0, 0)))
    border = jnp.pad(jnp.ones((h, w, 1), jnp.float32), ((1, 1), (1, 1), (0, 0)))
    w2 = jnp.transpose(p['w2'], (2, 3, 1, 0)).reshape(9, c1, c1)
    w2 = w2.astype(jnp.bfloat16)
    y2, p2s, p2q = _conv3x3(y1p, border, sc1, sh1, w2, stride=stride, ho=ho, wo=wo)
    sc2, sh2 = _bn_scale_shift(p2s, p2q, m2, p['g2'], p['b2'])
    y2_2d = y2.reshape(m2, c1)

    # ---- conv3 (1x1) + shortcut, then fused bn3/bn_s + add + relu ----
    w3 = p['w3'][:, :, 0, 0].T.astype(jnp.bfloat16)             # (planes, 4p)
    if 'ws' in p:
        xs = x[:, ::stride, ::stride, :].reshape(m2, cin).astype(jnp.bfloat16)
        ws = p['ws'][:, :, 0, 0].T.astype(jnp.bfloat16)
        y3, ysc, p3s, p3q, pss, psq = _conv3_proj(y2_2d, xs, sc2, sh2, w3, ws,
                                                  tm=tm2)
        sc3, sh3 = _bn_scale_shift(p3s, p3q, m2, p['g3'], p['b3'])
        scs, shs = _bn_scale_shift(pss, psq, m2, p['gs'], p['bs'])
        out2d = _final_proj(y3, ysc, sc3, sh3, scs, shs, tm=tm2)
    else:
        assert stride == 1 and cin == c3, "identity shortcut shape mismatch"
        y3, p3s, p3q = _conv3_id(y2_2d, sc2, sh2, w3, tm=tm2)
        sc3, sh3 = _bn_scale_shift(p3s, p3q, m2, p['g3'], p['b3'])
        out2d = _final_id(y3, x.reshape(m0, cin), sc3, sh3, tm=tm2)

    return out2d.reshape(n, ho, wo, c3)


def bottleneck_pallas(x_nchw, p, stride=1):
    """NCHW interface for PyTorch parity (transposes are cheap glue; callers
    that are already channels-last should use bottleneck_pallas_nhwc)."""
    x = jnp.transpose(x_nchw, (0, 2, 3, 1))
    out = bottleneck_pallas_nhwc(x, p, stride)
    return jnp.transpose(out, (0, 3, 1, 2))


# ------------------------ deterministic parameters -------------------------- #

def init_params(key, in_planes, planes, stride):
    exp_planes = EXPANSION * planes
    ks = jax.random.split(key, 12)
    p = {
        'w1': 0.2 * jax.random.normal(ks[0], (planes, in_planes, 1, 1), jnp.float32),
        'g1': 1.0 + 0.1 * jax.random.normal(ks[1], (planes,), jnp.float32),
        'b1': 0.1 * jax.random.normal(ks[2], (planes,), jnp.float32),
        'w2': 0.2 * jax.random.normal(ks[3], (planes, planes, 3, 3), jnp.float32),
        'g2': 1.0 + 0.1 * jax.random.normal(ks[4], (planes,), jnp.float32),
        'b2': 0.1 * jax.random.normal(ks[5], (planes,), jnp.float32),
        'w3': 0.2 * jax.random.normal(ks[6], (exp_planes, planes, 1, 1), jnp.float32),
        'g3': 1.0 + 0.1 * jax.random.normal(ks[7], (exp_planes,), jnp.float32),
        'b3': 0.1 * jax.random.normal(ks[8], (exp_planes,), jnp.float32),
    }
    if stride != 1 or in_planes != exp_planes:
        p['ws'] = 0.2 * jax.random.normal(ks[9], (exp_planes, in_planes, 1, 1), jnp.float32)
        p['gs'] = 1.0 + 0.1 * jax.random.normal(ks[10], (exp_planes,), jnp.float32)
        p['bs'] = 0.1 * jax.random.normal(ks[11], (exp_planes,), jnp.float32)
    return p


# --------------------------- pure-JAX reference ----------------------------- #

def _bn_train_nchw(y, gamma, beta):
    mean = jnp.mean(y, axis=(0, 2, 3), keepdims=True)
    var = jnp.mean((y - mean) ** 2, axis=(0, 2, 3), keepdims=True)
    return ((y - mean) * jax.lax.rsqrt(var + EPS) * gamma.reshape(1, -1, 1, 1)
            + beta.reshape(1, -1, 1, 1))


def _conv_nchw_bf16(x, w, stride=1, padding=0):
    # bf16 operands + f32 accumulation, mirroring the MXU-friendly kernel math.
    return jax.lax.conv_general_dilated(
        x.astype(jnp.bfloat16), w.astype(jnp.bfloat16),
        window_strides=(stride, stride),
        padding=[(padding, padding), (padding, padding)],
        dimension_numbers=('NCHW', 'OIHW', 'NCHW'),
        preferred_element_type=jnp.float32)


def bottleneck_reference(x, p, stride):
    out = jax.nn.relu(_bn_train_nchw(_conv_nchw_bf16(x, p['w1']), p['g1'], p['b1']))
    out = jax.nn.relu(_bn_train_nchw(
        _conv_nchw_bf16(out, p['w2'], stride=stride, padding=1), p['g2'], p['b2']))
    out = _bn_train_nchw(_conv_nchw_bf16(out, p['w3']), p['g3'], p['b3'])
    if 'ws' in p:
        sc = _bn_train_nchw(_conv_nchw_bf16(x, p['ws'], stride=stride),
                            p['gs'], p['bs'])
    else:
        sc = x
    return jax.nn.relu(out + sc)


# ----------------------------------- main ----------------------------------- #

if __name__ == "__main__":
    key = jax.random.PRNGKey(0)
    kx, kp = jax.random.split(key)

    in_planes, planes, stride = 4, 4, 1        # projection shortcut (4 != 16)
    x = jax.random.normal(kx, (2, in_planes, 16, 16), jnp.float32)
    params = init_params(kp, in_planes, planes, stride)

    fwd = jax.jit(lambda xx, pp: bottleneck_pallas(xx, pp, stride))
    out = jax.block_until_ready(fwd(x, params))
    ref = bottleneck_reference(x, params, stride)

    assert out.shape == ref.shape == (2, EXPANSION * planes, 16, 16)
    err = float(jnp.max(jnp.abs(out - ref)))
    # Tolerance accounts for bf16 matmul inputs (both paths) and the different
    # accumulation orders / BN scale-shift association between kernel and ref.
    assert err < 2e-2, f"max abs err {err}"
    print("KERNEL_OK")
</pallas_src>

<mosaic_0001>
module attributes {stable_mosaic.version = 11 : i64} {
  func.func @_mm_stats_kernel(%arg0: i32, %arg1: memref<256x4xbf16, #tpu.memory_space<vmem>>, %arg2: memref<4x4xbf16, #tpu.memory_space<vmem>>, %arg3: memref<256x4xf32, #tpu.memory_space<vmem>>, %arg4: memref<1x4xf32, #tpu.memory_space<vmem>>, %arg5: memref<1x4xf32, #tpu.memory_space<vmem>>) attributes {dimension_semantics = [#tpu.dimension_semantics<arbitrary>], iteration_bounds = array<i64: 2>, scalar_prefetch = 0 : i64, scratch_operands = 0 : i64, tpu.core_type = #tpu.core_type<tc>, window_params = [{transform_indices = @transform_0, window_bounds = array<i64: 256, 4>}, {pipeline_mode = #tpu.pipeline_mode<synchronous>, transform_indices = @transform_1, window_bounds = array<i64: 4, 4>}, {transform_indices = @transform_2, window_bounds = array<i64: 256, 4>}, {pipeline_mode = #tpu.pipeline_mode<synchronous>, transform_indices = @transform_3, window_bounds = array<i64: 1, 4>}, {pipeline_mode = #tpu.pipeline_mode<synchronous>, transform_indices = @transform_4, window_bounds = array<i64: 1, 4>}]} {
    %c0 = arith.constant 0 : index
    %c0_0 = arith.constant 0 : index
    %0 = vector.load %arg1[%c0, %c0_0] : memref<256x4xbf16, #tpu.memory_space<vmem>>, vector<256x4xbf16>
    %c0_1 = arith.constant 0 : index
    %c0_2 = arith.constant 0 : index
    %1 = vector.load %arg2[%c0_1, %c0_2] : memref<4x4xbf16, #tpu.memory_space<vmem>>, vector<4x4xbf16>
    %cst = arith.constant dense<0.000000e+00> : vector<256x4xf32>
    %2 = tpu.matmul %0, %1, %cst {dimension_numbers = #tpu.dot_dimension_numbers<[1], [0], [0], [1], [0, 0, 1, 1], [], []>} : vector<256x4xbf16>, vector<4x4xbf16>, vector<256x4xf32> -> vector<256x4xf32>
    %c0_3 = arith.constant 0 : index
    %c0_4 = arith.constant 0 : index
    %3 = vector.load %arg3[%c0_3, %c0_4] : memref<256x4xf32, #tpu.memory_space<vmem>>, vector<256x4xf32>
    tpu.vector_store %arg3[%c0_3, %c0_4], %2 {strides = array<i32>} : memref<256x4xf32, #tpu.memory_space<vmem>>, vector<256x4xf32>,
    %c0_i32 = arith.constant 0 : i32
    %4 = arith.cmpi eq, %arg0, %c0_i32 : i32
    %5 = arith.extui %4 : i1 to i32
    %c0_i32_5 = arith.constant 0 : i32
    %6 = arith.cmpi ne, %5, %c0_i32_5 : i32
    scf.if %6 {
      %cst_16 = arith.constant 0.000000e+00 : f32
      %18 = vector.broadcast %cst_16 : f32 to vector<1x4xf32>
      %c0_17 = arith.constant 0 : index
      %c0_18 = arith.constant 0 : index
      %19 = vector.load %arg4[%c0_17, %c0_18] : memref<1x4xf32, #tpu.memory_space<vmem>>, vector<1x4xf32>
      tpu.vector_store %arg4[%c0_17, %c0_18], %18 {strides = array<i32>} : memref<1x4xf32, #tpu.memory_space<vmem>>, vector<1x4xf32>,
      %cst_19 = arith.constant 0.000000e+00 : f32
      %20 = vector.broadcast %cst_19 : f32 to vector<1x4xf32>
      %c0_20 = arith.constant 0 : index
      %c0_21 = arith.constant 0 : index
      %21 = vector.load %arg5[%c0_20, %c0_21] : memref<1x4xf32, #tpu.memory_space<vmem>>, vector<1x4xf32>
      tpu.vector_store %arg5[%c0_20, %c0_21], %20 {strides = array<i32>} : memref<1x4xf32, #tpu.memory_space<vmem>>, vector<1x4xf32>,
    } else {
    }
    %c0_6 = arith.constant 0 : index
    %c0_7 = arith.constant 0 : index
    %7 = vector.load %arg4[%c0_6, %c0_7] : memref<1x4xf32, #tpu.memory_space<vmem>>, vector<1x4xf32>
    %cst_8 = arith.constant dense<0.000000e+00> : vector<4xf32>
    %8 = vector.multi_reduction <add>, %2, %cst_8 [0] : vector<256x4xf32> to vector<4xf32>
    %9 = vector.shape_cast %8 : vector<4xf32> to vector<1x4xf32>
    %10 = arith.addf %7, %9 : vector<1x4xf32>
    %c0_9 = arith.constant 0 : index
    %c0_10 = arith.constant 0 : index
    %11 = vector.load %arg4[%c0_9, %c0_10] : memref<1x4xf32, #tpu.memory_space<vmem>>, vector<1x4xf32>
    tpu.vector_store %arg4[%c0_9, %c0_10], %10 {strides = array<i32>} : memref<1x4xf32, #tpu.memory_space<vmem>>, vector<1x4xf32>,
    %c0_11 = arith.constant 0 : index
    %c0_12 = arith.constant 0 : index
    %12 = vector.load %arg5[%c0_11, %c0_12] : memref<1x4xf32, #tpu.memory_space<vmem>>, vector<1x4xf32>
    %13 = arith.mulf %2, %2 : vector<256x4xf32>
    %cst_13 = arith.constant dense<0.000000e+00> : vector<4xf32>
    %14 = vector.multi_reduction <add>, %13, %cst_13 [0] : vector<256x4xf32> to vector<4xf32>
    %15 = vector.shape_cast %14 : vector<4xf32> to vector<1x4xf32>
    %16 = arith.addf %12, %15 : vector<1x4xf32>
    %c0_14 = arith.constant 0 : index
    %c0_15 = arith.constant 0 : index
    %17 = vector.load %arg5[%c0_14, %c0_15] : memref<1x4xf32, #tpu.memory_space<vmem>>, vector<1x4xf32>
    tpu.vector_store %arg5[%c0_14, %c0_15], %16 {strides = array<i32>} : memref<1x4xf32, #tpu.memory_space<vmem>>, vector<1x4xf32>,
    return
  }
  func.func @transform_0(%arg0: i32) -> (i32, i32) {
    %c0_i32 = arith.constant 0 : i32
    %c0_i32_0 = arith.constant 0 : i32
    return %arg0, %c0_i32 : i32, i32
  }
  func.func @transform_1(%arg0: i32) -> (i32, i32) {
    %c0_i32 = arith.constant 0 : i32
    %c0_i32_0 = arith.constant 0 : i32
    %c0_i32_1 = arith.constant 0 : i32
    return %c0_i32, %c0_i32_0 : i32, i32
  }
  func.func @transform_2(%arg0: i32) -> (i32, i32) {
    %c0_i32 = arith.constant 0 : i32
    %c0_i32_0 = arith.constant 0 : i32
    return %arg0, %c0_i32 : i32, i32
  }
  func.func @transform_3(%arg0: i32) -> (i32, i32) {
    %c0_i32 = arith.constant 0 : i32
    %c0_i32_0 = arith.constant 0 : i32
    %c0_i32_1 = arith.constant 0 : i32
    return %c0_i32, %c0_i32_0 : i32, i32
  }
  func.func @transform_4(%arg0: i32) -> (i32, i32) {
    %c0_i32 = arith.constant 0 : i32
    %c0_i32_0 = arith.constant 0 : i32
    %c0_i32_1 = arith.constant 0 : i32
    return %c0_i32, %c0_i32_0 : i32, i32
  }
}

module attributes {stable_mosaic.version = 11 : i64} {
  func.func @_conv3x3_fused_kernel(%arg0: i32, %arg1: memref<1x18x18x4xf32, #tpu.memory_space<vmem>>, %arg2: memref<18x18x1xf32, #tpu.memory_space<vmem>>, %arg3: memref<1x4xf32, #tpu.memory_space<vmem>>, %arg4: memref<1x4xf32, #tpu.memory_space<vmem>>, %arg5: memref<9x4x4xbf16, #tpu.memory_space<vmem>>, %arg6: memref<1x256x4xf32, #tpu.memory_space<vmem>>, %arg7: memref<1x4xf32, #tpu.memory_space<vmem>>, %arg8: memref<1x4xf32, #tpu.memory_space<vmem>>) attributes {dimension_semantics = [#tpu.dimension_semantics<arbitrary>], iteration_bounds = array<i64: 2>, scalar_prefetch = 0 : i64, scratch_operands = 0 : i64, tpu.core_type = #tpu.core_type<tc>, window_params = [{transform_indices = @transform_0, window_bounds = array<i64: 1, 18, 18, 4>}, {pipeline_mode = #tpu.pipeline_mode<synchronous>, transform_indices = @transform_1, window_bounds = array<i64: 18, 18, 1>}, {pipeline_mode = #tpu.pipeline_mode<synchronous>, transform_indices = @transform_2, window_bounds = array<i64: 1, 4>}, {pipeline_mode = #tpu.pipeline_mode<synchronous>, transform_indices = @transform_3, window_bounds = array<i64: 1, 4>}, {pipeline_mode = #tpu.pipeline_mode<synchronous>, transform_indices = @transform_4, window_bounds = array<i64: 9, 4, 4>}, {transform_indices = @transform_5, window_bounds = array<i64: 1, 256, 4>}, {pipeline_mode = #tpu.pipeline_mode<synchronous>, transform_indices = @transform_6, window_bounds = array<i64: 1, 4>}, {pipeline_mode = #tpu.pipeline_mode<synchronous>, transform_indices = @transform_7, window_bounds = array<i64: 1, 4>}]} {
    %c0 = arith.constant 0 : index
    %c0_0 = arith.constant 0 : index
    %c0_1 = arith.constant 0 : index
    %c0_2 = arith.constant 0 : index
    %0 = vector.load %arg1[%c0, %c0_0, %c0_1, %c0_2] : memref<1x18x18x4xf32, #tpu.memory_space<vmem>>, vector<1x18x18x4xf32>
    %1 = vector.shape_cast %0 : vector<1x18x18x4xf32> to vector<18x18x4xf32>
    %c0_3 = arith.constant 0 : index
    %c0_4 = arith.constant 0 : index
    %2 = vector.load %arg3[%c0_3, %c0_4] : memref<1x4xf32, #tpu.memory_space<vmem>>, vector<1x4xf32>
    %3 = vector.shape_cast %2 : vector<1x4xf32> to vector<1x1x4xf32>
    %4 = vector.broadcast %3 : vector<1x1x4xf32> to vector<18x18x4xf32>
    %5 = arith.mulf %1, %4 : vector<18x18x4xf32>
    %c0_5 = arith.constant 0 : index
    %c0_6 = arith.constant 0 : index
    %6 = vector.load %arg4[%c0_5, %c0_6] : memref<1x4xf32, #tpu.memory_space<vmem>>, vector<1x4xf32>
    %7 = vector.shape_cast %6 : vector<1x4xf32> to vector<1x1x4xf32>
    %8 = vector.broadcast %7 : vector<1x1x4xf32> to vector<18x18x4xf32>
    %9 = arith.addf %5, %8 : vector<18x18x4xf32>
    %cst = arith.constant 0.000000e+00 : f32
    %10 = vector.broadcast %cst : f32 to vector<18x18x4xf32>
    %11 = arith.maximumf %9, %10 : vector<18x18x4xf32>
    %c0_7 = arith.constant 0 : index
    %c0_8 = arith.constant 0 : index
    %c0_9 = arith.constant 0 : index
    %12 = vector.load %arg2[%c0_7, %c0_8, %c0_9] : memref<18x18x1xf32, #tpu.memory_space<vmem>>, vector<18x18x1xf32>
    %13 = vector.broadcast %12 : vector<18x18x1xf32> to vector<18x18x4xf32>
    %14 = arith.mulf %11, %13 : vector<18x18x4xf32>
    %15 = arith.truncf %14 : vector<18x18x4xf32> to vector<18x18x4xbf16>
    %cst_10 = arith.constant 0.000000e+00 : f32
    %16 = vector.broadcast %cst_10 : f32 to vector<256x4xf32>
    %17 = vector.extract_strided_slice %15 {offsets = [0, 0, 0], sizes = [16, 16, 4], strides = [1, 1, 1]} : vector<18x18x4xbf16> to vector<16x16x4xbf16>
    %18 = vector.shape_cast %17 : vector<16x16x4xbf16> to vector<256x4xbf16>
    %c0_11 = arith.constant 0 : index
    %c0_12 = arith.constant 0 : index
    %c0_13 = arith.constant 0 : index
    %19 = vector.load %arg5[%c0_11, %c0_12, %c0_13] : memref<9x4x4xbf16, #tpu.memory_space<vmem>>, vector<1x4x4xbf16>
    %20 = vector.shape_cast %19 : vector<1x4x4xbf16> to vector<4x4xbf16>
    %cst_14 = arith.constant dense<0.000000e+00> : vector<256x4xf32>
    %21 = tpu.matmul %18, %20, %cst_14 {dimension_numbers = #tpu.dot_dimension_numbers<[1], [0], [0], [1], [0, 0, 1, 1], [], []>} : vector<256x4xbf16>, vector<4x4xbf16>, vector<256x4xf32> -> vector<256x4xf32>
    %22 = arith.addf %16, %21 : vector<256x4xf32>
    %23 = vector.extract_strided_slice %15 {offsets = [0, 1, 0], sizes = [16, 16, 4], strides = [1, 1, 1]} : vector<18x18x4xbf16> to vector<16x16x4xbf16>
    %24 = vector.shape_cast %23 : vector<16x16x4xbf16> to vector<256x4xbf16>
    %c1 = arith.constant 1 : index
    %c0_15 = arith.constant 0 : index
    %c0_16 = arith.constant 0 : index
    %25 = vector.load %arg5[%c1, %c0_15, %c0_16] : memref<9x4x4xbf16, #tpu.memory_space<vmem>>, vector<1x4x4xbf16>
    %26 = vector.shape_cast %25 : vector<1x4x4xbf16> to vector<4x4xbf16>
    %cst_17 = arith.constant dense<0.000000e+00> : vector<256x4xf32>
    %27 = tpu.matmul %24, %26, %cst_17 {dimension_numbers = #tpu.dot_dimension_numbers<[1], [0], [0], [1], [0, 0, 1, 1], [], []>} : vector<256x4xbf16>, vector<4x4xbf16>, vector<256x4xf32> -> vector<256x4xf32>
    %28 = arith.addf %22, %27 : vector<256x4xf32>
    %29 = vector.extract_strided_slice %15 {offsets = [0, 2, 0], sizes = [16, 16, 4], strides = [1, 1, 1]} : vector<18x18x4xbf16> to vector<16x16x4xbf16>
    %30 = vector.shape_cast %29 : vector<16x16x4xbf16> to vector<256x4xbf16>
    %c2 = arith.constant 2 : index
    %c0_18 = arith.constant 0 : index
    %c0_19 = arith.constant 0 : index
    %31 = vector.load %arg5[%c2, %c0_18, %c0_19] : memref<9x4x4xbf16, #tpu.memory_space<vmem>>, vector<1x4x4xbf16>
    %32 = vector.shape_cast %31 : vector<1x4x4xbf16> to vector<4x4xbf16>
    %cst_20 = arith.constant dense<0.000000e+00> : vector<256x4xf32>
    %33 = tpu.matmul %30, %32, %cst_20 {dimension_numbers = #tpu.dot_dimension_numbers<[1], [0], [0], [1], [0, 0, 1, 1], [], []>} : vector<256x4xbf16>, vector<4x4xbf16>, vector<256x4xf32> -> vector<256x4xf32>
    %34 = arith.addf %28, %33 : vector<256x4xf32>
    %35 = vector.extract_strided_slice %15 {offsets = [1, 0, 0], sizes = [16, 16, 4], strides = [1, 1, 1]} : vector<18x18x4xbf16> to vector<16x16x4xbf16>
    %36 = vector.shape_cast %35 : vector<16x16x4xbf16> to vector<256x4xbf16>
    %c3 = arith.constant 3 : index
    %c0_21 = arith.constant 0 : index
    %c0_22 = arith.constant 0 : index
    %37 = vector.load %arg5[%c3, %c0_21, %c0_22] : memref<9x4x4xbf16, #tpu.memory_space<vmem>>, vector<1x4x4xbf16>
    %38 = vector.shape_cast %37 : vector<1x4x4xbf16> to vector<4x4xbf16>
    %cst_23 = arith.constant dense<0.000000e+00> : vector<256x4xf32>
    %39 = tpu.matmul %36, %38, %cst_23 {dimension_numbers = #tpu.dot_dimension_numbers<[1], [0], [0], [1], [0, 0, 1, 1], [], []>} : vector<256x4xbf16>, vector<4x4xbf16>, vector<256x4xf32> -> vector<256x4xf32>
    %40 = arith.addf %34, %39 : vector<256x4xf32>
    %41 = vector.extract_strided_slice %15 {offsets = [1, 1, 0], sizes = [16, 16, 4], strides = [1, 1, 1]} : vector<18x18x4xbf16> to vector<16x16x4xbf16>
    %42 = vector.shape_cast %41 : vector<16x16x4xbf16> to vector<256x4xbf16>
    %c4 = arith.constant 4 : index
    %c0_24 = arith.constant 0 : index
    %c0_25 = arith.constant 0 : index
    %43 = vector.load %arg5[%c4, %c0_24, %c0_25] : memref<9x4x4xbf16, #tpu.memory_space<vmem>>, vector<1x4x4xbf16>
    %44 = vector.shape_cast %43 : vector<1x4x4xbf16> to vector<4x4xbf16>
    %cst_26 = arith.constant dense<0.000000e+00> : vector<256x4xf32>
    %45 = tpu.matmul %42, %44, %cst_26 {dimension_numbers = #tpu.dot_dimension_numbers<[1], [0], [0], [1], [0, 0, 1, 1], [], []>} : vector<256x4xbf16>, vector<4x4xbf16>, vector<256x4xf32> -> vector<256x4xf32>
    %46 = arith.addf %40, %45 : vector<256x4xf32>
    %47 = vector.extract_strided_slice %15 {offsets = [1, 2, 0], sizes = [16, 16, 4], strides = [1, 1, 1]} : vector<18x18x4xbf16> to vector<16x16x4xbf16>
    %48 = vector.shape_cast %47 : vector<16x16x4xbf16> to vector<256x4xbf16>
    %c5 = arith.constant 5 : index
    %c0_27 = arith.constant 0 : index
    %c0_28 = arith.constant 0 : index
    %49 = vector.load %arg5[%c5, %c0_27, %c0_28] : memref<9x4x4xbf16, #tpu.memory_space<vmem>>, vector<1x4x4xbf16>
    %50 = vector.shape_cast %49 : vector<1x4x4xbf16> to vector<4x4xbf16>
    %cst_29 = arith.constant dense<0.000000e+00> : vector<256x4xf32>
    %51 = tpu.matmul %48, %50, %cst_29 {dimension_numbers = #tpu.dot_dimension_numbers<[1], [0], [0], [1], [0, 0, 1, 1], [], []>} : vector<256x4xbf16>, vector<4x4xbf16>, vector<256x4xf32> -> vector<256x4xf32>
    %52 = arith.addf %46, %51 : vector<256x4xf32>
    %53 = vector.extract_strided_slice %15 {offsets = [2, 0, 0], sizes = [16, 16, 4], strides = [1, 1, 1]} : vector<18x18x4xbf16> to vector<16x16x4xbf16>
    %54 = vector.shape_cast %53 : vector<16x16x4xbf16> to vector<256x4xbf16>
    %c6 = arith.constant 6 : index
    %c0_30 = arith.constant 0 : index
    %c0_31 = arith.constant 0 : index
    %55 = vector.load %arg5[%c6, %c0_30, %c0_31] : memref<9x4x4xbf16, #tpu.memory_space<vmem>>, vector<1x4x4xbf16>
    %56 = vector.shape_cast %55 : vector<1x4x4xbf16> to vector<4x4xbf16>
    %cst_32 = arith.constant dense<0.000000e+00> : vector<256x4xf32>
    %57 = tpu.matmul %54, %56, %cst_32 {dimension_numbers = #tpu.dot_dimension_numbers<[1], [0], [0], [1], [0, 0, 1, 1], [], []>} : vector<256x4xbf16>, vector<4x4xbf16>, vector<256x4xf32> -> vector<256x4xf32>
    %58 = arith.addf %52, %57 : vector<256x4xf32>
    %59 = vector.extract_strided_slice %15 {offsets = [2, 1, 0], sizes = [16, 16, 4], strides = [1, 1, 1]} : vector<18x18x4xbf16> to vector<16x16x4xbf16>
    %60 = vector.shape_cast %59 : vector<16x16x4xbf16> to vector<256x4xbf16>
    %c7 = arith.constant 7 : index
    %c0_33 = arith.constant 0 : index
    %c0_34 = arith.constant 0 : index
    %61 = vector.load %arg5[%c7, %c0_33, %c0_34] : memref<9x4x4xbf16, #tpu.memory_space<vmem>>, vector<1x4x4xbf16>
    %62 = vector.shape_cast %61 : vector<1x4x4xbf16> to vector<4x4xbf16>
    %cst_35 = arith.constant dense<0.000000e+00> : vector<256x4xf32>
    %63 = tpu.matmul %60, %62, %cst_35 {dimension_numbers = #tpu.dot_dimension_numbers<[1], [0], [0], [1], [0, 0, 1, 1], [], []>} : vector<256x4xbf16>, vector<4x4xbf16>, vector<256x4xf32> -> vector<256x4xf32>
    %64 = arith.addf %58, %63 : vector<256x4xf32>
    %65 = vector.extract_strided_slice %15 {offsets = [2, 2, 0], sizes = [16, 16, 4], strides = [1, 1, 1]} : vector<18x18x4xbf16> to vector<16x16x4xbf16>
    %66 = vector.shape_cast %65 : vector<16x16x4xbf16> to vector<256x4xbf16>
    %c8 = arith.constant 8 : index
    %c0_36 = arith.constant 0 : index
    %c0_37 = arith.constant 0 : index
    %67 = vector.load %arg5[%c8, %c0_36, %c0_37] : memref<9x4x4xbf16, #tpu.memory_space<vmem>>, vector<1x4x4xbf16>
    %68 = vector.shape_cast %67 : vector<1x4x4xbf16> to vector<4x4xbf16>
    %cst_38 = arith.constant dense<0.000000e+00> : vector<256x4xf32>
    %69 = tpu.matmul %66, %68, %cst_38 {dimension_numbers = #tpu.dot_dimension_numbers<[1], [0], [0], [1], [0, 0, 1, 1], [], []>} : vector<256x4xbf16>, vector<4x4xbf16>, vector<256x4xf32> -> vector<256x4xf32>
    %70 = arith.addf %64, %69 : vector<256x4xf32>
    %c0_39 = arith.constant 0 : index
    %c0_40 = arith.constant 0 : index
    %c0_41 = arith.constant 0 : index
    %71 = vector.load %arg6[%c0_39, %c0_40, %c0_41] : memref<1x256x4xf32, #tpu.memory_space<vmem>>, vector<1x256x4xf32>
    %72 = vector.shape_cast %71 : vector<1x256x4xf32> to vector<256x4xf32>
    %73 = vector.shape_cast %70 : vector<256x4xf32> to vector<1x256x4xf32>
    tpu.vector_store %arg6[%c0_39, %c0_40, %c0_41], %73 {strides = array<i32>} : memref<1x256x4xf32, #tpu.memory_space<vmem>>, vector<1x256x4xf32>,
    %c0_i32 = arith.constant 0 : i32
    %74 = arith.cmpi eq, %arg0, %c0_i32 : i32
    %75 = arith.extui %74 : i1 to i32
    %c0_i32_42 = arith.constant 0 : i32
    %76 = arith.cmpi ne, %75, %c0_i32_42 : i32
    scf.if %76 {
      %cst_53 = arith.constant 0.000000e+00 : f32
      %88 = vector.broadcast %cst_53 : f32 to vector<1x4xf32>
      %c0_54 = arith.constant 0 : index
      %c0_55 = arith.constant 0 : index
      %89 = vector.load %arg7[%c0_54, %c0_55] : memref<1x4xf32, #tpu.memory_space<vmem>>, vector<1x4xf32>
      tpu.vector_store %arg7[%c0_54, %c0_55], %88 {strides = array<i32>} : memref<1x4xf32, #tpu.memory_space<vmem>>, vector<1x4xf32>,
      %cst_56 = arith.constant 0.000000e+00 : f32
      %90 = vector.broadcast %cst_56 : f32 to vector<1x4xf32>
      %c0_57 = arith.constant 0 : index
      %c0_58 = arith.constant 0 : index
      %91 = vector.load %arg8[%c0_57, %c0_58] : memref<1x4xf32, #tpu.memory_space<vmem>>, vector<1x4xf32>
      tpu.vector_store %arg8[%c0_57, %c0_58], %90 {strides = array<i32>} : memref<1x4xf32, #tpu.memory_space<vmem>>, vector<1x4xf32>,
    } else {
    }
    %c0_43 = arith.constant 0 : index
    %c0_44 = arith.constant 0 : index
    %77 = vector.load %arg7[%c0_43, %c0_44] : memref<1x4xf32, #tpu.memory_space<vmem>>, vector<1x4xf32>
    %cst_45 = arith.constant dense<0.000000e+00> : vector<4xf32>
    %78 = vector.multi_reduction <add>, %70, %cst_45 [0] : vector<256x4xf32> to vector<4xf32>
    %79 = vector.shape_cast %78 : vector<4xf32> to vector<1x4xf32>
    %80 = arith.addf %77, %79 : vector<1x4xf32>
    %c0_46 = arith.constant 0 : index
    %c0_47 = arith.constant 0 : index
    %81 = vector.load %arg7[%c0_46, %c0_47] : memref<1x4xf32, #tpu.memory_space<vmem>>, vector<1x4xf32>
    tpu.vector_store %arg7[%c0_46, %c0_47], %80 {strides = array<i32>} : memref<1x4xf32, #tpu.memory_space<vmem>>, vector<1x4xf32>,
    %c0_48 = arith.constant 0 : index
    %c0_49 = arith.constant 0 : index
    %82 = vector.load %arg8[%c0_48, %c0_49] : memref<1x4xf32, #tpu.memory_space<vmem>>, vector<1x4xf32>
    %83 = arith.mulf %70, %70 : vector<256x4xf32>
    %cst_50 = arith.constant dense<0.000000e+00> : vector<4xf32>
    %84 = vector.multi_reduction <add>, %83, %cst_50 [0] : vector<256x4xf32> to vector<4xf32>
    %85 = vector.shape_cast %84 : vector<4xf32> to vector<1x4xf32>
    %86 = arith.addf %82, %85 : vector<1x4xf32>
    %c0_51 = arith.constant 0 : index
    %c0_52 = arith.constant 0 : index
    %87 = vector.load %arg8[%c0_51, %c0_52] : memref<1x4xf32, #tpu.memory_space<vmem>>, vector<1x4xf32>
    tpu.vector_store %arg8[%c0_51, %c0_52], %86 {strides = array<i32>} : memref<1x4xf32, #tpu.memory_space<vmem>>, vector<1x4xf32>,
    return
  }
  func.func @transform_0(%arg0: i32) -> (i32, i32, i32, i32) {
    %c0_i32 = arith.constant 0 : i32
    %c0_i32_0 = arith.constant 0 : i32
    %c0_i32_1 = arith.constant 0 : i32
    %c0_i32_2 = arith.constant 0 : i32
    return %arg0, %c0_i32, %c0_i32_0, %c0_i32_1 : i32, i32, i32, i32
  }
  func.func @transform_1(%arg0: i32) -> (i32, i32, i32) {
    %c0_i32 = arith.constant 0 : i32
    %c0_i32_0 = arith.constant 0 : i32
    %c0_i32_1 = arith.constant 0 : i32
    %c0_i32_2 = arith.constant 0 : i32
    return %c0_i32, %c0_i32_0, %c0_i32_1 : i32, i32, i32
  }
  func.func @transform_2(%arg0: i32) -> (i32, i32) {
    %c0_i32 = arith.constant 0 : i32
    %c0_i32_0 = arith.constant 0 : i32
    %c0_i32_1 = arith.constant 0 : i32
    return %c0_i32, %c0_i32_0 : i32, i32
  }
  func.func @transform_3(%arg0: i32) -> (i32, i32) {
    %c0_i32 = arith.constant 0 : i32
    %c0_i32_0 = arith.constant 0 : i32
    %c0_i32_1 = arith.constant 0 : i32
    return %c0_i32, %c0_i32_0 : i32, i32
  }
  func.func @transform_4(%arg0: i32) -> (i32, i32, i32) {
    %c0_i32 = arith.constant 0 : i32
    %c0_i32_0 = arith.constant 0 : i32
    %c0_i32_1 = arith.constant 0 : i32
    %c0_i32_2 = arith.constant 0 : i32
    return %c0_i32, %c0_i32_0, %c0_i32_1 : i32, i32, i32
  }
  func.func @transform_5(%arg0: i32) -> (i32, i32, i32) {
    %c0_i32 = arith.constant 0 : i32
    %c0_i32_0 = arith.constant 0 : i32
    %c0_i32_1 = arith.constant 0 : i32
    return %arg0, %c0_i32, %c0_i32_0 : i32, i32, i32
  }
  func.func @transform_6(%arg0: i32) -> (i32, i32) {
    %c0_i32 = arith.constant 0 : i32
    %c0_i32_0 = arith.constant 0 : i32
    %c0_i32_1 = arith.constant 0 : i32
    return %c0_i32, %c0_i32_0 : i32, i32
  }
  func.func @transform_7(%arg0: i32) -> (i32, i32) {
    %c0_i32 = arith.constant 0 : i32
    %c0_i32_0 = arith.constant 0 : i32
    %c0_i32_1 = arith.constant 0 : i32
    return %c0_i32, %c0_i32_0 : i32, i32
  }
}

module attributes {stable_mosaic.version = 11 : i64} {
  func.func @_conv3_proj_kernel(%arg0: i32, %arg1: memref<256x4xf32, #tpu.memory_space<vmem>>, %arg2: memref<256x4xbf16, #tpu.memory_space<vmem>>, %arg3: memref<1x4xf32, #tpu.memory_space<vmem>>, %arg4: memref<1x4xf32, #tpu.memory_space<vmem>>, %arg5: memref<4x16xbf16, #tpu.memory_space<vmem>>, %arg6: memref<4x16xbf16, #tpu.memory_space<vmem>>, %arg7: memref<256x16xf32, #tpu.memory_space<vmem>>, %arg8: memref<256x16xf32, #tpu.memory_space<vmem>>, %arg9: memref<1x16xf32, #tpu.memory_space<vmem>>, %arg10: memref<1x16xf32, #tpu.memory_space<vmem>>, %arg11: memref<1x16xf32, #tpu.memory_space<vmem>>, %arg12: memref<1x16xf32, #tpu.memory_space<vmem>>) attributes {dimension_semantics = [#tpu.dimension_semantics<arbitrary>], iteration_bounds = array<i64: 2>, scalar_prefetch = 0 : i64, scratch_operands = 0 : i64, tpu.core_type = #tpu.core_type<tc>, window_params = [{transform_indices = @transform_0, window_bounds = array<i64: 256, 4>}, {transform_indices = @transform_1, window_bounds = array<i64: 256, 4>}, {pipeline_mode = #tpu.pipeline_mode<synchronous>, transform_indices = @transform_2, window_bounds = array<i64: 1, 4>}, {pipeline_mode = #tpu.pipeline_mode<synchronous>, transform_indices = @transform_3, window_bounds = array<i64: 1, 4>}, {pipeline_mode = #tpu.pipeline_mode<synchronous>, transform_indices = @transform_4, window_bounds = array<i64: 4, 16>}, {pipeline_mode = #tpu.pipeline_mode<synchronous>, transform_indices = @transform_5, window_bounds = array<i64: 4, 16>}, {transform_indices = @transform_6, window_bounds = array<i64: 256, 16>}, {transform_indices = @transform_7, window_bounds = array<i64: 256, 16>}, {pipeline_mode = #tpu.pipeline_mode<synchronous>, transform_indices = @transform_8, window_bounds = array<i64: 1, 16>}, {pipeline_mode = #tpu.pipeline_mode<synchronous>, transform_indices = @transform_9, window_bounds = array<i64: 1, 16>}, {pipeline_mode = #tpu.pipeline_mode<synchronous>, transform_indices = @transform_10, window_bounds = array<i64: 1, 16>}, {pipeline_mode = #tpu.pipeline_mode<synchronous>, transform_indices = @transform_11, window_bounds = array<i64: 1, 16>}]} {
    %c0 = arith.constant 0 : index
    %c0_0 = arith.constant 0 : index
    %0 = vector.load %arg1[%c0, %c0_0] : memref<256x4xf32, #tpu.memory_space<vmem>>, vector<256x4xf32>
    %c0_1 = arith.constant 0 : index
    %c0_2 = arith.constant 0 : index
    %1 = vector.load %arg3[%c0_1, %c0_2] : memref<1x4xf32, #tpu.memory_space<vmem>>, vector<1x4xf32>
    %2 = vector.broadcast %1 : vector<1x4xf32> to vector<256x4xf32>
    %3 = arith.mulf %0, %2 : vector<256x4xf32>
    %c0_3 = arith.constant 0 : index
    %c0_4 = arith.constant 0 : index
    %4 = vector.load %arg4[%c0_3, %c0_4] : memref<1x4xf32, #tpu.memory_space<vmem>>, vector<1x4xf32>
    %5 = vector.broadcast %4 : vector<1x4xf32> to vector<256x4xf32>
    %6 = arith.addf %3, %5 : vector<256x4xf32>
    %cst = arith.constant 0.000000e+00 : f32
    %7 = vector.broadcast %cst : f32 to vector<256x4xf32>
    %8 = arith.maximumf %6, %7 : vector<256x4xf32>
    %9 = arith.truncf %8 : vector<256x4xf32> to vector<256x4xbf16>
    %c0_5 = arith.constant 0 : index
    %c0_6 = arith.constant 0 : index
    %10 = vector.load %arg5[%c0_5, %c0_6] : memref<4x16xbf16, #tpu.memory_space<vmem>>, vector<4x16xbf16>
    %cst_7 = arith.constant dense<0.000000e+00> : vector<256x16xf32>
    %11 = tpu.matmul %9, %10, %cst_7 {dimension_numbers = #tpu.dot_dimension_numbers<[1], [0], [0], [1], [0, 0, 1, 1], [], []>} : vector<256x4xbf16>, vector<4x16xbf16>, vector<256x16xf32> -> vector<256x16xf32>
    %c0_8 = arith.constant 0 : index
    %c0_9 = arith.constant 0 : index
    %12 = vector.load %arg2[%c0_8, %c0_9] : memref<256x4xbf16, #tpu.memory_space<vmem>>, vector<256x4xbf16>
    %c0_10 = arith.constant 0 : index
    %c0_11 = arith.constant 0 : index
    %13 = vector.load %arg6[%c0_10, %c0_11] : memref<4x16xbf16, #tpu.memory_space<vmem>>, vector<4x16xbf16>
    %cst_12 = arith.constant dense<0.000000e+00> : vector<256x16xf32>
    %14 = tpu.matmul %12, %13, %cst_12 {dimension_numbers = #tpu.dot_dimension_numbers<[1], [0], [0], [1], [0, 0, 1, 1], [], []>} : vector<256x4xbf16>, vector<4x16xbf16>, vector<256x16xf32> -> vector<256x16xf32>
    %c0_13 = arith.constant 0 : index
    %c0_14 = arith.constant 0 : index
    %15 = vector.load %arg7[%c0_13, %c0_14] : memref<256x16xf32, #tpu.memory_space<vmem>>, vector<256x16xf32>
    tpu.vector_store %arg7[%c0_13, %c0_14], %11 {strides = array<i32>} : memref<256x16xf32, #tpu.memory_space<vmem>>, vector<256x16xf32>,
    %c0_15 = arith.constant 0 : index
    %c0_16 = arith.constant 0 : index
    %16 = vector.load %arg8[%c0_15, %c0_16] : memref<256x16xf32, #tpu.memory_space<vmem>>, vector<256x16xf32>
    tpu.vector_store %arg8[%c0_15, %c0_16], %14 {strides = array<i32>} : memref<256x16xf32, #tpu.memory_space<vmem>>, vector<256x16xf32>,
    %c0_i32 = arith.constant 0 : i32
    %17 = arith.cmpi eq, %arg0, %c0_i32 : i32
    %18 = arith.extui %17 : i1 to i32
    %c0_i32_17 = arith.constant 0 : i32
    %19 = arith.cmpi ne, %18, %c0_i32_17 : i32
    scf.if %19 {
      %cst_38 = arith.constant 0.000000e+00 : f32
      %42 = vector.broadcast %cst_38 : f32 to vector<1x16xf32>
      %c0_39 = arith.constant 0 : index
      %c0_40 = arith.constant 0 : index
      %43 = vector.load %arg9[%c0_39, %c0_40] : memref<1x16xf32, #tpu.memory_space<vmem>>, vector<1x16xf32>
      tpu.vector_store %arg9[%c0_39, %c0_40], %42 {strides = array<i32>} : memref<1x16xf32, #tpu.memory_space<vmem>>, vector<1x16xf32>,
      %cst_41 = arith.constant 0.000000e+00 : f32
      %44 = vector.broadcast %cst_41 : f32 to vector<1x16xf32>
      %c0_42 = arith.constant 0 : index
      %c0_43 = arith.constant 0 : index
      %45 = vector.load %arg10[%c0_42, %c0_43] : memref<1x16xf32, #tpu.memory_space<vmem>>, vector<1x16xf32>
      tpu.vector_store %arg10[%c0_42, %c0_43], %44 {strides = array<i32>} : memref<1x16xf32, #tpu.memory_space<vmem>>, vector<1x16xf32>,
      %cst_44 = arith.constant 0.000000e+00 : f32
      %46 = vector.broadcast %cst_44 : f32 to vector<1x16xf32>
      %c0_45 = arith.constant 0 : index
      %c0_46 = arith.constant 0 : index
      %47 = vector.load %arg11[%c0_45, %c0_46] : memref<1x16xf32, #tpu.memory_space<vmem>>, vector<1x16xf32>
      tpu.vector_store %arg11[%c0_45, %c0_46], %46 {strides = array<i32>} : memref<1x16xf32, #tpu.memory_space<vmem>>, vector<1x16xf32>,
      %cst_47 = arith.constant 0.000000e+00 : f32
      %48 = vector.broadcast %cst_47 : f32 to vector<1x16xf32>
      %c0_48 = arith.constant 0 : index
      %c0_49 = arith.constant 0 : index
      %49 = vector.load %arg12[%c0_48, %c0_49] : memref<1x16xf32, #tpu.memory_space<vmem>>, vector<1x16xf32>
      tpu.vector_store %arg12[%c0_48, %c0_49], %48 {strides = array<i32>} : memref<1x16xf32, #tpu.memory_space<vmem>>, vector<1x16xf32>,
    } else {
    }
    %c0_18 = arith.constant 0 : index
    %c0_19 = arith.constant 0 : index
    %20 = vector.load %arg9[%c0_18, %c0_19] : memref<1x16xf32, #tpu.memory_space<vmem>>, vector<1x16xf32>
    %cst_20 = arith.constant dense<0.000000e+00> : vector<16xf32>
    %21 = vector.multi_reduction <add>, %11, %cst_20 [0] : vector<256x16xf32> to vector<16xf32>
    %22 = vector.shape_cast %21 : vector<16xf32> to vector<1x16xf32>
    %23 = arith.addf %20, %22 : vector<1x16xf32>
    %c0_21 = arith.constant 0 : index
    %c0_22 = arith.constant 0 : index
    %24 = vector.load %arg9[%c0_21, %c0_22] : memref<1x16xf32, #tpu.memory_space<vmem>>, vector<1x16xf32>
    tpu.vector_store %arg9[%c0_21, %c0_22], %23 {strides = array<i32>} : memref<1x16xf32, #tpu.memory_space<vmem>>, vector<1x16xf32>,
    %c0_23 = arith.constant 0 : index
    %c0_24 = arith.constant 0 : index
    %25 = vector.load %arg10[%c0_23, %c0_24] : memref<1x16xf32, #tpu.memory_space<vmem>>, vector<1x16xf32>
    %26 = arith.mulf %11, %11 : vector<256x16xf32>
    %cst_25 = arith.constant dense<0.000000e+00> : vector<16xf32>
    %27 = vector.multi_reduction <add>, %26, %cst_25 [0] : vector<256x16xf32> to vector<16xf32>
    %28 = vector.shape_cast %27 : vector<16xf32> to vector<1x16xf32>
    %29 = arith.addf %25, %28 : vector<1x16xf32>
    %c0_26 = arith.constant 0 : index
    %c0_27 = arith.constant 0 : index
    %30 = vector.load %arg10[%c0_26, %c0_27] : memref<1x16xf32, #tpu.memory_space<vmem>>, vector<1x16xf32>
    tpu.vector_store %arg10[%c0_26, %c0_27], %29 {strides = array<i32>} : memref<1x16xf32, #tpu.memory_space<vmem>>, vector<1x16xf32>,
    %c0_28 = arith.constant 0 : index
    %c0_29 = arith.constant 0 : index
    %31 = vector.load %arg11[%c0_28, %c0_29] : memref<1x16xf32, #tpu.memory_space<vmem>>, vector<1x16xf32>
    %cst_30 = arith.constant dense<0.000000e+00> : vector<16xf32>
    %32 = vector.multi_reduction <add>, %14, %cst_30 [0] : vector<256x16xf32> to vector<16xf32>
    %33 = vector.shape_cast %32 : vector<16xf32> to vector<1x16xf32>
    %34 = arith.addf %31, %33 : vector<1x16xf32>
    %c0_31 = arith.constant 0 : index
    %c0_32 = arith.constant 0 : index
    %35 = vector.load %arg11[%c0_31, %c0_32] : memref<1x16xf32, #tpu.memory_space<vmem>>, vector<1x16xf32>
    tpu.vector_store %arg11[%c0_31, %c0_32], %34 {strides = array<i32>} : memref<1x16xf32, #tpu.memory_space<vmem>>, vector<1x16xf32>,
    %c0_33 = arith.constant 0 : index
    %c0_34 = arith.constant 0 : index
    %36 = vector.load %arg12[%c0_33, %c0_34] : memref<1x16xf32, #tpu.memory_space<vmem>>, vector<1x16xf32>
    %37 = arith.mulf %14, %14 : vector<256x16xf32>
    %cst_35 = arith.constant dense<0.000000e+00> : vector<16xf32>
    %38 = vector.multi_reduction <add>, %37, %cst_35 [0] : vector<256x16xf32> to vector<16xf32>
    %39 = vector.shape_cast %38 : vector<16xf32> to vector<1x16xf32>
    %40 = arith.addf %36, %39 : vector<1x16xf32>
    %c0_36 = arith.constant 0 : index
    %c0_37 = arith.constant 0 : index
    %41 = vector.load %arg12[%c0_36, %c0_37] : memref<1x16xf32, #tpu.memory_space<vmem>>, vector<1x16xf32>
    tpu.vector_store %arg12[%c0_36, %c0_37], %40 {strides = array<i32>} : memref<1x16xf32, #tpu.memory_space<vmem>>, vector<1x16xf32>,
    return
  }
  func.func @transform_0(%arg0: i32) -> (i32, i32) {
    %c0_i32 = arith.constant 0 : i32
    %c0_i32_0 = arith.constant 0 : i32
    return %arg0, %c0_i32 : i32, i32
  }
  func.func @transform_1(%arg0: i32) -> (i32, i32) {
    %c0_i32 = arith.constant 0 : i32
    %c0_i32_0 = arith.constant 0 : i32
    return %arg0, %c0_i32 : i32, i32
  }
  func.func @transform_2(%arg0: i32) -> (i32, i32) {
    %c0_i32 = arith.constant 0 : i32
    %c0_i32_0 = arith.constant 0 : i32
    %c0_i32_1 = arith.constant 0 : i32
    return %c0_i32, %c0_i32_0 : i32, i32
  }
  func.func @transform_3(%arg0: i32) -> (i32, i32) {
    %c0_i32 = arith.constant 0 : i32
    %c0_i32_0 = arith.constant 0 : i32
    %c0_i32_1 = arith.constant 0 : i32
    return %c0_i32, %c0_i32_0 : i32, i32
  }
  func.func @transform_4(%arg0: i32) -> (i32, i32) {
    %c0_i32 = arith.constant 0 : i32
    %c0_i32_0 = arith.constant 0 : i32
    %c0_i32_1 = arith.constant 0 : i32
    return %c0_i32, %c0_i32_0 : i32, i32
  }
  func.func @transform_5(%arg0: i32) -> (i32, i32) {
    %c0_i32 = arith.constant 0 : i32
    %c0_i32_0 = arith.constant 0 : i32
    %c0_i32_1 = arith.constant 0 : i32
    return %c0_i32, %c0_i32_0 : i32, i32
  }
  func.func @transform_6(%arg0: i32) -> (i32, i32) {
    %c0_i32 = arith.constant 0 : i32
    %c0_i32_0 = arith.constant 0 : i32
    return %arg0, %c0_i32 : i32, i32
  }
  func.func @transform_7(%arg0: i32) -> (i32, i32) {
    %c0_i32 = arith.constant 0 : i32
    %c0_i32_0 = arith.constant 0 : i32
    return %arg0, %c0_i32 : i32, i32
  }
  func.func @transform_8(%arg0: i32) -> (i32, i32) {
    %c0_i32 = arith.constant 0 : i32
    %c0_i32_0 = arith.constant 0 : i32
    %c0_i32_1 = arith.constant 0 : i32
    return %c0_i32, %c0_i32_0 : i32, i32
  }
  func.func @transform_9(%arg0: i32) -> (i32, i32) {
    %c0_i32 = arith.constant 0 : i32
    %c0_i32_0 = arith.constant 0 : i32
    %c0_i32_1 = arith.constant 0 : i32
    return %c0_i32, %c0_i32_0 : i32, i32
  }
  func.func @transform_10(%arg0: i32) -> (i32, i32) {
    %c0_i32 = arith.constant 0 : i32
    %c0_i32_0 = arith.constant 0 : i32
    %c0_i32_1 = arith.constant 0 : i32
    return %c0_i32, %c0_i32_0 : i32, i32
  }
  func.func @transform_11(%arg0: i32) -> (i32, i32) {
    %c0_i32 = arith.constant 0 : i32
    %c0_i32_0 = arith.constant 0 : i32
    %c0_i32_1 = arith.constant 0 : i32
    return %c0_i32, %c0_i32_0 : i32, i32
  }
}

module attributes {stable_mosaic.version = 11 : i64} {
  func.func @_final_proj_kernel(%arg0: i32, %arg1: memref<256x16xf32, #tpu.memory_space<vmem>>, %arg2: memref<256x16xf32, #tpu.memory_space<vmem>>, %arg3: memref<1x16xf32, #tpu.memory_space<vmem>>, %arg4: memref<1x16xf32, #tpu.memory_space<vmem>>, %arg5: memref<1x16xf32, #tpu.memory_space<vmem>>, %arg6: memref<1x16xf32, #tpu.memory_space<vmem>>, %arg7: memref<256x16xf32, #tpu.memory_space<vmem>>) attributes {dimension_semantics = [#tpu.dimension_semantics<parallel>], iteration_bounds = array<i64: 2>, scalar_prefetch = 0 : i64, scratch_operands = 0 : i64, tpu.core_type = #tpu.core_type<tc>, window_params = [{transform_indices = @transform_0, window_bounds = array<i64: 256, 16>}, {transform_indices = @transform_1, window_bounds = array<i64: 256, 16>}, {pipeline_mode = #tpu.pipeline_mode<synchronous>, transform_indices = @transform_2, window_bounds = array<i64: 1, 16>}, {pipeline_mode = #tpu.pipeline_mode<synchronous>, transform_indices = @transform_3, window_bounds = array<i64: 1, 16>}, {pipeline_mode = #tpu.pipeline_mode<synchronous>, transform_indices = @transform_4, window_bounds = array<i64: 1, 16>}, {pipeline_mode = #tpu.pipeline_mode<synchronous>, transform_indices = @transform_5, window_bounds = array<i64: 1, 16>}, {transform_indices = @transform_6, window_bounds = array<i64: 256, 16>}]} {
    %c0 = arith.constant 0 : index
    %c0_0 = arith.constant 0 : index
    %0 = vector.load %arg1[%c0, %c0_0] : memref<256x16xf32, #tpu.memory_space<vmem>>, vector<256x16xf32>
    %c0_1 = arith.constant 0 : index
    %c0_2 = arith.constant 0 : index
    %1 = vector.load %arg3[%c0_1, %c0_2] : memref<1x16xf32, #tpu.memory_space<vmem>>, vector<1x16xf32>
    %2 = vector.broadcast %1 : vector<1x16xf32> to vector<256x16xf32>
    %3 = arith.mulf %0, %2 : vector<256x16xf32>
    %c0_3 = arith.constant 0 : index
    %c0_4 = arith.constant 0 : index
    %4 = vector.load %arg4[%c0_3, %c0_4] : memref<1x16xf32, #tpu.memory_space<vmem>>, vector<1x16xf32>
    %5 = vector.broadcast %4 : vector<1x16xf32> to vector<256x16xf32>
    %6 = arith.addf %3, %5 : vector<256x16xf32>
    %c0_5 = arith.constant 0 : index
    %c0_6 = arith.constant 0 : index
    %7 = vector.load %arg2[%c0_5, %c0_6] : memref<256x16xf32, #tpu.memory_space<vmem>>, vector<256x16xf32>
    %c0_7 = arith.constant 0 : index
    %c0_8 = arith.constant 0 : index
    %8 = vector.load %arg5[%c0_7, %c0_8] : memref<1x16xf32, #tpu.memory_space<vmem>>, vector<1x16xf32>
    %9 = vector.broadcast %8 : vector<1x16xf32> to vector<256x16xf32>
    %10 = arith.mulf %7, %9 : vector<256x16xf32>
    %11 = arith.addf %6, %10 : vector<256x16xf32>
    %c0_9 = arith.constant 0 : index
    %c0_10 = arith.constant 0 : index
    %12 = vector.load %arg6[%c0_9, %c0_10] : memref<1x16xf32, #tpu.memory_space<vmem>>, vector<1x16xf32>
    %13 = vector.broadcast %12 : vector<1x16xf32> to vector<256x16xf32>
    %14 = arith.addf %11, %13 : vector<256x16xf32>
    %cst = arith.constant 0.000000e+00 : f32
    %15 = vector.broadcast %cst : f32 to vector<256x16xf32>
    %16 = arith.maximumf %14, %15 : vector<256x16xf32>
    %c0_11 = arith.constant 0 : index
    %c0_12 = arith.constant 0 : index
    %17 = vector.load %arg7[%c0_11, %c0_12] : memref<256x16xf32, #tpu.memory_space<vmem>>, vector<256x16xf32>
    tpu.vector_store %arg7[%c0_11, %c0_12], %16 {strides = array<i32>} : memref<256x16xf32, #tpu.memory_space<vmem>>, vector<256x16xf32>,
    return
  }
  func.func @transform_0(%arg0: i32) -> (i32, i32) {
    %c0_i32 = arith.constant 0 : i32
    %c0_i32_0 = arith.constant 0 : i32
    return %arg0, %c0_i32 : i32, i32
  }
  func.func @transform_1(%arg0: i32) -> (i32, i32) {
    %c0_i32 = arith.constant 0 : i32
    %c0_i32_0 = arith.constant 0 : i32
    return %arg0, %c0_i32 : i32, i32
  }
  func.func @transform_2(%arg0: i32) -> (i32, i32) {
    %c0_i32 = arith.constant 0 : i32
    %c0_i32_0 = arith.constant 0 : i32
    %c0_i32_1 = arith.constant 0 : i32
    return %c0_i32, %c0_i32_0 : i32, i32
  }
  func.func @transform_3(%arg0: i32) -> (i32, i32) {
    %c0_i32 = arith.constant 0 : i32
    %c0_i32_0 = arith.constant 0 : i32
    %c0_i32_1 = arith.constant 0 : i32
    return %c0_i32, %c0_i32_0 : i32, i32
  }
  func.func @transform_4(%arg0: i32) -> (i32, i32) {
    %c0_i32 = arith.constant 0 : i32
    %c0_i32_0 = arith.constant 0 : i32
    %c0_i32_1 = arith.constant 0 : i32
    return %c0_i32, %c0_i32_0 : i32, i32
  }
  func.func @transform_5(%arg0: i32) -> (i32, i32) {
    %c0_i32 = arith.constant 0 : i32
    %c0_i32_0 = arith.constant 0 : i32
    %c0_i32_1 = arith.constant 0 : i32
    return %c0_i32, %c0_i32_0 : i32, i32
  }
  func.func @transform_6(%arg0: i32) -> (i32, i32) {
    %c0_i32 = arith.constant 0 : i32
    %c0_i32_0 = arith.constant 0 : i32
    return %arg0, %c0_i32 : i32, i32
  }
}

</mosaic_0001>

<llo_original>
// kernel: _lambda_.4
$region0: #{_lambda_.4}
  #allocation0 [shape = 'u32[]', space=smem, size = 0x4, offset = 0x4, fixed_abs, tag = 'smem constant byte address 0x4 - core index']
  #allocation1 [shape = 'u32[144,128]{1,0:T(1,128)}', space=vmem, size = 0x12000, scoped, tag = 'internal scratch']
  %s0 = inlined_call_operand.vmem [shape: bf16[512,4], index: 0, kind: input, shape index: {}]
  %s1 = inlined_call_operand.vmem [shape: bf16[4,4], index: 1, kind: input, shape index: {}]
  %s2 = inlined_call_operand.vmem [shape: f32[512,4], index: 2, kind: output, shape index: {0}]
  %s3 = inlined_call_operand.vmem [shape: f32[1,4], index: 3, kind: output, shape index: {1}]
  %s4 = inlined_call_operand.vmem [shape: f32[1,4], index: 4, kind: output, shape index: {2}]
  %5 = xla_tuple %s2, %s3, %s4
  %s6 = sld [smem:[#allocation0]]
  $region61: #{_lambda_.4} parent=0
    _
  %s8 = ssub.s32 1, %s6
  %s9 = scalar_select 0, %s8, %s6
  loop: start=0, step=1, limit=4
  $region2: #{_lambda_.4} parent=0 // loop_pre_header
    _
  $region3: #{_lambda_.4} parent=0 // loop_header
    %s11 = sphi 0, %s15
    %p12 = scmp.ge.s32.totalorder %s11, 4
    %s21 = sphi 0, %s23
    %s24 = sphi 0, %s21
    %s25 = sphi 0, %s24
    %s41 = sphi 0, %s25
    %s45 = sphi 0, %s45
    %s47 = sphi 0, %s45
    %s48 = sphi 0, %s47
    %s62 = sphi 0, %s48
    %s68 = sphi 0, %s70
    %s71 = sphi 0, %s68
    %s72 = sphi 0, %s71
    %s88 = sphi 0, %s72
    %s92 = sphi 0, %s92
    %s94 = sphi 0, %s92
    %s95 = sphi 0, %s94
    %s109 = sphi 0, %s95
    %s113 = sphi 0, %s113
    %s115 = sphi 0, %s113
    %s116 = sphi 0, %s115
    %s130 = sphi 0, %s116
  $region4: #{_lambda_.4} parent=0 // loop_header_branch
    %14 = sbr.rel (%p12) target = $region8
  $region5: #{_lambda_.4} parent=0 // loop_body
    %s16 = ssub.s32 %s11, 1
    %s17 = ssub.s32 %s11, 2
    %s18 = sadd.s32 %s11, 1
    %s19 = ssub.s32 %s11, %s18
    %p20 = scmp.eq.s32.totalorder %s19, 0
    %s22 = sadd.s32 %s21, 1
    %s23 = scalar_select %p20, %s21, %s22
    %p26 = pneg %p20
    %p27 = scmp.eq.s32.totalorder %s11, 1
    %p28 = por %p26, %p27
    %p29 = scmp.ne.s32.totalorder %s21, %s24
    %p30 = scmp.eq.s32.totalorder %s11, 0
    %p31 = por %p29, %p30
    %p32 = scmp.ne.s32.totalorder %s21, %s24
    %p33 = scmp.eq.s32.totalorder %s16, 1
    %p34 = por %p32, %p33
    %p35 = scmp.ne.s32.totalorder %s24, %s25
    %p36 = scmp.eq.s32.totalorder %s16, 0
    %p37 = por %p35, %p36
    %p38 = scmp.ne.s32.totalorder %s24, %s25
    %p39 = scmp.eq.s32.totalorder %s17, 1
    %p40 = por %p38, %p39
    %p42 = scmp.ne.s32.totalorder %s25, %s41
    %p43 = scmp.eq.s32.totalorder %s17, 0
    %p44 = por %p42, %p43
    %s46 = sadd.s32 %s45, 1
    %p49 = scmp.eq.s32.totalorder %s11, 1
    %p50 = scmp.ne.s32.totalorder %s45, %s47
    %p51 = scmp.eq.s32.totalorder %s11, 0
    %p52 = por %p50, %p51
    %p53 = scmp.ne.s32.totalorder %s45, %s47
    %p54 = scmp.eq.s32.totalorder %s16, 1
    %p55 = por %p53, %p54
    %p56 = scmp.ne.s32.totalorder %s47, %s48
    %p57 = scmp.eq.s32.totalorder %s16, 0
    %p58 = por %p56, %p57
    %p59 = scmp.ne.s32.totalorder %s47, %s48
    %p60 = scmp.eq.s32.totalorder %s17, 1
    %p61 = por %p59, %p60
    %p63 = scmp.ne.s32.totalorder %s48, %s62
    %p64 = scmp.eq.s32.totalorder %s17, 0
    %p65 = por %p63, %p64
    %s66 = ssub.s32 %s11, %s18
    %p67 = scmp.eq.s32.totalorder %s66, 0
    %s69 = sadd.s32 %s68, 1
    %s70 = scalar_select %p67, %s68, %s69
    %p73 = pneg %p67
    %p74 = scmp.eq.s32.totalorder %s11, 1
    %p75 = por %p73, %p74
    %p76 = scmp.ne.s32.totalorder %s68, %s71
    %p77 = scmp.eq.s32.totalorder %s11, 0
    %p78 = por %p76, %p77
    %p79 = scmp.ne.s32.totalorder %s68, %s71
    %p80 = scmp.eq.s32.totalorder %s16, 1
    %p81 = por %p79, %p80
    %p82 = scmp.ne.s32.totalorder %s71, %s72
    %p83 = scmp.eq.s32.totalorder %s16, 0
    %p84 = por %p82, %p83
    %p85 = scmp.ne.s32.totalorder %s71, %s72
    %p86 = scmp.eq.s32.totalorder %s17, 1
    %p87 = por %p85, %p86
    %p89 = scmp.ne.s32.totalorder %s72, %s88
    %p90 = scmp.eq.s32.totalorder %s17, 0
    %p91 = por %p89, %p90
    %s93 = sadd.s32 %s92, 1
    %p96 = scmp.eq.s32.totalorder %s11, 1
    %p97 = scmp.ne.s32.totalorder %s92, %s94
    %p98 = scmp.eq.s32.totalorder %s11, 0
    %p99 = por %p97, %p98
    %p100 = scmp.ne.s32.totalorder %s92, %s94
    %p101 = scmp.eq.s32.totalorder %s16, 1
    %p102 = por %p100, %p101
    %p103 = scmp.ne.s32.totalorder %s94, %s95
    %p104 = scmp.eq.s32.totalorder %s16, 0
    %p105 = por %p103, %p104
    %p106 = scmp.ne.s32.totalorder %s94, %s95
    %p107 = scmp.eq.s32.totalorder %s17, 1
    %p108 = por %p106, %p107
    %p110 = scmp.ne.s32.totalorder %s95, %s109
    %p111 = scmp.eq.s32.totalorder %s17, 0
    %p112 = por %p110, %p111
    %s114 = sadd.s32 %s113, 1
    %p117 = scmp.eq.s32.totalorder %s11, 1
    %p118 = scmp.ne.s32.totalorder %s113, %s115
    %p119 = scmp.eq.s32.totalorder %s11, 0
    %p120 = por %p118, %p119
    %p121 = scmp.ne.s32.totalorder %s113, %s115
    %p122 = scmp.eq.s32.totalorder %s16, 1
    %p123 = por %p121, %p122
    %p124 = scmp.ne.s32.totalorder %s115, %s116
    %p125 = scmp.eq.s32.totalorder %s16, 0
    %p126 = por %p124, %p125
    %p127 = scmp.ne.s32.totalorder %s115, %s116
    %p128 = scmp.eq.s32.totalorder %s17, 1
    %p129 = por %p127, %p128
    %p131 = scmp.ne.s32.totalorder %s116, %s130
    %p132 = scmp.eq.s32.totalorder %s17, 0
    %p133 = por %p131, %p132
    %p134 = scmp.le.s32.totalorder 1, %s11
    %p135 = scmp.lt.s32.totalorder %s11, 3
    %p136 = pnand %p134, %p135
    %p137 = pneg %p136
    // Predicated region
    $region9: #{_lambda_.4} parent=5 // pred_check
      _
    $region10: #{_lambda_.4} parent=5 // pred_check_branch
      %139 = sbr.rel (%p136) target = $region12
    $region11: #{_lambda_.4} parent=5 // pred_region
      %s140 = ssub.s32 %s11, 1
      // Predicated region
      $region13: #{_lambda_.4} parent=11 // pred_check
        %p141 = pneg %p58
      $region14: #{_lambda_.4} parent=11 // pred_check_branch
        %143 = sbr.rel (%p141) target = $region16
      $region15: #{_lambda_.4} parent=11 // pred_region
        _
      $region16: #{_lambda_.4} parent=11 // pred_fallthru
        _
    $region12: #{_lambda_.4} parent=5 // pred_fallthru
      _
    %p144 = scmp.lt.s32.totalorder %s11, 2
    // Predicated region
    $region17: #{_lambda_.4} parent=5 // pred_check
      %p145 = pneg %p144
    $region18: #{_lambda_.4} parent=5 // pred_check_branch
      %147 = sbr.rel (%p145) target = $region20
    $region19: #{_lambda_.4} parent=5 // pred_region
      // Predicated region
      $region21: #{_lambda_.4} parent=19 // pred_check
        %p148 = pneg %p31
      $region22: #{_lambda_.4} parent=19 // pred_check_branch
        %150 = sbr.rel (%p148) target = $region24
      $region23: #{_lambda_.4} parent=19 // pred_region
        %s151 = smul.u32 32, %s11
        %p152 = scmp.lt.s32.totalorder %s151, 63
        %s153 = scalar_select %p152, %s151, 63
        %s154 = smul.addr %s153, 4
        %s155 = scalar_lea.vmem %s0, %s154
        %s156 = smul.u32 32, %s11
      $region24: #{_lambda_.4} parent=19 // pred_fallthru
        _
    $region20: #{_lambda_.4} parent=5 // pred_fallthru
      _
    %p157 = scmp.le.s32.totalorder 1, %s11
    %p158 = scmp.lt.s32.totalorder %s11, 3
    %p159 = pnand %p157, %p158
    %p160 = pneg %p159
    // Predicated region
    $region25: #{_lambda_.4} parent=5 // pred_check
      _
    $region26: #{_lambda_.4} parent=5 // pred_check_branch
      %162 = sbr.rel (%p159) target = $region28
    $region27: #{_lambda_.4} parent=5 // pred_region
      %s163 = ssub.s32 %s11, 1
      %s164 = smul.u32 32, %s16
      %p165 = scmp.lt.s32.totalorder %s164, 63
      %s166 = scalar_select %p165, %s164, 63
      %s167 = smul.addr %s166, 4
      %s168 = scalar_lea.vmem %s0, %s167
      %p169 = pneg %p37
      %p170 = pneg %p34
      %p171 = pneg %p58
      %p172 = pneg %p55
      %p173 = pneg %p84
      %p174 = pneg %p81
      %s175 = smul.u32 32, %s16
      %p176 = scmp.lt.s32.totalorder %s175, 63
      %s177 = scalar_select %p176, %s175, 63
      %s178 = smul.addr %s177, 8
      %s179 = scalar_lea.vmem %s2, %s178
      %p180 = pneg %p105
      %p181 = pneg %p102
      %p182 = pneg %p126
      %p183 = pneg %p123
      %s184 = smul.u32 32, %s16
      %p185 = scmp.lt.s32.totalorder %s184, 63
      %s186 = scalar_select %p185, %s184, 63
      %s187 = smul.addr %s186, 4
      %s188 = scalar_lea.vmem %s0, %s187
      %s189 = smul.u32 32, %s16
      %s190 = smul.u32 32, %s16
      %p191 = scmp.lt.s32.totalorder %s190, 63
      %s192 = scalar_select %p191, %s190, 63
      %s193 = smul.addr %s192, 8
      %s194 = scalar_lea.vmem %s2, %s193
      %s195 = smul.u32 32, %s16
      %v197 = vld [vmem:[%s188] sm:$0xf]
      %v198 = vld [vmem:[%s188 + $0x4] sm:$0xf]
      %v199 = vld [vmem:[%s188 + $0x8] sm:$0xf]
      %v200 = vld [vmem:[%s188 + $0xc] sm:$0xf]
      %v201 = vld [vmem:[%s188 + $0x10] sm:$0xf]
      %v202 = vld [vmem:[%s188 + $0x14] sm:$0xf]
      %v203 = vld [vmem:[%s188 + $0x18] sm:$0xf]
      %v204 = vld [vmem:[%s188 + $0x1c] sm:$0xf]
      %v205 = vld [vmem:[%s188 + $0x20] sm:$0xf]
      %v206 = vld [vmem:[%s188 + $0x24] sm:$0xf]
      %v207 = vld [vmem:[%s188 + $0x28] sm:$0xf]
      %v208 = vld [vmem:[%s188 + $0x2c] sm:$0xf]
      %v209 = vld [vmem:[%s188 + $0x30] sm:$0xf]
      %v210 = vld [vmem:[%s188 + $0x34] sm:$0xf]
      %v211 = vld [vmem:[%s188 + $0x38] sm:$0xf]
      %v212 = vld [vmem:[%s188 + $0x3c] sm:$0xf]
      %v213 = vld [vmem:[%s188 + $0x40] sm:$0xf]
      %v214 = vld [vmem:[%s188 + $0x44] sm:$0xf]
      %v215 = vld [vmem:[%s188 + $0x48] sm:$0xf]
      %v216 = vld [vmem:[%s188 + $0x4c] sm:$0xf]
      %v217 = vld [vmem:[%s188 + $0x50] sm:$0xf]
      %v218 = vld [vmem:[%s188 + $0x54] sm:$0xf]
      %v219 = vld [vmem:[%s188 + $0x58] sm:$0xf]
      %v220 = vld [vmem:[%s188 + $0x5c] sm:$0xf]
      %v221 = vld [vmem:[%s188 + $0x60] sm:$0xf]
      %v222 = vld [vmem:[%s188 + $0x64] sm:$0xf]
      %v223 = vld [vmem:[%s188 + $0x68] sm:$0xf]
      %v224 = vld [vmem:[%s188 + $0x6c] sm:$0xf]
      %v225 = vld [vmem:[%s188 + $0x70] sm:$0xf]
      %v226 = vld [vmem:[%s188 + $0x74] sm:$0xf]
      %v227 = vld [vmem:[%s188 + $0x78] sm:$0xf]
      %v228 = vld [vmem:[%s188 + $0x7c] sm:$0xf]
      %v229 = vld [vmem:[%s1] sm:$0x3]
      %v262 = vunpack.c.l.b16 %v197
      %v263 = vunpack.c.l.b16 %v198
      %v264 = vunpack.c.l.b16 %v199
      %v265 = vunpack.c.l.b16 %v200
      %v266 = vunpack.c.l.b16 %v201
      %v267 = vunpack.c.l.b16 %v202
      %v268 = vunpack.c.l.b16 %v203
      %v269 = vunpack.c.l.b16 %v204
      %v270 = vunpack.c.l.b16 %v205
      %v271 = vunpack.c.l.b16 %v206
      %v272 = vunpack.c.l.b16 %v207
      %v273 = vunpack.c.l.b16 %v208
      %v274 = vunpack.c.l.b16 %v209
      %v275 = vunpack.c.l.b16 %v210
      %v276 = vunpack.c.l.b16 %v211
      %v277 = vunpack.c.l.b16 %v212
      %v278 = vunpack.c.l.b16 %v213
      %v279 = vunpack.c.l.b16 %v214
      %v280 = vunpack.c.l.b16 %v215
      %v281 = vunpack.c.l.b16 %v216
      %v282 = vunpack.c.l.b16 %v217
      %v283 = vunpack.c.l.b16 %v218
      %v284 = vunpack.c.l.b16 %v219
      %v285 = vunpack.c.l.b16 %v220
      %v286 = vunpack.c.l.b16 %v221
      %v287 = vunpack.c.l.b16 %v222
      %v288 = vunpack.c.l.b16 %v223
      %v289 = vunpack.c.l.b16 %v224
      %v290 = vunpack.c.l.b16 %v225
      %v291 = vunpack.c.l.b16 %v226
      %v292 = vunpack.c.l.b16 %v227
      %v293 = vunpack.c.l.b16 %v228
      %v294 = vpack.c.b16 %v263, %v262
      %v295 = vpack.c.b16 %v265, %v264
      %v296 = vpack.c.b16 %v267, %v266
      %v297 = vpack.c.b16 %v269, %v268
      %v298 = vpack.c.b16 %v271, %v270
      %v299 = vpack.c.b16 %v273, %v272
      %v300 = vpack.c.b16 %v275, %v274
      %v301 = vpack.c.b16 %v277, %v276
      %v302 = vpack.c.b16 %v279, %v278
      %v303 = vpack.c.b16 %v281, %v280
      %v304 = vpack.c.b16 %v283, %v282
      %v305 = vpack.c.b16 %v285, %v284
      %v306 = vpack.c.b16 %v287, %v286
      %v307 = vpack.c.b16 %v289, %v288
      %v308 = vpack.c.b16 %v291, %v290
      %v309 = vpack.c.b16 %v293, %v292
      %vm310 = vcmask 31744
      %v312 = vsel %vm310, %v294, 0
      %v315 = vsel %vm310, %v295, 0
      %v318 = vsel %vm310, %v296, 0
      %v321 = vsel %vm310, %v297, 0
      %v324 = vsel %vm310, %v298, 0
      %v327 = vsel %vm310, %v299, 0
      %v330 = vsel %vm310, %v300, 0
      %v333 = vsel %vm310, %v301, 0
      %v336 = vsel %vm310, %v302, 0
      %v339 = vsel %vm310, %v303, 0
      %v342 = vsel %vm310, %v304, 0
      %v345 = vsel %vm310, %v305, 0
      %v348 = vsel %vm310, %v306, 0
      %v351 = vsel %vm310, %v307, 0
      %v354 = vsel %vm310, %v308, 0
      %v357 = vsel %vm310, %v309, 0
      %vm359 = vcmask 1041408
      %v361 = vsel %vm359, %v229, 0
      %363 = vmatprep.subr.bf16.mxu0 0
      %364 = vmatpush1.bf16.msra.mxu0 %v361
      %365 = vmatprep.subr.bf16.mxu0 0
      %366 = vmatpush1.bf16.msra.mxu0 0
      %367 = vmatprep.subr.bf16.mxu0 0
      %368 = vmatpush1.bf16.msra.mxu0 0
      %369 = vmatprep.subr.bf16.mxu0 0
      %370 = vmatpush1.bf16.msra.mxu0 0
      %371 = vmatprep.subr.bf16.mxu0 0
      %372 = vmatpush1.bf16.msra.mxu0 0
      %373 = vmatprep.subr.bf16.mxu0 0
      %374 = vmatpush1.bf16.msra.mxu0 0
      %375 = vmatprep.subr.bf16.mxu0 0
      %376 = vmatpush1.bf16.msra.mxu0 0
      %377 = vmatprep.subr.bf16.mxu0 0
      %378 = vmatpush1.bf16.msra.mxu0 0
      %379 = vmatprep.subr.bf16.mxu0 0
      %380 = vmatpush1.bf16.msra.mxu0 0
      %381 = vmatprep.subr.bf16.mxu0 0
      %382 = vmatpush1.bf16.msra.mxu0 0
      %383 = vmatprep.subr.bf16.mxu0 0
      %384 = vmatpush1.bf16.msra.mxu0 0
      %385 = vmatprep.subr.bf16.mxu0 0
      %386 = vmatpush1.bf16.msra.mxu0 0
      %387 = vmatprep.subr.bf16.mxu0 0
      %388 = vmatpush1.bf16.msra.mxu0 0
      %389 = vmatprep.subr.bf16.mxu0 0
      %390 = vmatpush1.bf16.msra.mxu0 0
      %391 = vmatprep.subr.bf16.mxu0 0
      %392 = vmatpush1.bf16.msra.mxu0 0
      %393 = vmatprep.subr.bf16.mxu0 0
      %394 = vmatpush1.bf16.msra.mxu0 0
      %395 = vmatprep.mubr.bf16.mxu0 0
      %396 = vmatmul.mubr.bf16.gmra.mrb[0].mxu0 %v312
      %v397 = vpop.f32.mrb[0].mxu0
      %v398 = vadd.f32 0.0, %v397
      %v399 = vpop.f32.mrb[0].mxu0
      %v400 = vpop.f32.mrb[0].mxu0
      %v401 = vadd.f32 0.0, %v400
      %v402 = vpop.f32.mrb[0].mxu0
      %403 = vmatprep.mubr.bf16.mxu0 0
      %404 = vmatmul.mubr.bf16.gmra.mrb[0].mxu0 %v315
      %v405 = vpop.f32.mrb[0].mxu0
      %v406 = vadd.f32 0.0, %v405
      %v407 = vpop.f32.mrb[0].mxu0
      %v408 = vpop.f32.mrb[0].mxu0
      %v409 = vadd.f32 0.0, %v408
      %v410 = vpop.f32.mrb[0].mxu0
      %411 = vmatprep.mubr.bf16.mxu0 0
      %412 = vmatmul.mubr.bf16.gmra.mrb[0].mxu0 %v318
      %v413 = vpop.f32.mrb[0].mxu0
      %v414 = vadd.f32 0.0, %v413
      %v415 = vpop.f32.mrb[0].mxu0
      %v416 = vpop.f32.mrb[0].mxu0
      %v417 = vadd.f32 0.0, %v416
      %v418 = vpop.f32.mrb[0].mxu0
      %419 = vmatprep.mubr.bf16.mxu0 0
      %420 = vmatmul.mubr.bf16.gmra.mrb[0].mxu0 %v321
      %v421 = vpop.f32.mrb[0].mxu0
      %v422 = vadd.f32 0.0, %v421
      %v423 = vpop.f32.mrb[0].mxu0
      %v424 = vpop.f32.mrb[0].mxu0
      %v425 = vadd.f32 0.0, %v424
      %v426 = vpop.f32.mrb[0].mxu0
      %427 = vmatprep.mubr.bf16.mxu0 0
      %428 = vmatmul.mubr.bf16.gmra.mrb[0].mxu0 %v324
      %v429 = vpop.f32.mrb[0].mxu0
      %v430 = vadd.f32 0.0, %v429
      %v431 = vpop.f32.mrb[0].mxu0
      %v432 = vpop.f32.mrb[0].mxu0
      %v433 = vadd.f32 0.0, %v432
      %v434 = vpop.f32.mrb[0].mxu0
      %435 = vmatprep.mubr.bf16.mxu0 0
      %436 = vmatmul.mubr.bf16.gmra.mrb[0].mxu0 %v327
      %v437 = vpop.f32.mrb[0].mxu0
      %v438 = vadd.f32 0.0, %v437
      %v439 = vpop.f32.mrb[0].mxu0
      %v440 = vpop.f32.mrb[0].mxu0
      %v441 = vadd.f32 0.0, %v440
      %v442 = vpop.f32.mrb[0].mxu0
      %443 = vmatprep.mubr.bf16.mxu0 0
      %444 = vmatmul.mubr.bf16.gmra.mrb[0].mxu0 %v330
      %v445 = vpop.f32.mrb[0].mxu0
      %v446 = vadd.f32 0.0, %v445
      %v447 = vpop.f32.mrb[0].mxu0
      %v448 = vpop.f32.mrb[0].mxu0
      %v449 = vadd.f32 0.0, %v448
      %v450 = vpop.f32.mrb[0].mxu0
      %451 = vmatprep.mubr.bf16.mxu0 0
      %452 = vmatmul.mubr.bf16.gmra.mrb[0].mxu0 %v333
      %v453 = vpop.f32.mrb[0].mxu0
      %v454 = vadd.f32 0.0, %v453
      %v455 = vpop.f32.mrb[0].mxu0
      %v456 = vpop.f32.mrb[0].mxu0
      %v457 = vadd.f32 0.0, %v456
      %v458 = vpop.f32.mrb[0].mxu0
      %459 = vmatprep.mubr.bf16.mxu0 0
      %460 = vmatmul.mubr.bf16.gmra.mrb[0].mxu0 %v336
      %v461 = vpop.f32.mrb[0].mxu0
      %v462 = vadd.f32 0.0, %v461
      %v463 = vpop.f32.mrb[0].mxu0
      %v464 = vpop.f32.mrb[0].mxu0
      %v465 = vadd.f32 0.0, %v464
      %v466 = vpop.f32.mrb[0].mxu0
      %467 = vmatprep.mubr.bf16.mxu0 0
      %468 = vmatmul.mubr.bf16.gmra.mrb[0].mxu0 %v339
      %v469 = vpop.f32.mrb[0].mxu0
      %v470 = vadd.f32 0.0, %v469
      %v471 = vpop.f32.mrb[0].mxu0
      %v472 = vpop.f32.mrb[0].mxu0
      %v473 = vadd.f32 0.0, %v472
      %v474 = vpop.f32.mrb[0].mxu0
      %475 = vmatprep.mubr.bf16.mxu0 0
      %476 = vmatmul.mubr.bf16.gmra.mrb[0].mxu0 %v342
      %v477 = vpop.f32.mrb[0].mxu0
      %v478 = vadd.f32 0.0, %v477
      %v479 = vpop.f32.mrb[0].mxu0
      %v480 = vpop.f32.mrb[0].mxu0
      %v481 = vadd.f32 0.0, %v480
      %v482 = vpop.f32.mrb[0].mxu0
      %483 = vmatprep.mubr.bf16.mxu0 0
      %484 = vmatmul.mubr.bf16.gmra.mrb[0].mxu0 %v345
      %v485 = vpop.f32.mrb[0].mxu0
      %v486 = vadd.f32 0.0, %v485
      %v487 = vpop.f32.mrb[0].mxu0
      %v488 = vpop.f32.mrb[0].mxu0
      %v489 = vadd.f32 0.0, %v488
      %v490 = vpop.f32.mrb[0].mxu0
      %491 = vmatprep.mubr.bf16.mxu0 0
      %492 = vmatmul.mubr.bf16.gmra.mrb[0].mxu0 %v348
      %v493 = vpop.f32.mrb[0].mxu0
      %v494 = vadd.f32 0.0, %v493
      %v495 = vpop.f32.mrb[0].mxu0
      %v496 = vpop.f32.mrb[0].mxu0
      %v497 = vadd.f32 0.0, %v496
      %v498 = vpop.f32.mrb[0].mxu0
      %499 = vmatprep.mubr.bf16.mxu0 0
      %500 = vmatmul.mubr.bf16.gmra.mrb[0].mxu0 %v351
      %v501 = vpop.f32.mrb[0].mxu0
      %v502 = vadd.f32 0.0, %v501
      %v503 = vpop.f32.mrb[0].mxu0
      %v504 = vpop.f32.mrb[0].mxu0
      %v505 = vadd.f32 0.0, %v504
      %v506 = vpop.f32.mrb[0].mxu0
      %507 = vmatprep.mubr.bf16.mxu0 0
      %508 = vmatmul.mubr.bf16.gmra.mrb[0].mxu0 %v354
      %v509 = vpop.f32.mrb[0].mxu0
      %v510 = vadd.f32 0.0, %v509
      %v511 = vpop.f32.mrb[0].mxu0
      %v512 = vpop.f32.mrb[0].mxu0
      %v513 = vadd.f32 0.0, %v512
      %v514 = vpop.f32.mrb[0].mxu0
      %515 = vmatprep.mubr.bf16.mxu0 0
      %516 = vmatmul.mubr.bf16.gmra.mrb[0].mxu0 %v357
      %v517 = vpop.f32.mrb[0].mxu0
      %v518 = vadd.f32 0.0, %v517
      %v519 = vpop.f32.mrb[0].mxu0
      %v520 = vpop.f32.mrb[0].mxu0
      %v521 = vadd.f32 0.0, %v520
      %v522 = vpop.f32.mrb[0].mxu0
      %523 = vdwg.mxu0
      %524 = vst.msk [vmem:[%s194] sm:$0xff] %vm310, %v398
      %525 = vst.msk [vmem:[%s194 + $0x8] sm:$0xff] %vm310, %v401
      %526 = vst.msk [vmem:[%s194 + $0x10] sm:$0xff] %vm310, %v406
      %527 = vst.msk [vmem:[%s194 + $0x18] sm:$0xff] %vm310, %v409
      %528 = vst.msk [vmem:[%s194 + $0x20] sm:$0xff] %vm310, %v414
      %529 = vst.msk [vmem:[%s194 + $0x28] sm:$0xff] %vm310, %v417
      %530 = vst.msk [vmem:[%s194 + $0x30] sm:$0xff] %vm310, %v422
      %531 = vst.msk [vmem:[%s194 + $0x38] sm:$0xff] %vm310, %v425
      %532 = vst.msk [vmem:[%s194 + $0x40] sm:$0xff] %vm310, %v430
      %533 = vst.msk [vmem:[%s194 + $0x48] sm:$0xff] %vm310, %v433
      %534 = vst.msk [vmem:[%s194 + $0x50] sm:$0xff] %vm310, %v438
      %535 = vst.msk [vmem:[%s194 + $0x58] sm:$0xff] %vm310, %v441
      %536 = vst.msk [vmem:[%s194 + $0x60] sm:$0xff] %vm310, %v446
      %537 = vst.msk [vmem:[%s194 + $0x68] sm:$0xff] %vm310, %v449
      %538 = vst.msk [vmem:[%s194 + $0x70] sm:$0xff] %vm310, %v454
      %539 = vst.msk [vmem:[%s194 + $0x78] sm:$0xff] %vm310, %v457
      %540 = vst.msk [vmem:[%s194 + $0x80] sm:$0xff] %vm310, %v462
      %541 = vst.msk [vmem:[%s194 + $0x88] sm:$0xff] %vm310, %v465
      %542 = vst.msk [vmem:[%s194 + $0x90] sm:$0xff] %vm310, %v470
      %543 = vst.msk [vmem:[%s194 + $0x98] sm:$0xff] %vm310, %v473
      %544 = vst.msk [vmem:[%s194 + $0xa0] sm:$0xff] %vm310, %v478
      %545 = vst.msk [vmem:[%s194 + $0xa8] sm:$0xff] %vm310, %v481
      %546 = vst.msk [vmem:[%s194 + $0xb0] sm:$0xff] %vm310, %v486
      %547 = vst.msk [vmem:[%s194 + $0xb8] sm:$0xff] %vm310, %v489
      %548 = vst.msk [vmem:[%s194 + $0xc0] sm:$0xff] %vm310, %v494
      %549 = vst.msk [vmem:[%s194 + $0xc8] sm:$0xff] %vm310, %v497
      %550 = vst.msk [vmem:[%s194 + $0xd0] sm:$0xff] %vm310, %v502
      %551 = vst.msk [vmem:[%s194 + $0xd8] sm:$0xff] %vm310, %v505
      %552 = vst.msk [vmem:[%s194 + $0xe0] sm:$0xff] %vm310, %v510
      %553 = vst.msk [vmem:[%s194 + $0xe8] sm:$0xff] %vm310, %v513
      %554 = vst.msk [vmem:[%s194 + $0xf0] sm:$0xff] %vm310, %v518
      %555 = vst.msk [vmem:[%s194 + $0xf8] sm:$0xff] %vm310, %v521
      %p556 = scmp.eq.s32.totalorder %s16, 0
      // Predicated region
      $region29: #{_lambda_.4} parent=27 // pred_check
        %p557 = pneg %p556
      $region30: #{_lambda_.4} parent=27 // pred_check_branch
        %559 = sbr.rel (%p557) target = $region32
      $region31: #{_lambda_.4} parent=27 // pred_region
        %vm560 = vcmask 24576
        %561 = vst.msk [vmem:[%s3] sm:$0x1] %vm560, 0.0
        %562 = vst.msk [vmem:[%s4] sm:$0x1] %vm560, 0.0
      $region32: #{_lambda_.4} parent=27 // pred_fallthru
        _
      %v563 = vld [vmem:[%s3] sm:$0x1]
      %v564 = vsel %vm310, %v398, 0.0
      %v565 = vsel %vm310, %v401, 0.0
      %v566 = vadd.f32 %v564, %v565
      %v567 = vsel %vm310, %v406, 0.0
      %v568 = vadd.f32 %v566, %v567
      %v569 = vsel %vm310, %v409, 0.0
      %v570 = vadd.f32 %v568, %v569
      %v571 = vsel %vm310, %v414, 0.0
      %v572 = vadd.f32 %v570, %v571
      %v573 = vsel %vm310, %v417, 0.0
      %v574 = vadd.f32 %v572, %v573
      %v575 = vsel %vm310, %v422, 0.0
      %v576 = vadd.f32 %v574, %v575
      %v577 = vsel %vm310, %v425, 0.0
      %v578 = vadd.f32 %v576, %v577
      %v579 = vsel %vm310, %v430, 0.0
      %v580 = vadd.f32 %v578, %v579
      %v581 = vsel %vm310, %v433, 0.0
      %v582 = vadd.f32 %v580, %v581
      %v583 = vsel %vm310, %v438, 0.0
      %v584 = vadd.f32 %v582, %v583
      %v585 = vsel %vm310, %v441, 0.0
      %v586 = vadd.f32 %v584, %v585
      %v587 = vsel %vm310, %v446, 0.0
      %v588 = vadd.f32 %v586, %v587
      %v589 = vsel %vm310, %v449, 0.0
      %v590 = vadd.f32 %v588, %v589
      %v591 = vsel %vm310, %v454, 0.0
      %v592 = vadd.f32 %v590, %v591
      %v593 = vsel %vm310, %v457, 0.0
      %v594 = vadd.f32 %v592, %v593
      %v595 = vsel %vm310, %v462, 0.0
      %v596 = vadd.f32 %v594, %v595
      %v597 = vsel %vm310, %v465, 0.0
      %v598 = vadd.f32 %v596, %v597
      %v599 = vsel %vm310, %v470, 0.0
      %v600 = vadd.f32 %v598, %v599
      %v601 = vsel %vm310, %v473, 0.0
      %v602 = vadd.f32 %v600, %v601
      %v603 = vsel %vm310, %v478, 0.0
      %v604 = vadd.f32 %v602, %v603
      %v605 = vsel %vm310, %v481, 0.0
      %v606 = vadd.f32 %v604, %v605
      %v607 = vsel %vm310, %v486, 0.0
      %v608 = vadd.f32 %v606, %v607
      %v609 = vsel %vm310, %v489, 0.0
      %v610 = vadd.f32 %v608, %v609
      %v611 = vsel %vm310, %v494, 0.0
      %v612 = vadd.f32 %v610, %v611
      %v613 = vsel %vm310, %v497, 0.0
      %v614 = vadd.f32 %v612, %v613
      %v615 = vsel %vm310, %v502, 0.0
      %v616 = vadd.f32 %v614, %v615
      %v617 = vsel %vm310, %v505, 0.0
      %v618 = vadd.f32 %v616, %v617
      %v619 = vsel %vm310, %v510, 0.0
      %v620 = vadd.f32 %v618, %v619
      %v621 = vsel %vm310, %v513, 0.0
      %v622 = vadd.f32 %v620, %v621
      %v623 = vsel %vm310, %v518, 0.0
      %v624 = vadd.f32 %v622, %v623
      %v625 = vsel %vm310, %v521, 0.0
      %v626 = vadd.f32 %v624, %v625
      %v627 = vrot.slane %v626, 4
      %v628 = vadd.f32 %v626, %v627
      %v629 = vrot.slane %v628, 2
      %v630 = vadd.f32 %v628, %v629
      %v631 = vrot.slane %v630, 1
      %v632 = vadd.f32 %v630, %v631
      %v633 = vadd.f32 %v563, %v632
      %vm634 = vcmask 24576
      %635 = vst.msk [vmem:[%s3] sm:$0x1] %vm634, %v633
      %v636 = vld [vmem:[%s4] sm:$0x1]
      %v637 = vmul.f32 %v398, %v398
      %v638 = vmul.f32 %v401, %v401
      %v639 = vmul.f32 %v406, %v406
      %v640 = vmul.f32 %v409, %v409
      %v641 = vmul.f32 %v414, %v414
      %v642 = vmul.f32 %v417, %v417
      %v643 = vmul.f32 %v422, %v422
      %v644 = vmul.f32 %v425, %v425
      %v645 = vmul.f32 %v430, %v430
      %v646 = vmul.f32 %v433, %v433
      %v647 = vmul.f32 %v438, %v438
      %v648 = vmul.f32 %v441, %v441
      %v649 = vmul.f32 %v446, %v446
      %v650 = vmul.f32 %v449, %v449
      %v651 = vmul.f32 %v454, %v454
      %v652 = vmul.f32 %v457, %v457
      %v653 = vmul.f32 %v462, %v462
      %v654 = vmul.f32 %v465, %v465
      %v655 = vmul.f32 %v470, %v470
      %v656 = vmul.f32 %v473, %v473
      %v657 = vmul.f32 %v478, %v478
      %v658 = vmul.f32 %v481, %v481
      %v659 = vmul.f32 %v486, %v486
      %v660 = vmul.f32 %v489, %v489
      %v661 = vmul.f32 %v494, %v494
      %v662 = vmul.f32 %v497, %v497
      %v663 = vmul.f32 %v502, %v502
      %v664 = vmul.f32 %v505, %v505
      %v665 = vmul.f32 %v510, %v510
      %v666 = vmul.f32 %v513, %v513
      %v667 = vmul.f32 %v518, %v518
      %v668 = vmul.f32 %v521, %v521
      %v669 = vsel %vm310, %v637, 0.0
      %v670 = vsel %vm310, %v638, 0.0
      %v671 = vadd.f32 %v669, %v670
      %v672 = vsel %vm310, %v639, 0.0
      %v673 = vadd.f32 %v671, %v672
      %v674 = vsel %vm310, %v640, 0.0
      %v675 = vadd.f32 %v673, %v674
      %v676 = vsel %vm310, %v641, 0.0
      %v677 = vadd.f32 %v675, %v676
      %v678 = vsel %vm310, %v642, 0.0
      %v679 = vadd.f32 %v677, %v678
      %v680 = vsel %vm310, %v643, 0.0
      %v681 = vadd.f32 %v679, %v680
      %v682 = vsel %vm310, %v644, 0.0
      %v683 = vadd.f32 %v681, %v682
      %v684 = vsel %vm310, %v645, 0.0
      %v685 = vadd.f32 %v683, %v684
      %v686 = vsel %vm310, %v646, 0.0
      %v687 = vadd.f32 %v685, %v686
      %v688 = vsel %vm310, %v647, 0.0
      %v689 = vadd.f32 %v687, %v688
      %v690 = vsel %vm310, %v648, 0.0
      %v691 = vadd.f32 %v689, %v690
      %v692 = vsel %vm310, %v649, 0.0
      %v693 = vadd.f32 %v691, %v692
      %v694 = vsel %vm310, %v650, 0.0
      %v695 = vadd.f32 %v693, %v694
      %v696 = vsel %vm310, %v651, 0.0
      %v697 = vadd.f32 %v695, %v696
      %v698 = vsel %vm310, %v652, 0.0
      %v699 = vadd.f32 %v697, %v698
      %v700 = vsel %vm310, %v653, 0.0
      %v701 = vadd.f32 %v699, %v700
      %v702 = vsel %vm310, %v654, 0.0
      %v703 = vadd.f32 %v701, %v702
      %v704 = vsel %vm310, %v655, 0.0
      %v705 = vadd.f32 %v703, %v704
      %v706 = vsel %vm310, %v656, 0.0
      %v707 = vadd.f32 %v705, %v706
      %v708 = vsel %vm310, %v657, 0.0
      %v709 = vadd.f32 %v707, %v708
      %v710 = vsel %vm310, %v658, 0.0
      %v711 = vadd.f32 %v709, %v710
      %v712 = vsel %vm310, %v659, 0.0
      %v713 = vadd.f32 %v711, %v712
      %v714 = vsel %vm310, %v660, 0.0
      %v715 = vadd.f32 %v713, %v714
      %v716 = vsel %vm310, %v661, 0.0
      %v717 = vadd.f32 %v715, %v716
      %v718 = vsel %vm310, %v662, 0.0
      %v719 = vadd.f32 %v717, %v718
      %v720 = vsel %vm310, %v663, 0.0
      %v721 = vadd.f32 %v719, %v720
      %v722 = vsel %vm310, %v664, 0.0
      %v723 = vadd.f32 %v721, %v722
      %v724 = vsel %vm310, %v665, 0.0
      %v725 = vadd.f32 %v723, %v724
      %v726 = vsel %vm310, %v666, 0.0
      %v727 = vadd.f32 %v725, %v726
      %v728 = vsel %vm310, %v667, 0.0
      %v729 = vadd.f32 %v727, %v728
      %v730 = vsel %vm310, %v668, 0.0
      %v731 = vadd.f32 %v729, %v730
      %v732 = vrot.slane %v731, 4
      %v733 = vadd.f32 %v731, %v732
      %v734 = vrot.slane %v733, 2
      %v735 = vadd.f32 %v733, %v734
      %v736 = vrot.slane %v735, 1
      %v737 = vadd.f32 %v735, %v736
      %v738 = vadd.f32 %v636, %v737
      %739 = vst.msk [vmem:[%s4] sm:$0x1] %vm634, %v738
      %s740 = smul.u32 32, %s16
      %p741 = scmp.lt.s32.totalorder %s740, 63
      %s742 = scalar_select %p741, %s740, 63
      %s743 = smul.addr %s742, 8
      %s744 = scalar_lea.vmem %s2, %s743
      // Predicated region
      $region33: #{_lambda_.4} parent=27 // pred_check
        %p745 = pneg %p81
      $region34: #{_lambda_.4} parent=27 // pred_check_branch
        %747 = sbr.rel (%p745) target = $region36
      $region35: #{_lambda_.4} parent=27 // pred_region
        %s748 = smul.u32 32, %s16
      $region36: #{_lambda_.4} parent=27 // pred_fallthru
        _
      // Predicated region
      $region37: #{_lambda_.4} parent=27 // pred_check
        %p749 = pneg %p102
      $region38: #{_lambda_.4} parent=27 // pred_check_branch
        %751 = sbr.rel (%p749) target = $region40
      $region39: #{_lambda_.4} parent=27 // pred_region
        _
      $region40: #{_lambda_.4} parent=27 // pred_fallthru
        _
      // Predicated region
      $region41: #{_lambda_.4} parent=27 // pred_check
        %p752 = pneg %p123
      $region42: #{_lambda_.4} parent=27 // pred_check_branch
        %754 = sbr.rel (%p752) target = $region44
      $region43: #{_lambda_.4} parent=27 // pred_region
        _
      $region44: #{_lambda_.4} parent=27 // pred_fallthru
        _
      // Predicated region
      $region45: #{_lambda_.4} parent=27 // pred_check
        %p755 = pneg %p102
      $region46: #{_lambda_.4} parent=27 // pred_check_branch
        %757 = sbr.rel (%p755) target = $region48
      $region47: #{_lambda_.4} parent=27 // pred_region
        _
      $region48: #{_lambda_.4} parent=27 // pred_fallthru
        _
      // Predicated region
      $region49: #{_lambda_.4} parent=27 // pred_check
        %p758 = pneg %p123
      $region50: #{_lambda_.4} parent=27 // pred_check_branch
        %760 = sbr.rel (%p758) target = $region52
      $region51: #{_lambda_.4} parent=27 // pred_region
        _
      $region52: #{_lambda_.4} parent=27 // pred_fallthru
        _
    $region28: #{_lambda_.4} parent=5 // pred_fallthru
      _
    %p761 = scmp.le.s32.totalorder 2, %s11
    // Predicated region
    $region53: #{_lambda_.4} parent=5 // pred_check
      %p762 = pneg %p761
    $region54: #{_lambda_.4} parent=5 // pred_check_branch
      %764 = sbr.rel (%p762) target = $region56
    $region55: #{_lambda_.4} parent=5 // pred_region
      %s765 = ssub.s32 %s11, 2
      // Predicated region
      $region57: #{_lambda_.4} parent=55 // pred_check
        %p766 = pneg %p87
      $region58: #{_lambda_.4} parent=55 // pred_check_branch
        %768 = sbr.rel (%p766) target = $region60
      $region59: #{_lambda_.4} parent=55 // pred_region
        %s769 = smul.u32 32, %s17
        %p770 = scmp.lt.s32.totalorder %s769, 63
        %s771 = scalar_select %p770, %s769, 63
        %s772 = smul.addr %s771, 8
        %s773 = scalar_lea.vmem %s2, %s772
      $region60: #{_lambda_.4} parent=55 // pred_fallthru
        _
    $region56: #{_lambda_.4} parent=5 // pred_fallthru
      _
  $region6: #{_lambda_.4} parent=0 // loop_footer
    %s15 = sadd.s32 1, %s11
  $region7: #{_lambda_.4} parent=0 // loop_footer_branch
    %10 = sbr.rel target = $region3
  $region8: #{_lambda_.4} parent=0 // loop_exit
    _

// kernel: _lambda_.6
$region0: #{_lambda_.6}
  #allocation0 [shape = 'u32[]', space=smem, size = 0x4, offset = 0x4, fixed_abs, tag = 'smem constant byte address 0x4 - core index']
  #allocation1 [shape = 'u32[144,128]{1,0:T(1,128)}', space=vmem, size = 0x12000, scoped, tag = 'internal scratch']
  %s0 = inlined_call_operand.vmem [shape: f32[512,4], index: 0, kind: input, shape index: {}]
  %s1 = inlined_call_operand.vmem [shape: bf16[512,4], index: 1, kind: input, shape index: {}]
  %s2 = inlined_call_operand.vmem [shape: f32[1,4], index: 2, kind: input, shape index: {}]
  %s3 = inlined_call_operand.vmem [shape: f32[1,4], index: 3, kind: input, shape index: {}]
  %s4 = inlined_call_operand.vmem [shape: bf16[4,16], index: 4, kind: input, shape index: {}]
  %s5 = inlined_call_operand.vmem [shape: bf16[4,16], index: 5, kind: input, shape index: {}]
  %s6 = inlined_call_operand.vmem [shape: f32[512,16], index: 6, kind: output, shape index: {0}]
  %s7 = inlined_call_operand.vmem [shape: f32[512,16], index: 7, kind: output, shape index: {1}]
  %s8 = inlined_call_operand.vmem [shape: f32[1,16], index: 8, kind: output, shape index: {2}]
  %s9 = inlined_call_operand.vmem [shape: f32[1,16], index: 9, kind: output, shape index: {3}]
  %s10 = inlined_call_operand.vmem [shape: f32[1,16], index: 10, kind: output, shape index: {4}]
  %s11 = inlined_call_operand.vmem [shape: f32[1,16], index: 11, kind: output, shape index: {5}]
  %12 = xla_tuple %s6, %s7, %s8, %s9, %s10, %s11
  %s13 = sld [smem:[#allocation0]]
  $region101: #{_lambda_.6} parent=0
    _
  %s15 = ssub.s32 1, %s13
  %s16 = scalar_select 0, %s15, %s13
  loop: start=0, step=1, limit=4
  $region2: #{_lambda_.6} parent=0 // loop_pre_header
    _
  $region3: #{_lambda_.6} parent=0 // loop_header
    %s18 = sphi 0, %s22
    %p19 = scmp.ge.s32.totalorder %s18, 4
    %s28 = sphi 0, %s30
    %s31 = sphi 0, %s28
    %s32 = sphi 0, %s31
    %s48 = sphi 0, %s32
    %s54 = sphi 0, %s56
    %s57 = sphi 0, %s54
    %s58 = sphi 0, %s57
    %s74 = sphi 0, %s58
    %s78 = sphi 0, %s78
    %s80 = sphi 0, %s78
    %s81 = sphi 0, %s80
    %s95 = sphi 0, %s81
    %s99 = sphi 0, %s99
    %s101 = sphi 0, %s99
    %s102 = sphi 0, %s101
    %s116 = sphi 0, %s102
    %s120 = sphi 0, %s120
    %s122 = sphi 0, %s120
    %s123 = sphi 0, %s122
    %s137 = sphi 0, %s123
    %s141 = sphi 0, %s141
    %s143 = sphi 0, %s141
    %s144 = sphi 0, %s143
    %s158 = sphi 0, %s144
    %s164 = sphi 0, %s166
    %s167 = sphi 0, %s164
    %s168 = sphi 0, %s167
    %s184 = sphi 0, %s168
    %s190 = sphi 0, %s192
    %s193 = sphi 0, %s190
    %s194 = sphi 0, %s193
    %s210 = sphi 0, %s194
    %s214 = sphi 0, %s214
    %s216 = sphi 0, %s214
    %s217 = sphi 0, %s216
    %s231 = sphi 0, %s217
    %s235 = sphi 0, %s235
    %s237 = sphi 0, %s235
    %s238 = sphi 0, %s237
    %s252 = sphi 0, %s238
    %s256 = sphi 0, %s256
    %s258 = sphi 0, %s256
    %s259 = sphi 0, %s258
    %s273 = sphi 0, %s259
    %s277 = sphi 0, %s277
    %s279 = sphi 0, %s277
    %s280 = sphi 0, %s279
    %s294 = sphi 0, %s280
  $region4: #{_lambda_.6} parent=0 // loop_header_branch
    %21 = sbr.rel (%p19) target = $region8
  $region5: #{_lambda_.6} parent=0 // loop_body
    %s23 = ssub.s32 %s18, 1
    %s24 = ssub.s32 %s18, 2
    %s25 = sadd.s32 %s18, 1
    %s26 = ssub.s32 %s18, %s25
    %p27 = scmp.eq.s32.totalorder %s26, 0
    %s29 = sadd.s32 %s28, 1
    %s30 = scalar_select %p27, %s28, %s29
    %p33 = pneg %p27
    %p34 = scmp.eq.s32.totalorder %s18, 1
    %p35 = por %p33, %p34
    %p36 = scmp.ne.s32.totalorder %s28, %s31
    %p37 = scmp.eq.s32.totalorder %s18, 0
    %p38 = por %p36, %p37
    %p39 = scmp.ne.s32.totalorder %s28, %s31
    %p40 = scmp.eq.s32.totalorder %s23, 1
    %p41 = por %p39, %p40
    %p42 = scmp.ne.s32.totalorder %s31, %s32
    %p43 = scmp.eq.s32.totalorder %s23, 0
    %p44 = por %p42, %p43
    %p45 = scmp.ne.s32.totalorder %s31, %s32
    %p46 = scmp.eq.s32.totalorder %s24, 1
    %p47 = por %p45, %p46
    %p49 = scmp.ne.s32.totalorder %s32, %s48
    %p50 = scmp.eq.s32.totalorder %s24, 0
    %p51 = por %p49, %p50
    %s52 = ssub.s32 %s18, %s25
    %p53 = scmp.eq.s32.totalorder %s52, 0
    %s55 = sadd.s32 %s54, 1
    %s56 = scalar_select %p53, %s54, %s55
    %p59 = pneg %p53
    %p60 = scmp.eq.s32.totalorder %s18, 1
    %p61 = por %p59, %p60
    %p62 = scmp.ne.s32.totalorder %s54, %s57
    %p63 = scmp.eq.s32.totalorder %s18, 0
    %p64 = por %p62, %p63
    %p65 = scmp.ne.s32.totalorder %s54, %s57
    %p66 = scmp.eq.s32.totalorder %s23, 1
    %p67 = por %p65, %p66
    %p68 = scmp.ne.s32.totalorder %s57, %s58
    %p69 = scmp.eq.s32.totalorder %s23, 0
    %p70 = por %p68, %p69
    %p71 = scmp.ne.s32.totalorder %s57, %s58
    %p72 = scmp.eq.s32.totalorder %s24, 1
    %p73 = por %p71, %p72
    %p75 = scmp.ne.s32.totalorder %s58, %s74
    %p76 = scmp.eq.s32.totalorder %s24, 0
    %p77 = por %p75, %p76
    %s79 = sadd.s32 %s78, 1
    %p82 = scmp.eq.s32.totalorder %s18, 1
    %p83 = scmp.ne.s32.totalorder %s78, %s80
    %p84 = scmp.eq.s32.totalorder %s18, 0
    %p85 = por %p83, %p84
    %p86 = scmp.ne.s32.totalorder %s78, %s80
    %p87 = scmp.eq.s32.totalorder %s23, 1
    %p88 = por %p86, %p87
    %p89 = scmp.ne.s32.totalorder %s80, %s81
    %p90 = scmp.eq.s32.totalorder %s23, 0
    %p91 = por %p89, %p90
    %p92 = scmp.ne.s32.totalorder %s80, %s81
    %p93 = scmp.eq.s32.totalorder %s24, 1
    %p94 = por %p92, %p93
    %p96 = scmp.ne.s32.totalorder %s81, %s95
    %p97 = scmp.eq.s32.totalorder %s24, 0
    %p98 = por %p96, %p97
    %s100 = sadd.s32 %s99, 1
    %p103 = scmp.eq.s32.totalorder %s18, 1
    %p104 = scmp.ne.s32.totalorder %s99, %s101
    %p105 = scmp.eq.s32.totalorder %s18, 0
    %p106 = por %p104, %p105
    %p107 = scmp.ne.s32.totalorder %s99, %s101
    %p108 = scmp.eq.s32.totalorder %s23, 1
    %p109 = por %p107, %p108
    %p110 = scmp.ne.s32.totalorder %s101, %s102
    %p111 = scmp.eq.s32.totalorder %s23, 0
    %p112 = por %p110, %p111
    %p113 = scmp.ne.s32.totalorder %s101, %s102
    %p114 = scmp.eq.s32.totalorder %s24, 1
    %p115 = por %p113, %p114
    %p117 = scmp.ne.s32.totalorder %s102, %s116
    %p118 = scmp.eq.s32.totalorder %s24, 0
    %p119 = por %p117, %p118
    %s121 = sadd.s32 %s120, 1
    %p124 = scmp.eq.s32.totalorder %s18, 1
    %p125 = scmp.ne.s32.totalorder %s120, %s122
    %p126 = scmp.eq.s32.totalorder %s18, 0
    %p127 = por %p125, %p126
    %p128 = scmp.ne.s32.totalorder %s120, %s122
    %p129 = scmp.eq.s32.totalorder %s23, 1
    %p130 = por %p128, %p129
    %p131 = scmp.ne.s32.totalorder %s122, %s123
    %p132 = scmp.eq.s32.totalorder %s23, 0
    %p133 = por %p131, %p132
    %p134 = scmp.ne.s32.totalorder %s122, %s123
    %p135 = scmp.eq.s32.totalorder %s24, 1
    %p136 = por %p134, %p135
    %p138 = scmp.ne.s32.totalorder %s123, %s137
    %p139 = scmp.eq.s32.totalorder %s24, 0
    %p140 = por %p138, %p139
    %s142 = sadd.s32 %s141, 1
    %p145 = scmp.eq.s32.totalorder %s18, 1
    %p146 = scmp.ne.s32.totalorder %s141, %s143
    %p147 = scmp.eq.s32.totalorder %s18, 0
    %p148 = por %p146, %p147
    %p149 = scmp.ne.s32.totalorder %s141, %s143
    %p150 = scmp.eq.s32.totalorder %s23, 1
    %p151 = por %p149, %p150
    %p152 = scmp.ne.s32.totalorder %s143, %s144
    %p153 = scmp.eq.s32.totalorder %s23, 0
    %p154 = por %p152, %p153
    %p155 = scmp.ne.s32.totalorder %s143, %s144
    %p156 = scmp.eq.s32.totalorder %s24, 1
    %p157 = por %p155, %p156
    %p159 = scmp.ne.s32.totalorder %s144, %s158
    %p160 = scmp.eq.s32.totalorder %s24, 0
    %p161 = por %p159, %p160
    %s162 = ssub.s32 %s18, %s25
    %p163 = scmp.eq.s32.totalorder %s162, 0
    %s165 = sadd.s32 %s164, 1
    %s166 = scalar_select %p163, %s164, %s165
    %p169 = pneg %p163
    %p170 = scmp.eq.s32.totalorder %s18, 1
    %p171 = por %p169, %p170
    %p172 = scmp.ne.s32.totalorder %s164, %s167
    %p173 = scmp.eq.s32.totalorder %s18, 0
    %p174 = por %p172, %p173
    %p175 = scmp.ne.s32.totalorder %s164, %s167
    %p176 = scmp.eq.s32.totalorder %s23, 1
    %p177 = por %p175, %p176
    %p178 = scmp.ne.s32.totalorder %s167, %s168
    %p179 = scmp.eq.s32.totalorder %s23, 0
    %p180 = por %p178, %p179
    %p181 = scmp.ne.s32.totalorder %s167, %s168
    %p182 = scmp.eq.s32.totalorder %s24, 1
    %p183 = por %p181, %p182
    %p185 = scmp.ne.s32.totalorder %s168, %s184
    %p186 = scmp.eq.s32.totalorder %s24, 0
    %p187 = por %p185, %p186
    %s188 = ssub.s32 %s18, %s25
    %p189 = scmp.eq.s32.totalorder %s188, 0
    %s191 = sadd.s32 %s190, 1
    %s192 = scalar_select %p189, %s190, %s191
    %p195 = pneg %p189
    %p196 = scmp.eq.s32.totalorder %s18, 1
    %p197 = por %p195, %p196
    %p198 = scmp.ne.s32.totalorder %s190, %s193
    %p199 = scmp.eq.s32.totalorder %s18, 0
    %p200 = por %p198, %p199
    %p201 = scmp.ne.s32.totalorder %s190, %s193
    %p202 = scmp.eq.s32.totalorder %s23, 1
    %p203 = por %p201, %p202
    %p204 = scmp.ne.s32.totalorder %s193, %s194
    %p205 = scmp.eq.s32.totalorder %s23, 0
    %p206 = por %p204, %p205
    %p207 = scmp.ne.s32.totalorder %s193, %s194
    %p208 = scmp.eq.s32.totalorder %s24, 1
    %p209 = por %p207, %p208
    %p211 = scmp.ne.s32.totalorder %s194, %s210
    %p212 = scmp.eq.s32.totalorder %s24, 0
    %p213 = por %p211, %p212
    %s215 = sadd.s32 %s214, 1
    %p218 = scmp.eq.s32.totalorder %s18, 1
    %p219 = scmp.ne.s32.totalorder %s214, %s216
    %p220 = scmp.eq.s32.totalorder %s18, 0
    %p221 = por %p219, %p220
    %p222 = scmp.ne.s32.totalorder %s214, %s216
    %p223 = scmp.eq.s32.totalorder %s23, 1
    %p224 = por %p222, %p223
    %p225 = scmp.ne.s32.totalorder %s216, %s217
    %p226 = scmp.eq.s32.totalorder %s23, 0
    %p227 = por %p225, %p226
    %p228 = scmp.ne.s32.totalorder %s216, %s217
    %p229 = scmp.eq.s32.totalorder %s24, 1
    %p230 = por %p228, %p229
    %p232 = scmp.ne.s32.totalorder %s217, %s231
    %p233 = scmp.eq.s32.totalorder %s24, 0
    %p234 = por %p232, %p233
    %s236 = sadd.s32 %s235, 1
    %p239 = scmp.eq.s32.totalorder %s18, 1
    %p240 = scmp.ne.s32.totalorder %s235, %s237
    %p241 = scmp.eq.s32.totalorder %s18, 0
    %p242 = por %p240, %p241
    %p243 = scmp.ne.s32.totalorder %s235, %s237
    %p244 = scmp.eq.s32.totalorder %s23, 1
    %p245 = por %p243, %p244
    %p246 = scmp.ne.s32.totalorder %s237, %s238
    %p247 = scmp.eq.s32.totalorder %s23, 0
    %p248 = por %p246, %p247
    %p249 = scmp.ne.s32.totalorder %s237, %s238
    %p250 = scmp.eq.s32.totalorder %s24, 1
    %p251 = por %p249, %p250
    %p253 = scmp.ne.s32.totalorder %s238, %s252
    %p254 = scmp.eq.s32.totalorder %s24, 0
    %p255 = por %p253, %p254
    %s257 = sadd.s32 %s256, 1
    %p260 = scmp.eq.s32.totalorder %s18, 1
    %p261 = scmp.ne.s32.totalorder %s256, %s258
    %p262 = scmp.eq.s32.totalorder %s18, 0
    %p263 = por %p261, %p262
    %p264 = scmp.ne.s32.totalorder %s256, %s258
    %p265 = scmp.eq.s32.totalorder %s23, 1
    %p266 = por %p264, %p265
    %p267 = scmp.ne.s32.totalorder %s258, %s259
    %p268 = scmp.eq.s32.totalorder %s23, 0
    %p269 = por %p267, %p268
    %p270 = scmp.ne.s32.totalorder %s258, %s259
    %p271 = scmp.eq.s32.totalorder %s24, 1
    %p272 = por %p270, %p271
    %p274 = scmp.ne.s32.totalorder %s259, %s273
    %p275 = scmp.eq.s32.totalorder %s24, 0
    %p276 = por %p274, %p275
    %s278 = sadd.s32 %s277, 1
    %p281 = scmp.eq.s32.totalorder %s18, 1
    %p282 = scmp.ne.s32.totalorder %s277, %s279
    %p283 = scmp.eq.s32.totalorder %s18, 0
    %p284 = por %p282, %p283
    %p285 = scmp.ne.s32.totalorder %s277, %s279
    %p286 = scmp.eq.s32.totalorder %s23, 1
    %p287 = por %p285, %p286
    %p288 = scmp.ne.s32.totalorder %s279, %s280
    %p289 = scmp.eq.s32.totalorder %s23, 0
    %p290 = por %p288, %p289
    %p291 = scmp.ne.s32.totalorder %s279, %s280
    %p292 = scmp.eq.s32.totalorder %s24, 1
    %p293 = por %p291, %p292
    %p295 = scmp.ne.s32.totalorder %s280, %s294
    %p296 = scmp.eq.s32.totalorder %s24, 0
    %p297 = por %p295, %p296
    %p298 = scmp.le.s32.totalorder 1, %s18
    %p299 = scmp.lt.s32.totalorder %s18, 3
    %p300 = pnand %p298, %p299
    %p301 = pneg %p300
    // Predicated region
    $region9: #{_lambda_.6} parent=5 // pred_check
      _
    $region10: #{_lambda_.6} parent=5 // pred_check_branch
      %303 = sbr.rel (%p300) target = $region12
    $region11: #{_lambda_.6} parent=5 // pred_region
      %s304 = ssub.s32 %s18, 1
      // Predicated region
      $region13: #{_lambda_.6} parent=11 // pred_check
        %p305 = pneg %p91
      $region14: #{_lambda_.6} parent=11 // pred_check_branch
        %307 = sbr.rel (%p305) target = $region16
      $region15: #{_lambda_.6} parent=11 // pred_region
        _
      $region16: #{_lambda_.6} parent=11 // pred_fallthru
        _
      // Predicated region
      $region17: #{_lambda_.6} parent=11 // pred_check
        %p308 = pneg %p112
      $region18: #{_lambda_.6} parent=11 // pred_check_branch
        %310 = sbr.rel (%p308) target = $region20
      $region19: #{_lambda_.6} parent=11 // pred_region
        _
      $region20: #{_lambda_.6} parent=11 // pred_fallthru
        _
      // Predicated region
      $region21: #{_lambda_.6} parent=11 // pred_check
        %p311 = pneg %p133
      $region22: #{_lambda_.6} parent=11 // pred_check_branch
        %313 = sbr.rel (%p311) target = $region24
      $region23: #{_lambda_.6} parent=11 // pred_region
        _
      $region24: #{_lambda_.6} parent=11 // pred_fallthru
        _
      // Predicated region
      $region25: #{_lambda_.6} parent=11 // pred_check
        %p314 = pneg %p154
      $region26: #{_lambda_.6} parent=11 // pred_check_branch
        %316 = sbr.rel (%p314) target = $region28
      $region27: #{_lambda_.6} parent=11 // pred_region
        _
      $region28: #{_lambda_.6} parent=11 // pred_fallthru
        _
    $region12: #{_lambda_.6} parent=5 // pred_fallthru
      _
    %p317 = scmp.lt.s32.totalorder %s18, 2
    // Predicated region
    $region29: #{_lambda_.6} parent=5 // pred_check
      %p318 = pneg %p317
    $region30: #{_lambda_.6} parent=5 // pred_check_branch
      %320 = sbr.rel (%p318) target = $region32
    $region31: #{_lambda_.6} parent=5 // pred_region
      // Predicated region
      $region33: #{_lambda_.6} parent=31 // pred_check
        %p321 = pneg %p38
      $region34: #{_lambda_.6} parent=31 // pred_check_branch
        %323 = sbr.rel (%p321) target = $region36
      $region35: #{_lambda_.6} parent=31 // pred_region
        %s324 = smul.u32 32, %s18
        %p325 = scmp.lt.s32.totalorder %s324, 63
        %s326 = scalar_select %p325, %s324, 63
        %s327 = smul.addr %s326, 8
        %s328 = scalar_lea.vmem %s0, %s327
        %s329 = smul.u32 32, %s18
      $region36: #{_lambda_.6} parent=31 // pred_fallthru
        _
      // Predicated region
      $region37: #{_lambda_.6} parent=31 // pred_check
        %p330 = pneg %p64
      $region38: #{_lambda_.6} parent=31 // pred_check_branch
        %332 = sbr.rel (%p330) target = $region40
      $region39: #{_lambda_.6} parent=31 // pred_region
        %s333 = smul.u32 32, %s18
        %p334 = scmp.lt.s32.totalorder %s333, 63
        %s335 = scalar_select %p334, %s333, 63
        %s336 = smul.addr %s335, 4
        %s337 = scalar_lea.vmem %s1, %s336
        %s338 = smul.u32 32, %s18
      $region40: #{_lambda_.6} parent=31 // pred_fallthru
        _
    $region32: #{_lambda_.6} parent=5 // pred_fallthru
      _
    %p339 = scmp.le.s32.totalorder 1, %s18
    %p340 = scmp.lt.s32.totalorder %s18, 3
    %p341 = pnand %p339, %p340
    %p342 = pneg %p341
    // Predicated region
    $region41: #{_lambda_.6} parent=5 // pred_check
      _
    $region42: #{_lambda_.6} parent=5 // pred_check_branch
      %344 = sbr.rel (%p341) target = $region44
    $region43: #{_lambda_.6} parent=5 // pred_region
      %s345 = ssub.s32 %s18, 1
      %s346 = smul.u32 32, %s23
      %p347 = scmp.lt.s32.totalorder %s346, 63
      %s348 = scalar_select %p347, %s346, 63
      %s349 = smul.addr %s348, 8
      %s350 = scalar_lea.vmem %s0, %s349
      %p351 = pneg %p44
      %p352 = pneg %p41
      %s353 = smul.u32 32, %s23
      %p354 = scmp.lt.s32.totalorder %s353, 63
      %s355 = scalar_select %p354, %s353, 63
      %s356 = smul.addr %s355, 4
      %s357 = scalar_lea.vmem %s1, %s356
      %p358 = pneg %p70
      %p359 = pneg %p67
      %p360 = pneg %p91
      %p361 = pneg %p88
      %p362 = pneg %p112
      %p363 = pneg %p109
      %p364 = pneg %p133
      %p365 = pneg %p130
      %p366 = pneg %p154
      %p367 = pneg %p151
      %p368 = pneg %p180
      %p369 = pneg %p177
      %s370 = smul.u32 32, %s23
      %p371 = scmp.lt.s32.totalorder %s370, 63
      %s372 = scalar_select %p371, %s370, 63
      %s373 = smul.addr %s372, 8
      %s374 = scalar_lea.vmem %s6, %s373
      %p375 = pneg %p206
      %p376 = pneg %p203
      %s377 = smul.u32 32, %s23
      %p378 = scmp.lt.s32.totalorder %s377, 63
      %s379 = scalar_select %p378, %s377, 63
      %s380 = smul.addr %s379, 8
      %s381 = scalar_lea.vmem %s7, %s380
      %p382 = pneg %p227
      %p383 = pneg %p224
      %p384 = pneg %p248
      %p385 = pneg %p245
      %p386 = pneg %p269
      %p387 = pneg %p266
      %p388 = pneg %p290
      %p389 = pneg %p287
      %s390 = smul.u32 32, %s23
      %p391 = scmp.lt.s32.totalorder %s390, 63
      %s392 = scalar_select %p391, %s390, 63
      %s393 = smul.addr %s392, 8
      %s394 = scalar_lea.vmem %s0, %s393
      %s395 = smul.u32 32, %s23
      %s396 = smul.u32 32, %s23
      %p397 = scmp.lt.s32.totalorder %s396, 63
      %s398 = scalar_select %p397, %s396, 63
      %s399 = smul.addr %s398, 4
      %s400 = scalar_lea.vmem %s1, %s399
      %s401 = smul.u32 32, %s23
      %s402 = smul.u32 32, %s23
      %p403 = scmp.lt.s32.totalorder %s402, 63
      %s404 = scalar_select %p403, %s402, 63
      %s405 = smul.addr %s404, 8
      %s406 = scalar_lea.vmem %s6, %s405
      %s407 = smul.u32 32, %s23
      %s408 = smul.u32 32, %s23
      %p409 = scmp.lt.s32.totalorder %s408, 63
      %s410 = scalar_select %p409, %s408, 63
      %s411 = smul.addr %s410, 8
      %s412 = scalar_lea.vmem %s7, %s411
      %s413 = smul.u32 32, %s23
      %v415 = vld [vmem:[%s394] sm:$0xff]
      %v416 = vld [vmem:[%s394 + $0x8] sm:$0xff]
      %v417 = vld [vmem:[%s394 + $0x10] sm:$0xff]
      %v418 = vld [vmem:[%s394 + $0x18] sm:$0xff]
      %v419 = vld [vmem:[%s394 + $0x20] sm:$0xff]
      %v420 = vld [vmem:[%s394 + $0x28] sm:$0xff]
      %v421 = vld [vmem:[%s394 + $0x30] sm:$0xff]
      %v422 = vld [vmem:[%s394 + $0x38] sm:$0xff]
      %v423 = vld [vmem:[%s394 + $0x40] sm:$0xff]
      %v424 = vld [vmem:[%s394 + $0x48] sm:$0xff]
      %v425 = vld [vmem:[%s394 + $0x50] sm:$0xff]
      %v426 = vld [vmem:[%s394 + $0x58] sm:$0xff]
      %v427 = vld [vmem:[%s394 + $0x60] sm:$0xff]
      %v428 = vld [vmem:[%s394 + $0x68] sm:$0xff]
      %v429 = vld [vmem:[%s394 + $0x70] sm:$0xff]
      %v430 = vld [vmem:[%s394 + $0x78] sm:$0xff]
      %v431 = vld [vmem:[%s394 + $0x80] sm:$0xff]
      %v432 = vld [vmem:[%s394 + $0x88] sm:$0xff]
      %v433 = vld [vmem:[%s394 + $0x90] sm:$0xff]
      %v434 = vld [vmem:[%s394 + $0x98] sm:$0xff]
      %v435 = vld [vmem:[%s394 + $0xa0] sm:$0xff]
      %v436 = vld [vmem:[%s394 + $0xa8] sm:$0xff]
      %v437 = vld [vmem:[%s394 + $0xb0] sm:$0xff]
      %v438 = vld [vmem:[%s394 + $0xb8] sm:$0xff]
      %v439 = vld [vmem:[%s394 + $0xc0] sm:$0xff]
      %v440 = vld [vmem:[%s394 + $0xc8] sm:$0xff]
      %v441 = vld [vmem:[%s394 + $0xd0] sm:$0xff]
      %v442 = vld [vmem:[%s394 + $0xd8] sm:$0xff]
      %v443 = vld [vmem:[%s394 + $0xe0] sm:$0xff]
      %v444 = vld [vmem:[%s394 + $0xe8] sm:$0xff]
      %v445 = vld [vmem:[%s394 + $0xf0] sm:$0xff]
      %v446 = vld [vmem:[%s394 + $0xf8] sm:$0xff]
      %v447 = vld [vmem:[%s2] sm:$0x1]
      %v449 = vlaneseq
      %v450 = vshrl.u32 %v449, 7
      %v451 = vsub.s32 0, %v450
      %v452 = vrot.slane %v447, %v451
      %v454 = vmul.f32 %v415, %v452
      %v455 = vmul.f32 %v416, %v452
      %v456 = vmul.f32 %v417, %v452
      %v457 = vmul.f32 %v418, %v452
      %v458 = vmul.f32 %v419, %v452
      %v459 = vmul.f32 %v420, %v452
      %v460 = vmul.f32 %v421, %v452
      %v461 = vmul.f32 %v422, %v452
      %v462 = vmul.f32 %v423, %v452
      %v463 = vmul.f32 %v424, %v452
      %v464 = vmul.f32 %v425, %v452
      %v465 = vmul.f32 %v426, %v452
      %v466 = vmul.f32 %v427, %v452
      %v467 = vmul.f32 %v428, %v452
      %v468 = vmul.f32 %v429, %v452
      %v469 = vmul.f32 %v430, %v452
      %v470 = vmul.f32 %v431, %v452
      %v471 = vmul.f32 %v432, %v452
      %v472 = vmul.f32 %v433, %v452
      %v473 = vmul.f32 %v434, %v452
      %v474 = vmul.f32 %v435, %v452
      %v475 = vmul.f32 %v436, %v452
      %v476 = vmul.f32 %v437, %v452
      %v477 = vmul.f32 %v438, %v452
      %v478 = vmul.f32 %v439, %v452
      %v479 = vmul.f32 %v440, %v452
      %v480 = vmul.f32 %v441, %v452
      %v481 = vmul.f32 %v442, %v452
      %v482 = vmul.f32 %v443, %v452
      %v483 = vmul.f32 %v444, %v452
      %v484 = vmul.f32 %v445, %v452
      %v485 = vmul.f32 %v446, %v452
      %v486 = vld [vmem:[%s3] sm:$0x1]
      %v488 = vlaneseq
      %v489 = vshrl.u32 %v488, 7
      %v490 = vsub.s32 0, %v489
      %v491 = vrot.slane %v486, %v490
      %v493 = vadd.f32 %v454, %v491
      %v494 = vadd.f32 %v455, %v491
      %v495 = vadd.f32 %v456, %v491
      %v496 = vadd.f32 %v457, %v491
      %v497 = vadd.f32 %v458, %v491
      %v498 = vadd.f32 %v459, %v491
      %v499 = vadd.f32 %v460, %v491
      %v500 = vadd.f32 %v461, %v491
      %v501 = vadd.f32 %v462, %v491
      %v502 = vadd.f32 %v463, %v491
      %v503 = vadd.f32 %v464, %v491
      %v504 = vadd.f32 %v465, %v491
      %v505 = vadd.f32 %v466, %v491
      %v506 = vadd.f32 %v467, %v491
      %v507 = vadd.f32 %v468, %v491
      %v508 = vadd.f32 %v469, %v491
      %v509 = vadd.f32 %v470, %v491
      %v510 = vadd.f32 %v471, %v491
      %v511 = vadd.f32 %v472, %v491
      %v512 = vadd.f32 %v473, %v491
      %v513 = vadd.f32 %v474, %v491
      %v514 = vadd.f32 %v475, %v491
      %v515 = vadd.f32 %v476, %v491
      %v516 = vadd.f32 %v477, %v491
      %v517 = vadd.f32 %v478, %v491
      %v518 = vadd.f32 %v479, %v491
      %v519 = vadd.f32 %v480, %v491
      %v520 = vadd.f32 %v481, %v491
      %v521 = vadd.f32 %v482, %v491
      %v522 = vadd.f32 %v483, %v491
      %v523 = vadd.f32 %v484, %v491
      %v524 = vadd.f32 %v485, %v491
      %v525 = vmax.f32 %v493, 0.0
      %v526 = vmax.f32 %v494, 0.0
      %v527 = vmax.f32 %v495, 0.0
      %v528 = vmax.f32 %v496, 0.0
      %v529 = vmax.f32 %v497, 0.0
      %v530 = vmax.f32 %v498, 0.0
      %v531 = vmax.f32 %v499, 0.0
      %v532 = vmax.f32 %v500, 0.0
      %v533 = vmax.f32 %v501, 0.0
      %v534 = vmax.f32 %v502, 0.0
      %v535 = vmax.f32 %v503, 0.0
      %v536 = vmax.f32 %v504, 0.0
      %v537 = vmax.f32 %v505, 0.0
      %v538 = vmax.f32 %v506, 0.0
      %v539 = vmax.f32 %v507, 0.0
      %v540 = vmax.f32 %v508, 0.0
      %v541 = vmax.f32 %v509, 0.0
      %v542 = vmax.f32 %v510, 0.0
      %v543 = vmax.f32 %v511, 0.0
      %v544 = vmax.f32 %v512, 0.0
      %v545 = vmax.f32 %v513, 0.0
      %v546 = vmax.f32 %v514, 0.0
      %v547 = vmax.f32 %v515, 0.0
      %v548 = vmax.f32 %v516, 0.0
      %v549 = vmax.f32 %v517, 0.0
      %v550 = vmax.f32 %v518, 0.0
      %v551 = vmax.f32 %v519, 0.0
      %v552 = vmax.f32 %v520, 0.0
      %v553 = vmax.f32 %v521, 0.0
      %v554 = vmax.f32 %v522, 0.0
      %v555 = vmax.f32 %v523, 0.0
      %v556 = vmax.f32 %v524, 0.0
      %v557 = vpack.c.bf16 %v526, %v525
      %v558 = vpack.c.bf16 %v528, %v527
      %v559 = vpack.c.bf16 %v530, %v529
      %v560 = vpack.c.bf16 %v532, %v531
      %v561 = vpack.c.bf16 %v534, %v533
      %v562 = vpack.c.bf16 %v536, %v535
      %v563 = vpack.c.bf16 %v538, %v537
      %v564 = vpack.c.bf16 %v540, %v539
      %v565 = vpack.c.bf16 %v542, %v541
      %v566 = vpack.c.bf16 %v544, %v543
      %v567 = vpack.c.bf16 %v546, %v545
      %v568 = vpack.c.bf16 %v548, %v547
      %v569 = vpack.c.bf16 %v550, %v549
      %v570 = vpack.c.bf16 %v552, %v551
      %v571 = vpack.c.bf16 %v554, %v553
      %v572 = vpack.c.bf16 %v556, %v555
      %v573 = vld [vmem:[%s4] sm:$0x3]
      %vm574 = vcmask 31744
      %v576 = vsel %vm574, %v557, 0
      %v579 = vsel %vm574, %v558, 0
      %v582 = vsel %vm574, %v559, 0
      %v585 = vsel %vm574, %v560, 0
      %v588 = vsel %vm574, %v561, 0
      %v591 = vsel %vm574, %v562, 0
      %v594 = vsel %vm574, %v563, 0
      %v597 = vsel %vm574, %v564, 0
      %v600 = vsel %vm574, %v565, 0
      %v603 = vsel %vm574, %v566, 0
      %v606 = vsel %vm574, %v567, 0
      %v609 = vsel %vm574, %v568, 0
      %v612 = vsel %vm574, %v569, 0
      %v615 = vsel %vm574, %v570, 0
      %v618 = vsel %vm574, %v571, 0
      %v621 = vsel %vm574, %v572, 0
      %vm623 = vcmask 1041408
      %v625 = vsel %vm623, %v573, 0
      %627 = vmatprep.subr.bf16.mxu0 0
      %628 = vmatpush1.bf16.msra.mxu0 %v625
      %629 = vmatprep.subr.bf16.mxu0 0
      %630 = vmatpush1.bf16.msra.mxu0 0
      %631 = vmatprep.subr.bf16.mxu0 0
      %632 = vmatpush1.bf16.msra.mxu0 0
      %633 = vmatprep.subr.bf16.mxu0 0
      %634 = vmatpush1.bf16.msra.mxu0 0
      %635 = vmatprep.subr.bf16.mxu0 0
      %636 = vmatpush1.bf16.msra.mxu0 0
      %637 = vmatprep.subr.bf16.mxu0 0
      %638 = vmatpush1.bf16.msra.mxu0 0
      %639 = vmatprep.subr.bf16.mxu0 0
      %640 = vmatpush1.bf16.msra.mxu0 0
      %641 = vmatprep.subr.bf16.mxu0 0
      %642 = vmatpush1.bf16.msra.mxu0 0
      %643 = vmatprep.subr.bf16.mxu0 0
      %644 = vmatpush1.bf16.msra.mxu0 0
      %645 = vmatprep.subr.bf16.mxu0 0
      %646 = vmatpush1.bf16.msra.mxu0 0
      %647 = vmatprep.subr.bf16.mxu0 0
      %648 = vmatpush1.bf16.msra.mxu0 0
      %649 = vmatprep.subr.bf16.mxu0 0
      %650 = vmatpush1.bf16.msra.mxu0 0
      %651 = vmatprep.subr.bf16.mxu0 0
      %652 = vmatpush1.bf16.msra.mxu0 0
      %653 = vmatprep.subr.bf16.mxu0 0
      %654 = vmatpush1.bf16.msra.mxu0 0
      %655 = vmatprep.subr.bf16.mxu0 0
      %656 = vmatpush1.bf16.msra.mxu0 0
      %657 = vmatprep.subr.bf16.mxu0 0
      %658 = vmatpush1.bf16.msra.mxu0 0
      %659 = vmatprep.mubr.bf16.mxu0 0
      %660 = vmatmul.mubr.bf16.gmra.mrb[0].mxu0 %v576
      %v661 = vpop.f32.mrb[0].mxu0
      %v662 = vadd.f32 0.0, %v661
      %v663 = vpop.f32.mrb[0].mxu0
      %v664 = vpop.f32.mrb[0].mxu0
      %v665 = vadd.f32 0.0, %v664
      %v666 = vpop.f32.mrb[0].mxu0
      %667 = vmatprep.mubr.bf16.mxu0 0
      %668 = vmatmul.mubr.bf16.gmra.mrb[0].mxu0 %v579
      %v669 = vpop.f32.mrb[0].mxu0
      %v670 = vadd.f32 0.0, %v669
      %v671 = vpop.f32.mrb[0].mxu0
      %v672 = vpop.f32.mrb[0].mxu0
      %v673 = vadd.f32 0.0, %v672
      %v674 = vpop.f32.mrb[0].mxu0
      %675 = vmatprep.mubr.bf16.mxu0 0
      %676 = vmatmul.mubr.bf16.gmra.mrb[0].mxu0 %v582
      %v677 = vpop.f32.mrb[0].mxu0
      %v678 = vadd.f32 0.0, %v677
      %v679 = vpop.f32.mrb[0].mxu0
      %v680 = vpop.f32.mrb[0].mxu0
      %v681 = vadd.f32 0.0, %v680
      %v682 = vpop.f32.mrb[0].mxu0
      %683 = vmatprep.mubr.bf16.mxu0 0
      %684 = vmatmul.mubr.bf16.gmra.mrb[0].mxu0 %v585
      %v685 = vpop.f32.mrb[0].mxu0
      %v686 = vadd.f32 0.0, %v685
      %v687 = vpop.f32.mrb[0].mxu0
      %v688 = vpop.f32.mrb[0].mxu0
      %v689 = vadd.f32 0.0, %v688
      %v690 = vpop.f32.mrb[0].mxu0
      %691 = vmatprep.mubr.bf16.mxu0 0
      %692 = vmatmul.mubr.bf16.gmra.mrb[0].mxu0 %v588
      %v693 = vpop.f32.mrb[0].mxu0
      %v694 = vadd.f32 0.0, %v693
      %v695 = vpop.f32.mrb[0].mxu0
      %v696 = vpop.f32.mrb[0].mxu0
      %v697 = vadd.f32 0.0, %v696
      %v698 = vpop.f32.mrb[0].mxu0
      %699 = vmatprep.mubr.bf16.mxu0 0
      %700 = vmatmul.mubr.bf16.gmra.mrb[0].mxu0 %v591
      %v701 = vpop.f32.mrb[0].mxu0
      %v702 = vadd.f32 0.0, %v701
      %v703 = vpop.f32.mrb[0].mxu0
      %v704 = vpop.f32.mrb[0].mxu0
      %v705 = vadd.f32 0.0, %v704
      %v706 = vpop.f32.mrb[0].mxu0
      %707 = vmatprep.mubr.bf16.mxu0 0
      %708 = vmatmul.mubr.bf16.gmra.mrb[0].mxu0 %v594
      %v709 = vpop.f32.mrb[0].mxu0
      %v710 = vadd.f32 0.0, %v709
      %v711 = vpop.f32.mrb[0].mxu0
      %v712 = vpop.f32.mrb[0].mxu0
      %v713 = vadd.f32 0.0, %v712
      %v714 = vpop.f32.mrb[0].mxu0
      %715 = vmatprep.mubr.bf16.mxu0 0
      %716 = vmatmul.mubr.bf16.gmra.mrb[0].mxu0 %v597
      %v717 = vpop.f32.mrb[0].mxu0
      %v718 = vadd.f32 0.0, %v717
      %v719 = vpop.f32.mrb[0].mxu0
      %v720 = vpop.f32.mrb[0].mxu0
      %v721 = vadd.f32 0.0, %v720
      %v722 = vpop.f32.mrb[0].mxu0
      %723 = vmatprep.mubr.bf16.mxu0 0
      %724 = vmatmul.mubr.bf16.gmra.mrb[0].mxu0 %v600
      %v725 = vpop.f32.mrb[0].mxu0
      %v726 = vadd.f32 0.0, %v725
      %v727 = vpop.f32.mrb[0].mxu0
      %v728 = vpop.f32.mrb[0].mxu0
      %v729 = vadd.f32 0.0, %v728
      %v730 = vpop.f32.mrb[0].mxu0
      %731 = vmatprep.mubr.bf16.mxu0 0
      %732 = vmatmul.mubr.bf16.gmra.mrb[0].mxu0 %v603
      %v733 = vpop.f32.mrb[0].mxu0
      %v734 = vadd.f32 0.0, %v733
      %v735 = vpop.f32.mrb[0].mxu0
      %v736 = vpop.f32.mrb[0].mxu0
      %v737 = vadd.f32 0.0, %v736
      %v738 = vpop.f32.mrb[0].mxu0
      %739 = vmatprep.mubr.bf16.mxu0 0
      %740 = vmatmul.mubr.bf16.gmra.mrb[0].mxu0 %v606
      %v741 = vpop.f32.mrb[0].mxu0
      %v742 = vadd.f32 0.0, %v741
      %v743 = vpop.f32.mrb[0].mxu0
      %v744 = vpop.f32.mrb[0].mxu0
      %v745 = vadd.f32 0.0, %v744
      %v746 = vpop.f32.mrb[0].mxu0
      %747 = vmatprep.mubr.bf16.mxu0 0
      %748 = vmatmul.mubr.bf16.gmra.mrb[0].mxu0 %v609
      %v749 = vpop.f32.mrb[0].mxu0
      %v750 = vadd.f32 0.0, %v749
      %v751 = vpop.f32.mrb[0].mxu0
      %v752 = vpop.f32.mrb[0].mxu0
      %v753 = vadd.f32 0.0, %v752
      %v754 = vpop.f32.mrb[0].mxu0
      %755 = vmatprep.mubr.bf16.mxu0 0
      %756 = vmatmul.mubr.bf16.gmra.mrb[0].mxu0 %v612
      %v757 = vpop.f32.mrb[0].mxu0
      %v758 = vadd.f32 0.0, %v757
      %v759 = vpop.f32.mrb[0].mxu0
      %v760 = vpop.f32.mrb[0].mxu0
      %v761 = vadd.f32 0.0, %v760
      %v762 = vpop.f32.mrb[0].mxu0
      %763 = vmatprep.mubr.bf16.mxu0 0
      %764 = vmatmul.mubr.bf16.gmra.mrb[0].mxu0 %v615
      %v765 = vpop.f32.mrb[0].mxu0
      %v766 = vadd.f32 0.0, %v765
      %v767 = vpop.f32.mrb[0].mxu0
      %v768 = vpop.f32.mrb[0].mxu0
      %v769 = vadd.f32 0.0, %v768
      %v770 = vpop.f32.mrb[0].mxu0
      %771 = vmatprep.mubr.bf16.mxu0 0
      %772 = vmatmul.mubr.bf16.gmra.mrb[0].mxu0 %v618
      %v773 = vpop.f32.mrb[0].mxu0
      %v774 = vadd.f32 0.0, %v773
      %v775 = vpop.f32.mrb[0].mxu0
      %v776 = vpop.f32.mrb[0].mxu0
      %v777 = vadd.f32 0.0, %v776
      %v778 = vpop.f32.mrb[0].mxu0
      %779 = vmatprep.mubr.bf16.mxu0 0
      %780 = vmatmul.mubr.bf16.gmra.mrb[0].mxu0 %v621
      %v781 = vpop.f32.mrb[0].mxu0
      %v782 = vadd.f32 0.0, %v781
      %v783 = vpop.f32.mrb[0].mxu0
      %v784 = vpop.f32.mrb[0].mxu0
      %v785 = vadd.f32 0.0, %v784
      %v786 = vpop.f32.mrb[0].mxu0
      %787 = vdwg.mxu0
      %v788 = vld [vmem:[%s400] sm:$0xf]
      %v789 = vld [vmem:[%s400 + $0x4] sm:$0xf]
      %v790 = vld [vmem:[%s400 + $0x8] sm:$0xf]
      %v791 = vld [vmem:[%s400 + $0xc] sm:$0xf]
      %v792 = vld [vmem:[%s400 + $0x10] sm:$0xf]
      %v793 = vld [vmem:[%s400 + $0x14] sm:$0xf]
      %v794 = vld [vmem:[%s400 + $0x18] sm:$0xf]
      %v795 = vld [vmem:[%s400 + $0x1c] sm:$0xf]
      %v796 = vld [vmem:[%s400 + $0x20] sm:$0xf]
      %v797 = vld [vmem:[%s400 + $0x24] sm:$0xf]
      %v798 = vld [vmem:[%s400 + $0x28] sm:$0xf]
      %v799 = vld [vmem:[%s400 + $0x2c] sm:$0xf]
      %v800 = vld [vmem:[%s400 + $0x30] sm:$0xf]
      %v801 = vld [vmem:[%s400 + $0x34] sm:$0xf]
      %v802 = vld [vmem:[%s400 + $0x38] sm:$0xf]
      %v803 = vld [vmem:[%s400 + $0x3c] sm:$0xf]
      %v804 = vld [vmem:[%s400 + $0x40] sm:$0xf]
      %v805 = vld [vmem:[%s400 + $0x44] sm:$0xf]
      %v806 = vld [vmem:[%s400 + $0x48] sm:$0xf]
      %v807 = vld [vmem:[%s400 + $0x4c] sm:$0xf]
      %v808 = vld [vmem:[%s400 + $0x50] sm:$0xf]
      %v809 = vld [vmem:[%s400 + $0x54] sm:$0xf]
      %v810 = vld [vmem:[%s400 + $0x58] sm:$0xf]
      %v811 = vld [vmem:[%s400 + $0x5c] sm:$0xf]
      %v812 = vld [vmem:[%s400 + $0x60] sm:$0xf]
      %v813 = vld [vmem:[%s400 + $0x64] sm:$0xf]
      %v814 = vld [vmem:[%s400 + $0x68] sm:$0xf]
      %v815 = vld [vmem:[%s400 + $0x6c] sm:$0xf]
      %v816 = vld [vmem:[%s400 + $0x70] sm:$0xf]
      %v817 = vld [vmem:[%s400 + $0x74] sm:$0xf]
      %v818 = vld [vmem:[%s400 + $0x78] sm:$0xf]
      %v819 = vld [vmem:[%s400 + $0x7c] sm:$0xf]
      %v820 = vld [vmem:[%s5] sm:$0x3]
      %v853 = vunpack.c.l.b16 %v788
      %v854 = vunpack.c.l.b16 %v789
      %v855 = vunpack.c.l.b16 %v790
      %v856 = vunpack.c.l.b16 %v791
      %v857 = vunpack.c.l.b16 %v792
      %v858 = vunpack.c.l.b16 %v793
      %v859 = vunpack.c.l.b16 %v794
      %v860 = vunpack.c.l.b16 %v795
      %v861 = vunpack.c.l.b16 %v796
      %v862 = vunpack.c.l.b16 %v797
      %v863 = vunpack.c.l.b16 %v798
      %v864 = vunpack.c.l.b16 %v799
      %v865 = vunpack.c.l.b16 %v800
      %v866 = vunpack.c.l.b16 %v801
      %v867 = vunpack.c.l.b16 %v802
      %v868 = vunpack.c.l.b16 %v803
      %v869 = vunpack.c.l.b16 %v804
      %v870 = vunpack.c.l.b16 %v805
      %v871 = vunpack.c.l.b16 %v806
      %v872 = vunpack.c.l.b16 %v807
      %v873 = vunpack.c.l.b16 %v808
      %v874 = vunpack.c.l.b16 %v809
      %v875 = vunpack.c.l.b16 %v810
      %v876 = vunpack.c.l.b16 %v811
      %v877 = vunpack.c.l.b16 %v812
      %v878 = vunpack.c.l.b16 %v813
      %v879 = vunpack.c.l.b16 %v814
      %v880 = vunpack.c.l.b16 %v815
      %v881 = vunpack.c.l.b16 %v816
      %v882 = vunpack.c.l.b16 %v817
      %v883 = vunpack.c.l.b16 %v818
      %v884 = vunpack.c.l.b16 %v819
      %v885 = vpack.c.b16 %v854, %v853
      %v886 = vpack.c.b16 %v856, %v855
      %v887 = vpack.c.b16 %v858, %v857
      %v888 = vpack.c.b16 %v860, %v859
      %v889 = vpack.c.b16 %v862, %v861
      %v890 = vpack.c.b16 %v864, %v863
      %v891 = vpack.c.b16 %v866, %v865
      %v892 = vpack.c.b16 %v868, %v867
      %v893 = vpack.c.b16 %v870, %v869
      %v894 = vpack.c.b16 %v872, %v871
      %v895 = vpack.c.b16 %v874, %v873
      %v896 = vpack.c.b16 %v876, %v875
      %v897 = vpack.c.b16 %v878, %v877
      %v898 = vpack.c.b16 %v880, %v879
      %v899 = vpack.c.b16 %v882, %v881
      %v900 = vpack.c.b16 %v884, %v883
      %v902 = vsel %vm574, %v885, 0
      %v905 = vsel %vm574, %v886, 0
      %v908 = vsel %vm574, %v887, 0
      %v911 = vsel %vm574, %v888, 0
      %v914 = vsel %vm574, %v889, 0
      %v917 = vsel %vm574, %v890, 0
      %v920 = vsel %vm574, %v891, 0
      %v923 = vsel %vm574, %v892, 0
      %v926 = vsel %vm574, %v893, 0
      %v929 = vsel %vm574, %v894, 0
      %v932 = vsel %vm574, %v895, 0
      %v935 = vsel %vm574, %v896, 0
      %v938 = vsel %vm574, %v897, 0
      %v941 = vsel %vm574, %v898, 0
      %v944 = vsel %vm574, %v899, 0
      %v947 = vsel %vm574, %v900, 0
      %v950 = vsel %vm623, %v820, 0
      %952 = vmatprep.subr.bf16.mxu0 0
      %953 = vmatpush1.bf16.msra.mxu0 %v950
      %954 = vmatprep.subr.bf16.mxu0 0
      %955 = vmatpush1.bf16.msra.mxu0 0
      %956 = vmatprep.subr.bf16.mxu0 0
      %957 = vmatpush1.bf16.msra.mxu0 0
      %958 = vmatprep.subr.bf16.mxu0 0
      %959 = vmatpush1.bf16.msra.mxu0 0
      %960 = vmatprep.subr.bf16.mxu0 0
      %961 = vmatpush1.bf16.msra.mxu0 0
      %962 = vmatprep.subr.bf16.mxu0 0
      %963 = vmatpush1.bf16.msra.mxu0 0
      %964 = vmatprep.subr.bf16.mxu0 0
      %965 = vmatpush1.bf16.msra.mxu0 0
      %966 = vmatprep.subr.bf16.mxu0 0
      %967 = vmatpush1.bf16.msra.mxu0 0
      %968 = vmatprep.subr.bf16.mxu0 0
      %969 = vmatpush1.bf16.msra.mxu0 0
      %970 = vmatprep.subr.bf16.mxu0 0
      %971 = vmatpush1.bf16.msra.mxu0 0
      %972 = vmatprep.subr.bf16.mxu0 0
      %973 = vmatpush1.bf16.msra.mxu0 0
      %974 = vmatprep.subr.bf16.mxu0 0
      %975 = vmatpush1.bf16.msra.mxu0 0
      %976 = vmatprep.subr.bf16.mxu0 0
      %977 = vmatpush1.bf16.msra.mxu0 0
      %978 = vmatprep.subr.bf16.mxu0 0
      %979 = vmatpush1.bf16.msra.mxu0 0
      %980 = vmatprep.subr.bf16.mxu0 0
      %981 = vmatpush1.bf16.msra.mxu0 0
      %982 = vmatprep.subr.bf16.mxu0 0
      %983 = vmatpush1.bf16.msra.mxu0 0
      %984 = vmatprep.mubr.bf16.mxu0 0
      %985 = vmatmul.mubr.bf16.gmra.mrb[0].mxu0 %v902
      %v986 = vpop.f32.mrb[0].mxu0
      %v987 = vadd.f32 0.0, %v986
      %v988 = vpop.f32.mrb[0].mxu0
      %v989 = vpop.f32.mrb[0].mxu0
      %v990 = vadd.f32 0.0, %v989
      %v991 = vpop.f32.mrb[0].mxu0
      %992 = vmatprep.mubr.bf16.mxu0 0
      %993 = vmatmul.mubr.bf16.gmra.mrb[0].mxu0 %v905
      %v994 = vpop.f32.mrb[0].mxu0
      %v995 = vadd.f32 0.0, %v994
      %v996 = vpop.f32.mrb[0].mxu0
      %v997 = vpop.f32.mrb[0].mxu0
      %v998 = vadd.f32 0.0, %v997
      %v999 = vpop.f32.mrb[0].mxu0
      %1000 = vmatprep.mubr.bf16.mxu0 0
      %1001 = vmatmul.mubr.bf16.gmra.mrb[0].mxu0 %v908
      %v1002 = vpop.f32.mrb[0].mxu0
      %v1003 = vadd.f32 0.0, %v1002
      %v1004 = vpop.f32.mrb[0].mxu0
      %v1005 = vpop.f32.mrb[0].mxu0
      %v1006 = vadd.f32 0.0, %v1005
      %v1007 = vpop.f32.mrb[0].mxu0
      %1008 = vmatprep.mubr.bf16.mxu0 0
      %1009 = vmatmul.mubr.bf16.gmra.mrb[0].mxu0 %v911
      %v1010 = vpop.f32.mrb[0].mxu0
      %v1011 = vadd.f32 0.0, %v1010
      %v1012 = vpop.f32.mrb[0].mxu0
      %v1013 = vpop.f32.mrb[0].mxu0
      %v1014 = vadd.f32 0.0, %v1013
      %v1015 = vpop.f32.mrb[0].mxu0
      %1016 = vmatprep.mubr.bf16.mxu0 0
      %1017 = vmatmul.mubr.bf16.gmra.mrb[0].mxu0 %v914
      %v1018 = vpop.f32.mrb[0].mxu0
      %v1019 = vadd.f32 0.0, %v1018
      %v1020 = vpop.f32.mrb[0].mxu0
      %v1021 = vpop.f32.mrb[0].mxu0
      %v1022 = vadd.f32 0.0, %v1021
      %v1023 = vpop.f32.mrb[0].mxu0
      %1024 = vmatprep.mubr.bf16.mxu0 0
      %1025 = vmatmul.mubr.bf16.gmra.mrb[0].mxu0 %v917
      %v1026 = vpop.f32.mrb[0].mxu0
      %v1027 = vadd.f32 0.0, %v1026
      %v1028 = vpop.f32.mrb[0].mxu0
      %v1029 = vpop.f32.mrb[0].mxu0
      %v1030 = vadd.f32 0.0, %v1029
      %v1031 = vpop.f32.mrb[0].mxu0
      %1032 = vmatprep.mubr.bf16.mxu0 0
      %1033 = vmatmul.mubr.bf16.gmra.mrb[0].mxu0 %v920
      %v1034 = vpop.f32.mrb[0].mxu0
      %v1035 = vadd.f32 0.0, %v1034
      %v1036 = vpop.f32.mrb[0].mxu0
      %v1037 = vpop.f32.mrb[0].mxu0
      %v1038 = vadd.f32 0.0, %v1037
      %v1039 = vpop.f32.mrb[0].mxu0
      %1040 = vmatprep.mubr.bf16.mxu0 0
      %1041 = vmatmul.mubr.bf16.gmra.mrb[0].mxu0 %v923
      %v1042 = vpop.f32.mrb[0].mxu0
      %v1043 = vadd.f32 0.0, %v1042
      %v1044 = vpop.f32.mrb[0].mxu0
      %v1045 = vpop.f32.mrb[0].mxu0
      %v1046 = vadd.f32 0.0, %v1045
      %v1047 = vpop.f32.mrb[0].mxu0
      %1048 = vmatprep.mubr.bf16.mxu0 0
      %1049 = vmatmul.mubr.bf16.gmra.mrb[0].mxu0 %v926
      %v1050 = vpop.f32.mrb[0].mxu0
      %v1051 = vadd.f32 0.0, %v1050
      %v1052 = vpop.f32.mrb[0].mxu0
      %v1053 = vpop.f32.mrb[0].mxu0
      %v1054 = vadd.f32 0.0, %v1053
      %v1055 = vpop.f32.mrb[0].mxu0
      %1056 = vmatprep.mubr.bf16.mxu0 0
      %1057 = vmatmul.mubr.bf16.gmra.mrb[0].mxu0 %v929
      %v1058 = vpop.f32.mrb[0].mxu0
      %v1059 = vadd.f32 0.0, %v1058
      %v1060 = vpop.f32.mrb[0].mxu0
      %v1061 = vpop.f32.mrb[0].mxu0
      %v1062 = vadd.f32 0.0, %v1061
      %v1063 = vpop.f32.mrb[0].mxu0
      %1064 = vmatprep.mubr.bf16.mxu0 0
      %1065 = vmatmul.mubr.bf16.gmra.mrb[0].mxu0 %v932
      %v1066 = vpop.f32.mrb[0].mxu0
      %v1067 = vadd.f32 0.0, %v1066
      %v1068 = vpop.f32.mrb[0].mxu0
      %v1069 = vpop.f32.mrb[0].mxu0
      %v1070 = vadd.f32 0.0, %v1069
      %v1071 = vpop.f32.mrb[0].mxu0
      %1072 = vmatprep.mubr.bf16.mxu0 0
      %1073 = vmatmul.mubr.bf16.gmra.mrb[0].mxu0 %v935
      %v1074 = vpop.f32.mrb[0].mxu0
      %v1075 = vadd.f32 0.0, %v1074
      %v1076 = vpop.f32.mrb[0].mxu0
      %v1077 = vpop.f32.mrb[0].mxu0
      %v1078 = vadd.f32 0.0, %v1077
      %v1079 = vpop.f32.mrb[0].mxu0
      %1080 = vmatprep.mubr.bf16.mxu0 0
      %1081 = vmatmul.mubr.bf16.gmra.mrb[0].mxu0 %v938
      %v1082 = vpop.f32.mrb[0].mxu0
      %v1083 = vadd.f32 0.0, %v1082
      %v1084 = vpop.f32.mrb[0].mxu0
      %v1085 = vpop.f32.mrb[0].mxu0
      %v1086 = vadd.f32 0.0, %v1085
      %v1087 = vpop.f32.mrb[0].mxu0
      %1088 = vmatprep.mubr.bf16.mxu0 0
      %1089 = vmatmul.mubr.bf16.gmra.mrb[0].mxu0 %v941
      %v1090 = vpop.f32.mrb[0].mxu0
      %v1091 = vadd.f32 0.0, %v1090
      %v1092 = vpop.f32.mrb[0].mxu0
      %v1093 = vpop.f32.mrb[0].mxu0
      %v1094 = vadd.f32 0.0, %v1093
      %v1095 = vpop.f32.mrb[0].mxu0
      %1096 = vmatprep.mubr.bf16.mxu0 0
      %1097 = vmatmul.mubr.bf16.gmra.mrb[0].mxu0 %v944
      %v1098 = vpop.f32.mrb[0].mxu0
      %v1099 = vadd.f32 0.0, %v1098
      %v1100 = vpop.f32.mrb[0].mxu0
      %v1101 = vpop.f32.mrb[0].mxu0
      %v1102 = vadd.f32 0.0, %v1101
      %v1103 = vpop.f32.mrb[0].mxu0
      %1104 = vmatprep.mubr.bf16.mxu0 0
      %1105 = vmatmul.mubr.bf16.gmra.mrb[0].mxu0 %v947
      %v1106 = vpop.f32.mrb[0].mxu0
      %v1107 = vadd.f32 0.0, %v1106
      %v1108 = vpop.f32.mrb[0].mxu0
      %v1109 = vpop.f32.mrb[0].mxu0
      %v1110 = vadd.f32 0.0, %v1109
      %v1111 = vpop.f32.mrb[0].mxu0
      %1112 = vdwg.mxu0
      %vm1113 = vcmask 130048
      %1114 = vst.msk [vmem:[%s406] sm:$0xff] %vm1113, %v662
      %1115 = vst.msk [vmem:[%s406 + $0x8] sm:$0xff] %vm1113, %v665
      %1116 = vst.msk [vmem:[%s406 + $0x10] sm:$0xff] %vm1113, %v670
      %1117 = vst.msk [vmem:[%s406 + $0x18] sm:$0xff] %vm1113, %v673
      %1118 = vst.msk [vmem:[%s406 + $0x20] sm:$0xff] %vm1113, %v678
      %1119 = vst.msk [vmem:[%s406 + $0x28] sm:$0xff] %vm1113, %v681
      %1120 = vst.msk [vmem:[%s406 + $0x30] sm:$0xff] %vm1113, %v686
      %1121 = vst.msk [vmem:[%s406 + $0x38] sm:$0xff] %vm1113, %v689
      %1122 = vst.msk [vmem:[%s406 + $0x40] sm:$0xff] %vm1113, %v694
      %1123 = vst.msk [vmem:[%s406 + $0x48] sm:$0xff] %vm1113, %v697
      %1124 = vst.msk [vmem:[%s406 + $0x50] sm:$0xff] %vm1113, %v702
      %1125 = vst.msk [vmem:[%s406 + $0x58] sm:$0xff] %vm1113, %v705
      %1126 = vst.msk [vmem:[%s406 + $0x60] sm:$0xff] %vm1113, %v710
      %1127 = vst.msk [vmem:[%s406 + $0x68] sm:$0xff] %vm1113, %v713
      %1128 = vst.msk [vmem:[%s406 + $0x70] sm:$0xff] %vm1113, %v718
      %1129 = vst.msk [vmem:[%s406 + $0x78] sm:$0xff] %vm1113, %v721
      %1130 = vst.msk [vmem:[%s406 + $0x80] sm:$0xff] %vm1113, %v726
      %1131 = vst.msk [vmem:[%s406 + $0x88] sm:$0xff] %vm1113, %v729
      %1132 = vst.msk [vmem:[%s406 + $0x90] sm:$0xff] %vm1113, %v734
      %1133 = vst.msk [vmem:[%s406 + $0x98] sm:$0xff] %vm1113, %v737
      %1134 = vst.msk [vmem:[%s406 + $0xa0] sm:$0xff] %vm1113, %v742
      %1135 = vst.msk [vmem:[%s406 + $0xa8] sm:$0xff] %vm1113, %v745
      %1136 = vst.msk [vmem:[%s406 + $0xb0] sm:$0xff] %vm1113, %v750
      %1137 = vst.msk [vmem:[%s406 + $0xb8] sm:$0xff] %vm1113, %v753
      %1138 = vst.msk [vmem:[%s406 + $0xc0] sm:$0xff] %vm1113, %v758
      %1139 = vst.msk [vmem:[%s406 + $0xc8] sm:$0xff] %vm1113, %v761
      %1140 = vst.msk [vmem:[%s406 + $0xd0] sm:$0xff] %vm1113, %v766
      %1141 = vst.msk [vmem:[%s406 + $0xd8] sm:$0xff] %vm1113, %v769
      %1142 = vst.msk [vmem:[%s406 + $0xe0] sm:$0xff] %vm1113, %v774
      %1143 = vst.msk [vmem:[%s406 + $0xe8] sm:$0xff] %vm1113, %v777
      %1144 = vst.msk [vmem:[%s406 + $0xf0] sm:$0xff] %vm1113, %v782
      %1145 = vst.msk [vmem:[%s406 + $0xf8] sm:$0xff] %vm1113, %v785
      %1146 = vst.msk [vmem:[%s412] sm:$0xff] %vm1113, %v987
      %1147 = vst.msk [vmem:[%s412 + $0x8] sm:$0xff] %vm1113, %v990
      %1148 = vst.msk [vmem:[%s412 + $0x10] sm:$0xff] %vm1113, %v995
      %1149 = vst.msk [vmem:[%s412 + $0x18] sm:$0xff] %vm1113, %v998
      %1150 = vst.msk [vmem:[%s412 + $0x20] sm:$0xff] %vm1113, %v1003
      %1151 = vst.msk [vmem:[%s412 + $0x28] sm:$0xff] %vm1113, %v1006
      %1152 = vst.msk [vmem:[%s412 + $0x30] sm:$0xff] %vm1113, %v1011
      %1153 = vst.msk [vmem:[%s412 + $0x38] sm:$0xff] %vm1113, %v1014
      %1154 = vst.msk [vmem:[%s412 + $0x40] sm:$0xff] %vm1113, %v1019
      %1155 = vst.msk [vmem:[%s412 + $0x48] sm:$0xff] %vm1113, %v1022
      %1156 = vst.msk [vmem:[%s412 + $0x50] sm:$0xff] %vm1113, %v1027
      %1157 = vst.msk [vmem:[%s412 + $0x58] sm:$0xff] %vm1113, %v1030
      %1158 = vst.msk [vmem:[%s412 + $0x60] sm:$0xff] %vm1113, %v1035
      %1159 = vst.msk [vmem:[%s412 + $0x68] sm:$0xff] %vm1113, %v1038
      %1160 = vst.msk [vmem:[%s412 + $0x70] sm:$0xff] %vm1113, %v1043
      %1161 = vst.msk [vmem:[%s412 + $0x78] sm:$0xff] %vm1113, %v1046
      %1162 = vst.msk [vmem:[%s412 + $0x80] sm:$0xff] %vm1113, %v1051
      %1163 = vst.msk [vmem:[%s412 + $0x88] sm:$0xff] %vm1113, %v1054
      %1164 = vst.msk [vmem:[%s412 + $0x90] sm:$0xff] %vm1113, %v1059
      %1165 = vst.msk [vmem:[%s412 + $0x98] sm:$0xff] %vm1113, %v1062
      %1166 = vst.msk [vmem:[%s412 + $0xa0] sm:$0xff] %vm1113, %v1067
      %1167 = vst.msk [vmem:[%s412 + $0xa8] sm:$0xff] %vm1113, %v1070
      %1168 = vst.msk [vmem:[%s412 + $0xb0] sm:$0xff] %vm1113, %v1075
      %1169 = vst.msk [vmem:[%s412 + $0xb8] sm:$0xff] %vm1113, %v1078
      %1170 = vst.msk [vmem:[%s412 + $0xc0] sm:$0xff] %vm1113, %v1083
      %1171 = vst.msk [vmem:[%s412 + $0xc8] sm:$0xff] %vm1113, %v1086
      %1172 = vst.msk [vmem:[%s412 + $0xd0] sm:$0xff] %vm1113, %v1091
      %1173 = vst.msk [vmem:[%s412 + $0xd8] sm:$0xff] %vm1113, %v1094
      %1174 = vst.msk [vmem:[%s412 + $0xe0] sm:$0xff] %vm1113, %v1099
      %1175 = vst.msk [vmem:[%s412 + $0xe8] sm:$0xff] %vm1113, %v1102
      %1176 = vst.msk [vmem:[%s412 + $0xf0] sm:$0xff] %vm1113, %v1107
      %1177 = vst.msk [vmem:[%s412 + $0xf8] sm:$0xff] %vm1113, %v1110
      %p1178 = scmp.eq.s32.totalorder %s23, 0
      // Predicated region
      $region45: #{_lambda_.6} parent=43 // pred_check
        %p1179 = pneg %p1178
      $region46: #{_lambda_.6} parent=43 // pred_check_branch
        %1181 = sbr.rel (%p1179) target = $region48
      $region47: #{_lambda_.6} parent=43 // pred_region
        %vm1182 = vcmask 122880
        %1183 = vst.msk [vmem:[%s8] sm:$0x1] %vm1182, 0.0
        %1184 = vst.msk [vmem:[%s9] sm:$0x1] %vm1182, 0.0
        %1185 = vst.msk [vmem:[%s10] sm:$0x1] %vm1182, 0.0
        %1186 = vst.msk [vmem:[%s11] sm:$0x1] %vm1182, 0.0
      $region48: #{_lambda_.6} parent=43 // pred_fallthru
        _
      %v1187 = vld [vmem:[%s8] sm:$0x1]
      %v1188 = vsel %vm1113, %v662, 0.0
      %v1189 = vsel %vm1113, %v665, 0.0
      %v1190 = vadd.f32 %v1188, %v1189
      %v1191 = vsel %vm1113, %v670, 0.0
      %v1192 = vadd.f32 %v1190, %v1191
      %v1193 = vsel %vm1113, %v673, 0.0
      %v1194 = vadd.f32 %v1192, %v1193
      %v1195 = vsel %vm1113, %v678, 0.0
      %v1196 = vadd.f32 %v1194, %v1195
      %v1197 = vsel %vm1113, %v681, 0.0
      %v1198 = vadd.f32 %v1196, %v1197
      %v1199 = vsel %vm1113, %v686, 0.0
      %v1200 = vadd.f32 %v1198, %v1199
      %v1201 = vsel %vm1113, %v689, 0.0
      %v1202 = vadd.f32 %v1200, %v1201
      %v1203 = vsel %vm1113, %v694, 0.0
      %v1204 = vadd.f32 %v1202, %v1203
      %v1205 = vsel %vm1113, %v697, 0.0
      %v1206 = vadd.f32 %v1204, %v1205
      %v1207 = vsel %vm1113, %v702, 0.0
      %v1208 = vadd.f32 %v1206, %v1207
      %v1209 = vsel %vm1113, %v705, 0.0
      %v1210 = vadd.f32 %v1208, %v1209
      %v1211 = vsel %vm1113, %v710, 0.0
      %v1212 = vadd.f32 %v1210, %v1211
      %v1213 = vsel %vm1113, %v713, 0.0
      %v1214 = vadd.f32 %v1212, %v1213
      %v1215 = vsel %vm1113, %v718, 0.0
      %v1216 = vadd.f32 %v1214, %v1215
      %v1217 = vsel %vm1113, %v721, 0.0
      %v1218 = vadd.f32 %v1216, %v1217
      %v1219 = vsel %vm1113, %v726, 0.0
      %v1220 = vadd.f32 %v1218, %v1219
      %v1221 = vsel %vm1113, %v729, 0.0
      %v1222 = vadd.f32 %v1220, %v1221
      %v1223 = vsel %vm1113, %v734, 0.0
      %v1224 = vadd.f32 %v1222, %v1223
      %v1225 = vsel %vm1113, %v737, 0.0
      %v1226 = vadd.f32 %v1224, %v1225
      %v1227 = vsel %vm1113, %v742, 0.0
      %v1228 = vadd.f32 %v1226, %v1227
      %v1229 = vsel %vm1113, %v745, 0.0
      %v1230 = vadd.f32 %v1228, %v1229
      %v1231 = vsel %vm1113, %v750, 0.0
      %v1232 = vadd.f32 %v1230, %v1231
      %v1233 = vsel %vm1113, %v753, 0.0
      %v1234 = vadd.f32 %v1232, %v1233
      %v1235 = vsel %vm1113, %v758, 0.0
      %v1236 = vadd.f32 %v1234, %v1235
      %v1237 = vsel %vm1113, %v761, 0.0
      %v1238 = vadd.f32 %v1236, %v1237
      %v1239 = vsel %vm1113, %v766, 0.0
      %v1240 = vadd.f32 %v1238, %v1239
      %v1241 = vsel %vm1113, %v769, 0.0
      %v1242 = vadd.f32 %v1240, %v1241
      %v1243 = vsel %vm1113, %v774, 0.0
      %v1244 = vadd.f32 %v1242, %v1243
      %v1245 = vsel %vm1113, %v777, 0.0
      %v1246 = vadd.f32 %v1244, %v1245
      %v1247 = vsel %vm1113, %v782, 0.0
      %v1248 = vadd.f32 %v1246, %v1247
      %v1249 = vsel %vm1113, %v785, 0.0
      %v1250 = vadd.f32 %v1248, %v1249
      %v1251 = vrot.slane %v1250, 4
      %v1252 = vadd.f32 %v1250, %v1251
      %v1253 = vrot.slane %v1252, 2
      %v1254 = vadd.f32 %v1252, %v1253
      %v1255 = vrot.slane %v1254, 1
      %v1256 = vadd.f32 %v1254, %v1255
      %v1257 = vadd.f32 %v1187, %v1256
      %vm1258 = vcmask 122880
      %1259 = vst.msk [vmem:[%s8] sm:$0x1] %vm1258, %v1257
      %v1260 = vld [vmem:[%s9] sm:$0x1]
      %v1261 = vmul.f32 %v662, %v662
      %v1262 = vmul.f32 %v665, %v665
      %v1263 = vmul.f32 %v670, %v670
      %v1264 = vmul.f32 %v673, %v673
      %v1265 = vmul.f32 %v678, %v678
      %v1266 = vmul.f32 %v681, %v681
      %v1267 = vmul.f32 %v686, %v686
      %v1268 = vmul.f32 %v689, %v689
      %v1269 = vmul.f32 %v694, %v694
      %v1270 = vmul.f32 %v697, %v697
      %v1271 = vmul.f32 %v702, %v702
      %v1272 = vmul.f32 %v705, %v705
      %v1273 = vmul.f32 %v710, %v710
      %v1274 = vmul.f32 %v713, %v713
      %v1275 = vmul.f32 %v718, %v718
      %v1276 = vmul.f32 %v721, %v721
      %v1277 = vmul.f32 %v726, %v726
      %v1278 = vmul.f32 %v729, %v729
      %v1279 = vmul.f32 %v734, %v734
      %v1280 = vmul.f32 %v737, %v737
      %v1281 = vmul.f32 %v742, %v742
      %v1282 = vmul.f32 %v745, %v745
      %v1283 = vmul.f32 %v750, %v750
      %v1284 = vmul.f32 %v753, %v753
      %v1285 = vmul.f32 %v758, %v758
      %v1286 = vmul.f32 %v761, %v761
      %v1287 = vmul.f32 %v766, %v766
      %v1288 = vmul.f32 %v769, %v769
      %v1289 = vmul.f32 %v774, %v774
      %v1290 = vmul.f32 %v777, %v777
      %v1291 = vmul.f32 %v782, %v782
      %v1292 = vmul.f32 %v785, %v785
      %v1293 = vsel %vm1113, %v1261, 0.0
      %v1294 = vsel %vm1113, %v1262, 0.0
      %v1295 = vadd.f32 %v1293, %v1294
      %v1296 = vsel %vm1113, %v1263, 0.0
      %v1297 = vadd.f32 %v1295, %v1296
      %v1298 = vsel %vm1113, %v1264, 0.0
      %v1299 = vadd.f32 %v1297, %v1298
      %v1300 = vsel %vm1113, %v1265, 0.0
      %v1301 = vadd.f32 %v1299, %v1300
      %v1302 = vsel %vm1113, %v1266, 0.0
      %v1303 = vadd.f32 %v1301, %v1302
      %v1304 = vsel %vm1113, %v1267, 0.0
      %v1305 = vadd.f32 %v1303, %v1304
      %v1306 = vsel %vm1113, %v1268, 0.0
      %v1307 = vadd.f32 %v1305, %v1306
      %v1308 = vsel %vm1113, %v1269, 0.0
      %v1309 = vadd.f32 %v1307, %v1308
      %v1310 = vsel %vm1113, %v1270, 0.0
      %v1311 = vadd.f32 %v1309, %v1310
      %v1312 = vsel %vm1113, %v1271, 0.0
      %v1313 = vadd.f32 %v1311, %v1312
      %v1314 = vsel %vm1113, %v1272, 0.0
      %v1315 = vadd.f32 %v1313, %v1314
      %v1316 = vsel %vm1113, %v1273, 0.0
      %v1317 = vadd.f32 %v1315, %v1316
      %v1318 = vsel %vm1113, %v1274, 0.0
      %v1319 = vadd.f32 %v1317, %v1318
      %v1320 = vsel %vm1113, %v1275, 0.0
      %v1321 = vadd.f32 %v1319, %v1320
      %v1322 = vsel %vm1113, %v1276, 0.0
      %v1323 = vadd.f32 %v1321, %v1322
      %v1324 = vsel %vm1113, %v1277, 0.0
      %v1325 = vadd.f32 %v1323, %v1324
      %v1326 = vsel %vm1113, %v1278, 0.0
      %v1327 = vadd.f32 %v1325, %v1326
      %v1328 = vsel %vm1113, %v1279, 0.0
      %v1329 = vadd.f32 %v1327, %v1328
      %v1330 = vsel %vm1113, %v1280, 0.0
      %v1331 = vadd.f32 %v1329, %v1330
      %v1332 = vsel %vm1113, %v1281, 0.0
      %v1333 = vadd.f32 %v1331, %v1332
      %v1334 = vsel %vm1113, %v1282, 0.0
      %v1335 = vadd.f32 %v1333, %v1334
      %v1336 = vsel %vm1113, %v1283, 0.0
      %v1337 = vadd.f32 %v1335, %v1336
      %v1338 = vsel %vm1113, %v1284, 0.0
      %v1339 = vadd.f32 %v1337, %v1338
      %v1340 = vsel %vm1113, %v1285, 0.0
      %v1341 = vadd.f32 %v1339, %v1340
      %v1342 = vsel %vm1113, %v1286, 0.0
      %v1343 = vadd.f32 %v1341, %v1342
      %v1344 = vsel %vm1113, %v1287, 0.0
      %v1345 = vadd.f32 %v1343, %v1344
      %v1346 = vsel %vm1113, %v1288, 0.0
      %v1347 = vadd.f32 %v1345, %v1346
      %v1348 = vsel %vm1113, %v1289, 0.0
      %v1349 = vadd.f32 %v1347, %v1348
      %v1350 = vsel %vm1113, %v1290, 0.0
      %v1351 = vadd.f32 %v1349, %v1350
      %v1352 = vsel %vm1113, %v1291, 0.0
      %v1353 = vadd.f32 %v1351, %v1352
      %v1354 = vsel %vm1113, %v1292, 0.0
      %v1355 = vadd.f32 %v1353, %v1354
      %v1356 = vrot.slane %v1355, 4
      %v1357 = vadd.f32 %v1355, %v1356
      %v1358 = vrot.slane %v1357, 2
      %v1359 = vadd.f32 %v1357, %v1358
      %v1360 = vrot.slane %v1359, 1
      %v1361 = vadd.f32 %v1359, %v1360
      %v1362 = vadd.f32 %v1260, %v1361
      %1363 = vst.msk [vmem:[%s9] sm:$0x1] %vm1258, %v1362
      %v1364 = vld [vmem:[%s10] sm:$0x1]
      %v1365 = vsel %vm1113, %v987, 0.0
      %v1366 = vsel %vm1113, %v990, 0.0
      %v1367 = vadd.f32 %v1365, %v1366
      %v1368 = vsel %vm1113, %v995, 0.0
      %v1369 = vadd.f32 %v1367, %v1368
      %v1370 = vsel %vm1113, %v998, 0.0
      %v1371 = vadd.f32 %v1369, %v1370
      %v1372 = vsel %vm1113, %v1003, 0.0
      %v1373 = vadd.f32 %v1371, %v1372
      %v1374 = vsel %vm1113, %v1006, 0.0
      %v1375 = vadd.f32 %v1373, %v1374
      %v1376 = vsel %vm1113, %v1011, 0.0
      %v1377 = vadd.f32 %v1375, %v1376
      %v1378 = vsel %vm1113, %v1014, 0.0
      %v1379 = vadd.f32 %v1377, %v1378
      %v1380 = vsel %vm1113, %v1019, 0.0
      %v1381 = vadd.f32 %v1379, %v1380
      %v1382 = vsel %vm1113, %v1022, 0.0
      %v1383 = vadd.f32 %v1381, %v1382
      %v1384 = vsel %vm1113, %v1027, 0.0
      %v1385 = vadd.f32 %v1383, %v1384
      %v1386 = vsel %vm1113, %v1030, 0.0
      %v1387 = vadd.f32 %v1385, %v1386
      %v1388 = vsel %vm1113, %v1035, 0.0
      %v1389 = vadd.f32 %v1387, %v1388
      %v1390 = vsel %vm1113, %v1038, 0.0
      %v1391 = vadd.f32 %v1389, %v1390
      %v1392 = vsel %vm1113, %v1043, 0.0
      %v1393 = vadd.f32 %v1391, %v1392
      %v1394 = vsel %vm1113, %v1046, 0.0
      %v1395 = vadd.f32 %v1393, %v1394
      %v1396 = vsel %vm1113, %v1051, 0.0
      %v1397 = vadd.f32 %v1395, %v1396
      %v1398 = vsel %vm1113, %v1054, 0.0
      %v1399 = vadd.f32 %v1397, %v1398
      %v1400 = vsel %vm1113, %v1059, 0.0
      %v1401 = vadd.f32 %v1399, %v1400
      %v1402 = vsel %vm1113, %v1062, 0.0
      %v1403 = vadd.f32 %v1401, %v1402
      %v1404 = vsel %vm1113, %v1067, 0.0
      %v1405 = vadd.f32 %v1403, %v1404
      %v1406 = vsel %vm1113, %v1070, 0.0
      %v1407 = vadd.f32 %v1405, %v1406
      %v1408 = vsel %vm1113, %v1075, 0.0
      %v1409 = vadd.f32 %v1407, %v1408
      %v1410 = vsel %vm1113, %v1078, 0.0
      %v1411 = vadd.f32 %v1409, %v1410
      %v1412 = vsel %vm1113, %v1083, 0.0
      %v1413 = vadd.f32 %v1411, %v1412
      %v1414 = vsel %vm1113, %v1086, 0.0
      %v1415 = vadd.f32 %v1413, %v1414
      %v1416 = vsel %vm1113, %v1091, 0.0
      %v1417 = vadd.f32 %v1415, %v1416
      %v1418 = vsel %vm1113, %v1094, 0.0
      %v1419 = vadd.f32 %v1417, %v1418
      %v1420 = vsel %vm1113, %v1099, 0.0
      %v1421 = vadd.f32 %v1419, %v1420
      %v1422 = vsel %vm1113, %v1102, 0.0
      %v1423 = vadd.f32 %v1421, %v1422
      %v1424 = vsel %vm1113, %v1107, 0.0
      %v1425 = vadd.f32 %v1423, %v1424
      %v1426 = vsel %vm1113, %v1110, 0.0
      %v1427 = vadd.f32 %v1425, %v1426
      %v1428 = vrot.slane %v1427, 4
      %v1429 = vadd.f32 %v1427, %v1428
      %v1430 = vrot.slane %v1429, 2
      %v1431 = vadd.f32 %v1429, %v1430
      %v1432 = vrot.slane %v1431, 1
      %v1433 = vadd.f32 %v1431, %v1432
      %v1434 = vadd.f32 %v1364, %v1433
      %1435 = vst.msk [vmem:[%s10] sm:$0x1] %vm1258, %v1434
      %v1436 = vld [vmem:[%s11] sm:$0x1]
      %v1437 = vmul.f32 %v987, %v987
      %v1438 = vmul.f32 %v990, %v990
      %v1439 = vmul.f32 %v995, %v995
      %v1440 = vmul.f32 %v998, %v998
      %v1441 = vmul.f32 %v1003, %v1003
      %v1442 = vmul.f32 %v1006, %v1006
      %v1443 = vmul.f32 %v1011, %v1011
      %v1444 = vmul.f32 %v1014, %v1014
      %v1445 = vmul.f32 %v1019, %v1019
      %v1446 = vmul.f32 %v1022, %v1022
      %v1447 = vmul.f32 %v1027, %v1027
      %v1448 = vmul.f32 %v1030, %v1030
      %v1449 = vmul.f32 %v1035, %v1035
      %v1450 = vmul.f32 %v1038, %v1038
      %v1451 = vmul.f32 %v1043, %v1043
      %v1452 = vmul.f32 %v1046, %v1046
      %v1453 = vmul.f32 %v1051, %v1051
      %v1454 = vmul.f32 %v1054, %v1054
      %v1455 = vmul.f32 %v1059, %v1059
      %v1456 = vmul.f32 %v1062, %v1062
      %v1457 = vmul.f32 %v1067, %v1067
      %v1458 = vmul.f32 %v1070, %v1070
      %v1459 = vmul.f32 %v1075, %v1075
      %v1460 = vmul.f32 %v1078, %v1078
      %v1461 = vmul.f32 %v1083, %v1083
      %v1462 = vmul.f32 %v1086, %v1086
      %v1463 = vmul.f32 %v1091, %v1091
      %v1464 = vmul.f32 %v1094, %v1094
      %v1465 = vmul.f32 %v1099, %v1099
      %v1466 = vmul.f32 %v1102, %v1102
      %v1467 = vmul.f32 %v1107, %v1107
      %v1468 = vmul.f32 %v1110, %v1110
      %v1469 = vsel %vm1113, %v1437, 0.0
      %v1470 = vsel %vm1113, %v1438, 0.0
      %v1471 = vadd.f32 %v1469, %v1470
      %v1472 = vsel %vm1113, %v1439, 0.0
      %v1473 = vadd.f32 %v1471, %v1472
      %v1474 = vsel %vm1113, %v1440, 0.0
      %v1475 = vadd.f32 %v1473, %v1474
      %v1476 = vsel %vm1113, %v1441, 0.0
      %v1477 = vadd.f32 %v1475, %v1476
      %v1478 = vsel %vm1113, %v1442, 0.0
      %v1479 = vadd.f32 %v1477, %v1478
      %v1480 = vsel %vm1113, %v1443, 0.0
      %v1481 = vadd.f32 %v1479, %v1480
      %v1482 = vsel %vm1113, %v1444, 0.0
      %v1483 = vadd.f32 %v1481, %v1482
      %v1484 = vsel %vm1113, %v1445, 0.0
      %v1485 = vadd.f32 %v1483, %v1484
      %v1486 = vsel %vm1113, %v1446, 0.0
      %v1487 = vadd.f32 %v1485, %v1486
      %v1488 = vsel %vm1113, %v1447, 0.0
      %v1489 = vadd.f32 %v1487, %v1488
      %v1490 = vsel %vm1113, %v1448, 0.0
      %v1491 = vadd.f32 %v1489, %v1490
      %v1492 = vsel %vm1113, %v1449, 0.0
      %v1493 = vadd.f32 %v1491, %v1492
      %v1494 = vsel %vm1113, %v1450, 0.0
      %v1495 = vadd.f32 %v1493, %v1494
      %v1496 = vsel %vm1113, %v1451, 0.0
      %v1497 = vadd.f32 %v1495, %v1496
      %v1498 = vsel %vm1113, %v1452, 0.0
      %v1499 = vadd.f32 %v1497, %v1498
      %v1500 = vsel %vm1113, %v1453, 0.0
      %v1501 = vadd.f32 %v1499, %v1500
      %v1502 = vsel %vm1113, %v1454, 0.0
      %v1503 = vadd.f32 %v1501, %v1502
      %v1504 = vsel %vm1113, %v1455, 0.0
      %v1505 = vadd.f32 %v1503, %v1504
      %v1506 = vsel %vm1113, %v1456, 0.0
      %v1507 = vadd.f32 %v1505, %v1506
      %v1508 = vsel %vm1113, %v1457, 0.0
      %v1509 = vadd.f32 %v1507, %v1508
      %v1510 = vsel %vm1113, %v1458, 0.0
      %v1511 = vadd.f32 %v1509, %v1510
      %v1512 = vsel %vm1113, %v1459, 0.0
      %v1513 = vadd.f32 %v1511, %v1512
      %v1514 = vsel %vm1113, %v1460, 0.0
      %v1515 = vadd.f32 %v1513, %v1514
      %v1516 = vsel %vm1113, %v1461, 0.0
      %v1517 = vadd.f32 %v1515, %v1516
      %v1518 = vsel %vm1113, %v1462, 0.0
      %v1519 = vadd.f32 %v1517, %v1518
      %v1520 = vsel %vm1113, %v1463, 0.0
      %v1521 = vadd.f32 %v1519, %v1520
      %v1522 = vsel %vm1113, %v1464, 0.0
      %v1523 = vadd.f32 %v1521, %v1522
      %v1524 = vsel %vm1113, %v1465, 0.0
      %v1525 = vadd.f32 %v1523, %v1524
      %v1526 = vsel %vm1113, %v1466, 0.0
      %v1527 = vadd.f32 %v1525, %v1526
      %v1528 = vsel %vm1113, %v1467, 0.0
      %v1529 = vadd.f32 %v1527, %v1528
      %v1530 = vsel %vm1113, %v1468, 0.0
      %v1531 = vadd.f32 %v1529, %v1530
      %v1532 = vrot.slane %v1531, 4
      %v1533 = vadd.f32 %v1531, %v1532
      %v1534 = vrot.slane %v1533, 2
      %v1535 = vadd.f32 %v1533, %v1534
      %v1536 = vrot.slane %v1535, 1
      %v1537 = vadd.f32 %v1535, %v1536
      %v1538 = vadd.f32 %v1436, %v1537
      %1539 = vst.msk [vmem:[%s11] sm:$0x1] %vm1258, %v1538
      %s1540 = smul.u32 32, %s23
      %p1541 = scmp.lt.s32.totalorder %s1540, 63
      %s1542 = scalar_select %p1541, %s1540, 63
      %s1543 = smul.addr %s1542, 8
      %s1544 = scalar_lea.vmem %s6, %s1543
      %s1545 = smul.u32 32, %s23
      %p1546 = scmp.lt.s32.totalorder %s1545, 63
      %s1547 = scalar_select %p1546, %s1545, 63
      %s1548 = smul.addr %s1547, 8
      %s1549 = scalar_lea.vmem %s7, %s1548
      // Predicated region
      $region49: #{_lambda_.6} parent=43 // pred_check
        %p1550 = pneg %p177
      $region50: #{_lambda_.6} parent=43 // pred_check_branch
        %1552 = sbr.rel (%p1550) target = $region52
      $region51: #{_lambda_.6} parent=43 // pred_region
        %s1553 = smul.u32 32, %s23
      $region52: #{_lambda_.6} parent=43 // pred_fallthru
        _
      // Predicated region
      $region53: #{_lambda_.6} parent=43 // pred_check
        %p1554 = pneg %p203
      $region54: #{_lambda_.6} parent=43 // pred_check_branch
        %1556 = sbr.rel (%p1554) target = $region56
      $region55: #{_lambda_.6} parent=43 // pred_region
        %s1557 = smul.u32 32, %s23
      $region56: #{_lambda_.6} parent=43 // pred_fallthru
        _
      // Predicated region
      $region57: #{_lambda_.6} parent=43 // pred_check
        %p1558 = pneg %p224
      $region58: #{_lambda_.6} parent=43 // pred_check_branch
        %1560 = sbr.rel (%p1558) target = $region60
      $region59: #{_lambda_.6} parent=43 // pred_region
        _
      $region60: #{_lambda_.6} parent=43 // pred_fallthru
        _
      // Predicated region
      $region61: #{_lambda_.6} parent=43 // pred_check
        %p1561 = pneg %p245
      $region62: #{_lambda_.6} parent=43 // pred_check_branch
        %1563 = sbr.rel (%p1561) target = $region64
      $region63: #{_lambda_.6} parent=43 // pred_region
        _
      $region64: #{_lambda_.6} parent=43 // pred_fallthru
        _
      // Predicated region
      $region65: #{_lambda_.6} parent=43 // pred_check
        %p1564 = pneg %p266
      $region66: #{_lambda_.6} parent=43 // pred_check_branch
        %1566 = sbr.rel (%p1564) target = $region68
      $region67: #{_lambda_.6} parent=43 // pred_region
        _
      $region68: #{_lambda_.6} parent=43 // pred_fallthru
        _
      // Predicated region
      $region69: #{_lambda_.6} parent=43 // pred_check
        %p1567 = pneg %p287
      $region70: #{_lambda_.6} parent=43 // pred_check_branch
        %1569 = sbr.rel (%p1567) target = $region72
      $region71: #{_lambda_.6} parent=43 // pred_region
        _
      $region72: #{_lambda_.6} parent=43 // pred_fallthru
        _
      // Predicated region
      $region73: #{_lambda_.6} parent=43 // pred_check
        %p1570 = pneg %p224
      $region74: #{_lambda_.6} parent=43 // pred_check_branch
        %1572 = sbr.rel (%p1570) target = $region76
      $region75: #{_lambda_.6} parent=43 // pred_region
        _
      $region76: #{_lambda_.6} parent=43 // pred_fallthru
        _
      // Predicated region
      $region77: #{_lambda_.6} parent=43 // pred_check
        %p1573 = pneg %p245
      $region78: #{_lambda_.6} parent=43 // pred_check_branch
        %1575 = sbr.rel (%p1573) target = $region80
      $region79: #{_lambda_.6} parent=43 // pred_region
        _
      $region80: #{_lambda_.6} parent=43 // pred_fallthru
        _
      // Predicated region
      $region81: #{_lambda_.6} parent=43 // pred_check
        %p1576 = pneg %p266
      $region82: #{_lambda_.6} parent=43 // pred_check_branch
        %1578 = sbr.rel (%p1576) target = $region84
      $region83: #{_lambda_.6} parent=43 // pred_region
        _
      $region84: #{_lambda_.6} parent=43 // pred_fallthru
        _
      // Predicated region
      $region85: #{_lambda_.6} parent=43 // pred_check
        %p1579 = pneg %p287
      $region86: #{_lambda_.6} parent=43 // pred_check_branch
        %1581 = sbr.rel (%p1579) target = $region88
      $region87: #{_lambda_.6} parent=43 // pred_region
        _
      $region88: #{_lambda_.6} parent=43 // pred_fallthru
        _
    $region44: #{_lambda_.6} parent=5 // pred_fallthru
      _
    %p1582 = scmp.le.s32.totalorder 2, %s18
    // Predicated region
    $region89: #{_lambda_.6} parent=5 // pred_check
      %p1583 = pneg %p1582
    $region90: #{_lambda_.6} parent=5 // pred_check_branch
      %1585 = sbr.rel (%p1583) target = $region92
    $region91: #{_lambda_.6} parent=5 // pred_region
      %s1586 = ssub.s32 %s18, 2
      // Predicated region
      $region93: #{_lambda_.6} parent=91 // pred_check
        %p1587 = pneg %p183
      $region94: #{_lambda_.6} parent=91 // pred_check_branch
        %1589 = sbr.rel (%p1587) target = $region96
      $region95: #{_lambda_.6} parent=91 // pred_region
        %s1590 = smul.u32 32, %s24
        %p1591 = scmp.lt.s32.totalorder %s1590, 63
        %s1592 = scalar_select %p1591, %s1590, 63
        %s1593 = smul.addr %s1592, 8
        %s1594 = scalar_lea.vmem %s6, %s1593
      $region96: #{_lambda_.6} parent=91 // pred_fallthru
        _
      // Predicated region
      $region97: #{_lambda_.6} parent=91 // pred_check
        %p1595 = pneg %p209
      $region98: #{_lambda_.6} parent=91 // pred_check_branch
        %1597 = sbr.rel (%p1595) target = $region100
      $region99: #{_lambda_.6} parent=91 // pred_region
        %s1598 = smul.u32 32, %s24
        %p1599 = scmp.lt.s32.totalorder %s1598, 63
        %s1600 = scalar_select %p1599, %s1598, 63
        %s1601 = smul.addr %s1600, 8
        %s1602 = scalar_lea.vmem %s7, %s1601
      $region100: #{_lambda_.6} parent=91 // pred_fallthru
        _
    $region92: #{_lambda_.6} parent=5 // pred_fallthru
      _
  $region6: #{_lambda_.6} parent=0 // loop_footer
    %s22 = sadd.s32 1, %s18
  $region7: #{_lambda_.6} parent=0 // loop_footer_branch
    %17 = sbr.rel target = $region3
  $region8: #{_lambda_.6} parent=0 // loop_exit
    _

// kernel: _lambda_.7
$region0: #{_lambda_.7}
  #allocation0 [shape = 'u32[]', space=smem, size = 0x4, offset = 0x4, fixed_abs, tag = 'smem constant byte address 0x4 - core index']
  #allocation1 [shape = 'u32[144,128]{1,0:T(1,128)}', space=vmem, size = 0x12000, scoped, tag = 'internal scratch']
  %s0 = inlined_call_operand.vmem [shape: f32[512,16], index: 0, kind: input, shape index: {}]
  %s1 = inlined_call_operand.vmem [shape: f32[512,16], index: 1, kind: input, shape index: {}]
  %s2 = inlined_call_operand.vmem [shape: f32[1,16], index: 2, kind: input, shape index: {}]
  %s3 = inlined_call_operand.vmem [shape: f32[1,16], index: 3, kind: input, shape index: {}]
  %s4 = inlined_call_operand.vmem [shape: f32[1,16], index: 4, kind: input, shape index: {}]
  %s5 = inlined_call_operand.vmem [shape: f32[1,16], index: 5, kind: input, shape index: {}]
  %s6 = inlined_call_operand.vmem [shape: f32[512,16], index: 6, kind: output, shape index: {}]
  %s7 = sld [smem:[#allocation0]]
  $region57: #{_lambda_.7} parent=0
    _
  %s9 = ssub.s32 1, %s7
  %s10 = scalar_select 0, %s9, %s7
  loop: start=0, step=1, limit=4
  $region2: #{_lambda_.7} parent=0 // loop_pre_header
    _
  $region3: #{_lambda_.7} parent=0 // loop_header
    %s12 = sphi 0, %s16
    %p13 = scmp.ge.s32.totalorder %s12, 4
    %s22 = sphi 0, %s24
    %s25 = sphi 0, %s22
    %s26 = sphi 0, %s25
    %s42 = sphi 0, %s26
    %s48 = sphi 0, %s50
    %s51 = sphi 0, %s48
    %s52 = sphi 0, %s51
    %s68 = sphi 0, %s52
    %s72 = sphi 0, %s72
    %s74 = sphi 0, %s72
    %s75 = sphi 0, %s74
    %s89 = sphi 0, %s75
    %s93 = sphi 0, %s93
    %s95 = sphi 0, %s93
    %s96 = sphi 0, %s95
    %s110 = sphi 0, %s96
    %s114 = sphi 0, %s114
    %s116 = sphi 0, %s114
    %s117 = sphi 0, %s116
    %s131 = sphi 0, %s117
    %s135 = sphi 0, %s135
    %s137 = sphi 0, %s135
    %s138 = sphi 0, %s137
    %s152 = sphi 0, %s138
    %s158 = sphi 0, %s160
    %s161 = sphi 0, %s158
    %s162 = sphi 0, %s161
    %s178 = sphi 0, %s162
  $region4: #{_lambda_.7} parent=0 // loop_header_branch
    %15 = sbr.rel (%p13) target = $region8
  $region5: #{_lambda_.7} parent=0 // loop_body
    %s17 = ssub.s32 %s12, 1
    %s18 = ssub.s32 %s12, 2
    %s19 = sadd.s32 %s12, 1
    %s20 = ssub.s32 %s12, %s19
    %p21 = scmp.eq.s32.totalorder %s20, 0
    %s23 = sadd.s32 %s22, 1
    %s24 = scalar_select %p21, %s22, %s23
    %p27 = pneg %p21
    %p28 = scmp.eq.s32.totalorder %s12, 1
    %p29 = por %p27, %p28
    %p30 = scmp.ne.s32.totalorder %s22, %s25
    %p31 = scmp.eq.s32.totalorder %s12, 0
    %p32 = por %p30, %p31
    %p33 = scmp.ne.s32.totalorder %s22, %s25
    %p34 = scmp.eq.s32.totalorder %s17, 1
    %p35 = por %p33, %p34
    %p36 = scmp.ne.s32.totalorder %s25, %s26
    %p37 = scmp.eq.s32.totalorder %s17, 0
    %p38 = por %p36, %p37
    %p39 = scmp.ne.s32.totalorder %s25, %s26
    %p40 = scmp.eq.s32.totalorder %s18, 1
    %p41 = por %p39, %p40
    %p43 = scmp.ne.s32.totalorder %s26, %s42
    %p44 = scmp.eq.s32.totalorder %s18, 0
    %p45 = por %p43, %p44
    %s46 = ssub.s32 %s12, %s19
    %p47 = scmp.eq.s32.totalorder %s46, 0
    %s49 = sadd.s32 %s48, 1
    %s50 = scalar_select %p47, %s48, %s49
    %p53 = pneg %p47
    %p54 = scmp.eq.s32.totalorder %s12, 1
    %p55 = por %p53, %p54
    %p56 = scmp.ne.s32.totalorder %s48, %s51
    %p57 = scmp.eq.s32.totalorder %s12, 0
    %p58 = por %p56, %p57
    %p59 = scmp.ne.s32.totalorder %s48, %s51
    %p60 = scmp.eq.s32.totalorder %s17, 1
    %p61 = por %p59, %p60
    %p62 = scmp.ne.s32.totalorder %s51, %s52
    %p63 = scmp.eq.s32.totalorder %s17, 0
    %p64 = por %p62, %p63
    %p65 = scmp.ne.s32.totalorder %s51, %s52
    %p66 = scmp.eq.s32.totalorder %s18, 1
    %p67 = por %p65, %p66
    %p69 = scmp.ne.s32.totalorder %s52, %s68
    %p70 = scmp.eq.s32.totalorder %s18, 0
    %p71 = por %p69, %p70
    %s73 = sadd.s32 %s72, 1
    %p76 = scmp.eq.s32.totalorder %s12, 1
    %p77 = scmp.ne.s32.totalorder %s72, %s74
    %p78 = scmp.eq.s32.totalorder %s12, 0
    %p79 = por %p77, %p78
    %p80 = scmp.ne.s32.totalorder %s72, %s74
    %p81 = scmp.eq.s32.totalorder %s17, 1
    %p82 = por %p80, %p81
    %p83 = scmp.ne.s32.totalorder %s74, %s75
    %p84 = scmp.eq.s32.totalorder %s17, 0
    %p85 = por %p83, %p84
    %p86 = scmp.ne.s32.totalorder %s74, %s75
    %p87 = scmp.eq.s32.totalorder %s18, 1
    %p88 = por %p86, %p87
    %p90 = scmp.ne.s32.totalorder %s75, %s89
    %p91 = scmp.eq.s32.totalorder %s18, 0
    %p92 = por %p90, %p91
    %s94 = sadd.s32 %s93, 1
    %p97 = scmp.eq.s32.totalorder %s12, 1
    %p98 = scmp.ne.s32.totalorder %s93, %s95
    %p99 = scmp.eq.s32.totalorder %s12, 0
    %p100 = por %p98, %p99
    %p101 = scmp.ne.s32.totalorder %s93, %s95
    %p102 = scmp.eq.s32.totalorder %s17, 1
    %p103 = por %p101, %p102
    %p104 = scmp.ne.s32.totalorder %s95, %s96
    %p105 = scmp.eq.s32.totalorder %s17, 0
    %p106 = por %p104, %p105
    %p107 = scmp.ne.s32.totalorder %s95, %s96
    %p108 = scmp.eq.s32.totalorder %s18, 1
    %p109 = por %p107, %p108
    %p111 = scmp.ne.s32.totalorder %s96, %s110
    %p112 = scmp.eq.s32.totalorder %s18, 0
    %p113 = por %p111, %p112
    %s115 = sadd.s32 %s114, 1
    %p118 = scmp.eq.s32.totalorder %s12, 1
    %p119 = scmp.ne.s32.totalorder %s114, %s116
    %p120 = scmp.eq.s32.totalorder %s12, 0
    %p121 = por %p119, %p120
    %p122 = scmp.ne.s32.totalorder %s114, %s116
    %p123 = scmp.eq.s32.totalorder %s17, 1
    %p124 = por %p122, %p123
    %p125 = scmp.ne.s32.totalorder %s116, %s117
    %p126 = scmp.eq.s32.totalorder %s17, 0
    %p127 = por %p125, %p126
    %p128 = scmp.ne.s32.totalorder %s116, %s117
    %p129 = scmp.eq.s32.totalorder %s18, 1
    %p130 = por %p128, %p129
    %p132 = scmp.ne.s32.totalorder %s117, %s131
    %p133 = scmp.eq.s32.totalorder %s18, 0
    %p134 = por %p132, %p133
    %s136 = sadd.s32 %s135, 1
    %p139 = scmp.eq.s32.totalorder %s12, 1
    %p140 = scmp.ne.s32.totalorder %s135, %s137
    %p141 = scmp.eq.s32.totalorder %s12, 0
    %p142 = por %p140, %p141
    %p143 = scmp.ne.s32.totalorder %s135, %s137
    %p144 = scmp.eq.s32.totalorder %s17, 1
    %p145 = por %p143, %p144
    %p146 = scmp.ne.s32.totalorder %s137, %s138
    %p147 = scmp.eq.s32.totalorder %s17, 0
    %p148 = por %p146, %p147
    %p149 = scmp.ne.s32.totalorder %s137, %s138
    %p150 = scmp.eq.s32.totalorder %s18, 1
    %p151 = por %p149, %p150
    %p153 = scmp.ne.s32.totalorder %s138, %s152
    %p154 = scmp.eq.s32.totalorder %s18, 0
    %p155 = por %p153, %p154
    %s156 = ssub.s32 %s12, %s19
    %p157 = scmp.eq.s32.totalorder %s156, 0
    %s159 = sadd.s32 %s158, 1
    %s160 = scalar_select %p157, %s158, %s159
    %p163 = pneg %p157
    %p164 = scmp.eq.s32.totalorder %s12, 1
    %p165 = por %p163, %p164
    %p166 = scmp.ne.s32.totalorder %s158, %s161
    %p167 = scmp.eq.s32.totalorder %s12, 0
    %p168 = por %p166, %p167
    %p169 = scmp.ne.s32.totalorder %s158, %s161
    %p170 = scmp.eq.s32.totalorder %s17, 1
    %p171 = por %p169, %p170
    %p172 = scmp.ne.s32.totalorder %s161, %s162
    %p173 = scmp.eq.s32.totalorder %s17, 0
    %p174 = por %p172, %p173
    %p175 = scmp.ne.s32.totalorder %s161, %s162
    %p176 = scmp.eq.s32.totalorder %s18, 1
    %p177 = por %p175, %p176
    %p179 = scmp.ne.s32.totalorder %s162, %s178
    %p180 = scmp.eq.s32.totalorder %s18, 0
    %p181 = por %p179, %p180
    %p182 = scmp.le.s32.totalorder 1, %s12
    %p183 = scmp.lt.s32.totalorder %s12, 3
    %p184 = pnand %p182, %p183
    %p185 = pneg %p184
    // Predicated region
    $region9: #{_lambda_.7} parent=5 // pred_check
      _
    $region10: #{_lambda_.7} parent=5 // pred_check_branch
      %187 = sbr.rel (%p184) target = $region12
    $region11: #{_lambda_.7} parent=5 // pred_region
      %s188 = ssub.s32 %s12, 1
      // Predicated region
      $region13: #{_lambda_.7} parent=11 // pred_check
        %p189 = pneg %p85
      $region14: #{_lambda_.7} parent=11 // pred_check_branch
        %191 = sbr.rel (%p189) target = $region16
      $region15: #{_lambda_.7} parent=11 // pred_region
        _
      $region16: #{_lambda_.7} parent=11 // pred_fallthru
        _
      // Predicated region
      $region17: #{_lambda_.7} parent=11 // pred_check
        %p192 = pneg %p106
      $region18: #{_lambda_.7} parent=11 // pred_check_branch
        %194 = sbr.rel (%p192) target = $region20
      $region19: #{_lambda_.7} parent=11 // pred_region
        _
      $region20: #{_lambda_.7} parent=11 // pred_fallthru
        _
      // Predicated region
      $region21: #{_lambda_.7} parent=11 // pred_check
        %p195 = pneg %p127
      $region22: #{_lambda_.7} parent=11 // pred_check_branch
        %197 = sbr.rel (%p195) target = $region24
      $region23: #{_lambda_.7} parent=11 // pred_region
        _
      $region24: #{_lambda_.7} parent=11 // pred_fallthru
        _
      // Predicated region
      $region25: #{_lambda_.7} parent=11 // pred_check
        %p198 = pneg %p148
      $region26: #{_lambda_.7} parent=11 // pred_check_branch
        %200 = sbr.rel (%p198) target = $region28
      $region27: #{_lambda_.7} parent=11 // pred_region
        _
      $region28: #{_lambda_.7} parent=11 // pred_fallthru
        _
    $region12: #{_lambda_.7} parent=5 // pred_fallthru
      _
    %p201 = scmp.lt.s32.totalorder %s12, 2
    // Predicated region
    $region29: #{_lambda_.7} parent=5 // pred_check
      %p202 = pneg %p201
    $region30: #{_lambda_.7} parent=5 // pred_check_branch
      %204 = sbr.rel (%p202) target = $region32
    $region31: #{_lambda_.7} parent=5 // pred_region
      // Predicated region
      $region33: #{_lambda_.7} parent=31 // pred_check
        %p205 = pneg %p32
      $region34: #{_lambda_.7} parent=31 // pred_check_branch
        %207 = sbr.rel (%p205) target = $region36
      $region35: #{_lambda_.7} parent=31 // pred_region
        %s208 = smul.u32 32, %s12
        %p209 = scmp.lt.s32.totalorder %s208, 63
        %s210 = scalar_select %p209, %s208, 63
        %s211 = smul.addr %s210, 8
        %s212 = scalar_lea.vmem %s0, %s211
        %s213 = smul.u32 32, %s12
      $region36: #{_lambda_.7} parent=31 // pred_fallthru
        _
      // Predicated region
      $region37: #{_lambda_.7} parent=31 // pred_check
        %p214 = pneg %p58
      $region38: #{_lambda_.7} parent=31 // pred_check_branch
        %216 = sbr.rel (%p214) target = $region40
      $region39: #{_lambda_.7} parent=31 // pred_region
        %s217 = smul.u32 32, %s12
        %p218 = scmp.lt.s32.totalorder %s217, 63
        %s219 = scalar_select %p218, %s217, 63
        %s220 = smul.addr %s219, 8
        %s221 = scalar_lea.vmem %s1, %s220
        %s222 = smul.u32 32, %s12
      $region40: #{_lambda_.7} parent=31 // pred_fallthru
        _
    $region32: #{_lambda_.7} parent=5 // pred_fallthru
      _
    %p223 = scmp.le.s32.totalorder 1, %s12
    %p224 = scmp.lt.s32.totalorder %s12, 3
    %p225 = pnand %p223, %p224
    %p226 = pneg %p225
    // Predicated region
    $region41: #{_lambda_.7} parent=5 // pred_check
      _
    $region42: #{_lambda_.7} parent=5 // pred_check_branch
      %228 = sbr.rel (%p225) target = $region44
    $region43: #{_lambda_.7} parent=5 // pred_region
      %s229 = ssub.s32 %s12, 1
      %s230 = smul.u32 32, %s17
      %p231 = scmp.lt.s32.totalorder %s230, 63
      %s232 = scalar_select %p231, %s230, 63
      %s233 = smul.addr %s232, 8
      %s234 = scalar_lea.vmem %s0, %s233
      %p235 = pneg %p38
      %p236 = pneg %p35
      %s237 = smul.u32 32, %s17
      %p238 = scmp.lt.s32.totalorder %s237, 63
      %s239 = scalar_select %p238, %s237, 63
      %s240 = smul.addr %s239, 8
      %s241 = scalar_lea.vmem %s1, %s240
      %p242 = pneg %p64
      %p243 = pneg %p61
      %p244 = pneg %p85
      %p245 = pneg %p82
      %p246 = pneg %p106
      %p247 = pneg %p103
      %p248 = pneg %p127
      %p249 = pneg %p124
      %p250 = pneg %p148
      %p251 = pneg %p145
      %p252 = pneg %p174
      %p253 = pneg %p171
      %s254 = smul.u32 32, %s17
      %p255 = scmp.lt.s32.totalorder %s254, 63
      %s256 = scalar_select %p255, %s254, 63
      %s257 = smul.addr %s256, 8
      %s258 = scalar_lea.vmem %s6, %s257
      %s259 = smul.u32 32, %s17
      %p260 = scmp.lt.s32.totalorder %s259, 63
      %s261 = scalar_select %p260, %s259, 63
      %s262 = smul.addr %s261, 8
      %s263 = scalar_lea.vmem %s0, %s262
      %s264 = smul.u32 32, %s17
      %s265 = smul.u32 32, %s17
      %p266 = scmp.lt.s32.totalorder %s265, 63
      %s267 = scalar_select %p266, %s265, 63
      %s268 = smul.addr %s267, 8
      %s269 = scalar_lea.vmem %s1, %s268
      %s270 = smul.u32 32, %s17
      %s271 = smul.u32 32, %s17
      %p272 = scmp.lt.s32.totalorder %s271, 63
      %s273 = scalar_select %p272, %s271, 63
      %s274 = smul.addr %s273, 8
      %s275 = scalar_lea.vmem %s6, %s274
      %s276 = smul.u32 32, %s17
      %v277 = vld [vmem:[%s263] sm:$0xff]
      %v278 = vld [vmem:[%s263 + $0x8] sm:$0xff]
      %v279 = vld [vmem:[%s263 + $0x10] sm:$0xff]
      %v280 = vld [vmem:[%s263 + $0x18] sm:$0xff]
      %v281 = vld [vmem:[%s263 + $0x20] sm:$0xff]
      %v282 = vld [vmem:[%s263 + $0x28] sm:$0xff]
      %v283 = vld [vmem:[%s263 + $0x30] sm:$0xff]
      %v284 = vld [vmem:[%s263 + $0x38] sm:$0xff]
      %v285 = vld [vmem:[%s263 + $0x40] sm:$0xff]
      %v286 = vld [vmem:[%s263 + $0x48] sm:$0xff]
      %v287 = vld [vmem:[%s263 + $0x50] sm:$0xff]
      %v288 = vld [vmem:[%s263 + $0x58] sm:$0xff]
      %v289 = vld [vmem:[%s263 + $0x60] sm:$0xff]
      %v290 = vld [vmem:[%s263 + $0x68] sm:$0xff]
      %v291 = vld [vmem:[%s263 + $0x70] sm:$0xff]
      %v292 = vld [vmem:[%s263 + $0x78] sm:$0xff]
      %v293 = vld [vmem:[%s263 + $0x80] sm:$0xff]
      %v294 = vld [vmem:[%s263 + $0x88] sm:$0xff]
      %v295 = vld [vmem:[%s263 + $0x90] sm:$0xff]
      %v296 = vld [vmem:[%s263 + $0x98] sm:$0xff]
      %v297 = vld [vmem:[%s263 + $0xa0] sm:$0xff]
      %v298 = vld [vmem:[%s263 + $0xa8] sm:$0xff]
      %v299 = vld [vmem:[%s263 + $0xb0] sm:$0xff]
      %v300 = vld [vmem:[%s263 + $0xb8] sm:$0xff]
      %v301 = vld [vmem:[%s263 + $0xc0] sm:$0xff]
      %v302 = vld [vmem:[%s263 + $0xc8] sm:$0xff]
      %v303 = vld [vmem:[%s263 + $0xd0] sm:$0xff]
      %v304 = vld [vmem:[%s263 + $0xd8] sm:$0xff]
      %v305 = vld [vmem:[%s263 + $0xe0] sm:$0xff]
      %v306 = vld [vmem:[%s263 + $0xe8] sm:$0xff]
      %v307 = vld [vmem:[%s263 + $0xf0] sm:$0xff]
      %v308 = vld [vmem:[%s263 + $0xf8] sm:$0xff]
      %v309 = vld [vmem:[%s2] sm:$0x1]
      %v311 = vlaneseq
      %v312 = vshrl.u32 %v311, 7
      %v313 = vsub.s32 0, %v312
      %v314 = vrot.slane %v309, %v313
      %v316 = vmul.f32 %v277, %v314
      %v317 = vmul.f32 %v278, %v314
      %v318 = vmul.f32 %v279, %v314
      %v319 = vmul.f32 %v280, %v314
      %v320 = vmul.f32 %v281, %v314
      %v321 = vmul.f32 %v282, %v314
      %v322 = vmul.f32 %v283, %v314
      %v323 = vmul.f32 %v284, %v314
      %v324 = vmul.f32 %v285, %v314
      %v325 = vmul.f32 %v286, %v314
      %v326 = vmul.f32 %v287, %v314
      %v327 = vmul.f32 %v288, %v314
      %v328 = vmul.f32 %v289, %v314
      %v329 = vmul.f32 %v290, %v314
      %v330 = vmul.f32 %v291, %v314
      %v331 = vmul.f32 %v292, %v314
      %v332 = vmul.f32 %v293, %v314
      %v333 = vmul.f32 %v294, %v314
      %v334 = vmul.f32 %v295, %v314
      %v335 = vmul.f32 %v296, %v314
      %v336 = vmul.f32 %v297, %v314
      %v337 = vmul.f32 %v298, %v314
      %v338 = vmul.f32 %v299, %v314
      %v339 = vmul.f32 %v300, %v314
      %v340 = vmul.f32 %v301, %v314
      %v341 = vmul.f32 %v302, %v314
      %v342 = vmul.f32 %v303, %v314
      %v343 = vmul.f32 %v304, %v314
      %v344 = vmul.f32 %v305, %v314
      %v345 = vmul.f32 %v306, %v314
      %v346 = vmul.f32 %v307, %v314
      %v347 = vmul.f32 %v308, %v314
      %v348 = vld [vmem:[%s3] sm:$0x1]
      %v350 = vlaneseq
      %v351 = vshrl.u32 %v350, 7
      %v352 = vsub.s32 0, %v351
      %v353 = vrot.slane %v348, %v352
      %v355 = vadd.f32 %v316, %v353
      %v356 = vadd.f32 %v317, %v353
      %v357 = vadd.f32 %v318, %v353
      %v358 = vadd.f32 %v319, %v353
      %v359 = vadd.f32 %v320, %v353
      %v360 = vadd.f32 %v321, %v353
      %v361 = vadd.f32 %v322, %v353
      %v362 = vadd.f32 %v323, %v353
      %v363 = vadd.f32 %v324, %v353
      %v364 = vadd.f32 %v325, %v353
      %v365 = vadd.f32 %v326, %v353
      %v366 = vadd.f32 %v327, %v353
      %v367 = vadd.f32 %v328, %v353
      %v368 = vadd.f32 %v329, %v353
      %v369 = vadd.f32 %v330, %v353
      %v370 = vadd.f32 %v331, %v353
      %v371 = vadd.f32 %v332, %v353
      %v372 = vadd.f32 %v333, %v353
      %v373 = vadd.f32 %v334, %v353
      %v374 = vadd.f32 %v335, %v353
      %v375 = vadd.f32 %v336, %v353
      %v376 = vadd.f32 %v337, %v353
      %v377 = vadd.f32 %v338, %v353
      %v378 = vadd.f32 %v339, %v353
      %v379 = vadd.f32 %v340, %v353
      %v380 = vadd.f32 %v341, %v353
      %v381 = vadd.f32 %v342, %v353
      %v382 = vadd.f32 %v343, %v353
      %v383 = vadd.f32 %v344, %v353
      %v384 = vadd.f32 %v345, %v353
      %v385 = vadd.f32 %v346, %v353
      %v386 = vadd.f32 %v347, %v353
      %v387 = vld [vmem:[%s269] sm:$0xff]
      %v388 = vld [vmem:[%s269 + $0x8] sm:$0xff]
      %v389 = vld [vmem:[%s269 + $0x10] sm:$0xff]
      %v390 = vld [vmem:[%s269 + $0x18] sm:$0xff]
      %v391 = vld [vmem:[%s269 + $0x20] sm:$0xff]
      %v392 = vld [vmem:[%s269 + $0x28] sm:$0xff]
      %v393 = vld [vmem:[%s269 + $0x30] sm:$0xff]
      %v394 = vld [vmem:[%s269 + $0x38] sm:$0xff]
      %v395 = vld [vmem:[%s269 + $0x40] sm:$0xff]
      %v396 = vld [vmem:[%s269 + $0x48] sm:$0xff]
      %v397 = vld [vmem:[%s269 + $0x50] sm:$0xff]
      %v398 = vld [vmem:[%s269 + $0x58] sm:$0xff]
      %v399 = vld [vmem:[%s269 + $0x60] sm:$0xff]
      %v400 = vld [vmem:[%s269 + $0x68] sm:$0xff]
      %v401 = vld [vmem:[%s269 + $0x70] sm:$0xff]
      %v402 = vld [vmem:[%s269 + $0x78] sm:$0xff]
      %v403 = vld [vmem:[%s269 + $0x80] sm:$0xff]
      %v404 = vld [vmem:[%s269 + $0x88] sm:$0xff]
      %v405 = vld [vmem:[%s269 + $0x90] sm:$0xff]
      %v406 = vld [vmem:[%s269 + $0x98] sm:$0xff]
      %v407 = vld [vmem:[%s269 + $0xa0] sm:$0xff]
      %v408 = vld [vmem:[%s269 + $0xa8] sm:$0xff]
      %v409 = vld [vmem:[%s269 + $0xb0] sm:$0xff]
      %v410 = vld [vmem:[%s269 + $0xb8] sm:$0xff]
      %v411 = vld [vmem:[%s269 + $0xc0] sm:$0xff]
      %v412 = vld [vmem:[%s269 + $0xc8] sm:$0xff]
      %v413 = vld [vmem:[%s269 + $0xd0] sm:$0xff]
      %v414 = vld [vmem:[%s269 + $0xd8] sm:$0xff]
      %v415 = vld [vmem:[%s269 + $0xe0] sm:$0xff]
      %v416 = vld [vmem:[%s269 + $0xe8] sm:$0xff]
      %v417 = vld [vmem:[%s269 + $0xf0] sm:$0xff]
      %v418 = vld [vmem:[%s269 + $0xf8] sm:$0xff]
      %v419 = vld [vmem:[%s4] sm:$0x1]
      %v421 = vlaneseq
      %v422 = vshrl.u32 %v421, 7
      %v423 = vsub.s32 0, %v422
      %v424 = vrot.slane %v419, %v423
      %v426 = vmul.f32 %v387, %v424
      %v427 = vmul.f32 %v388, %v424
      %v428 = vmul.f32 %v389, %v424
      %v429 = vmul.f32 %v390, %v424
      %v430 = vmul.f32 %v391, %v424
      %v431 = vmul.f32 %v392, %v424
      %v432 = vmul.f32 %v393, %v424
      %v433 = vmul.f32 %v394, %v424
      %v434 = vmul.f32 %v395, %v424
      %v435 = vmul.f32 %v396, %v424
      %v436 = vmul.f32 %v397, %v424
      %v437 = vmul.f32 %v398, %v424
      %v438 = vmul.f32 %v399, %v424
      %v439 = vmul.f32 %v400, %v424
      %v440 = vmul.f32 %v401, %v424
      %v441 = vmul.f32 %v402, %v424
      %v442 = vmul.f32 %v403, %v424
      %v443 = vmul.f32 %v404, %v424
      %v444 = vmul.f32 %v405, %v424
      %v445 = vmul.f32 %v406, %v424
      %v446 = vmul.f32 %v407, %v424
      %v447 = vmul.f32 %v408, %v424
      %v448 = vmul.f32 %v409, %v424
      %v449 = vmul.f32 %v410, %v424
      %v450 = vmul.f32 %v411, %v424
      %v451 = vmul.f32 %v412, %v424
      %v452 = vmul.f32 %v413, %v424
      %v453 = vmul.f32 %v414, %v424
      %v454 = vmul.f32 %v415, %v424
      %v455 = vmul.f32 %v416, %v424
      %v456 = vmul.f32 %v417, %v424
      %v457 = vmul.f32 %v418, %v424
      %v458 = vadd.f32 %v355, %v426
      %v459 = vadd.f32 %v356, %v427
      %v460 = vadd.f32 %v357, %v428
      %v461 = vadd.f32 %v358, %v429
      %v462 = vadd.f32 %v359, %v430
      %v463 = vadd.f32 %v360, %v431
      %v464 = vadd.f32 %v361, %v432
      %v465 = vadd.f32 %v362, %v433
      %v466 = vadd.f32 %v363, %v434
      %v467 = vadd.f32 %v364, %v435
      %v468 = vadd.f32 %v365, %v436
      %v469 = vadd.f32 %v366, %v437
      %v470 = vadd.f32 %v367, %v438
      %v471 = vadd.f32 %v368, %v439
      %v472 = vadd.f32 %v369, %v440
      %v473 = vadd.f32 %v370, %v441
      %v474 = vadd.f32 %v371, %v442
      %v475 = vadd.f32 %v372, %v443
      %v476 = vadd.f32 %v373, %v444
      %v477 = vadd.f32 %v374, %v445
      %v478 = vadd.f32 %v375, %v446
      %v479 = vadd.f32 %v376, %v447
      %v480 = vadd.f32 %v377, %v448
      %v481 = vadd.f32 %v378, %v449
      %v482 = vadd.f32 %v379, %v450
      %v483 = vadd.f32 %v380, %v451
      %v484 = vadd.f32 %v381, %v452
      %v485 = vadd.f32 %v382, %v453
      %v486 = vadd.f32 %v383, %v454
      %v487 = vadd.f32 %v384, %v455
      %v488 = vadd.f32 %v385, %v456
      %v489 = vadd.f32 %v386, %v457
      %v490 = vld [vmem:[%s5] sm:$0x1]
      %v492 = vlaneseq
      %v493 = vshrl.u32 %v492, 7
      %v494 = vsub.s32 0, %v493
      %v495 = vrot.slane %v490, %v494
      %v497 = vadd.f32 %v458, %v495
      %v498 = vadd.f32 %v459, %v495
      %v499 = vadd.f32 %v460, %v495
      %v500 = vadd.f32 %v461, %v495
      %v501 = vadd.f32 %v462, %v495
      %v502 = vadd.f32 %v463, %v495
      %v503 = vadd.f32 %v464, %v495
      %v504 = vadd.f32 %v465, %v495
      %v505 = vadd.f32 %v466, %v495
      %v506 = vadd.f32 %v467, %v495
      %v507 = vadd.f32 %v468, %v495
      %v508 = vadd.f32 %v469, %v495
      %v509 = vadd.f32 %v470, %v495
      %v510 = vadd.f32 %v471, %v495
      %v511 = vadd.f32 %v472, %v495
      %v512 = vadd.f32 %v473, %v495
      %v513 = vadd.f32 %v474, %v495
      %v514 = vadd.f32 %v475, %v495
      %v515 = vadd.f32 %v476, %v495
      %v516 = vadd.f32 %v477, %v495
      %v517 = vadd.f32 %v478, %v495
      %v518 = vadd.f32 %v479, %v495
      %v519 = vadd.f32 %v480, %v495
      %v520 = vadd.f32 %v481, %v495
      %v521 = vadd.f32 %v482, %v495
      %v522 = vadd.f32 %v483, %v495
      %v523 = vadd.f32 %v484, %v495
      %v524 = vadd.f32 %v485, %v495
      %v525 = vadd.f32 %v486, %v495
      %v526 = vadd.f32 %v487, %v495
      %v527 = vadd.f32 %v488, %v495
      %v528 = vadd.f32 %v489, %v495
      %v529 = vmax.f32 %v497, 0.0
      %v530 = vmax.f32 %v498, 0.0
      %v531 = vmax.f32 %v499, 0.0
      %v532 = vmax.f32 %v500, 0.0
      %v533 = vmax.f32 %v501, 0.0
      %v534 = vmax.f32 %v502, 0.0
      %v535 = vmax.f32 %v503, 0.0
      %v536 = vmax.f32 %v504, 0.0
      %v537 = vmax.f32 %v505, 0.0
      %v538 = vmax.f32 %v506, 0.0
      %v539 = vmax.f32 %v507, 0.0
      %v540 = vmax.f32 %v508, 0.0
      %v541 = vmax.f32 %v509, 0.0
      %v542 = vmax.f32 %v510, 0.0
      %v543 = vmax.f32 %v511, 0.0
      %v544 = vmax.f32 %v512, 0.0
      %v545 = vmax.f32 %v513, 0.0
      %v546 = vmax.f32 %v514, 0.0
      %v547 = vmax.f32 %v515, 0.0
      %v548 = vmax.f32 %v516, 0.0
      %v549 = vmax.f32 %v517, 0.0
      %v550 = vmax.f32 %v518, 0.0
      %v551 = vmax.f32 %v519, 0.0
      %v552 = vmax.f32 %v520, 0.0
      %v553 = vmax.f32 %v521, 0.0
      %v554 = vmax.f32 %v522, 0.0
      %v555 = vmax.f32 %v523, 0.0
      %v556 = vmax.f32 %v524, 0.0
      %v557 = vmax.f32 %v525, 0.0
      %v558 = vmax.f32 %v526, 0.0
      %v559 = vmax.f32 %v527, 0.0
      %v560 = vmax.f32 %v528, 0.0
      %vm561 = vcmask 130048
      %562 = vst.msk [vmem:[%s275] sm:$0xff] %vm561, %v529
      %563 = vst.msk [vmem:[%s275 + $0x8] sm:$0xff] %vm561, %v530
      %564 = vst.msk [vmem:[%s275 + $0x10] sm:$0xff] %vm561, %v531
      %565 = vst.msk [vmem:[%s275 + $0x18] sm:$0xff] %vm561, %v532
      %566 = vst.msk [vmem:[%s275 + $0x20] sm:$0xff] %vm561, %v533
      %567 = vst.msk [vmem:[%s275 + $0x28] sm:$0xff] %vm561, %v534
      %568 = vst.msk [vmem:[%s275 + $0x30] sm:$0xff] %vm561, %v535
      %569 = vst.msk [vmem:[%s275 + $0x38] sm:$0xff] %vm561, %v536
      %570 = vst.msk [vmem:[%s275 + $0x40] sm:$0xff] %vm561, %v537
      %571 = vst.msk [vmem:[%s275 + $0x48] sm:$0xff] %vm561, %v538
      %572 = vst.msk [vmem:[%s275 + $0x50] sm:$0xff] %vm561, %v539
      %573 = vst.msk [vmem:[%s275 + $0x58] sm:$0xff] %vm561, %v540
      %574 = vst.msk [vmem:[%s275 + $0x60] sm:$0xff] %vm561, %v541
      %575 = vst.msk [vmem:[%s275 + $0x68] sm:$0xff] %vm561, %v542
      %576 = vst.msk [vmem:[%s275 + $0x70] sm:$0xff] %vm561, %v543
      %577 = vst.msk [vmem:[%s275 + $0x78] sm:$0xff] %vm561, %v544
      %578 = vst.msk [vmem:[%s275 + $0x80] sm:$0xff] %vm561, %v545
      %579 = vst.msk [vmem:[%s275 + $0x88] sm:$0xff] %vm561, %v546
      %580 = vst.msk [vmem:[%s275 + $0x90] sm:$0xff] %vm561, %v547
      %581 = vst.msk [vmem:[%s275 + $0x98] sm:$0xff] %vm561, %v548
      %582 = vst.msk [vmem:[%s275 + $0xa0] sm:$0xff] %vm561, %v549
      %583 = vst.msk [vmem:[%s275 + $0xa8] sm:$0xff] %vm561, %v550
      %584 = vst.msk [vmem:[%s275 + $0xb0] sm:$0xff] %vm561, %v551
      %585 = vst.msk [vmem:[%s275 + $0xb8] sm:$0xff] %vm561, %v552
      %586 = vst.msk [vmem:[%s275 + $0xc0] sm:$0xff] %vm561, %v553
      %587 = vst.msk [vmem:[%s275 + $0xc8] sm:$0xff] %vm561, %v554
      %588 = vst.msk [vmem:[%s275 + $0xd0] sm:$0xff] %vm561, %v555
      %589 = vst.msk [vmem:[%s275 + $0xd8] sm:$0xff] %vm561, %v556
      %590 = vst.msk [vmem:[%s275 + $0xe0] sm:$0xff] %vm561, %v557
      %591 = vst.msk [vmem:[%s275 + $0xe8] sm:$0xff] %vm561, %v558
      %592 = vst.msk [vmem:[%s275 + $0xf0] sm:$0xff] %vm561, %v559
      %593 = vst.msk [vmem:[%s275 + $0xf8] sm:$0xff] %vm561, %v560
      %s594 = smul.u32 32, %s17
      %p595 = scmp.lt.s32.totalorder %s594, 63
      %s596 = scalar_select %p595, %s594, 63
      %s597 = smul.addr %s596, 8
      %s598 = scalar_lea.vmem %s6, %s597
      // Predicated region
      $region45: #{_lambda_.7} parent=43 // pred_check
        %p599 = pneg %p171
      $region46: #{_lambda_.7} parent=43 // pred_check_branch
        %601 = sbr.rel (%p599) target = $region48
      $region47: #{_lambda_.7} parent=43 // pred_region
        %s602 = smul.u32 32, %s17
      $region48: #{_lambda_.7} parent=43 // pred_fallthru
        _
    $region44: #{_lambda_.7} parent=5 // pred_fallthru
      _
    %p603 = scmp.le.s32.totalorder 2, %s12
    // Predicated region
    $region49: #{_lambda_.7} parent=5 // pred_check
      %p604 = pneg %p603
    $region50: #{_lambda_.7} parent=5 // pred_check_branch
      %606 = sbr.rel (%p604) target = $region52
    $region51: #{_lambda_.7} parent=5 // pred_region
      %s607 = ssub.s32 %s12, 2
      // Predicated region
      $region53: #{_lambda_.7} parent=51 // pred_check
        %p608 = pneg %p177
      $region54: #{_lambda_.7} parent=51 // pred_check_branch
        %610 = sbr.rel (%p608) target = $region56
      $region55: #{_lambda_.7} parent=51 // pred_region
        %s611 = smul.u32 32, %s18
        %p612 = scmp.lt.s32.totalorder %s611, 63
        %s613 = scalar_select %p612, %s611, 63
        %s614 = smul.addr %s613, 8
        %s615 = scalar_lea.vmem %s6, %s614
      $region56: #{_lambda_.7} parent=51 // pred_fallthru
        _
    $region52: #{_lambda_.7} parent=5 // pred_fallthru
      _
  $region6: #{_lambda_.7} parent=0 // loop_footer
    %s16 = sadd.s32 1, %s12
  $region7: #{_lambda_.7} parent=0 // loop_footer_branch
    %11 = sbr.rel target = $region3
  $region8: #{_lambda_.7} parent=0 // loop_exit
    _

// kernel: _lambda_.5
$region0: #{_lambda_.5}
  #allocation0 [shape = 'u32[]', space=smem, size = 0x4, offset = 0x4, fixed_abs, tag = 'smem constant byte address 0x4 - core index']
  #allocation1 [shape = 'u32[144,128]{1,0:T(1,128)}', space=vmem, size = 0x12000, scoped, tag = 'internal scratch']
  %s0 = inlined_call_operand.vmem [shape: f32[2,18,18,4], index: 0, kind: input, shape index: {}]
  %s1 = inlined_call_operand.vmem [shape: f32[18,18,1], index: 1, kind: input, shape index: {}]
  %s2 = inlined_call_operand.vmem [shape: f32[1,4], index: 2, kind: input, shape index: {}]
  %s3 = inlined_call_operand.vmem [shape: f32[1,4], index: 3, kind: input, shape index: {}]
  %s4 = inlined_call_operand.vmem [shape: bf16[9,4,4], index: 4, kind: input, shape index: {}]
  %s5 = inlined_call_operand.vmem [shape: f32[2,256,4], index: 5, kind: output, shape index: {0}]
  %s6 = inlined_call_operand.vmem [shape: f32[1,4], index: 6, kind: output, shape index: {1}]
  %s7 = inlined_call_operand.vmem [shape: f32[1,4], index: 7, kind: output, shape index: {2}]
  %8 = xla_tuple %s5, %s6, %s7
  %s9 = sld [smem:[#allocation0]]
  $region73: #{_lambda_.5} parent=0
    _
  %s11 = ssub.s32 1, %s9
  %s12 = scalar_select 0, %s11, %s9
  loop: start=0, step=1, limit=4
  $region2: #{_lambda_.5} parent=0 // loop_pre_header
    _
  $region3: #{_lambda_.5} parent=0 // loop_header
    %s14 = sphi 0, %s18
    %p15 = scmp.ge.s32.totalorder %s14, 4
    %s24 = sphi 0, %s26
    %s27 = sphi 0, %s24
    %s28 = sphi 0, %s27
    %s44 = sphi 0, %s28
    %s48 = sphi 0, %s48
    %s50 = sphi 0, %s48
    %s51 = sphi 0, %s50
    %s65 = sphi 0, %s51
    %s69 = sphi 0, %s69
    %s71 = sphi 0, %s69
    %s72 = sphi 0, %s71
    %s86 = sphi 0, %s72
    %s90 = sphi 0, %s90
    %s92 = sphi 0, %s90
    %s93 = sphi 0, %s92
    %s107 = sphi 0, %s93
    %s111 = sphi 0, %s111
    %s113 = sphi 0, %s111
    %s114 = sphi 0, %s113
    %s128 = sphi 0, %s114
    %s134 = sphi 0, %s136
    %s137 = sphi 0, %s134
    %s138 = sphi 0, %s137
    %s154 = sphi 0, %s138
    %s158 = sphi 0, %s158
    %s160 = sphi 0, %s158
    %s161 = sphi 0, %s160
    %s175 = sphi 0, %s161
    %s179 = sphi 0, %s179
    %s181 = sphi 0, %s179
    %s182 = sphi 0, %s181
    %s196 = sphi 0, %s182
  $region4: #{_lambda_.5} parent=0 // loop_header_branch
    %17 = sbr.rel (%p15) target = $region8
  $region5: #{_lambda_.5} parent=0 // loop_body
    %s19 = ssub.s32 %s14, 1
    %s20 = ssub.s32 %s14, 2
    %s21 = sadd.s32 %s14, 1
    %s22 = ssub.s32 %s14, %s21
    %p23 = scmp.eq.s32.totalorder %s22, 0
    %s25 = sadd.s32 %s24, 1
    %s26 = scalar_select %p23, %s24, %s25
    %p29 = pneg %p23
    %p30 = scmp.eq.s32.totalorder %s14, 1
    %p31 = por %p29, %p30
    %p32 = scmp.ne.s32.totalorder %s24, %s27
    %p33 = scmp.eq.s32.totalorder %s14, 0
    %p34 = por %p32, %p33
    %p35 = scmp.ne.s32.totalorder %s24, %s27
    %p36 = scmp.eq.s32.totalorder %s19, 1
    %p37 = por %p35, %p36
    %p38 = scmp.ne.s32.totalorder %s27, %s28
    %p39 = scmp.eq.s32.totalorder %s19, 0
    %p40 = por %p38, %p39
    %p41 = scmp.ne.s32.totalorder %s27, %s28
    %p42 = scmp.eq.s32.totalorder %s20, 1
    %p43 = por %p41, %p42
    %p45 = scmp.ne.s32.totalorder %s28, %s44
    %p46 = scmp.eq.s32.totalorder %s20, 0
    %p47 = por %p45, %p46
    %s49 = sadd.s32 %s48, 1
    %p52 = scmp.eq.s32.totalorder %s14, 1
    %p53 = scmp.ne.s32.totalorder %s48, %s50
    %p54 = scmp.eq.s32.totalorder %s14, 0
    %p55 = por %p53, %p54
    %p56 = scmp.ne.s32.totalorder %s48, %s50
    %p57 = scmp.eq.s32.totalorder %s19, 1
    %p58 = por %p56, %p57
    %p59 = scmp.ne.s32.totalorder %s50, %s51
    %p60 = scmp.eq.s32.totalorder %s19, 0
    %p61 = por %p59, %p60
    %p62 = scmp.ne.s32.totalorder %s50, %s51
    %p63 = scmp.eq.s32.totalorder %s20, 1
    %p64 = por %p62, %p63
    %p66 = scmp.ne.s32.totalorder %s51, %s65
    %p67 = scmp.eq.s32.totalorder %s20, 0
    %p68 = por %p66, %p67
    %s70 = sadd.s32 %s69, 1
    %p73 = scmp.eq.s32.totalorder %s14, 1
    %p74 = scmp.ne.s32.totalorder %s69, %s71
    %p75 = scmp.eq.s32.totalorder %s14, 0
    %p76 = por %p74, %p75
    %p77 = scmp.ne.s32.totalorder %s69, %s71
    %p78 = scmp.eq.s32.totalorder %s19, 1
    %p79 = por %p77, %p78
    %p80 = scmp.ne.s32.totalorder %s71, %s72
    %p81 = scmp.eq.s32.totalorder %s19, 0
    %p82 = por %p80, %p81
    %p83 = scmp.ne.s32.totalorder %s71, %s72
    %p84 = scmp.eq.s32.totalorder %s20, 1
    %p85 = por %p83, %p84
    %p87 = scmp.ne.s32.totalorder %s72, %s86
    %p88 = scmp.eq.s32.totalorder %s20, 0
    %p89 = por %p87, %p88
    %s91 = sadd.s32 %s90, 1
    %p94 = scmp.eq.s32.totalorder %s14, 1
    %p95 = scmp.ne.s32.totalorder %s90, %s92
    %p96 = scmp.eq.s32.totalorder %s14, 0
    %p97 = por %p95, %p96
    %p98 = scmp.ne.s32.totalorder %s90, %s92
    %p99 = scmp.eq.s32.totalorder %s19, 1
    %p100 = por %p98, %p99
    %p101 = scmp.ne.s32.totalorder %s92, %s93
    %p102 = scmp.eq.s32.totalorder %s19, 0
    %p103 = por %p101, %p102
    %p104 = scmp.ne.s32.totalorder %s92, %s93
    %p105 = scmp.eq.s32.totalorder %s20, 1
    %p106 = por %p104, %p105
    %p108 = scmp.ne.s32.totalorder %s93, %s107
    %p109 = scmp.eq.s32.totalorder %s20, 0
    %p110 = por %p108, %p109
    %s112 = sadd.s32 %s111, 1
    %p115 = scmp.eq.s32.totalorder %s14, 1
    %p116 = scmp.ne.s32.totalorder %s111, %s113
    %p117 = scmp.eq.s32.totalorder %s14, 0
    %p118 = por %p116, %p117
    %p119 = scmp.ne.s32.totalorder %s111, %s113
    %p120 = scmp.eq.s32.totalorder %s19, 1
    %p121 = por %p119, %p120
    %p122 = scmp.ne.s32.totalorder %s113, %s114
    %p123 = scmp.eq.s32.totalorder %s19, 0
    %p124 = por %p122, %p123
    %p125 = scmp.ne.s32.totalorder %s113, %s114
    %p126 = scmp.eq.s32.totalorder %s20, 1
    %p127 = por %p125, %p126
    %p129 = scmp.ne.s32.totalorder %s114, %s128
    %p130 = scmp.eq.s32.totalorder %s20, 0
    %p131 = por %p129, %p130
    %s132 = ssub.s32 %s14, %s21
    %p133 = scmp.eq.s32.totalorder %s132, 0
    %s135 = sadd.s32 %s134, 1
    %s136 = scalar_select %p133, %s134, %s135
    %p139 = pneg %p133
    %p140 = scmp.eq.s32.totalorder %s14, 1
    %p141 = por %p139, %p140
    %p142 = scmp.ne.s32.totalorder %s134, %s137
    %p143 = scmp.eq.s32.totalorder %s14, 0
    %p144 = por %p142, %p143
    %p145 = scmp.ne.s32.totalorder %s134, %s137
    %p146 = scmp.eq.s32.totalorder %s19, 1
    %p147 = por %p145, %p146
    %p148 = scmp.ne.s32.totalorder %s137, %s138
    %p149 = scmp.eq.s32.totalorder %s19, 0
    %p150 = por %p148, %p149
    %p151 = scmp.ne.s32.totalorder %s137, %s138
    %p152 = scmp.eq.s32.totalorder %s20, 1
    %p153 = por %p151, %p152
    %p155 = scmp.ne.s32.totalorder %s138, %s154
    %p156 = scmp.eq.s32.totalorder %s20, 0
    %p157 = por %p155, %p156
    %s159 = sadd.s32 %s158, 1
    %p162 = scmp.eq.s32.totalorder %s14, 1
    %p163 = scmp.ne.s32.totalorder %s158, %s160
    %p164 = scmp.eq.s32.totalorder %s14, 0
    %p165 = por %p163, %p164
    %p166 = scmp.ne.s32.totalorder %s158, %s160
    %p167 = scmp.eq.s32.totalorder %s19, 1
    %p168 = por %p166, %p167
    %p169 = scmp.ne.s32.totalorder %s160, %s161
    %p170 = scmp.eq.s32.totalorder %s19, 0
    %p171 = por %p169, %p170
    %p172 = scmp.ne.s32.totalorder %s160, %s161
    %p173 = scmp.eq.s32.totalorder %s20, 1
    %p174 = por %p172, %p173
    %p176 = scmp.ne.s32.totalorder %s161, %s175
    %p177 = scmp.eq.s32.totalorder %s20, 0
    %p178 = por %p176, %p177
    %s180 = sadd.s32 %s179, 1
    %p183 = scmp.eq.s32.totalorder %s14, 1
    %p184 = scmp.ne.s32.totalorder %s179, %s181
    %p185 = scmp.eq.s32.totalorder %s14, 0
    %p186 = por %p184, %p185
    %p187 = scmp.ne.s32.totalorder %s179, %s181
    %p188 = scmp.eq.s32.totalorder %s19, 1
    %p189 = por %p187, %p188
    %p190 = scmp.ne.s32.totalorder %s181, %s182
    %p191 = scmp.eq.s32.totalorder %s19, 0
    %p192 = por %p190, %p191
    %p193 = scmp.ne.s32.totalorder %s181, %s182
    %p194 = scmp.eq.s32.totalorder %s20, 1
    %p195 = por %p193, %p194
    %p197 = scmp.ne.s32.totalorder %s182, %s196
    %p198 = scmp.eq.s32.totalorder %s20, 0
    %p199 = por %p197, %p198
    %p200 = scmp.le.s32.totalorder 1, %s14
    %p201 = scmp.lt.s32.totalorder %s14, 3
    %p202 = pnand %p200, %p201
    %p203 = pneg %p202
    // Predicated region
    $region9: #{_lambda_.5} parent=5 // pred_check
      _
    $region10: #{_lambda_.5} parent=5 // pred_check_branch
      %205 = sbr.rel (%p202) target = $region12
    $region11: #{_lambda_.5} parent=5 // pred_region
      %s206 = ssub.s32 %s14, 1
      // Predicated region
      $region13: #{_lambda_.5} parent=11 // pred_check
        %p207 = pneg %p61
      $region14: #{_lambda_.5} parent=11 // pred_check_branch
        %209 = sbr.rel (%p207) target = $region16
      $region15: #{_lambda_.5} parent=11 // pred_region
        _
      $region16: #{_lambda_.5} parent=11 // pred_fallthru
        _
      // Predicated region
      $region17: #{_lambda_.5} parent=11 // pred_check
        %p210 = pneg %p82
      $region18: #{_lambda_.5} parent=11 // pred_check_branch
        %212 = sbr.rel (%p210) target = $region20
      $region19: #{_lambda_.5} parent=11 // pred_region
        _
      $region20: #{_lambda_.5} parent=11 // pred_fallthru
        _
      // Predicated region
      $region21: #{_lambda_.5} parent=11 // pred_check
        %p213 = pneg %p103
      $region22: #{_lambda_.5} parent=11 // pred_check_branch
        %215 = sbr.rel (%p213) target = $region24
      $region23: #{_lambda_.5} parent=11 // pred_region
        _
      $region24: #{_lambda_.5} parent=11 // pred_fallthru
        _
      // Predicated region
      $region25: #{_lambda_.5} parent=11 // pred_check
        %p216 = pneg %p124
      $region26: #{_lambda_.5} parent=11 // pred_check_branch
        %218 = sbr.rel (%p216) target = $region28
      $region27: #{_lambda_.5} parent=11 // pred_region
        _
      $region28: #{_lambda_.5} parent=11 // pred_fallthru
        _
    $region12: #{_lambda_.5} parent=5 // pred_fallthru
      _
    %p219 = scmp.lt.s32.totalorder %s14, 2
    // Predicated region
    $region29: #{_lambda_.5} parent=5 // pred_check
      %p220 = pneg %p219
    $region30: #{_lambda_.5} parent=5 // pred_check_branch
      %222 = sbr.rel (%p220) target = $region32
    $region31: #{_lambda_.5} parent=5 // pred_region
      // Predicated region
      $region33: #{_lambda_.5} parent=31 // pred_check
        %p223 = pneg %p34
      $region34: #{_lambda_.5} parent=31 // pred_check_branch
        %225 = sbr.rel (%p223) target = $region36
      $region35: #{_lambda_.5} parent=31 // pred_region
        %p226 = scmp.lt.s32.totalorder %s14, 1
        %s227 = scalar_select %p226, %s14, 1
        %s228 = smul.addr %s227, 54
        %s229 = smul.addr %s228, 8
        %s230 = scalar_lea.vmem %s0, %s229
      $region36: #{_lambda_.5} parent=31 // pred_fallthru
        _
    $region32: #{_lambda_.5} parent=5 // pred_fallthru
      _
    %p231 = scmp.le.s32.totalorder 1, %s14
    %p232 = scmp.lt.s32.totalorder %s14, 3
    %p233 = pnand %p231, %p232
    %p234 = pneg %p233
    // Predicated region
    $region37: #{_lambda_.5} parent=5 // pred_check
      _
    $region38: #{_lambda_.5} parent=5 // pred_check_branch
      %236 = sbr.rel (%p233) target = $region40
    $region39: #{_lambda_.5} parent=5 // pred_region
      %s237 = ssub.s32 %s14, 1
      %p238 = scmp.lt.s32.totalorder %s19, 1
      %s239 = scalar_select %p238, %s19, 1
      %s240 = smul.addr %s239, 54
      %s241 = smul.addr %s240, 8
      %s242 = scalar_lea.vmem %s0, %s241
      %p243 = pneg %p40
      %p244 = pneg %p37
      %p245 = pneg %p61
      %p246 = pneg %p58
      %p247 = pneg %p82
      %p248 = pneg %p79
      %p249 = pneg %p103
      %p250 = pneg %p100
      %p251 = pneg %p124
      %p252 = pneg %p121
      %p253 = pneg %p150
      %p254 = pneg %p147
      %p255 = scmp.lt.s32.totalorder %s19, 1
      %s256 = scalar_select %p255, %s19, 1
      %s257 = smul.addr %s256, 32
      %s258 = smul.addr %s257, 8
      %s259 = scalar_lea.vmem %s5, %s258
      %p260 = pneg %p171
      %p261 = pneg %p168
      %p262 = pneg %p192
      %p263 = pneg %p189
      %p264 = scmp.lt.s32.totalorder %s19, 1
      %s265 = scalar_select %p264, %s19, 1
      %s266 = smul.addr %s265, 54
      %s267 = smul.addr %s266, 8
      %s268 = scalar_lea.vmem %s0, %s267
      %p269 = scmp.lt.s32.totalorder %s19, 1
      %s270 = scalar_select %p269, %s19, 1
      %s271 = smul.addr %s270, 32
      %s272 = smul.addr %s271, 8
      %s273 = scalar_lea.vmem %s5, %s272
      %v275 = vld [vmem:[%s268] sm:$0xff]
      %v276 = vld [vmem:[%s268 + $0x8] sm:$0xff]
      %v277 = vld [vmem:[%s268 + $0x10] sm:$0x3]
      %v278 = vld [vmem:[%s268 + $0x18] sm:$0xff]
      %v279 = vld [vmem:[%s268 + $0x20] sm:$0xff]
      %v280 = vld [vmem:[%s268 + $0x28] sm:$0x3]
      %v281 = vld [vmem:[%s268 + $0x30] sm:$0xff]
      %v282 = vld [vmem:[%s268 + $0x38] sm:$0xff]
      %v283 = vld [vmem:[%s268 + $0x40] sm:$0x3]
      %v284 = vld [vmem:[%s268 + $0x48] sm:$0xff]
      %v285 = vld [vmem:[%s268 + $0x50] sm:$0xff]
      %v286 = vld [vmem:[%s268 + $0x58] sm:$0x3]
      %v287 = vld [vmem:[%s268 + $0x60] sm:$0xff]
      %v288 = vld [vmem:[%s268 + $0x68] sm:$0xff]
      %v289 = vld [vmem:[%s268 + $0x70] sm:$0x3]
      %v290 = vld [vmem:[%s268 + $0x78] sm:$0xff]
      %v291 = vld [vmem:[%s268 + $0x80] sm:$0xff]
      %v292 = vld [vmem:[%s268 + $0x88] sm:$0x3]
      %v293 = vld [vmem:[%s268 + $0x90] sm:$0xff]
      %v294 = vld [vmem:[%s268 + $0x98] sm:$0xff]
      %v295 = vld [vmem:[%s268 + $0xa0] sm:$0x3]
      %v296 = vld [vmem:[%s268 + $0xa8] sm:$0xff]
      %v297 = vld [vmem:[%s268 + $0xb0] sm:$0xff]
      %v298 = vld [vmem:[%s268 + $0xb8] sm:$0x3]
      %v299 = vld [vmem:[%s268 + $0xc0] sm:$0xff]
      %v300 = vld [vmem:[%s268 + $0xc8] sm:$0xff]
      %v301 = vld [vmem:[%s268 + $0xd0] sm:$0x3]
      %v302 = vld [vmem:[%s268 + $0xd8] sm:$0xff]
      %v303 = vld [vmem:[%s268 + $0xe0] sm:$0xff]
      %v304 = vld [vmem:[%s268 + $0xe8] sm:$0x3]
      %v305 = vld [vmem:[%s268 + $0xf0] sm:$0xff]
      %v306 = vld [vmem:[%s268 + $0xf8] sm:$0xff]
      %v307 = vld [vmem:[%s268 + $0x100] sm:$0x3]
      %v308 = vld [vmem:[%s268 + $0x108] sm:$0xff]
      %v309 = vld [vmem:[%s268 + $0x110] sm:$0xff]
      %v310 = vld [vmem:[%s268 + $0x118] sm:$0x3]
      %v311 = vld [vmem:[%s268 + $0x120] sm:$0xff]
      %v312 = vld [vmem:[%s268 + $0x128] sm:$0xff]
      %v313 = vld [vmem:[%s268 + $0x130] sm:$0x3]
      %v314 = vld [vmem:[%s268 + $0x138] sm:$0xff]
      %v315 = vld [vmem:[%s268 + $0x140] sm:$0xff]
      %v316 = vld [vmem:[%s268 + $0x148] sm:$0x3]
      %v317 = vld [vmem:[%s268 + $0x150] sm:$0xff]
      %v318 = vld [vmem:[%s268 + $0x158] sm:$0xff]
      %v319 = vld [vmem:[%s268 + $0x160] sm:$0x3]
      %v320 = vld [vmem:[%s268 + $0x168] sm:$0xff]
      %v321 = vld [vmem:[%s268 + $0x170] sm:$0xff]
      %v322 = vld [vmem:[%s268 + $0x178] sm:$0x3]
      %v323 = vld [vmem:[%s268 + $0x180] sm:$0xff]
      %v324 = vld [vmem:[%s268 + $0x188] sm:$0xff]
      %v325 = vld [vmem:[%s268 + $0x190] sm:$0x3]
      %v326 = vld [vmem:[%s268 + $0x198] sm:$0xff]
      %v327 = vld [vmem:[%s268 + $0x1a0] sm:$0xff]
      %v328 = vld [vmem:[%s268 + $0x1a8] sm:$0x3]
      %v329 = vld [vmem:[%s2] sm:$0x1]
      %v331 = vlaneseq
      %v332 = vshrl.u32 %v331, 7
      %v333 = vsub.s32 0, %v332
      %v334 = vrot.slane %v329, %v333
      %v336 = vmul.f32 %v275, %v334
      %v337 = vmul.f32 %v276, %v334
      %v338 = vmul.f32 %v277, %v334
      %v339 = vmul.f32 %v278, %v334
      %v340 = vmul.f32 %v279, %v334
      %v341 = vmul.f32 %v280, %v334
      %v342 = vmul.f32 %v281, %v334
      %v343 = vmul.f32 %v282, %v334
      %v344 = vmul.f32 %v283, %v334
      %v345 = vmul.f32 %v284, %v334
      %v346 = vmul.f32 %v285, %v334
      %v347 = vmul.f32 %v286, %v334
      %v348 = vmul.f32 %v287, %v334
      %v349 = vmul.f32 %v288, %v334
      %v350 = vmul.f32 %v289, %v334
      %v351 = vmul.f32 %v290, %v334
      %v352 = vmul.f32 %v291, %v334
      %v353 = vmul.f32 %v292, %v334
      %v354 = vmul.f32 %v293, %v334
      %v355 = vmul.f32 %v294, %v334
      %v356 = vmul.f32 %v295, %v334
      %v357 = vmul.f32 %v296, %v334
      %v358 = vmul.f32 %v297, %v334
      %v359 = vmul.f32 %v298, %v334
      %v360 = vmul.f32 %v299, %v334
      %v361 = vmul.f32 %v300, %v334
      %v362 = vmul.f32 %v301, %v334
      %v363 = vmul.f32 %v302, %v334
      %v364 = vmul.f32 %v303, %v334
      %v365 = vmul.f32 %v304, %v334
      %v366 = vmul.f32 %v305, %v334
      %v367 = vmul.f32 %v306, %v334
      %v368 = vmul.f32 %v307, %v334
      %v369 = vmul.f32 %v308, %v334
      %v370 = vmul.f32 %v309, %v334
      %v371 = vmul.f32 %v310, %v334
      %v372 = vmul.f32 %v311, %v334
      %v373 = vmul.f32 %v312, %v334
      %v374 = vmul.f32 %v313, %v334
      %v375 = vmul.f32 %v314, %v334
      %v376 = vmul.f32 %v315, %v334
      %v377 = vmul.f32 %v316, %v334
      %v378 = vmul.f32 %v317, %v334
      %v379 = vmul.f32 %v318, %v334
      %v380 = vmul.f32 %v319, %v334
      %v381 = vmul.f32 %v320, %v334
      %v382 = vmul.f32 %v321, %v334
      %v383 = vmul.f32 %v322, %v334
      %v384 = vmul.f32 %v323, %v334
      %v385 = vmul.f32 %v324, %v334
      %v386 = vmul.f32 %v325, %v334
      %v387 = vmul.f32 %v326, %v334
      %v388 = vmul.f32 %v327, %v334
      %v389 = vmul.f32 %v328, %v334
      %v390 = vld [vmem:[%s3] sm:$0x1]
      %v392 = vlaneseq
      %v393 = vshrl.u32 %v392, 7
      %v394 = vsub.s32 0, %v393
      %v395 = vrot.slane %v390, %v394
      %v397 = vadd.f32 %v336, %v395
      %v398 = vadd.f32 %v337, %v395
      %v399 = vadd.f32 %v338, %v395
      %v400 = vadd.f32 %v339, %v395
      %v401 = vadd.f32 %v340, %v395
      %v402 = vadd.f32 %v341, %v395
      %v403 = vadd.f32 %v342, %v395
      %v404 = vadd.f32 %v343, %v395
      %v405 = vadd.f32 %v344, %v395
      %v406 = vadd.f32 %v345, %v395
      %v407 = vadd.f32 %v346, %v395
      %v408 = vadd.f32 %v347, %v395
      %v409 = vadd.f32 %v348, %v395
      %v410 = vadd.f32 %v349, %v395
      %v411 = vadd.f32 %v350, %v395
      %v412 = vadd.f32 %v351, %v395
      %v413 = vadd.f32 %v352, %v395
      %v414 = vadd.f32 %v353, %v395
      %v415 = vadd.f32 %v354, %v395
      %v416 = vadd.f32 %v355, %v395
      %v417 = vadd.f32 %v356, %v395
      %v418 = vadd.f32 %v357, %v395
      %v419 = vadd.f32 %v358, %v395
      %v420 = vadd.f32 %v359, %v395
      %v421 = vadd.f32 %v360, %v395
      %v422 = vadd.f32 %v361, %v395
      %v423 = vadd.f32 %v362, %v395
      %v424 = vadd.f32 %v363, %v395
      %v425 = vadd.f32 %v364, %v395
      %v426 = vadd.f32 %v365, %v395
      %v427 = vadd.f32 %v366, %v395
      %v428 = vadd.f32 %v367, %v395
      %v429 = vadd.f32 %v368, %v395
      %v430 = vadd.f32 %v369, %v395
      %v431 = vadd.f32 %v370, %v395
      %v432 = vadd.f32 %v371, %v395
      %v433 = vadd.f32 %v372, %v395
      %v434 = vadd.f32 %v373, %v395
      %v435 = vadd.f32 %v374, %v395
      %v436 = vadd.f32 %v375, %v395
      %v437 = vadd.f32 %v376, %v395
      %v438 = vadd.f32 %v377, %v395
      %v439 = vadd.f32 %v378, %v395
      %v440 = vadd.f32 %v379, %v395
      %v441 = vadd.f32 %v380, %v395
      %v442 = vadd.f32 %v381, %v395
      %v443 = vadd.f32 %v382, %v395
      %v444 = vadd.f32 %v383, %v395
      %v445 = vadd.f32 %v384, %v395
      %v446 = vadd.f32 %v385, %v395
      %v447 = vadd.f32 %v386, %v395
      %v448 = vadd.f32 %v387, %v395
      %v449 = vadd.f32 %v388, %v395
      %v450 = vadd.f32 %v389, %v395
      %v451 = vmax.f32 %v397, 0.0
      %v452 = vmax.f32 %v398, 0.0
      %v453 = vmax.f32 %v399, 0.0
      %v454 = vmax.f32 %v400, 0.0
      %v455 = vmax.f32 %v401, 0.0
      %v456 = vmax.f32 %v402, 0.0
      %v457 = vmax.f32 %v403, 0.0
      %v458 = vmax.f32 %v404, 0.0
      %v459 = vmax.f32 %v405, 0.0
      %v460 = vmax.f32 %v406, 0.0
      %v461 = vmax.f32 %v407, 0.0
      %v462 = vmax.f32 %v408, 0.0
      %v463 = vmax.f32 %v409, 0.0
      %v464 = vmax.f32 %v410, 0.0
      %v465 = vmax.f32 %v411, 0.0
      %v466 = vmax.f32 %v412, 0.0
      %v467 = vmax.f32 %v413, 0.0
      %v468 = vmax.f32 %v414, 0.0
      %v469 = vmax.f32 %v415, 0.0
      %v470 = vmax.f32 %v416, 0.0
      %v471 = vmax.f32 %v417, 0.0
      %v472 = vmax.f32 %v418, 0.0
      %v473 = vmax.f32 %v419, 0.0
      %v474 = vmax.f32 %v420, 0.0
      %v475 = vmax.f32 %v421, 0.0
      %v476 = vmax.f32 %v422, 0.0
      %v477 = vmax.f32 %v423, 0.0
      %v478 = vmax.f32 %v424, 0.0
      %v479 = vmax.f32 %v425, 0.0
      %v480 = vmax.f32 %v426, 0.0
      %v481 = vmax.f32 %v427, 0.0
      %v482 = vmax.f32 %v428, 0.0
      %v483 = vmax.f32 %v429, 0.0
      %v484 = vmax.f32 %v430, 0.0
      %v485 = vmax.f32 %v431, 0.0
      %v486 = vmax.f32 %v432, 0.0
      %v487 = vmax.f32 %v433, 0.0
      %v488 = vmax.f32 %v434, 0.0
      %v489 = vmax.f32 %v435, 0.0
      %v490 = vmax.f32 %v436, 0.0
      %v491 = vmax.f32 %v437, 0.0
      %v492 = vmax.f32 %v438, 0.0
      %v493 = vmax.f32 %v439, 0.0
      %v494 = vmax.f32 %v440, 0.0
      %v495 = vmax.f32 %v441, 0.0
      %v496 = vmax.f32 %v442, 0.0
      %v497 = vmax.f32 %v443, 0.0
      %v498 = vmax.f32 %v444, 0.0
      %v499 = vmax.f32 %v445, 0.0
      %v500 = vmax.f32 %v446, 0.0
      %v501 = vmax.f32 %v447, 0.0
      %v502 = vmax.f32 %v448, 0.0
      %v503 = vmax.f32 %v449, 0.0
      %v504 = vmax.f32 %v450, 0.0
      %v505 = vld [vmem:[%s1] sm:$0xff]
      %v506 = vld [vmem:[%s1 + $0x8] sm:$0xff]
      %v507 = vld [vmem:[%s1 + $0x10] sm:$0x3]
      %v508 = vld [vmem:[%s1 + $0x18] sm:$0xff]
      %v509 = vld [vmem:[%s1 + $0x20] sm:$0xff]
      %v510 = vld [vmem:[%s1 + $0x28] sm:$0x3]
      %v511 = vld [vmem:[%s1 + $0x30] sm:$0xff]
      %v512 = vld [vmem:[%s1 + $0x38] sm:$0xff]
      %v513 = vld [vmem:[%s1 + $0x40] sm:$0x3]
      %v514 = vld [vmem:[%s1 + $0x48] sm:$0xff]
      %v515 = vld [vmem:[%s1 + $0x50] sm:$0xff]
      %v516 = vld [vmem:[%s1 + $0x58] sm:$0x3]
      %v517 = vld [vmem:[%s1 + $0x60] sm:$0xff]
      %v518 = vld [vmem:[%s1 + $0x68] sm:$0xff]
      %v519 = vld [vmem:[%s1 + $0x70] sm:$0x3]
      %v520 = vld [vmem:[%s1 + $0x78] sm:$0xff]
      %v521 = vld [vmem:[%s1 + $0x80] sm:$0xff]
      %v522 = vld [vmem:[%s1 + $0x88] sm:$0x3]
      %v523 = vld [vmem:[%s1 + $0x90] sm:$0xff]
      %v524 = vld [vmem:[%s1 + $0x98] sm:$0xff]
      %v525 = vld [vmem:[%s1 + $0xa0] sm:$0x3]
      %v526 = vld [vmem:[%s1 + $0xa8] sm:$0xff]
      %v527 = vld [vmem:[%s1 + $0xb0] sm:$0xff]
      %v528 = vld [vmem:[%s1 + $0xb8] sm:$0x3]
      %v529 = vld [vmem:[%s1 + $0xc0] sm:$0xff]
      %v530 = vld [vmem:[%s1 + $0xc8] sm:$0xff]
      %v531 = vld [vmem:[%s1 + $0xd0] sm:$0x3]
      %v532 = vld [vmem:[%s1 + $0xd8] sm:$0xff]
      %v533 = vld [vmem:[%s1 + $0xe0] sm:$0xff]
      %v534 = vld [vmem:[%s1 + $0xe8] sm:$0x3]
      %v535 = vld [vmem:[%s1 + $0xf0] sm:$0xff]
      %v536 = vld [vmem:[%s1 + $0xf8] sm:$0xff]
      %v537 = vld [vmem:[%s1 + $0x100] sm:$0x3]
      %v538 = vld [vmem:[%s1 + $0x108] sm:$0xff]
      %v539 = vld [vmem:[%s1 + $0x110] sm:$0xff]
      %v540 = vld [vmem:[%s1 + $0x118] sm:$0x3]
      %v541 = vld [vmem:[%s1 + $0x120] sm:$0xff]
      %v542 = vld [vmem:[%s1 + $0x128] sm:$0xff]
      %v543 = vld [vmem:[%s1 + $0x130] sm:$0x3]
      %v544 = vld [vmem:[%s1 + $0x138] sm:$0xff]
      %v545 = vld [vmem:[%s1 + $0x140] sm:$0xff]
      %v546 = vld [vmem:[%s1 + $0x148] sm:$0x3]
      %v547 = vld [vmem:[%s1 + $0x150] sm:$0xff]
      %v548 = vld [vmem:[%s1 + $0x158] sm:$0xff]
      %v549 = vld [vmem:[%s1 + $0x160] sm:$0x3]
      %v550 = vld [vmem:[%s1 + $0x168] sm:$0xff]
      %v551 = vld [vmem:[%s1 + $0x170] sm:$0xff]
      %v552 = vld [vmem:[%s1 + $0x178] sm:$0x3]
      %v553 = vld [vmem:[%s1 + $0x180] sm:$0xff]
      %v554 = vld [vmem:[%s1 + $0x188] sm:$0xff]
      %v555 = vld [vmem:[%s1 + $0x190] sm:$0x3]
      %v556 = vld [vmem:[%s1 + $0x198] sm:$0xff]
      %v557 = vld [vmem:[%s1 + $0x1a0] sm:$0xff]
      %v558 = vld [vmem:[%s1 + $0x1a8] sm:$0x3]
      %560 = vset.pattern.permute.xlu0 0
      %561 = vperm.xlu0 %560, %v505
      %v562 = vpop.permute.xlu0 %561
      %565 = vset.pattern.permute.xlu0 0
      %566 = vperm.xlu0 %565, %v506
      %v567 = vpop.permute.xlu0 %566
      %570 = vset.pattern.permute.xlu0 0
      %571 = vperm.xlu0 %570, %v507
      %v572 = vpop.permute.xlu0 %571
      %575 = vset.pattern.permute.xlu0 0
      %576 = vperm.xlu0 %575, %v508
      %v577 = vpop.permute.xlu0 %576
      %580 = vset.pattern.permute.xlu0 0
      %581 = vperm.xlu0 %580, %v509
      %v582 = vpop.permute.xlu0 %581
      %585 = vset.pattern.permute.xlu0 0
      %586 = vperm.xlu0 %585, %v510
      %v587 = vpop.permute.xlu0 %586
      %590 = vset.pattern.permute.xlu0 0
      %591 = vperm.xlu0 %590, %v511
      %v592 = vpop.permute.xlu0 %591
      %595 = vset.pattern.permute.xlu0 0
      %596 = vperm.xlu0 %595, %v512
      %v597 = vpop.permute.xlu0 %596
      %600 = vset.pattern.permute.xlu0 0
      %601 = vperm.xlu0 %600, %v513
      %v602 = vpop.permute.xlu0 %601
      %605 = vset.pattern.permute.xlu0 0
      %606 = vperm.xlu0 %605, %v514
      %v607 = vpop.permute.xlu0 %606
      %610 = vset.pattern.permute.xlu0 0
      %611 = vperm.xlu0 %610, %v515
      %v612 = vpop.permute.xlu0 %611
      %615 = vset.pattern.permute.xlu0 0
      %616 = vperm.xlu0 %615, %v516
      %v617 = vpop.permute.xlu0 %616
      %620 = vset.pattern.permute.xlu0 0
      %621 = vperm.xlu0 %620, %v517
      %v622 = vpop.permute.xlu0 %621
      %625 = vset.pattern.permute.xlu0 0
      %626 = vperm.xlu0 %625, %v518
      %v627 = vpop.permute.xlu0 %626
      %630 = vset.pattern.permute.xlu0 0
      %631 = vperm.xlu0 %630, %v519
      %v632 = vpop.permute.xlu0 %631
      %635 = vset.pattern.permute.xlu0 0
      %636 = vperm.xlu0 %635, %v520
      %v637 = vpop.permute.xlu0 %636
      %640 = vset.pattern.permute.xlu0 0
      %641 = vperm.xlu0 %640, %v521
      %v642 = vpop.permute.xlu0 %641
      %645 = vset.pattern.permute.xlu0 0
      %646 = vperm.xlu0 %645, %v522
      %v647 = vpop.permute.xlu0 %646
      %650 = vset.pattern.permute.xlu0 0
      %651 = vperm.xlu0 %650, %v523
      %v652 = vpop.permute.xlu0 %651
      %655 = vset.pattern.permute.xlu0 0
      %656 = vperm.xlu0 %655, %v524
      %v657 = vpop.permute.xlu0 %656
      %660 = vset.pattern.permute.xlu0 0
      %661 = vperm.xlu0 %660, %v525
      %v662 = vpop.permute.xlu0 %661
      %665 = vset.pattern.permute.xlu0 0
      %666 = vperm.xlu0 %665, %v526
      %v667 = vpop.permute.xlu0 %666
      %670 = vset.pattern.permute.xlu0 0
      %671 = vperm.xlu0 %670, %v527
      %v672 = vpop.permute.xlu0 %671
      %675 = vset.pattern.permute.xlu0 0
      %676 = vperm.xlu0 %675, %v528
      %v677 = vpop.permute.xlu0 %676
      %680 = vset.pattern.permute.xlu0 0
      %681 = vperm.xlu0 %680, %v529
      %v682 = vpop.permute.xlu0 %681
      %685 = vset.pattern.permute.xlu0 0
      %686 = vperm.xlu0 %685, %v530
      %v687 = vpop.permute.xlu0 %686
      %690 = vset.pattern.permute.xlu0 0
      %691 = vperm.xlu0 %690, %v531
      %v692 = vpop.permute.xlu0 %691
      %695 = vset.pattern.permute.xlu0 0
      %696 = vperm.xlu0 %695, %v532
      %v697 = vpop.permute.xlu0 %696
      %700 = vset.pattern.permute.xlu0 0
      %701 = vperm.xlu0 %700, %v533
      %v702 = vpop.permute.xlu0 %701
      %705 = vset.pattern.permute.xlu0 0
      %706 = vperm.xlu0 %705, %v534
      %v707 = vpop.permute.xlu0 %706
      %710 = vset.pattern.permute.xlu0 0
      %711 = vperm.xlu0 %710, %v535
      %v712 = vpop.permute.xlu0 %711
      %715 = vset.pattern.permute.xlu0 0
      %716 = vperm.xlu0 %715, %v536
      %v717 = vpop.permute.xlu0 %716
      %720 = vset.pattern.permute.xlu0 0
      %721 = vperm.xlu0 %720, %v537
      %v722 = vpop.permute.xlu0 %721
      %725 = vset.pattern.permute.xlu0 0
      %726 = vperm.xlu0 %725, %v538
      %v727 = vpop.permute.xlu0 %726
      %730 = vset.pattern.permute.xlu0 0
      %731 = vperm.xlu0 %730, %v539
      %v732 = vpop.permute.xlu0 %731
      %735 = vset.pattern.permute.xlu0 0
      %736 = vperm.xlu0 %735, %v540
      %v737 = vpop.permute.xlu0 %736
      %740 = vset.pattern.permute.xlu0 0
      %741 = vperm.xlu0 %740, %v541
      %v742 = vpop.permute.xlu0 %741
      %745 = vset.pattern.permute.xlu0 0
      %746 = vperm.xlu0 %745, %v542
      %v747 = vpop.permute.xlu0 %746
      %750 = vset.pattern.permute.xlu0 0
      %751 = vperm.xlu0 %750, %v543
      %v752 = vpop.permute.xlu0 %751
      %755 = vset.pattern.permute.xlu0 0
      %756 = vperm.xlu0 %755, %v544
      %v757 = vpop.permute.xlu0 %756
      %760 = vset.pattern.permute.xlu0 0
      %761 = vperm.xlu0 %760, %v545
      %v762 = vpop.permute.xlu0 %761
      %765 = vset.pattern.permute.xlu0 0
      %766 = vperm.xlu0 %765, %v546
      %v767 = vpop.permute.xlu0 %766
      %770 = vset.pattern.permute.xlu0 0
      %771 = vperm.xlu0 %770, %v547
      %v772 = vpop.permute.xlu0 %771
      %775 = vset.pattern.permute.xlu0 0
      %776 = vperm.xlu0 %775, %v548
      %v777 = vpop.permute.xlu0 %776
      %780 = vset.pattern.permute.xlu0 0
      %781 = vperm.xlu0 %780, %v549
      %v782 = vpop.permute.xlu0 %781
      %785 = vset.pattern.permute.xlu0 0
      %786 = vperm.xlu0 %785, %v550
      %v787 = vpop.permute.xlu0 %786
      %790 = vset.pattern.permute.xlu0 0
      %791 = vperm.xlu0 %790, %v551
      %v792 = vpop.permute.xlu0 %791
      %795 = vset.pattern.permute.xlu0 0
      %796 = vperm.xlu0 %795, %v552
      %v797 = vpop.permute.xlu0 %796
      %800 = vset.pattern.permute.xlu0 0
      %801 = vperm.xlu0 %800, %v553
      %v802 = vpop.permute.xlu0 %801
      %805 = vset.pattern.permute.xlu0 0
      %806 = vperm.xlu0 %805, %v554
      %v807 = vpop.permute.xlu0 %806
      %810 = vset.pattern.permute.xlu0 0
      %811 = vperm.xlu0 %810, %v555
      %v812 = vpop.permute.xlu0 %811
      %815 = vset.pattern.permute.xlu0 0
      %816 = vperm.xlu0 %815, %v556
      %v817 = vpop.permute.xlu0 %816
      %820 = vset.pattern.permute.xlu0 0
      %821 = vperm.xlu0 %820, %v557
      %v822 = vpop.permute.xlu0 %821
      %825 = vset.pattern.permute.xlu0 0
      %826 = vperm.xlu0 %825, %v558
      %v827 = vpop.permute.xlu0 %826
      %v829 = vmul.f32 %v451, %v562
      %v830 = vmul.f32 %v452, %v567
      %v831 = vmul.f32 %v453, %v572
      %v832 = vmul.f32 %v454, %v577
      %v833 = vmul.f32 %v455, %v582
      %v834 = vmul.f32 %v456, %v587
      %v835 = vmul.f32 %v457, %v592
      %v836 = vmul.f32 %v458, %v597
      %v837 = vmul.f32 %v459, %v602
      %v838 = vmul.f32 %v460, %v607
      %v839 = vmul.f32 %v461, %v612
      %v840 = vmul.f32 %v462, %v617
      %v841 = vmul.f32 %v463, %v622
      %v842 = vmul.f32 %v464, %v627
      %v843 = vmul.f32 %v465, %v632
      %v844 = vmul.f32 %v466, %v637
      %v845 = vmul.f32 %v467, %v642
      %v846 = vmul.f32 %v468, %v647
      %v847 = vmul.f32 %v469, %v652
      %v848 = vmul.f32 %v470, %v657
      %v849 = vmul.f32 %v471, %v662
      %v850 = vmul.f32 %v472, %v667
      %v851 = vmul.f32 %v473, %v672
      %v852 = vmul.f32 %v474, %v677
      %v853 = vmul.f32 %v475, %v682
      %v854 = vmul.f32 %v476, %v687
      %v855 = vmul.f32 %v477, %v692
      %v856 = vmul.f32 %v478, %v697
      %v857 = vmul.f32 %v479, %v702
      %v858 = vmul.f32 %v480, %v707
      %v859 = vmul.f32 %v481, %v712
      %v860 = vmul.f32 %v482, %v717
      %v861 = vmul.f32 %v483, %v722
      %v862 = vmul.f32 %v484, %v727
      %v863 = vmul.f32 %v485, %v732
      %v864 = vmul.f32 %v486, %v737
      %v865 = vmul.f32 %v487, %v742
      %v866 = vmul.f32 %v488, %v747
      %v867 = vmul.f32 %v489, %v752
      %v868 = vmul.f32 %v490, %v757
      %v869 = vmul.f32 %v491, %v762
      %v870 = vmul.f32 %v492, %v767
      %v871 = vmul.f32 %v493, %v772
      %v872 = vmul.f32 %v494, %v777
      %v873 = vmul.f32 %v495, %v782
      %v874 = vmul.f32 %v496, %v787
      %v875 = vmul.f32 %v497, %v792
      %v876 = vmul.f32 %v498, %v797
      %v877 = vmul.f32 %v499, %v802
      %v878 = vmul.f32 %v500, %v807
      %v879 = vmul.f32 %v501, %v812
      %v880 = vmul.f32 %v502, %v817
      %v881 = vmul.f32 %v503, %v822
      %v882 = vmul.f32 %v504, %v827
      %v883 = vpack.c.bf16 %v830, %v829
      %v884 = vpack.c.bf16 %v831, %v831
      %v885 = vpack.c.bf16 %v833, %v832
      %v886 = vpack.c.bf16 %v834, %v834
      %v887 = vpack.c.bf16 %v836, %v835
      %v888 = vpack.c.bf16 %v837, %v837
      %v889 = vpack.c.bf16 %v839, %v838
      %v890 = vpack.c.bf16 %v840, %v840
      %v891 = vpack.c.bf16 %v842, %v841
      %v892 = vpack.c.bf16 %v843, %v843
      %v893 = vpack.c.bf16 %v845, %v844
      %v894 = vpack.c.bf16 %v846, %v846
      %v895 = vpack.c.bf16 %v848, %v847
      %v896 = vpack.c.bf16 %v849, %v849
      %v897 = vpack.c.bf16 %v851, %v850
      %v898 = vpack.c.bf16 %v852, %v852
      %v899 = vpack.c.bf16 %v854, %v853
      %v900 = vpack.c.bf16 %v855, %v855
      %v901 = vpack.c.bf16 %v857, %v856
      %v902 = vpack.c.bf16 %v858, %v858
      %v903 = vpack.c.bf16 %v860, %v859
      %v904 = vpack.c.bf16 %v861, %v861
      %v905 = vpack.c.bf16 %v863, %v862
      %v906 = vpack.c.bf16 %v864, %v864
      %v907 = vpack.c.bf16 %v866, %v865
      %v908 = vpack.c.bf16 %v867, %v867
      %v909 = vpack.c.bf16 %v869, %v868
      %v910 = vpack.c.bf16 %v870, %v870
      %v911 = vpack.c.bf16 %v872, %v871
      %v912 = vpack.c.bf16 %v873, %v873
      %v913 = vpack.c.bf16 %v875, %v874
      %v914 = vpack.c.bf16 %v876, %v876
      %v915 = vpack.c.bf16 %v878, %v877
      %v916 = vpack.c.bf16 %v879, %v879
      %v917 = vpack.c.bf16 %v881, %v880
      %v918 = vpack.c.bf16 %v882, %v882
      %v919 = vld [vmem:[%s4] sm:$0x3]
      %vm920 = vsmask.f32 7424
      %v922 = vshrl.u32 %v883, 16
      %v924 = vshll.u32 %v883, 16
      %v926 = vrot.slane %v924, 1
      %v927 = vor.u32 %v922, %v926
      %v929 = vshll.u32 %v884, 16
      %v931 = vrot.slane %v929, 1
      %v932 = vsel %vm920, %v927, %v931
      %v934 = vshrl.u32 %v885, 16
      %v936 = vshll.u32 %v885, 16
      %v938 = vrot.slane %v936, 1
      %v939 = vor.u32 %v934, %v938
      %v941 = vshll.u32 %v886, 16
      %v943 = vrot.slane %v941, 1
      %v944 = vsel %vm920, %v939, %v943
      %v946 = vshrl.u32 %v887, 16
      %v948 = vshll.u32 %v887, 16
      %v950 = vrot.slane %v948, 1
      %v951 = vor.u32 %v946, %v950
      %v953 = vshll.u32 %v888, 16
      %v955 = vrot.slane %v953, 1
      %v956 = vsel %vm920, %v951, %v955
      %v958 = vshrl.u32 %v889, 16
      %v960 = vshll.u32 %v889, 16
      %v962 = vrot.slane %v960, 1
      %v963 = vor.u32 %v958, %v962
      %v965 = vshll.u32 %v890, 16
      %v967 = vrot.slane %v965, 1
      %v968 = vsel %vm920, %v963, %v967
      %v970 = vshrl.u32 %v891, 16
      %v972 = vshll.u32 %v891, 16
      %v974 = vrot.slane %v972, 1
      %v975 = vor.u32 %v970, %v974
      %v977 = vshll.u32 %v892, 16
      %v979 = vrot.slane %v977, 1
      %v980 = vsel %vm920, %v975, %v979
      %v982 = vshrl.u32 %v893, 16
      %v984 = vshll.u32 %v893, 16
      %v986 = vrot.slane %v984, 1
      %v987 = vor.u32 %v982, %v986
      %v989 = vshll.u32 %v894, 16
      %v991 = vrot.slane %v989, 1
      %v992 = vsel %vm920, %v987, %v991
      %v994 = vshrl.u32 %v895, 16
      %v996 = vshll.u32 %v895, 16
      %v998 = vrot.slane %v996, 1
      %v999 = vor.u32 %v994, %v998
      %v1001 = vshll.u32 %v896, 16
      %v1003 = vrot.slane %v1001, 1
      %v1004 = vsel %vm920, %v999, %v1003
      %v1006 = vshrl.u32 %v897, 16
      %v1008 = vshll.u32 %v897, 16
      %v1010 = vrot.slane %v1008, 1
      %v1011 = vor.u32 %v1006, %v1010
      %v1013 = vshll.u32 %v898, 16
      %v1015 = vrot.slane %v1013, 1
      %v1016 = vsel %vm920, %v1011, %v1015
      %v1018 = vshrl.u32 %v899, 16
      %v1020 = vshll.u32 %v899, 16
      %v1022 = vrot.slane %v1020, 1
      %v1023 = vor.u32 %v1018, %v1022
      %v1025 = vshll.u32 %v900, 16
      %v1027 = vrot.slane %v1025, 1
      %v1028 = vsel %vm920, %v1023, %v1027
      %v1030 = vshrl.u32 %v901, 16
      %v1032 = vshll.u32 %v901, 16
      %v1034 = vrot.slane %v1032, 1
      %v1035 = vor.u32 %v1030, %v1034
      %v1037 = vshll.u32 %v902, 16
      %v1039 = vrot.slane %v1037, 1
      %v1040 = vsel %vm920, %v1035, %v1039
      %v1042 = vshrl.u32 %v903, 16
      %v1044 = vshll.u32 %v903, 16
      %v1046 = vrot.slane %v1044, 1
      %v1047 = vor.u32 %v1042, %v1046
      %v1049 = vshll.u32 %v904, 16
      %v1051 = vrot.slane %v1049, 1
      %v1052 = vsel %vm920, %v1047, %v1051
      %v1054 = vshrl.u32 %v905, 16
      %v1056 = vshll.u32 %v905, 16
      %v1058 = vrot.slane %v1056, 1
      %v1059 = vor.u32 %v1054, %v1058
      %v1061 = vshll.u32 %v906, 16
      %v1063 = vrot.slane %v1061, 1
      %v1064 = vsel %vm920, %v1059, %v1063
      %v1066 = vshrl.u32 %v907, 16
      %v1068 = vshll.u32 %v907, 16
      %v1070 = vrot.slane %v1068, 1
      %v1071 = vor.u32 %v1066, %v1070
      %v1073 = vshll.u32 %v908, 16
      %v1075 = vrot.slane %v1073, 1
      %v1076 = vsel %vm920, %v1071, %v1075
      %v1078 = vshrl.u32 %v909, 16
      %v1080 = vshll.u32 %v909, 16
      %v1082 = vrot.slane %v1080, 1
      %v1083 = vor.u32 %v1078, %v1082
      %v1085 = vshll.u32 %v910, 16
      %v1087 = vrot.slane %v1085, 1
      %v1088 = vsel %vm920, %v1083, %v1087
      %v1090 = vshrl.u32 %v911, 16
      %v1092 = vshll.u32 %v911, 16
      %v1094 = vrot.slane %v1092, 1
      %v1095 = vor.u32 %v1090, %v1094
      %v1097 = vshll.u32 %v912, 16
      %v1099 = vrot.slane %v1097, 1
      %v1100 = vsel %vm920, %v1095, %v1099
      %v1102 = vshrl.u32 %v913, 16
      %v1104 = vshll.u32 %v913, 16
      %v1106 = vrot.slane %v1104, 1
      %v1107 = vor.u32 %v1102, %v1106
      %v1109 = vshll.u32 %v914, 16
      %v1111 = vrot.slane %v1109, 1
      %v1112 = vsel %vm920, %v1107, %v1111
      %s1113 = scalar_lea.vmem %s4, 2
      %v1114 = vld [vmem:[%s1113] sm:$0x3]
      %vm1115 = vcmask 31744
      %v1117 = vsel %vm1115, %v932, 0
      %v1120 = vsel %vm1115, %v944, 0
      %v1123 = vsel %vm1115, %v956, 0
      %v1126 = vsel %vm1115, %v968, 0
      %v1129 = vsel %vm1115, %v980, 0
      %v1132 = vsel %vm1115, %v992, 0
      %v1135 = vsel %vm1115, %v1004, 0
      %v1138 = vsel %vm1115, %v1016, 0
      %v1141 = vsel %vm1115, %v1028, 0
      %v1144 = vsel %vm1115, %v1040, 0
      %v1147 = vsel %vm1115, %v1052, 0
      %v1150 = vsel %vm1115, %v1064, 0
      %v1153 = vsel %vm1115, %v1076, 0
      %v1156 = vsel %vm1115, %v1088, 0
      %v1159 = vsel %vm1115, %v1100, 0
      %v1162 = vsel %vm1115, %v1112, 0
      %vm1164 = vcmask 1041408
      %v1166 = vsel %vm1164, %v1114, 0
      %1168 = vmatprep.subr.bf16.mxu0 0
      %1169 = vmatpush1.bf16.msra.mxu0 %v1166
      %1170 = vmatprep.subr.bf16.mxu0 0
      %1171 = vmatpush1.bf16.msra.mxu0 0
      %1172 = vmatprep.subr.bf16.mxu0 0
      %1173 = vmatpush1.bf16.msra.mxu0 0
      %1174 = vmatprep.subr.bf16.mxu0 0
      %1175 = vmatpush1.bf16.msra.mxu0 0
      %1176 = vmatprep.subr.bf16.mxu0 0
      %1177 = vmatpush1.bf16.msra.mxu0 0
      %1178 = vmatprep.subr.bf16.mxu0 0
      %1179 = vmatpush1.bf16.msra.mxu0 0
      %1180 = vmatprep.subr.bf16.mxu0 0
      %1181 = vmatpush1.bf16.msra.mxu0 0
      %1182 = vmatprep.subr.bf16.mxu0 0
      %1183 = vmatpush1.bf16.msra.mxu0 0
      %1184 = vmatprep.subr.bf16.mxu0 0
      %1185 = vmatpush1.bf16.msra.mxu0 0
      %1186 = vmatprep.subr.bf16.mxu0 0
      %1187 = vmatpush1.bf16.msra.mxu0 0
      %1188 = vmatprep.subr.bf16.mxu0 0
      %1189 = vmatpush1.bf16.msra.mxu0 0
      %1190 = vmatprep.subr.bf16.mxu0 0
      %1191 = vmatpush1.bf16.msra.mxu0 0
      %1192 = vmatprep.subr.bf16.mxu0 0
      %1193 = vmatpush1.bf16.msra.mxu0 0
      %1194 = vmatprep.subr.bf16.mxu0 0
      %1195 = vmatpush1.bf16.msra.mxu0 0
      %1196 = vmatprep.subr.bf16.mxu0 0
      %1197 = vmatpush1.bf16.msra.mxu0 0
      %1198 = vmatprep.subr.bf16.mxu0 0
      %1199 = vmatpush1.bf16.msra.mxu0 0
      %1200 = vmatprep.mubr.bf16.mxu0 0
      %1201 = vmatmul.mubr.bf16.gmra.mrb[0].mxu0 %v1117
      %v1202 = vpop.f32.mrb[0].mxu0
      %v1203 = vadd.f32 0.0, %v1202
      %v1204 = vpop.f32.mrb[0].mxu0
      %v1205 = vpop.f32.mrb[0].mxu0
      %v1206 = vadd.f32 0.0, %v1205
      %v1207 = vpop.f32.mrb[0].mxu0
      %1208 = vmatprep.mubr.bf16.mxu0 0
      %1209 = vmatmul.mubr.bf16.gmra.mrb[0].mxu0 %v1120
      %v1210 = vpop.f32.mrb[0].mxu0
      %v1211 = vadd.f32 0.0, %v1210
      %v1212 = vpop.f32.mrb[0].mxu0
      %v1213 = vpop.f32.mrb[0].mxu0
      %v1214 = vadd.f32 0.0, %v1213
      %v1215 = vpop.f32.mrb[0].mxu0
      %1216 = vmatprep.mubr.bf16.mxu0 0
      %1217 = vmatmul.mubr.bf16.gmra.mrb[0].mxu0 %v1123
      %v1218 = vpop.f32.mrb[0].mxu0
      %v1219 = vadd.f32 0.0, %v1218
      %v1220 = vpop.f32.mrb[0].mxu0
      %v1221 = vpop.f32.mrb[0].mxu0
      %v1222 = vadd.f32 0.0, %v1221
      %v1223 = vpop.f32.mrb[0].mxu0
      %1224 = vmatprep.mubr.bf16.mxu0 0
      %1225 = vmatmul.mubr.bf16.gmra.mrb[0].mxu0 %v1126
      %v1226 = vpop.f32.mrb[0].mxu0
      %v1227 = vadd.f32 0.0, %v1226
      %v1228 = vpop.f32.mrb[0].mxu0
      %v1229 = vpop.f32.mrb[0].mxu0
      %v1230 = vadd.f32 0.0, %v1229
      %v1231 = vpop.f32.mrb[0].mxu0
      %1232 = vmatprep.mubr.bf16.mxu0 0
      %1233 = vmatmul.mubr.bf16.gmra.mrb[0].mxu0 %v1129
      %v1234 = vpop.f32.mrb[0].mxu0
      %v1235 = vadd.f32 0.0, %v1234
      %v1236 = vpop.f32.mrb[0].mxu0
      %v1237 = vpop.f32.mrb[0].mxu0
      %v1238 = vadd.f32 0.0, %v1237
      %v1239 = vpop.f32.mrb[0].mxu0
      %1240 = vmatprep.mubr.bf16.mxu0 0
      %1241 = vmatmul.mubr.bf16.gmra.mrb[0].mxu0 %v1132
      %v1242 = vpop.f32.mrb[0].mxu0
      %v1243 = vadd.f32 0.0, %v1242
      %v1244 = vpop.f32.mrb[0].mxu0
      %v1245 = vpop.f32.mrb[0].mxu0
      %v1246 = vadd.f32 0.0, %v1245
      %v1247 = vpop.f32.mrb[0].mxu0
      %1248 = vmatprep.mubr.bf16.mxu0 0
      %1249 = vmatmul.mubr.bf16.gmra.mrb[0].mxu0 %v1135
      %v1250 = vpop.f32.mrb[0].mxu0
      %v1251 = vadd.f32 0.0, %v1250
      %v1252 = vpop.f32.mrb[0].mxu0
      %v1253 = vpop.f32.mrb[0].mxu0
      %v1254 = vadd.f32 0.0, %v1253
      %v1255 = vpop.f32.mrb[0].mxu0
      %1256 = vmatprep.mubr.bf16.mxu0 0
      %1257 = vmatmul.mubr.bf16.gmra.mrb[0].mxu0 %v1138
      %v1258 = vpop.f32.mrb[0].mxu0
      %v1259 = vadd.f32 0.0, %v1258
      %v1260 = vpop.f32.mrb[0].mxu0
      %v1261 = vpop.f32.mrb[0].mxu0
      %v1262 = vadd.f32 0.0, %v1261
      %v1263 = vpop.f32.mrb[0].mxu0
      %1264 = vmatprep.mubr.bf16.mxu0 0
      %1265 = vmatmul.mubr.bf16.gmra.mrb[0].mxu0 %v1141
      %v1266 = vpop.f32.mrb[0].mxu0
      %v1267 = vadd.f32 0.0, %v1266
      %v1268 = vpop.f32.mrb[0].mxu0
      %v1269 = vpop.f32.mrb[0].mxu0
      %v1270 = vadd.f32 0.0, %v1269
      %v1271 = vpop.f32.mrb[0].mxu0
      %1272 = vmatprep.mubr.bf16.mxu0 0
      %1273 = vmatmul.mubr.bf16.gmra.mrb[0].mxu0 %v1144
      %v1274 = vpop.f32.mrb[0].mxu0
      %v1275 = vadd.f32 0.0, %v1274
      %v1276 = vpop.f32.mrb[0].mxu0
      %v1277 = vpop.f32.mrb[0].mxu0
      %v1278 = vadd.f32 0.0, %v1277
      %v1279 = vpop.f32.mrb[0].mxu0
      %1280 = vmatprep.mubr.bf16.mxu0 0
      %1281 = vmatmul.mubr.bf16.gmra.mrb[0].mxu0 %v1147
      %v1282 = vpop.f32.mrb[0].mxu0
      %v1283 = vadd.f32 0.0, %v1282
      %v1284 = vpop.f32.mrb[0].mxu0
      %v1285 = vpop.f32.mrb[0].mxu0
      %v1286 = vadd.f32 0.0, %v1285
      %v1287 = vpop.f32.mrb[0].mxu0
      %1288 = vmatprep.mubr.bf16.mxu0 0
      %1289 = vmatmul.mubr.bf16.gmra.mrb[0].mxu0 %v1150
      %v1290 = vpop.f32.mrb[0].mxu0
      %v1291 = vadd.f32 0.0, %v1290
      %v1292 = vpop.f32.mrb[0].mxu0
      %v1293 = vpop.f32.mrb[0].mxu0
      %v1294 = vadd.f32 0.0, %v1293
      %v1295 = vpop.f32.mrb[0].mxu0
      %1296 = vmatprep.mubr.bf16.mxu0 0
      %1297 = vmatmul.mubr.bf16.gmra.mrb[0].mxu0 %v1153
      %v1298 = vpop.f32.mrb[0].mxu0
      %v1299 = vadd.f32 0.0, %v1298
      %v1300 = vpop.f32.mrb[0].mxu0
      %v1301 = vpop.f32.mrb[0].mxu0
      %v1302 = vadd.f32 0.0, %v1301
      %v1303 = vpop.f32.mrb[0].mxu0
      %1304 = vmatprep.mubr.bf16.mxu0 0
      %1305 = vmatmul.mubr.bf16.gmra.mrb[0].mxu0 %v1156
      %v1306 = vpop.f32.mrb[0].mxu0
      %v1307 = vadd.f32 0.0, %v1306
      %v1308 = vpop.f32.mrb[0].mxu0
      %v1309 = vpop.f32.mrb[0].mxu0
      %v1310 = vadd.f32 0.0, %v1309
      %v1311 = vpop.f32.mrb[0].mxu0
      %1312 = vmatprep.mubr.bf16.mxu0 0
      %1313 = vmatmul.mubr.bf16.gmra.mrb[0].mxu0 %v1159
      %v1314 = vpop.f32.mrb[0].mxu0
      %v1315 = vadd.f32 0.0, %v1314
      %v1316 = vpop.f32.mrb[0].mxu0
      %v1317 = vpop.f32.mrb[0].mxu0
      %v1318 = vadd.f32 0.0, %v1317
      %v1319 = vpop.f32.mrb[0].mxu0
      %1320 = vmatprep.mubr.bf16.mxu0 0
      %1321 = vmatmul.mubr.bf16.gmra.mrb[0].mxu0 %v1162
      %v1322 = vpop.f32.mrb[0].mxu0
      %v1323 = vadd.f32 0.0, %v1322
      %v1324 = vpop.f32.mrb[0].mxu0
      %v1325 = vpop.f32.mrb[0].mxu0
      %v1326 = vadd.f32 0.0, %v1325
      %v1327 = vpop.f32.mrb[0].mxu0
      %1328 = vdwg.mxu0
      %v1329 = vsel %vm1115, %v883, 0
      %v1331 = vsel %vm1115, %v885, 0
      %v1333 = vsel %vm1115, %v887, 0
      %v1335 = vsel %vm1115, %v889, 0
      %v1337 = vsel %vm1115, %v891, 0
      %v1339 = vsel %vm1115, %v893, 0
      %v1341 = vsel %vm1115, %v895, 0
      %v1343 = vsel %vm1115, %v897, 0
      %v1345 = vsel %vm1115, %v899, 0
      %v1347 = vsel %vm1115, %v901, 0
      %v1349 = vsel %vm1115, %v903, 0
      %v1351 = vsel %vm1115, %v905, 0
      %v1353 = vsel %vm1115, %v907, 0
      %v1355 = vsel %vm1115, %v909, 0
      %v1357 = vsel %vm1115, %v911, 0
      %v1359 = vsel %vm1115, %v913, 0
      %v1362 = vsel %vm1164, %v919, 0
      %1364 = vmatprep.subr.bf16.mxu0 0
      %1365 = vmatpush1.bf16.msra.mxu0 %v1362
      %1366 = vmatprep.subr.bf16.mxu0 0
      %1367 = vmatpush1.bf16.msra.mxu0 0
      %1368 = vmatprep.subr.bf16.mxu0 0
      %1369 = vmatpush1.bf16.msra.mxu0 0
      %1370 = vmatprep.subr.bf16.mxu0 0
      %1371 = vmatpush1.bf16.msra.mxu0 0
      %1372 = vmatprep.subr.bf16.mxu0 0
      %1373 = vmatpush1.bf16.msra.mxu0 0
      %1374 = vmatprep.subr.bf16.mxu0 0
      %1375 = vmatpush1.bf16.msra.mxu0 0
      %1376 = vmatprep.subr.bf16.mxu0 0
      %1377 = vmatpush1.bf16.msra.mxu0 0
      %1378 = vmatprep.subr.bf16.mxu0 0
      %1379 = vmatpush1.bf16.msra.mxu0 0
      %1380 = vmatprep.subr.bf16.mxu0 0
      %1381 = vmatpush1.bf16.msra.mxu0 0
      %1382 = vmatprep.subr.bf16.mxu0 0
      %1383 = vmatpush1.bf16.msra.mxu0 0
      %1384 = vmatprep.subr.bf16.mxu0 0
      %1385 = vmatpush1.bf16.msra.mxu0 0
      %1386 = vmatprep.subr.bf16.mxu0 0
      %1387 = vmatpush1.bf16.msra.mxu0 0
      %1388 = vmatprep.subr.bf16.mxu0 0
      %1389 = vmatpush1.bf16.msra.mxu0 0
      %1390 = vmatprep.subr.bf16.mxu0 0
      %1391 = vmatpush1.bf16.msra.mxu0 0
      %1392 = vmatprep.subr.bf16.mxu0 0
      %1393 = vmatpush1.bf16.msra.mxu0 0
      %1394 = vmatprep.subr.bf16.mxu0 0
      %1395 = vmatpush1.bf16.msra.mxu0 0
      %1396 = vmatprep.mubr.bf16.mxu0 0
      %1397 = vmatmul.mubr.bf16.gmra.mrb[0].mxu0 %v1329
      %v1398 = vpop.f32.mrb[0].mxu0
      %v1399 = vadd.f32 %v1203, %v1398
      %v1400 = vpop.f32.mrb[0].mxu0
      %v1401 = vpop.f32.mrb[0].mxu0
      %v1402 = vadd.f32 %v1206, %v1401
      %v1403 = vpop.f32.mrb[0].mxu0
      %1404 = vmatprep.mubr.bf16.mxu0 0
      %1405 = vmatmul.mubr.bf16.gmra.mrb[0].mxu0 %v1331
      %v1406 = vpop.f32.mrb[0].mxu0
      %v1407 = vadd.f32 %v1211, %v1406
      %v1408 = vpop.f32.mrb[0].mxu0
      %v1409 = vpop.f32.mrb[0].mxu0
      %v1410 = vadd.f32 %v1214, %v1409
      %v1411 = vpop.f32.mrb[0].mxu0
      %1412 = vmatprep.mubr.bf16.mxu0 0
      %1413 = vmatmul.mubr.bf16.gmra.mrb[0].mxu0 %v1333
      %v1414 = vpop.f32.mrb[0].mxu0
      %v1415 = vadd.f32 %v1219, %v1414
      %v1416 = vpop.f32.mrb[0].mxu0
      %v1417 = vpop.f32.mrb[0].mxu0
      %v1418 = vadd.f32 %v1222, %v1417
      %v1419 = vpop.f32.mrb[0].mxu0
      %1420 = vmatprep.mubr.bf16.mxu0 0
      %1421 = vmatmul.mubr.bf16.gmra.mrb[0].mxu0 %v1335
      %v1422 = vpop.f32.mrb[0].mxu0
      %v1423 = vadd.f32 %v1227, %v1422
      %v1424 = vpop.f32.mrb[0].mxu0
      %v1425 = vpop.f32.mrb[0].mxu0
      %v1426 = vadd.f32 %v1230, %v1425
      %v1427 = vpop.f32.mrb[0].mxu0
      %1428 = vmatprep.mubr.bf16.mxu0 0
      %1429 = vmatmul.mubr.bf16.gmra.mrb[0].mxu0 %v1337
      %v1430 = vpop.f32.mrb[0].mxu0
      %v1431 = vadd.f32 %v1235, %v1430
      %v1432 = vpop.f32.mrb[0].mxu0
      %v1433 = vpop.f32.mrb[0].mxu0
      %v1434 = vadd.f32 %v1238, %v1433
      %v1435 = vpop.f32.mrb[0].mxu0
      %1436 = vmatprep.mubr.bf16.mxu0 0
      %1437 = vmatmul.mubr.bf16.gmra.mrb[0].mxu0 %v1339
      %v1438 = vpop.f32.mrb[0].mxu0
      %v1439 = vadd.f32 %v1243, %v1438
      %v1440 = vpop.f32.mrb[0].mxu0
      %v1441 = vpop.f32.mrb[0].mxu0
      %v1442 = vadd.f32 %v1246, %v1441
      %v1443 = vpop.f32.mrb[0].mxu0
      %1444 = vmatprep.mubr.bf16.mxu0 0
      %1445 = vmatmul.mubr.bf16.gmra.mrb[0].mxu0 %v1341
      %v1446 = vpop.f32.mrb[0].mxu0
      %v1447 = vadd.f32 %v1251, %v1446
      %v1448 = vpop.f32.mrb[0].mxu0
      %v1449 = vpop.f32.mrb[0].mxu0
      %v1450 = vadd.f32 %v1254, %v1449
      %v1451 = vpop.f32.mrb[0].mxu0
      %1452 = vmatprep.mubr.bf16.mxu0 0
      %1453 = vmatmul.mubr.bf16.gmra.mrb[0].mxu0 %v1343
      %v1454 = vpop.f32.mrb[0].mxu0
      %v1455 = vadd.f32 %v1259, %v1454
      %v1456 = vpop.f32.mrb[0].mxu0
      %v1457 = vpop.f32.mrb[0].mxu0
      %v1458 = vadd.f32 %v1262, %v1457
      %v1459 = vpop.f32.mrb[0].mxu0
      %1460 = vmatprep.mubr.bf16.mxu0 0
      %1461 = vmatmul.mubr.bf16.gmra.mrb[0].mxu0 %v1345
      %v1462 = vpop.f32.mrb[0].mxu0
      %v1463 = vadd.f32 %v1267, %v1462
      %v1464 = vpop.f32.mrb[0].mxu0
      %v1465 = vpop.f32.mrb[0].mxu0
      %v1466 = vadd.f32 %v1270, %v1465
      %v1467 = vpop.f32.mrb[0].mxu0
      %1468 = vmatprep.mubr.bf16.mxu0 0
      %1469 = vmatmul.mubr.bf16.gmra.mrb[0].mxu0 %v1347
      %v1470 = vpop.f32.mrb[0].mxu0
      %v1471 = vadd.f32 %v1275, %v1470
      %v1472 = vpop.f32.mrb[0].mxu0
      %v1473 = vpop.f32.mrb[0].mxu0
      %v1474 = vadd.f32 %v1278, %v1473
      %v1475 = vpop.f32.mrb[0].mxu0
      %1476 = vmatprep.mubr.bf16.mxu0 0
      %1477 = vmatmul.mubr.bf16.gmra.mrb[0].mxu0 %v1349
      %v1478 = vpop.f32.mrb[0].mxu0
      %v1479 = vadd.f32 %v1283, %v1478
      %v1480 = vpop.f32.mrb[0].mxu0
      %v1481 = vpop.f32.mrb[0].mxu0
      %v1482 = vadd.f32 %v1286, %v1481
      %v1483 = vpop.f32.mrb[0].mxu0
      %1484 = vmatprep.mubr.bf16.mxu0 0
      %1485 = vmatmul.mubr.bf16.gmra.mrb[0].mxu0 %v1351
      %v1486 = vpop.f32.mrb[0].mxu0
      %v1487 = vadd.f32 %v1291, %v1486
      %v1488 = vpop.f32.mrb[0].mxu0
      %v1489 = vpop.f32.mrb[0].mxu0
      %v1490 = vadd.f32 %v1294, %v1489
      %v1491 = vpop.f32.mrb[0].mxu0
      %1492 = vmatprep.mubr.bf16.mxu0 0
      %1493 = vmatmul.mubr.bf16.gmra.mrb[0].mxu0 %v1353
      %v1494 = vpop.f32.mrb[0].mxu0
      %v1495 = vadd.f32 %v1299, %v1494
      %v1496 = vpop.f32.mrb[0].mxu0
      %v1497 = vpop.f32.mrb[0].mxu0
      %v1498 = vadd.f32 %v1302, %v1497
      %v1499 = vpop.f32.mrb[0].mxu0
      %1500 = vmatprep.mubr.bf16.mxu0 0
      %1501 = vmatmul.mubr.bf16.gmra.mrb[0].mxu0 %v1355
      %v1502 = vpop.f32.mrb[0].mxu0
      %v1503 = vadd.f32 %v1307, %v1502
      %v1504 = vpop.f32.mrb[0].mxu0
      %v1505 = vpop.f32.mrb[0].mxu0
      %v1506 = vadd.f32 %v1310, %v1505
      %v1507 = vpop.f32.mrb[0].mxu0
      %1508 = vmatprep.mubr.bf16.mxu0 0
      %1509 = vmatmul.mubr.bf16.gmra.mrb[0].mxu0 %v1357
      %v1510 = vpop.f32.mrb[0].mxu0
      %v1511 = vadd.f32 %v1315, %v1510
      %v1512 = vpop.f32.mrb[0].mxu0
      %v1513 = vpop.f32.mrb[0].mxu0
      %v1514 = vadd.f32 %v1318, %v1513
      %v1515 = vpop.f32.mrb[0].mxu0
      %1516 = vmatprep.mubr.bf16.mxu0 0
      %1517 = vmatmul.mubr.bf16.gmra.mrb[0].mxu0 %v1359
      %v1518 = vpop.f32.mrb[0].mxu0
      %v1519 = vadd.f32 %v1323, %v1518
      %v1520 = vpop.f32.mrb[0].mxu0
      %v1521 = vpop.f32.mrb[0].mxu0
      %v1522 = vadd.f32 %v1326, %v1521
      %v1523 = vpop.f32.mrb[0].mxu0
      %1524 = vdwg.mxu0
      %vm1557 = vcmask 1046528
      %v1558 = vrot.slane %v883, 1
      %v1559 = vrot.slane %v884, 1
      %v1560 = vsel %vm1557, %v1558, %v1559
      %v1561 = vrot.slane %v885, 1
      %v1562 = vrot.slane %v886, 1
      %v1563 = vsel %vm1557, %v1561, %v1562
      %v1564 = vrot.slane %v887, 1
      %v1565 = vrot.slane %v888, 1
      %v1566 = vsel %vm1557, %v1564, %v1565
      %v1567 = vrot.slane %v889, 1
      %v1568 = vrot.slane %v890, 1
      %v1569 = vsel %vm1557, %v1567, %v1568
      %v1570 = vrot.slane %v891, 1
      %v1571 = vrot.slane %v892, 1
      %v1572 = vsel %vm1557, %v1570, %v1571
      %v1573 = vrot.slane %v893, 1
      %v1574 = vrot.slane %v894, 1
      %v1575 = vsel %vm1557, %v1573, %v1574
      %v1576 = vrot.slane %v895, 1
      %v1577 = vrot.slane %v896, 1
      %v1578 = vsel %vm1557, %v1576, %v1577
      %v1579 = vrot.slane %v897, 1
      %v1580 = vrot.slane %v898, 1
      %v1581 = vsel %vm1557, %v1579, %v1580
      %v1582 = vrot.slane %v899, 1
      %v1583 = vrot.slane %v900, 1
      %v1584 = vsel %vm1557, %v1582, %v1583
      %v1585 = vrot.slane %v901, 1
      %v1586 = vrot.slane %v902, 1
      %v1587 = vsel %vm1557, %v1585, %v1586
      %v1588 = vrot.slane %v903, 1
      %v1589 = vrot.slane %v904, 1
      %v1590 = vsel %vm1557, %v1588, %v1589
      %v1591 = vrot.slane %v905, 1
      %v1592 = vrot.slane %v906, 1
      %v1593 = vsel %vm1557, %v1591, %v1592
      %v1594 = vrot.slane %v907, 1
      %v1595 = vrot.slane %v908, 1
      %v1596 = vsel %vm1557, %v1594, %v1595
      %v1597 = vrot.slane %v909, 1
      %v1598 = vrot.slane %v910, 1
      %v1599 = vsel %vm1557, %v1597, %v1598
      %v1600 = vrot.slane %v911, 1
      %v1601 = vrot.slane %v912, 1
      %v1602 = vsel %vm1557, %v1600, %v1601
      %v1603 = vrot.slane %v913, 1
      %v1604 = vrot.slane %v914, 1
      %v1605 = vsel %vm1557, %v1603, %v1604
      %s1606 = scalar_lea.vmem %s4, 4
      %v1607 = vld [vmem:[%s1606] sm:$0x3]
      %v1609 = vsel %vm1115, %v1560, 0
      %v1612 = vsel %vm1115, %v1563, 0
      %v1615 = vsel %vm1115, %v1566, 0
      %v1618 = vsel %vm1115, %v1569, 0
      %v1621 = vsel %vm1115, %v1572, 0
      %v1624 = vsel %vm1115, %v1575, 0
      %v1627 = vsel %vm1115, %v1578, 0
      %v1630 = vsel %vm1115, %v1581, 0
      %v1633 = vsel %vm1115, %v1584, 0
      %v1636 = vsel %vm1115, %v1587, 0
      %v1639 = vsel %vm1115, %v1590, 0
      %v1642 = vsel %vm1115, %v1593, 0
      %v1645 = vsel %vm1115, %v1596, 0
      %v1648 = vsel %vm1115, %v1599, 0
      %v1651 = vsel %vm1115, %v1602, 0
      %v1654 = vsel %vm1115, %v1605, 0
      %v1657 = vsel %vm1164, %v1607, 0
      %1659 = vmatprep.subr.bf16.mxu0 0
      %1660 = vmatpush1.bf16.msra.mxu0 %v1657
      %1661 = vmatprep.subr.bf16.mxu0 0
      %1662 = vmatpush1.bf16.msra.mxu0 0
      %1663 = vmatprep.subr.bf16.mxu0 0
      %1664 = vmatpush1.bf16.msra.mxu0 0
      %1665 = vmatprep.subr.bf16.mxu0 0
      %1666 = vmatpush1.bf16.msra.mxu0 0
      %1667 = vmatprep.subr.bf16.mxu0 0
      %1668 = vmatpush1.bf16.msra.mxu0 0
      %1669 = vmatprep.subr.bf16.mxu0 0
      %1670 = vmatpush1.bf16.msra.mxu0 0
      %1671 = vmatprep.subr.bf16.mxu0 0
      %1672 = vmatpush1.bf16.msra.mxu0 0
      %1673 = vmatprep.subr.bf16.mxu0 0
      %1674 = vmatpush1.bf16.msra.mxu0 0
      %1675 = vmatprep.subr.bf16.mxu0 0
      %1676 = vmatpush1.bf16.msra.mxu0 0
      %1677 = vmatprep.subr.bf16.mxu0 0
      %1678 = vmatpush1.bf16.msra.mxu0 0
      %1679 = vmatprep.subr.bf16.mxu0 0
      %1680 = vmatpush1.bf16.msra.mxu0 0
      %1681 = vmatprep.subr.bf16.mxu0 0
      %1682 = vmatpush1.bf16.msra.mxu0 0
      %1683 = vmatprep.subr.bf16.mxu0 0
      %1684 = vmatpush1.bf16.msra.mxu0 0
      %1685 = vmatprep.subr.bf16.mxu0 0
      %1686 = vmatpush1.bf16.msra.mxu0 0
      %1687 = vmatprep.subr.bf16.mxu0 0
      %1688 = vmatpush1.bf16.msra.mxu0 0
      %1689 = vmatprep.subr.bf16.mxu0 0
      %1690 = vmatpush1.bf16.msra.mxu0 0
      %1691 = vmatprep.mubr.bf16.mxu0 0
      %1692 = vmatmul.mubr.bf16.gmra.mrb[0].mxu0 %v1609
      %v1693 = vpop.f32.mrb[0].mxu0
      %v1694 = vadd.f32 0.0, %v1693
      %v1695 = vpop.f32.mrb[0].mxu0
      %v1696 = vpop.f32.mrb[0].mxu0
      %v1697 = vadd.f32 0.0, %v1696
      %v1698 = vpop.f32.mrb[0].mxu0
      %1699 = vmatprep.mubr.bf16.mxu0 0
      %1700 = vmatmul.mubr.bf16.gmra.mrb[0].mxu0 %v1612
      %v1701 = vpop.f32.mrb[0].mxu0
      %v1702 = vadd.f32 0.0, %v1701
      %v1703 = vpop.f32.mrb[0].mxu0
      %v1704 = vpop.f32.mrb[0].mxu0
      %v1705 = vadd.f32 0.0, %v1704
      %v1706 = vpop.f32.mrb[0].mxu0
      %1707 = vmatprep.mubr.bf16.mxu0 0
      %1708 = vmatmul.mubr.bf16.gmra.mrb[0].mxu0 %v1615
      %v1709 = vpop.f32.mrb[0].mxu0
      %v1710 = vadd.f32 0.0, %v1709
      %v1711 = vpop.f32.mrb[0].mxu0
      %v1712 = vpop.f32.mrb[0].mxu0
      %v1713 = vadd.f32 0.0, %v1712
      %v1714 = vpop.f32.mrb[0].mxu0
      %1715 = vmatprep.mubr.bf16.mxu0 0
      %1716 = vmatmul.mubr.bf16.gmra.mrb[0].mxu0 %v1618
      %v1717 = vpop.f32.mrb[0].mxu0
      %v1718 = vadd.f32 0.0, %v1717
      %v1719 = vpop.f32.mrb[0].mxu0
      %v1720 = vpop.f32.mrb[0].mxu0
      %v1721 = vadd.f32 0.0, %v1720
      %v1722 = vpop.f32.mrb[0].mxu0
      %1723 = vmatprep.mubr.bf16.mxu0 0
      %1724 = vmatmul.mubr.bf16.gmra.mrb[0].mxu0 %v1621
      %v1725 = vpop.f32.mrb[0].mxu0
      %v1726 = vadd.f32 0.0, %v1725
      %v1727 = vpop.f32.mrb[0].mxu0
      %v1728 = vpop.f32.mrb[0].mxu0
      %v1729 = vadd.f32 0.0, %v1728
      %v1730 = vpop.f32.mrb[0].mxu0
      %1731 = vmatprep.mubr.bf16.mxu0 0
      %1732 = vmatmul.mubr.bf16.gmra.mrb[0].mxu0 %v1624
      %v1733 = vpop.f32.mrb[0].mxu0
      %v1734 = vadd.f32 0.0, %v1733
      %v1735 = vpop.f32.mrb[0].mxu0
      %v1736 = vpop.f32.mrb[0].mxu0
      %v1737 = vadd.f32 0.0, %v1736
      %v1738 = vpop.f32.mrb[0].mxu0
      %1739 = vmatprep.mubr.bf16.mxu0 0
      %1740 = vmatmul.mubr.bf16.gmra.mrb[0].mxu0 %v1627
      %v1741 = vpop.f32.mrb[0].mxu0
      %v1742 = vadd.f32 0.0, %v1741
      %v1743 = vpop.f32.mrb[0].mxu0
      %v1744 = vpop.f32.mrb[0].mxu0
      %v1745 = vadd.f32 0.0, %v1744
      %v1746 = vpop.f32.mrb[0].mxu0
      %1747 = vmatprep.mubr.bf16.mxu0 0
      %1748 = vmatmul.mubr.bf16.gmra.mrb[0].mxu0 %v1630
      %v1749 = vpop.f32.mrb[0].mxu0
      %v1750 = vadd.f32 0.0, %v1749
      %v1751 = vpop.f32.mrb[0].mxu0
      %v1752 = vpop.f32.mrb[0].mxu0
      %v1753 = vadd.f32 0.0, %v1752
      %v1754 = vpop.f32.mrb[0].mxu0
      %1755 = vmatprep.mubr.bf16.mxu0 0
      %1756 = vmatmul.mubr.bf16.gmra.mrb[0].mxu0 %v1633
      %v1757 = vpop.f32.mrb[0].mxu0
      %v1758 = vadd.f32 0.0, %v1757
      %v1759 = vpop.f32.mrb[0].mxu0
      %v1760 = vpop.f32.mrb[0].mxu0
      %v1761 = vadd.f32 0.0, %v1760
      %v1762 = vpop.f32.mrb[0].mxu0
      %1763 = vmatprep.mubr.bf16.mxu0 0
      %1764 = vmatmul.mubr.bf16.gmra.mrb[0].mxu0 %v1636
      %v1765 = vpop.f32.mrb[0].mxu0
      %v1766 = vadd.f32 0.0, %v1765
      %v1767 = vpop.f32.mrb[0].mxu0
      %v1768 = vpop.f32.mrb[0].mxu0
      %v1769 = vadd.f32 0.0, %v1768
      %v1770 = vpop.f32.mrb[0].mxu0
      %1771 = vmatprep.mubr.bf16.mxu0 0
      %1772 = vmatmul.mubr.bf16.gmra.mrb[0].mxu0 %v1639
      %v1773 = vpop.f32.mrb[0].mxu0
      %v1774 = vadd.f32 0.0, %v1773
      %v1775 = vpop.f32.mrb[0].mxu0
      %v1776 = vpop.f32.mrb[0].mxu0
      %v1777 = vadd.f32 0.0, %v1776
      %v1778 = vpop.f32.mrb[0].mxu0
      %1779 = vmatprep.mubr.bf16.mxu0 0
      %1780 = vmatmul.mubr.bf16.gmra.mrb[0].mxu0 %v1642
      %v1781 = vpop.f32.mrb[0].mxu0
      %v1782 = vadd.f32 0.0, %v1781
      %v1783 = vpop.f32.mrb[0].mxu0
      %v1784 = vpop.f32.mrb[0].mxu0
      %v1785 = vadd.f32 0.0, %v1784
      %v1786 = vpop.f32.mrb[0].mxu0
      %1787 = vmatprep.mubr.bf16.mxu0 0
      %1788 = vmatmul.mubr.bf16.gmra.mrb[0].mxu0 %v1645
      %v1789 = vpop.f32.mrb[0].mxu0
      %v1790 = vadd.f32 0.0, %v1789
      %v1791 = vpop.f32.mrb[0].mxu0
      %v1792 = vpop.f32.mrb[0].mxu0
      %v1793 = vadd.f32 0.0, %v1792
      %v1794 = vpop.f32.mrb[0].mxu0
      %1795 = vmatprep.mubr.bf16.mxu0 0
      %1796 = vmatmul.mubr.bf16.gmra.mrb[0].mxu0 %v1648
      %v1797 = vpop.f32.mrb[0].mxu0
      %v1798 = vadd.f32 0.0, %v1797
      %v1799 = vpop.f32.mrb[0].mxu0
      %v1800 = vpop.f32.mrb[0].mxu0
      %v1801 = vadd.f32 0.0, %v1800
      %v1802 = vpop.f32.mrb[0].mxu0
      %1803 = vmatprep.mubr.bf16.mxu0 0
      %1804 = vmatmul.mubr.bf16.gmra.mrb[0].mxu0 %v1651
      %v1805 = vpop.f32.mrb[0].mxu0
      %v1806 = vadd.f32 0.0, %v1805
      %v1807 = vpop.f32.mrb[0].mxu0
      %v1808 = vpop.f32.mrb[0].mxu0
      %v1809 = vadd.f32 0.0, %v1808
      %v1810 = vpop.f32.mrb[0].mxu0
      %1811 = vmatprep.mubr.bf16.mxu0 0
      %1812 = vmatmul.mubr.bf16.gmra.mrb[0].mxu0 %v1654
      %v1813 = vpop.f32.mrb[0].mxu0
      %v1814 = vadd.f32 0.0, %v1813
      %v1815 = vpop.f32.mrb[0].mxu0
      %v1816 = vpop.f32.mrb[0].mxu0
      %v1817 = vadd.f32 0.0, %v1816
      %v1818 = vpop.f32.mrb[0].mxu0
      %1819 = vdwg.mxu0
      %v1820 = vadd.f32 %v1399, %v1694
      %v1821 = vadd.f32 %v1402, %v1697
      %v1822 = vadd.f32 %v1407, %v1702
      %v1823 = vadd.f32 %v1410, %v1705
      %v1824 = vadd.f32 %v1415, %v1710
      %v1825 = vadd.f32 %v1418, %v1713
      %v1826 = vadd.f32 %v1423, %v1718
      %v1827 = vadd.f32 %v1426, %v1721
      %v1828 = vadd.f32 %v1431, %v1726
      %v1829 = vadd.f32 %v1434, %v1729
      %v1830 = vadd.f32 %v1439, %v1734
      %v1831 = vadd.f32 %v1442, %v1737
      %v1832 = vadd.f32 %v1447, %v1742
      %v1833 = vadd.f32 %v1450, %v1745
      %v1834 = vadd.f32 %v1455, %v1750
      %v1835 = vadd.f32 %v1458, %v1753
      %v1836 = vadd.f32 %v1463, %v1758
      %v1837 = vadd.f32 %v1466, %v1761
      %v1838 = vadd.f32 %v1471, %v1766
      %v1839 = vadd.f32 %v1474, %v1769
      %v1840 = vadd.f32 %v1479, %v1774
      %v1841 = vadd.f32 %v1482, %v1777
      %v1842 = vadd.f32 %v1487, %v1782
      %v1843 = vadd.f32 %v1490, %v1785
      %v1844 = vadd.f32 %v1495, %v1790
      %v1845 = vadd.f32 %v1498, %v1793
      %v1846 = vadd.f32 %v1503, %v1798
      %v1847 = vadd.f32 %v1506, %v1801
      %v1848 = vadd.f32 %v1511, %v1806
      %v1849 = vadd.f32 %v1514, %v1809
      %v1850 = vadd.f32 %v1519, %v1814
      %v1851 = vadd.f32 %v1522, %v1817
      %s1852 = scalar_lea.vmem %s4, 6
      %v1853 = vld [vmem:[%s1852] sm:$0x3]
      %v1855 = vsel %vm1115, %v915, 0
      %v1858 = vsel %vm1164, %v1853, 0
      %1860 = vmatprep.subr.bf16.mxu0 0
      %1861 = vmatpush1.bf16.msra.mxu0 %v1858
      %1862 = vmatprep.subr.bf16.mxu0 0
      %1863 = vmatpush1.bf16.msra.mxu0 0
      %1864 = vmatprep.subr.bf16.mxu0 0
      %1865 = vmatpush1.bf16.msra.mxu0 0
      %1866 = vmatprep.subr.bf16.mxu0 0
      %1867 = vmatpush1.bf16.msra.mxu0 0
      %1868 = vmatprep.subr.bf16.mxu0 0
      %1869 = vmatpush1.bf16.msra.mxu0 0
      %1870 = vmatprep.subr.bf16.mxu0 0
      %1871 = vmatpush1.bf16.msra.mxu0 0
      %1872 = vmatprep.subr.bf16.mxu0 0
      %1873 = vmatpush1.bf16.msra.mxu0 0
      %1874 = vmatprep.subr.bf16.mxu0 0
      %1875 = vmatpush1.bf16.msra.mxu0 0
      %1876 = vmatprep.subr.bf16.mxu0 0
      %1877 = vmatpush1.bf16.msra.mxu0 0
      %1878 = vmatprep.subr.bf16.mxu0 0
      %1879 = vmatpush1.bf16.msra.mxu0 0
      %1880 = vmatprep.subr.bf16.mxu0 0
      %1881 = vmatpush1.bf16.msra.mxu0 0
      %1882 = vmatprep.subr.bf16.mxu0 0
      %1883 = vmatpush1.bf16.msra.mxu0 0
      %1884 = vmatprep.subr.bf16.mxu0 0
      %1885 = vmatpush1.bf16.msra.mxu0 0
      %1886 = vmatprep.subr.bf16.mxu0 0
      %1887 = vmatpush1.bf16.msra.mxu0 0
      %1888 = vmatprep.subr.bf16.mxu0 0
      %1889 = vmatpush1.bf16.msra.mxu0 0
      %1890 = vmatprep.subr.bf16.mxu0 0
      %1891 = vmatpush1.bf16.msra.mxu0 0
      %1892 = vmatprep.mubr.bf16.mxu0 0
      %1893 = vmatmul.mubr.bf16.gmra.mrb[0].mxu0 %v1331
      %v1894 = vpop.f32.mrb[0].mxu0
      %v1895 = vadd.f32 0.0, %v1894
      %v1896 = vpop.f32.mrb[0].mxu0
      %v1897 = vpop.f32.mrb[0].mxu0
      %v1898 = vadd.f32 0.0, %v1897
      %v1899 = vpop.f32.mrb[0].mxu0
      %1900 = vmatprep.mubr.bf16.mxu0 0
      %1901 = vmatmul.mubr.bf16.gmra.mrb[0].mxu0 %v1333
      %v1902 = vpop.f32.mrb[0].mxu0
      %v1903 = vadd.f32 0.0, %v1902
      %v1904 = vpop.f32.mrb[0].mxu0
      %v1905 = vpop.f32.mrb[0].mxu0
      %v1906 = vadd.f32 0.0, %v1905
      %v1907 = vpop.f32.mrb[0].mxu0
      %1908 = vmatprep.mubr.bf16.mxu0 0
      %1909 = vmatmul.mubr.bf16.gmra.mrb[0].mxu0 %v1335
      %v1910 = vpop.f32.mrb[0].mxu0
      %v1911 = vadd.f32 0.0, %v1910
      %v1912 = vpop.f32.mrb[0].mxu0
      %v1913 = vpop.f32.mrb[0].mxu0
      %v1914 = vadd.f32 0.0, %v1913
      %v1915 = vpop.f32.mrb[0].mxu0
      %1916 = vmatprep.mubr.bf16.mxu0 0
      %1917 = vmatmul.mubr.bf16.gmra.mrb[0].mxu0 %v1337
      %v1918 = vpop.f32.mrb[0].mxu0
      %v1919 = vadd.f32 0.0, %v1918
      %v1920 = vpop.f32.mrb[0].mxu0
      %v1921 = vpop.f32.mrb[0].mxu0
      %v1922 = vadd.f32 0.0, %v1921
      %v1923 = vpop.f32.mrb[0].mxu0
      %1924 = vmatprep.mubr.bf16.mxu0 0
      %1925 = vmatmul.mubr.bf16.gmra.mrb[0].mxu0 %v1339
      %v1926 = vpop.f32.mrb[0].mxu0
      %v1927 = vadd.f32 0.0, %v1926
      %v1928 = vpop.f32.mrb[0].mxu0
      %v1929 = vpop.f32.mrb[0].mxu0
      %v1930 = vadd.f32 0.0, %v1929
      %v1931 = vpop.f32.mrb[0].mxu0
      %1932 = vmatprep.mubr.bf16.mxu0 0
      %1933 = vmatmul.mubr.bf16.gmra.mrb[0].mxu0 %v1341
      %v1934 = vpop.f32.mrb[0].mxu0
      %v1935 = vadd.f32 0.0, %v1934
      %v1936 = vpop.f32.mrb[0].mxu0
      %v1937 = vpop.f32.mrb[0].mxu0
      %v1938 = vadd.f32 0.0, %v1937
      %v1939 = vpop.f32.mrb[0].mxu0
      %1940 = vmatprep.mubr.bf16.mxu0 0
      %1941 = vmatmul.mubr.bf16.gmra.mrb[0].mxu0 %v1343
      %v1942 = vpop.f32.mrb[0].mxu0
      %v1943 = vadd.f32 0.0, %v1942
      %v1944 = vpop.f32.mrb[0].mxu0
      %v1945 = vpop.f32.mrb[0].mxu0
      %v1946 = vadd.f32 0.0, %v1945
      %v1947 = vpop.f32.mrb[0].mxu0
      %1948 = vmatprep.mubr.bf16.mxu0 0
      %1949 = vmatmul.mubr.bf16.gmra.mrb[0].mxu0 %v1345
      %v1950 = vpop.f32.mrb[0].mxu0
      %v1951 = vadd.f32 0.0, %v1950
      %v1952 = vpop.f32.mrb[0].mxu0
      %v1953 = vpop.f32.mrb[0].mxu0
      %v1954 = vadd.f32 0.0, %v1953
      %v1955 = vpop.f32.mrb[0].mxu0
      %1956 = vmatprep.mubr.bf16.mxu0 0
      %1957 = vmatmul.mubr.bf16.gmra.mrb[0].mxu0 %v1347
      %v1958 = vpop.f32.mrb[0].mxu0
      %v1959 = vadd.f32 0.0, %v1958
      %v1960 = vpop.f32.mrb[0].mxu0
      %v1961 = vpop.f32.mrb[0].mxu0
      %v1962 = vadd.f32 0.0, %v1961
      %v1963 = vpop.f32.mrb[0].mxu0
      %1964 = vmatprep.mubr.bf16.mxu0 0
      %1965 = vmatmul.mubr.bf16.gmra.mrb[0].mxu0 %v1349
      %v1966 = vpop.f32.mrb[0].mxu0
      %v1967 = vadd.f32 0.0, %v1966
      %v1968 = vpop.f32.mrb[0].mxu0
      %v1969 = vpop.f32.mrb[0].mxu0
      %v1970 = vadd.f32 0.0, %v1969
      %v1971 = vpop.f32.mrb[0].mxu0
      %1972 = vmatprep.mubr.bf16.mxu0 0
      %1973 = vmatmul.mubr.bf16.gmra.mrb[0].mxu0 %v1351
      %v1974 = vpop.f32.mrb[0].mxu0
      %v1975 = vadd.f32 0.0, %v1974
      %v1976 = vpop.f32.mrb[0].mxu0
      %v1977 = vpop.f32.mrb[0].mxu0
      %v1978 = vadd.f32 0.0, %v1977
      %v1979 = vpop.f32.mrb[0].mxu0
      %1980 = vmatprep.mubr.bf16.mxu0 0
      %1981 = vmatmul.mubr.bf16.gmra.mrb[0].mxu0 %v1353
      %v1982 = vpop.f32.mrb[0].mxu0
      %v1983 = vadd.f32 0.0, %v1982
      %v1984 = vpop.f32.mrb[0].mxu0
      %v1985 = vpop.f32.mrb[0].mxu0
      %v1986 = vadd.f32 0.0, %v1985
      %v1987 = vpop.f32.mrb[0].mxu0
      %1988 = vmatprep.mubr.bf16.mxu0 0
      %1989 = vmatmul.mubr.bf16.gmra.mrb[0].mxu0 %v1355
      %v1990 = vpop.f32.mrb[0].mxu0
      %v1991 = vadd.f32 0.0, %v1990
      %v1992 = vpop.f32.mrb[0].mxu0
      %v1993 = vpop.f32.mrb[0].mxu0
      %v1994 = vadd.f32 0.0, %v1993
      %v1995 = vpop.f32.mrb[0].mxu0
      %1996 = vmatprep.mubr.bf16.mxu0 0
      %1997 = vmatmul.mubr.bf16.gmra.mrb[0].mxu0 %v1357
      %v1998 = vpop.f32.mrb[0].mxu0
      %v1999 = vadd.f32 0.0, %v1998
      %v2000 = vpop.f32.mrb[0].mxu0
      %v2001 = vpop.f32.mrb[0].mxu0
      %v2002 = vadd.f32 0.0, %v2001
      %v2003 = vpop.f32.mrb[0].mxu0
      %2004 = vmatprep.mubr.bf16.mxu0 0
      %2005 = vmatmul.mubr.bf16.gmra.mrb[0].mxu0 %v1359
      %v2006 = vpop.f32.mrb[0].mxu0
      %v2007 = vadd.f32 0.0, %v2006
      %v2008 = vpop.f32.mrb[0].mxu0
      %v2009 = vpop.f32.mrb[0].mxu0
      %v2010 = vadd.f32 0.0, %v2009
      %v2011 = vpop.f32.mrb[0].mxu0
      %2012 = vmatprep.mubr.bf16.mxu0 0
      %2013 = vmatmul.mubr.bf16.gmra.mrb[0].mxu0 %v1855
      %v2014 = vpop.f32.mrb[0].mxu0
      %v2015 = vadd.f32 0.0, %v2014
      %v2016 = vpop.f32.mrb[0].mxu0
      %v2017 = vpop.f32.mrb[0].mxu0
      %v2018 = vadd.f32 0.0, %v2017
      %v2019 = vpop.f32.mrb[0].mxu0
      %2020 = vdwg.mxu0
      %v2021 = vadd.f32 %v1820, %v1895
      %v2022 = vadd.f32 %v1821, %v1898
      %v2023 = vadd.f32 %v1822, %v1903
      %v2024 = vadd.f32 %v1823, %v1906
      %v2025 = vadd.f32 %v1824, %v1911
      %v2026 = vadd.f32 %v1825, %v1914
      %v2027 = vadd.f32 %v1826, %v1919
      %v2028 = vadd.f32 %v1827, %v1922
      %v2029 = vadd.f32 %v1828, %v1927
      %v2030 = vadd.f32 %v1829, %v1930
      %v2031 = vadd.f32 %v1830, %v1935
      %v2032 = vadd.f32 %v1831, %v1938
      %v2033 = vadd.f32 %v1832, %v1943
      %v2034 = vadd.f32 %v1833, %v1946
      %v2035 = vadd.f32 %v1834, %v1951
      %v2036 = vadd.f32 %v1835, %v1954
      %v2037 = vadd.f32 %v1836, %v1959
      %v2038 = vadd.f32 %v1837, %v1962
      %v2039 = vadd.f32 %v1838, %v1967
      %v2040 = vadd.f32 %v1839, %v1970
      %v2041 = vadd.f32 %v1840, %v1975
      %v2042 = vadd.f32 %v1841, %v1978
      %v2043 = vadd.f32 %v1842, %v1983
      %v2044 = vadd.f32 %v1843, %v1986
      %v2045 = vadd.f32 %v1844, %v1991
      %v2046 = vadd.f32 %v1845, %v1994
      %v2047 = vadd.f32 %v1846, %v1999
      %v2048 = vadd.f32 %v1847, %v2002
      %v2049 = vadd.f32 %v1848, %v2007
      %v2050 = vadd.f32 %v1849, %v2010
      %v2051 = vadd.f32 %v1850, %v2015
      %v2052 = vadd.f32 %v1851, %v2018
      %v2053 = vshrl.u32 %v915, 16
      %v2055 = vshll.u32 %v915, 16
      %v2057 = vrot.slane %v2055, 1
      %v2058 = vor.u32 %v2053, %v2057
      %v2060 = vshll.u32 %v916, 16
      %v2062 = vrot.slane %v2060, 1
      %v2063 = vsel %vm920, %v2058, %v2062
      %s2064 = scalar_lea.vmem %s4, 8
      %v2065 = vld [vmem:[%s2064] sm:$0x3]
      %v2067 = vsel %vm1115, %v2063, 0
      %v2070 = vsel %vm1164, %v2065, 0
      %2072 = vmatprep.subr.bf16.mxu0 0
      %2073 = vmatpush1.bf16.msra.mxu0 %v2070
      %2074 = vmatprep.subr.bf16.mxu0 0
      %2075 = vmatpush1.bf16.msra.mxu0 0
      %2076 = vmatprep.subr.bf16.mxu0 0
      %2077 = vmatpush1.bf16.msra.mxu0 0
      %2078 = vmatprep.subr.bf16.mxu0 0
      %2079 = vmatpush1.bf16.msra.mxu0 0
      %2080 = vmatprep.subr.bf16.mxu0 0
      %2081 = vmatpush1.bf16.msra.mxu0 0
      %2082 = vmatprep.subr.bf16.mxu0 0
      %2083 = vmatpush1.bf16.msra.mxu0 0
      %2084 = vmatprep.subr.bf16.mxu0 0
      %2085 = vmatpush1.bf16.msra.mxu0 0
      %2086 = vmatprep.subr.bf16.mxu0 0
      %2087 = vmatpush1.bf16.msra.mxu0 0
      %2088 = vmatprep.subr.bf16.mxu0 0
      %2089 = vmatpush1.bf16.msra.mxu0 0
      %2090 = vmatprep.subr.bf16.mxu0 0
      %2091 = vmatpush1.bf16.msra.mxu0 0
      %2092 = vmatprep.subr.bf16.mxu0 0
      %2093 = vmatpush1.bf16.msra.mxu0 0
      %2094 = vmatprep.subr.bf16.mxu0 0
      %2095 = vmatpush1.bf16.msra.mxu0 0
      %2096 = vmatprep.subr.bf16.mxu0 0
      %2097 = vmatpush1.bf16.msra.mxu0 0
      %2098 = vmatprep.subr.bf16.mxu0 0
      %2099 = vmatpush1.bf16.msra.mxu0 0
      %2100 = vmatprep.subr.bf16.mxu0 0
      %2101 = vmatpush1.bf16.msra.mxu0 0
      %2102 = vmatprep.subr.bf16.mxu0 0
      %2103 = vmatpush1.bf16.msra.mxu0 0
      %2104 = vmatprep.mubr.bf16.mxu0 0
      %2105 = vmatmul.mubr.bf16.gmra.mrb[0].mxu0 %v1120
      %v2106 = vpop.f32.mrb[0].mxu0
      %v2107 = vadd.f32 0.0, %v2106
      %v2108 = vpop.f32.mrb[0].mxu0
      %v2109 = vpop.f32.mrb[0].mxu0
      %v2110 = vadd.f32 0.0, %v2109
      %v2111 = vpop.f32.mrb[0].mxu0
      %2112 = vmatprep.mubr.bf16.mxu0 0
      %2113 = vmatmul.mubr.bf16.gmra.mrb[0].mxu0 %v1123
      %v2114 = vpop.f32.mrb[0].mxu0
      %v2115 = vadd.f32 0.0, %v2114
      %v2116 = vpop.f32.mrb[0].mxu0
      %v2117 = vpop.f32.mrb[0].mxu0
      %v2118 = vadd.f32 0.0, %v2117
      %v2119 = vpop.f32.mrb[0].mxu0
      %2120 = vmatprep.mubr.bf16.mxu0 0
      %2121 = vmatmul.mubr.bf16.gmra.mrb[0].mxu0 %v1126
      %v2122 = vpop.f32.mrb[0].mxu0
      %v2123 = vadd.f32 0.0, %v2122
      %v2124 = vpop.f32.mrb[0].mxu0
      %v2125 = vpop.f32.mrb[0].mxu0
      %v2126 = vadd.f32 0.0, %v2125
      %v2127 = vpop.f32.mrb[0].mxu0
      %2128 = vmatprep.mubr.bf16.mxu0 0
      %2129 = vmatmul.mubr.bf16.gmra.mrb[0].mxu0 %v1129
      %v2130 = vpop.f32.mrb[0].mxu0
      %v2131 = vadd.f32 0.0, %v2130
      %v2132 = vpop.f32.mrb[0].mxu0
      %v2133 = vpop.f32.mrb[0].mxu0
      %v2134 = vadd.f32 0.0, %v2133
      %v2135 = vpop.f32.mrb[0].mxu0
      %2136 = vmatprep.mubr.bf16.mxu0 0
      %2137 = vmatmul.mubr.bf16.gmra.mrb[0].mxu0 %v1132
      %v2138 = vpop.f32.mrb[0].mxu0
      %v2139 = vadd.f32 0.0, %v2138
      %v2140 = vpop.f32.mrb[0].mxu0
      %v2141 = vpop.f32.mrb[0].mxu0
      %v2142 = vadd.f32 0.0, %v2141
      %v2143 = vpop.f32.mrb[0].mxu0
      %2144 = vmatprep.mubr.bf16.mxu0 0
      %2145 = vmatmul.mubr.bf16.gmra.mrb[0].mxu0 %v1135
      %v2146 = vpop.f32.mrb[0].mxu0
      %v2147 = vadd.f32 0.0, %v2146
      %v2148 = vpop.f32.mrb[0].mxu0
      %v2149 = vpop.f32.mrb[0].mxu0
      %v2150 = vadd.f32 0.0, %v2149
      %v2151 = vpop.f32.mrb[0].mxu0
      %2152 = vmatprep.mubr.bf16.mxu0 0
      %2153 = vmatmul.mubr.bf16.gmra.mrb[0].mxu0 %v1138
      %v2154 = vpop.f32.mrb[0].mxu0
      %v2155 = vadd.f32 0.0, %v2154
      %v2156 = vpop.f32.mrb[0].mxu0
      %v2157 = vpop.f32.mrb[0].mxu0
      %v2158 = vadd.f32 0.0, %v2157
      %v2159 = vpop.f32.mrb[0].mxu0
      %2160 = vmatprep.mubr.bf16.mxu0 0
      %2161 = vmatmul.mubr.bf16.gmra.mrb[0].mxu0 %v1141
      %v2162 = vpop.f32.mrb[0].mxu0
      %v2163 = vadd.f32 0.0, %v2162
      %v2164 = vpop.f32.mrb[0].mxu0
      %v2165 = vpop.f32.mrb[0].mxu0
      %v2166 = vadd.f32 0.0, %v2165
      %v2167 = vpop.f32.mrb[0].mxu0
      %2168 = vmatprep.mubr.bf16.mxu0 0
      %2169 = vmatmul.mubr.bf16.gmra.mrb[0].mxu0 %v1144
      %v2170 = vpop.f32.mrb[0].mxu0
      %v2171 = vadd.f32 0.0, %v2170
      %v2172 = vpop.f32.mrb[0].mxu0
      %v2173 = vpop.f32.mrb[0].mxu0
      %v2174 = vadd.f32 0.0, %v2173
      %v2175 = vpop.f32.mrb[0].mxu0
      %2176 = vmatprep.mubr.bf16.mxu0 0
      %2177 = vmatmul.mubr.bf16.gmra.mrb[0].mxu0 %v1147
      %v2178 = vpop.f32.mrb[0].mxu0
      %v2179 = vadd.f32 0.0, %v2178
      %v2180 = vpop.f32.mrb[0].mxu0
      %v2181 = vpop.f32.mrb[0].mxu0
      %v2182 = vadd.f32 0.0, %v2181
      %v2183 = vpop.f32.mrb[0].mxu0
      %2184 = vmatprep.mubr.bf16.mxu0 0
      %2185 = vmatmul.mubr.bf16.gmra.mrb[0].mxu0 %v1150
      %v2186 = vpop.f32.mrb[0].mxu0
      %v2187 = vadd.f32 0.0, %v2186
      %v2188 = vpop.f32.mrb[0].mxu0
      %v2189 = vpop.f32.mrb[0].mxu0
      %v2190 = vadd.f32 0.0, %v2189
      %v2191 = vpop.f32.mrb[0].mxu0
      %2192 = vmatprep.mubr.bf16.mxu0 0
      %2193 = vmatmul.mubr.bf16.gmra.mrb[0].mxu0 %v1153
      %v2194 = vpop.f32.mrb[0].mxu0
      %v2195 = vadd.f32 0.0, %v2194
      %v2196 = vpop.f32.mrb[0].mxu0
      %v2197 = vpop.f32.mrb[0].mxu0
      %v2198 = vadd.f32 0.0, %v2197
      %v2199 = vpop.f32.mrb[0].mxu0
      %2200 = vmatprep.mubr.bf16.mxu0 0
      %2201 = vmatmul.mubr.bf16.gmra.mrb[0].mxu0 %v1156
      %v2202 = vpop.f32.mrb[0].mxu0
      %v2203 = vadd.f32 0.0, %v2202
      %v2204 = vpop.f32.mrb[0].mxu0
      %v2205 = vpop.f32.mrb[0].mxu0
      %v2206 = vadd.f32 0.0, %v2205
      %v2207 = vpop.f32.mrb[0].mxu0
      %2208 = vmatprep.mubr.bf16.mxu0 0
      %2209 = vmatmul.mubr.bf16.gmra.mrb[0].mxu0 %v1159
      %v2210 = vpop.f32.mrb[0].mxu0
      %v2211 = vadd.f32 0.0, %v2210
      %v2212 = vpop.f32.mrb[0].mxu0
      %v2213 = vpop.f32.mrb[0].mxu0
      %v2214 = vadd.f32 0.0, %v2213
      %v2215 = vpop.f32.mrb[0].mxu0
      %2216 = vmatprep.mubr.bf16.mxu0 0
      %2217 = vmatmul.mubr.bf16.gmra.mrb[0].mxu0 %v1162
      %v2218 = vpop.f32.mrb[0].mxu0
      %v2219 = vadd.f32 0.0, %v2218
      %v2220 = vpop.f32.mrb[0].mxu0
      %v2221 = vpop.f32.mrb[0].mxu0
      %v2222 = vadd.f32 0.0, %v2221
      %v2223 = vpop.f32.mrb[0].mxu0
      %2224 = vmatprep.mubr.bf16.mxu0 0
      %2225 = vmatmul.mubr.bf16.gmra.mrb[0].mxu0 %v2067
      %v2226 = vpop.f32.mrb[0].mxu0
      %v2227 = vadd.f32 0.0, %v2226
      %v2228 = vpop.f32.mrb[0].mxu0
      %v2229 = vpop.f32.mrb[0].mxu0
      %v2230 = vadd.f32 0.0, %v2229
      %v2231 = vpop.f32.mrb[0].mxu0
      %2232 = vdwg.mxu0
      %v2233 = vadd.f32 %v2021, %v2107
      %v2234 = vadd.f32 %v2022, %v2110
      %v2235 = vadd.f32 %v2023, %v2115
      %v2236 = vadd.f32 %v2024, %v2118
      %v2237 = vadd.f32 %v2025, %v2123
      %v2238 = vadd.f32 %v2026, %v2126
      %v2239 = vadd.f32 %v2027, %v2131
      %v2240 = vadd.f32 %v2028, %v2134
      %v2241 = vadd.f32 %v2029, %v2139
      %v2242 = vadd.f32 %v2030, %v2142
      %v2243 = vadd.f32 %v2031, %v2147
      %v2244 = vadd.f32 %v2032, %v2150
      %v2245 = vadd.f32 %v2033, %v2155
      %v2246 = vadd.f32 %v2034, %v2158
      %v2247 = vadd.f32 %v2035, %v2163
      %v2248 = vadd.f32 %v2036, %v2166
      %v2249 = vadd.f32 %v2037, %v2171
      %v2250 = vadd.f32 %v2038, %v2174
      %v2251 = vadd.f32 %v2039, %v2179
      %v2252 = vadd.f32 %v2040, %v2182
      %v2253 = vadd.f32 %v2041, %v2187
      %v2254 = vadd.f32 %v2042, %v2190
      %v2255 = vadd.f32 %v2043, %v2195
      %v2256 = vadd.f32 %v2044, %v2198
      %v2257 = vadd.f32 %v2045, %v2203
      %v2258 = vadd.f32 %v2046, %v2206
      %v2259 = vadd.f32 %v2047, %v2211
      %v2260 = vadd.f32 %v2048, %v2214
      %v2261 = vadd.f32 %v2049, %v2219
      %v2262 = vadd.f32 %v2050, %v2222
      %v2263 = vadd.f32 %v2051, %v2227
      %v2264 = vadd.f32 %v2052, %v2230
      %v2267 = vrot.slane %v915, 1
      %v2268 = vrot.slane %v916, 1
      %v2269 = vsel %vm1557, %v2267, %v2268
      %s2270 = scalar_lea.vmem %s4, 10
      %v2271 = vld [vmem:[%s2270] sm:$0x3]
      %v2273 = vsel %vm1115, %v2269, 0
      %v2276 = vsel %vm1164, %v2271, 0
      %2278 = vmatprep.subr.bf16.mxu0 0
      %2279 = vmatpush1.bf16.msra.mxu0 %v2276
      %2280 = vmatprep.subr.bf16.mxu0 0
      %2281 = vmatpush1.bf16.msra.mxu0 0
      %2282 = vmatprep.subr.bf16.mxu0 0
      %2283 = vmatpush1.bf16.msra.mxu0 0
      %2284 = vmatprep.subr.bf16.mxu0 0
      %2285 = vmatpush1.bf16.msra.mxu0 0
      %2286 = vmatprep.subr.bf16.mxu0 0
      %2287 = vmatpush1.bf16.msra.mxu0 0
      %2288 = vmatprep.subr.bf16.mxu0 0
      %2289 = vmatpush1.bf16.msra.mxu0 0
      %2290 = vmatprep.subr.bf16.mxu0 0
      %2291 = vmatpush1.bf16.msra.mxu0 0
      %2292 = vmatprep.subr.bf16.mxu0 0
      %2293 = vmatpush1.bf16.msra.mxu0 0
      %2294 = vmatprep.subr.bf16.mxu0 0
      %2295 = vmatpush1.bf16.msra.mxu0 0
      %2296 = vmatprep.subr.bf16.mxu0 0
      %2297 = vmatpush1.bf16.msra.mxu0 0
      %2298 = vmatprep.subr.bf16.mxu0 0
      %2299 = vmatpush1.bf16.msra.mxu0 0
      %2300 = vmatprep.subr.bf16.mxu0 0
      %2301 = vmatpush1.bf16.msra.mxu0 0
      %2302 = vmatprep.subr.bf16.mxu0 0
      %2303 = vmatpush1.bf16.msra.mxu0 0
      %2304 = vmatprep.subr.bf16.mxu0 0
      %2305 = vmatpush1.bf16.msra.mxu0 0
      %2306 = vmatprep.subr.bf16.mxu0 0
      %2307 = vmatpush1.bf16.msra.mxu0 0
      %2308 = vmatprep.subr.bf16.mxu0 0
      %2309 = vmatpush1.bf16.msra.mxu0 0
      %2310 = vmatprep.mubr.bf16.mxu0 0
      %2311 = vmatmul.mubr.bf16.gmra.mrb[0].mxu0 %v1612
      %v2312 = vpop.f32.mrb[0].mxu0
      %v2313 = vadd.f32 0.0, %v2312
      %v2314 = vpop.f32.mrb[0].mxu0
      %v2315 = vpop.f32.mrb[0].mxu0
      %v2316 = vadd.f32 0.0, %v2315
      %v2317 = vpop.f32.mrb[0].mxu0
      %2318 = vmatprep.mubr.bf16.mxu0 0
      %2319 = vmatmul.mubr.bf16.gmra.mrb[0].mxu0 %v1615
      %v2320 = vpop.f32.mrb[0].mxu0
      %v2321 = vadd.f32 0.0, %v2320
      %v2322 = vpop.f32.mrb[0].mxu0
      %v2323 = vpop.f32.mrb[0].mxu0
      %v2324 = vadd.f32 0.0, %v2323
      %v2325 = vpop.f32.mrb[0].mxu0
      %2326 = vmatprep.mubr.bf16.mxu0 0
      %2327 = vmatmul.mubr.bf16.gmra.mrb[0].mxu0 %v1618
      %v2328 = vpop.f32.mrb[0].mxu0
      %v2329 = vadd.f32 0.0, %v2328
      %v2330 = vpop.f32.mrb[0].mxu0
      %v2331 = vpop.f32.mrb[0].mxu0
      %v2332 = vadd.f32 0.0, %v2331
      %v2333 = vpop.f32.mrb[0].mxu0
      %2334 = vmatprep.mubr.bf16.mxu0 0
      %2335 = vmatmul.mubr.bf16.gmra.mrb[0].mxu0 %v1621
      %v2336 = vpop.f32.mrb[0].mxu0
      %v2337 = vadd.f32 0.0, %v2336
      %v2338 = vpop.f32.mrb[0].mxu0
      %v2339 = vpop.f32.mrb[0].mxu0
      %v2340 = vadd.f32 0.0, %v2339
      %v2341 = vpop.f32.mrb[0].mxu0
      %2342 = vmatprep.mubr.bf16.mxu0 0
      %2343 = vmatmul.mubr.bf16.gmra.mrb[0].mxu0 %v1624
      %v2344 = vpop.f32.mrb[0].mxu0
      %v2345 = vadd.f32 0.0, %v2344
      %v2346 = vpop.f32.mrb[0].mxu0
      %v2347 = vpop.f32.mrb[0].mxu0
      %v2348 = vadd.f32 0.0, %v2347
      %v2349 = vpop.f32.mrb[0].mxu0
      %2350 = vmatprep.mubr.bf16.mxu0 0
      %2351 = vmatmul.mubr.bf16.gmra.mrb[0].mxu0 %v1627
      %v2352 = vpop.f32.mrb[0].mxu0
      %v2353 = vadd.f32 0.0, %v2352
      %v2354 = vpop.f32.mrb[0].mxu0
      %v2355 = vpop.f32.mrb[0].mxu0
      %v2356 = vadd.f32 0.0, %v2355
      %v2357 = vpop.f32.mrb[0].mxu0
      %2358 = vmatprep.mubr.bf16.mxu0 0
      %2359 = vmatmul.mubr.bf16.gmra.mrb[0].mxu0 %v1630
      %v2360 = vpop.f32.mrb[0].mxu0
      %v2361 = vadd.f32 0.0, %v2360
      %v2362 = vpop.f32.mrb[0].mxu0
      %v2363 = vpop.f32.mrb[0].mxu0
      %v2364 = vadd.f32 0.0, %v2363
      %v2365 = vpop.f32.mrb[0].mxu0
      %2366 = vmatprep.mubr.bf16.mxu0 0
      %2367 = vmatmul.mubr.bf16.gmra.mrb[0].mxu0 %v1633
      %v2368 = vpop.f32.mrb[0].mxu0
      %v2369 = vadd.f32 0.0, %v2368
      %v2370 = vpop.f32.mrb[0].mxu0
      %v2371 = vpop.f32.mrb[0].mxu0
      %v2372 = vadd.f32 0.0, %v2371
      %v2373 = vpop.f32.mrb[0].mxu0
      %2374 = vmatprep.mubr.bf16.mxu0 0
      %2375 = vmatmul.mubr.bf16.gmra.mrb[0].mxu0 %v1636
      %v2376 = vpop.f32.mrb[0].mxu0
      %v2377 = vadd.f32 0.0, %v2376
      %v2378 = vpop.f32.mrb[0].mxu0
      %v2379 = vpop.f32.mrb[0].mxu0
      %v2380 = vadd.f32 0.0, %v2379
      %v2381 = vpop.f32.mrb[0].mxu0
      %2382 = vmatprep.mubr.bf16.mxu0 0
      %2383 = vmatmul.mubr.bf16.gmra.mrb[0].mxu0 %v1639
      %v2384 = vpop.f32.mrb[0].mxu0
      %v2385 = vadd.f32 0.0, %v2384
      %v2386 = vpop.f32.mrb[0].mxu0
      %v2387 = vpop.f32.mrb[0].mxu0
      %v2388 = vadd.f32 0.0, %v2387
      %v2389 = vpop.f32.mrb[0].mxu0
      %2390 = vmatprep.mubr.bf16.mxu0 0
      %2391 = vmatmul.mubr.bf16.gmra.mrb[0].mxu0 %v1642
      %v2392 = vpop.f32.mrb[0].mxu0
      %v2393 = vadd.f32 0.0, %v2392
      %v2394 = vpop.f32.mrb[0].mxu0
      %v2395 = vpop.f32.mrb[0].mxu0
      %v2396 = vadd.f32 0.0, %v2395
      %v2397 = vpop.f32.mrb[0].mxu0
      %2398 = vmatprep.mubr.bf16.mxu0 0
      %2399 = vmatmul.mubr.bf16.gmra.mrb[0].mxu0 %v1645
      %v2400 = vpop.f32.mrb[0].mxu0
      %v2401 = vadd.f32 0.0, %v2400
      %v2402 = vpop.f32.mrb[0].mxu0
      %v2403 = vpop.f32.mrb[0].mxu0
      %v2404 = vadd.f32 0.0, %v2403
      %v2405 = vpop.f32.mrb[0].mxu0
      %2406 = vmatprep.mubr.bf16.mxu0 0
      %2407 = vmatmul.mubr.bf16.gmra.mrb[0].mxu0 %v1648
      %v2408 = vpop.f32.mrb[0].mxu0
      %v2409 = vadd.f32 0.0, %v2408
      %v2410 = vpop.f32.mrb[0].mxu0
      %v2411 = vpop.f32.mrb[0].mxu0
      %v2412 = vadd.f32 0.0, %v2411
      %v2413 = vpop.f32.mrb[0].mxu0
      %2414 = vmatprep.mubr.bf16.mxu0 0
      %2415 = vmatmul.mubr.bf16.gmra.mrb[0].mxu0 %v1651
      %v2416 = vpop.f32.mrb[0].mxu0
      %v2417 = vadd.f32 0.0, %v2416
      %v2418 = vpop.f32.mrb[0].mxu0
      %v2419 = vpop.f32.mrb[0].mxu0
      %v2420 = vadd.f32 0.0, %v2419
      %v2421 = vpop.f32.mrb[0].mxu0
      %2422 = vmatprep.mubr.bf16.mxu0 0
      %2423 = vmatmul.mubr.bf16.gmra.mrb[0].mxu0 %v1654
      %v2424 = vpop.f32.mrb[0].mxu0
      %v2425 = vadd.f32 0.0, %v2424
      %v2426 = vpop.f32.mrb[0].mxu0
      %v2427 = vpop.f32.mrb[0].mxu0
      %v2428 = vadd.f32 0.0, %v2427
      %v2429 = vpop.f32.mrb[0].mxu0
      %2430 = vmatprep.mubr.bf16.mxu0 0
      %2431 = vmatmul.mubr.bf16.gmra.mrb[0].mxu0 %v2273
      %v2432 = vpop.f32.mrb[0].mxu0
      %v2433 = vadd.f32 0.0, %v2432
      %v2434 = vpop.f32.mrb[0].mxu0
      %v2435 = vpop.f32.mrb[0].mxu0
      %v2436 = vadd.f32 0.0, %v2435
      %v2437 = vpop.f32.mrb[0].mxu0
      %2438 = vdwg.mxu0
      %v2439 = vadd.f32 %v2233, %v2313
      %v2440 = vadd.f32 %v2234, %v2316
      %v2441 = vadd.f32 %v2235, %v2321
      %v2442 = vadd.f32 %v2236, %v2324
      %v2443 = vadd.f32 %v2237, %v2329
      %v2444 = vadd.f32 %v2238, %v2332
      %v2445 = vadd.f32 %v2239, %v2337
      %v2446 = vadd.f32 %v2240, %v2340
      %v2447 = vadd.f32 %v2241, %v2345
      %v2448 = vadd.f32 %v2242, %v2348
      %v2449 = vadd.f32 %v2243, %v2353
      %v2450 = vadd.f32 %v2244, %v2356
      %v2451 = vadd.f32 %v2245, %v2361
      %v2452 = vadd.f32 %v2246, %v2364
      %v2453 = vadd.f32 %v2247, %v2369
      %v2454 = vadd.f32 %v2248, %v2372
      %v2455 = vadd.f32 %v2249, %v2377
      %v2456 = vadd.f32 %v2250, %v2380
      %v2457 = vadd.f32 %v2251, %v2385
      %v2458 = vadd.f32 %v2252, %v2388
      %v2459 = vadd.f32 %v2253, %v2393
      %v2460 = vadd.f32 %v2254, %v2396
      %v2461 = vadd.f32 %v2255, %v2401
      %v2462 = vadd.f32 %v2256, %v2404
      %v2463 = vadd.f32 %v2257, %v2409
      %v2464 = vadd.f32 %v2258, %v2412
      %v2465 = vadd.f32 %v2259, %v2417
      %v2466 = vadd.f32 %v2260, %v2420
      %v2467 = vadd.f32 %v2261, %v2425
      %v2468 = vadd.f32 %v2262, %v2428
      %v2469 = vadd.f32 %v2263, %v2433
      %v2470 = vadd.f32 %v2264, %v2436
      %s2471 = scalar_lea.vmem %s4, 12
      %v2472 = vld [vmem:[%s2471] sm:$0x3]
      %v2474 = vsel %vm1115, %v917, 0
      %v2477 = vsel %vm1164, %v2472, 0
      %2479 = vmatprep.subr.bf16.mxu0 0
      %2480 = vmatpush1.bf16.msra.mxu0 %v2477
      %2481 = vmatprep.subr.bf16.mxu0 0
      %2482 = vmatpush1.bf16.msra.mxu0 0
      %2483 = vmatprep.subr.bf16.mxu0 0
      %2484 = vmatpush1.bf16.msra.mxu0 0
      %2485 = vmatprep.subr.bf16.mxu0 0
      %2486 = vmatpush1.bf16.msra.mxu0 0
      %2487 = vmatprep.subr.bf16.mxu0 0
      %2488 = vmatpush1.bf16.msra.mxu0 0
      %2489 = vmatprep.subr.bf16.mxu0 0
      %2490 = vmatpush1.bf16.msra.mxu0 0
      %2491 = vmatprep.subr.bf16.mxu0 0
      %2492 = vmatpush1.bf16.msra.mxu0 0
      %2493 = vmatprep.subr.bf16.mxu0 0
      %2494 = vmatpush1.bf16.msra.mxu0 0
      %2495 = vmatprep.subr.bf16.mxu0 0
      %2496 = vmatpush1.bf16.msra.mxu0 0
      %2497 = vmatprep.subr.bf16.mxu0 0
      %2498 = vmatpush1.bf16.msra.mxu0 0
      %2499 = vmatprep.subr.bf16.mxu0 0
      %2500 = vmatpush1.bf16.msra.mxu0 0
      %2501 = vmatprep.subr.bf16.mxu0 0
      %2502 = vmatpush1.bf16.msra.mxu0 0
      %2503 = vmatprep.subr.bf16.mxu0 0
      %2504 = vmatpush1.bf16.msra.mxu0 0
      %2505 = vmatprep.subr.bf16.mxu0 0
      %2506 = vmatpush1.bf16.msra.mxu0 0
      %2507 = vmatprep.subr.bf16.mxu0 0
      %2508 = vmatpush1.bf16.msra.mxu0 0
      %2509 = vmatprep.subr.bf16.mxu0 0
      %2510 = vmatpush1.bf16.msra.mxu0 0
      %2511 = vmatprep.mubr.bf16.mxu0 0
      %2512 = vmatmul.mubr.bf16.gmra.mrb[0].mxu0 %v1333
      %v2513 = vpop.f32.mrb[0].mxu0
      %v2514 = vadd.f32 0.0, %v2513
      %v2515 = vpop.f32.mrb[0].mxu0
      %v2516 = vpop.f32.mrb[0].mxu0
      %v2517 = vadd.f32 0.0, %v2516
      %v2518 = vpop.f32.mrb[0].mxu0
      %2519 = vmatprep.mubr.bf16.mxu0 0
      %2520 = vmatmul.mubr.bf16.gmra.mrb[0].mxu0 %v1335
      %v2521 = vpop.f32.mrb[0].mxu0
      %v2522 = vadd.f32 0.0, %v2521
      %v2523 = vpop.f32.mrb[0].mxu0
      %v2524 = vpop.f32.mrb[0].mxu0
      %v2525 = vadd.f32 0.0, %v2524
      %v2526 = vpop.f32.mrb[0].mxu0
      %2527 = vmatprep.mubr.bf16.mxu0 0
      %2528 = vmatmul.mubr.bf16.gmra.mrb[0].mxu0 %v1337
      %v2529 = vpop.f32.mrb[0].mxu0
      %v2530 = vadd.f32 0.0, %v2529
      %v2531 = vpop.f32.mrb[0].mxu0
      %v2532 = vpop.f32.mrb[0].mxu0
      %v2533 = vadd.f32 0.0, %v2532
      %v2534 = vpop.f32.mrb[0].mxu0
      %2535 = vmatprep.mubr.bf16.mxu0 0
      %2536 = vmatmul.mubr.bf16.gmra.mrb[0].mxu0 %v1339
      %v2537 = vpop.f32.mrb[0].mxu0
      %v2538 = vadd.f32 0.0, %v2537
      %v2539 = vpop.f32.mrb[0].mxu0
      %v2540 = vpop.f32.mrb[0].mxu0
      %v2541 = vadd.f32 0.0, %v2540
      %v2542 = vpop.f32.mrb[0].mxu0
      %2543 = vmatprep.mubr.bf16.mxu0 0
      %2544 = vmatmul.mubr.bf16.gmra.mrb[0].mxu0 %v1341
      %v2545 = vpop.f32.mrb[0].mxu0
      %v2546 = vadd.f32 0.0, %v2545
      %v2547 = vpop.f32.mrb[0].mxu0
      %v2548 = vpop.f32.mrb[0].mxu0
      %v2549 = vadd.f32 0.0, %v2548
      %v2550 = vpop.f32.mrb[0].mxu0
      %2551 = vmatprep.mubr.bf16.mxu0 0
      %2552 = vmatmul.mubr.bf16.gmra.mrb[0].mxu0 %v1343
      %v2553 = vpop.f32.mrb[0].mxu0
      %v2554 = vadd.f32 0.0, %v2553
      %v2555 = vpop.f32.mrb[0].mxu0
      %v2556 = vpop.f32.mrb[0].mxu0
      %v2557 = vadd.f32 0.0, %v2556
      %v2558 = vpop.f32.mrb[0].mxu0
      %2559 = vmatprep.mubr.bf16.mxu0 0
      %2560 = vmatmul.mubr.bf16.gmra.mrb[0].mxu0 %v1345
      %v2561 = vpop.f32.mrb[0].mxu0
      %v2562 = vadd.f32 0.0, %v2561
      %v2563 = vpop.f32.mrb[0].mxu0
      %v2564 = vpop.f32.mrb[0].mxu0
      %v2565 = vadd.f32 0.0, %v2564
      %v2566 = vpop.f32.mrb[0].mxu0
      %2567 = vmatprep.mubr.bf16.mxu0 0
      %2568 = vmatmul.mubr.bf16.gmra.mrb[0].mxu0 %v1347
      %v2569 = vpop.f32.mrb[0].mxu0
      %v2570 = vadd.f32 0.0, %v2569
      %v2571 = vpop.f32.mrb[0].mxu0
      %v2572 = vpop.f32.mrb[0].mxu0
      %v2573 = vadd.f32 0.0, %v2572
      %v2574 = vpop.f32.mrb[0].mxu0
      %2575 = vmatprep.mubr.bf16.mxu0 0
      %2576 = vmatmul.mubr.bf16.gmra.mrb[0].mxu0 %v1349
      %v2577 = vpop.f32.mrb[0].mxu0
      %v2578 = vadd.f32 0.0, %v2577
      %v2579 = vpop.f32.mrb[0].mxu0
      %v2580 = vpop.f32.mrb[0].mxu0
      %v2581 = vadd.f32 0.0, %v2580
      %v2582 = vpop.f32.mrb[0].mxu0
      %2583 = vmatprep.mubr.bf16.mxu0 0
      %2584 = vmatmul.mubr.bf16.gmra.mrb[0].mxu0 %v1351
      %v2585 = vpop.f32.mrb[0].mxu0
      %v2586 = vadd.f32 0.0, %v2585
      %v2587 = vpop.f32.mrb[0].mxu0
      %v2588 = vpop.f32.mrb[0].mxu0
      %v2589 = vadd.f32 0.0, %v2588
      %v2590 = vpop.f32.mrb[0].mxu0
      %2591 = vmatprep.mubr.bf16.mxu0 0
      %2592 = vmatmul.mubr.bf16.gmra.mrb[0].mxu0 %v1353
      %v2593 = vpop.f32.mrb[0].mxu0
      %v2594 = vadd.f32 0.0, %v2593
      %v2595 = vpop.f32.mrb[0].mxu0
      %v2596 = vpop.f32.mrb[0].mxu0
      %v2597 = vadd.f32 0.0, %v2596
      %v2598 = vpop.f32.mrb[0].mxu0
      %2599 = vmatprep.mubr.bf16.mxu0 0
      %2600 = vmatmul.mubr.bf16.gmra.mrb[0].mxu0 %v1355
      %v2601 = vpop.f32.mrb[0].mxu0
      %v2602 = vadd.f32 0.0, %v2601
      %v2603 = vpop.f32.mrb[0].mxu0
      %v2604 = vpop.f32.mrb[0].mxu0
      %v2605 = vadd.f32 0.0, %v2604
      %v2606 = vpop.f32.mrb[0].mxu0
      %2607 = vmatprep.mubr.bf16.mxu0 0
      %2608 = vmatmul.mubr.bf16.gmra.mrb[0].mxu0 %v1357
      %v2609 = vpop.f32.mrb[0].mxu0
      %v2610 = vadd.f32 0.0, %v2609
      %v2611 = vpop.f32.mrb[0].mxu0
      %v2612 = vpop.f32.mrb[0].mxu0
      %v2613 = vadd.f32 0.0, %v2612
      %v2614 = vpop.f32.mrb[0].mxu0
      %2615 = vmatprep.mubr.bf16.mxu0 0
      %2616 = vmatmul.mubr.bf16.gmra.mrb[0].mxu0 %v1359
      %v2617 = vpop.f32.mrb[0].mxu0
      %v2618 = vadd.f32 0.0, %v2617
      %v2619 = vpop.f32.mrb[0].mxu0
      %v2620 = vpop.f32.mrb[0].mxu0
      %v2621 = vadd.f32 0.0, %v2620
      %v2622 = vpop.f32.mrb[0].mxu0
      %2623 = vmatprep.mubr.bf16.mxu0 0
      %2624 = vmatmul.mubr.bf16.gmra.mrb[0].mxu0 %v1855
      %v2625 = vpop.f32.mrb[0].mxu0
      %v2626 = vadd.f32 0.0, %v2625
      %v2627 = vpop.f32.mrb[0].mxu0
      %v2628 = vpop.f32.mrb[0].mxu0
      %v2629 = vadd.f32 0.0, %v2628
      %v2630 = vpop.f32.mrb[0].mxu0
      %2631 = vmatprep.mubr.bf16.mxu0 0
      %2632 = vmatmul.mubr.bf16.gmra.mrb[0].mxu0 %v2474
      %v2633 = vpop.f32.mrb[0].mxu0
      %v2634 = vadd.f32 0.0, %v2633
      %v2635 = vpop.f32.mrb[0].mxu0
      %v2636 = vpop.f32.mrb[0].mxu0
      %v2637 = vadd.f32 0.0, %v2636
      %v2638 = vpop.f32.mrb[0].mxu0
      %2639 = vdwg.mxu0
      %v2640 = vadd.f32 %v2439, %v2514
      %v2641 = vadd.f32 %v2440, %v2517
      %v2642 = vadd.f32 %v2441, %v2522
      %v2643 = vadd.f32 %v2442, %v2525
      %v2644 = vadd.f32 %v2443, %v2530
      %v2645 = vadd.f32 %v2444, %v2533
      %v2646 = vadd.f32 %v2445, %v2538
      %v2647 = vadd.f32 %v2446, %v2541
      %v2648 = vadd.f32 %v2447, %v2546
      %v2649 = vadd.f32 %v2448, %v2549
      %v2650 = vadd.f32 %v2449, %v2554
      %v2651 = vadd.f32 %v2450, %v2557
      %v2652 = vadd.f32 %v2451, %v2562
      %v2653 = vadd.f32 %v2452, %v2565
      %v2654 = vadd.f32 %v2453, %v2570
      %v2655 = vadd.f32 %v2454, %v2573
      %v2656 = vadd.f32 %v2455, %v2578
      %v2657 = vadd.f32 %v2456, %v2581
      %v2658 = vadd.f32 %v2457, %v2586
      %v2659 = vadd.f32 %v2458, %v2589
      %v2660 = vadd.f32 %v2459, %v2594
      %v2661 = vadd.f32 %v2460, %v2597
      %v2662 = vadd.f32 %v2461, %v2602
      %v2663 = vadd.f32 %v2462, %v2605
      %v2664 = vadd.f32 %v2463, %v2610
      %v2665 = vadd.f32 %v2464, %v2613
      %v2666 = vadd.f32 %v2465, %v2618
      %v2667 = vadd.f32 %v2466, %v2621
      %v2668 = vadd.f32 %v2467, %v2626
      %v2669 = vadd.f32 %v2468, %v2629
      %v2670 = vadd.f32 %v2469, %v2634
      %v2671 = vadd.f32 %v2470, %v2637
      %v2672 = vshrl.u32 %v917, 16
      %v2674 = vshll.u32 %v917, 16
      %v2676 = vrot.slane %v2674, 1
      %v2677 = vor.u32 %v2672, %v2676
      %v2679 = vshll.u32 %v918, 16
      %v2681 = vrot.slane %v2679, 1
      %v2682 = vsel %vm920, %v2677, %v2681
      %s2683 = scalar_lea.vmem %s4, 14
      %v2684 = vld [vmem:[%s2683] sm:$0x3]
      %v2686 = vsel %vm1115, %v2682, 0
      %v2689 = vsel %vm1164, %v2684, 0
      %2691 = vmatprep.subr.bf16.mxu0 0
      %2692 = vmatpush1.bf16.msra.mxu0 %v2689
      %2693 = vmatprep.subr.bf16.mxu0 0
      %2694 = vmatpush1.bf16.msra.mxu0 0
      %2695 = vmatprep.subr.bf16.mxu0 0
      %2696 = vmatpush1.bf16.msra.mxu0 0
      %2697 = vmatprep.subr.bf16.mxu0 0
      %2698 = vmatpush1.bf16.msra.mxu0 0
      %2699 = vmatprep.subr.bf16.mxu0 0
      %2700 = vmatpush1.bf16.msra.mxu0 0
      %2701 = vmatprep.subr.bf16.mxu0 0
      %2702 = vmatpush1.bf16.msra.mxu0 0
      %2703 = vmatprep.subr.bf16.mxu0 0
      %2704 = vmatpush1.bf16.msra.mxu0 0
      %2705 = vmatprep.subr.bf16.mxu0 0
      %2706 = vmatpush1.bf16.msra.mxu0 0
      %2707 = vmatprep.subr.bf16.mxu0 0
      %2708 = vmatpush1.bf16.msra.mxu0 0
      %2709 = vmatprep.subr.bf16.mxu0 0
      %2710 = vmatpush1.bf16.msra.mxu0 0
      %2711 = vmatprep.subr.bf16.mxu0 0
      %2712 = vmatpush1.bf16.msra.mxu0 0
      %2713 = vmatprep.subr.bf16.mxu0 0
      %2714 = vmatpush1.bf16.msra.mxu0 0
      %2715 = vmatprep.subr.bf16.mxu0 0
      %2716 = vmatpush1.bf16.msra.mxu0 0
      %2717 = vmatprep.subr.bf16.mxu0 0
      %2718 = vmatpush1.bf16.msra.mxu0 0
      %2719 = vmatprep.subr.bf16.mxu0 0
      %2720 = vmatpush1.bf16.msra.mxu0 0
      %2721 = vmatprep.subr.bf16.mxu0 0
      %2722 = vmatpush1.bf16.msra.mxu0 0
      %2723 = vmatprep.mubr.bf16.mxu0 0
      %2724 = vmatmul.mubr.bf16.gmra.mrb[0].mxu0 %v1123
      %v2725 = vpop.f32.mrb[0].mxu0
      %v2726 = vadd.f32 0.0, %v2725
      %v2727 = vpop.f32.mrb[0].mxu0
      %v2728 = vpop.f32.mrb[0].mxu0
      %v2729 = vadd.f32 0.0, %v2728
      %v2730 = vpop.f32.mrb[0].mxu0
      %2731 = vmatprep.mubr.bf16.mxu0 0
      %2732 = vmatmul.mubr.bf16.gmra.mrb[0].mxu0 %v1126
      %v2733 = vpop.f32.mrb[0].mxu0
      %v2734 = vadd.f32 0.0, %v2733
      %v2735 = vpop.f32.mrb[0].mxu0
      %v2736 = vpop.f32.mrb[0].mxu0
      %v2737 = vadd.f32 0.0, %v2736
      %v2738 = vpop.f32.mrb[0].mxu0
      %2739 = vmatprep.mubr.bf16.mxu0 0
      %2740 = vmatmul.mubr.bf16.gmra.mrb[0].mxu0 %v1129
      %v2741 = vpop.f32.mrb[0].mxu0
      %v2742 = vadd.f32 0.0, %v2741
      %v2743 = vpop.f32.mrb[0].mxu0
      %v2744 = vpop.f32.mrb[0].mxu0
      %v2745 = vadd.f32 0.0, %v2744
      %v2746 = vpop.f32.mrb[0].mxu0
      %2747 = vmatprep.mubr.bf16.mxu0 0
      %2748 = vmatmul.mubr.bf16.gmra.mrb[0].mxu0 %v1132
      %v2749 = vpop.f32.mrb[0].mxu0
      %v2750 = vadd.f32 0.0, %v2749
      %v2751 = vpop.f32.mrb[0].mxu0
      %v2752 = vpop.f32.mrb[0].mxu0
      %v2753 = vadd.f32 0.0, %v2752
      %v2754 = vpop.f32.mrb[0].mxu0
      %2755 = vmatprep.mubr.bf16.mxu0 0
      %2756 = vmatmul.mubr.bf16.gmra.mrb[0].mxu0 %v1135
      %v2757 = vpop.f32.mrb[0].mxu0
      %v2758 = vadd.f32 0.0, %v2757
      %v2759 = vpop.f32.mrb[0].mxu0
      %v2760 = vpop.f32.mrb[0].mxu0
      %v2761 = vadd.f32 0.0, %v2760
      %v2762 = vpop.f32.mrb[0].mxu0
      %2763 = vmatprep.mubr.bf16.mxu0 0
      %2764 = vmatmul.mubr.bf16.gmra.mrb[0].mxu0 %v1138
      %v2765 = vpop.f32.mrb[0].mxu0
      %v2766 = vadd.f32 0.0, %v2765
      %v2767 = vpop.f32.mrb[0].mxu0
      %v2768 = vpop.f32.mrb[0].mxu0
      %v2769 = vadd.f32 0.0, %v2768
      %v2770 = vpop.f32.mrb[0].mxu0
      %2771 = vmatprep.mubr.bf16.mxu0 0
      %2772 = vmatmul.mubr.bf16.gmra.mrb[0].mxu0 %v1141
      %v2773 = vpop.f32.mrb[0].mxu0
      %v2774 = vadd.f32 0.0, %v2773
      %v2775 = vpop.f32.mrb[0].mxu0
      %v2776 = vpop.f32.mrb[0].mxu0
      %v2777 = vadd.f32 0.0, %v2776
      %v2778 = vpop.f32.mrb[0].mxu0
      %2779 = vmatprep.mubr.bf16.mxu0 0
      %2780 = vmatmul.mubr.bf16.gmra.mrb[0].mxu0 %v1144
      %v2781 = vpop.f32.mrb[0].mxu0
      %v2782 = vadd.f32 0.0, %v2781
      %v2783 = vpop.f32.mrb[0].mxu0
      %v2784 = vpop.f32.mrb[0].mxu0
      %v2785 = vadd.f32 0.0, %v2784
      %v2786 = vpop.f32.mrb[0].mxu0
      %2787 = vmatprep.mubr.bf16.mxu0 0
      %2788 = vmatmul.mubr.bf16.gmra.mrb[0].mxu0 %v1147
      %v2789 = vpop.f32.mrb[0].mxu0
      %v2790 = vadd.f32 0.0, %v2789
      %v2791 = vpop.f32.mrb[0].mxu0
      %v2792 = vpop.f32.mrb[0].mxu0
      %v2793 = vadd.f32 0.0, %v2792
      %v2794 = vpop.f32.mrb[0].mxu0
      %2795 = vmatprep.mubr.bf16.mxu0 0
      %2796 = vmatmul.mubr.bf16.gmra.mrb[0].mxu0 %v1150
      %v2797 = vpop.f32.mrb[0].mxu0
      %v2798 = vadd.f32 0.0, %v2797
      %v2799 = vpop.f32.mrb[0].mxu0
      %v2800 = vpop.f32.mrb[0].mxu0
      %v2801 = vadd.f32 0.0, %v2800
      %v2802 = vpop.f32.mrb[0].mxu0
      %2803 = vmatprep.mubr.bf16.mxu0 0
      %2804 = vmatmul.mubr.bf16.gmra.mrb[0].mxu0 %v1153
      %v2805 = vpop.f32.mrb[0].mxu0
      %v2806 = vadd.f32 0.0, %v2805
      %v2807 = vpop.f32.mrb[0].mxu0
      %v2808 = vpop.f32.mrb[0].mxu0
      %v2809 = vadd.f32 0.0, %v2808
      %v2810 = vpop.f32.mrb[0].mxu0
      %2811 = vmatprep.mubr.bf16.mxu0 0
      %2812 = vmatmul.mubr.bf16.gmra.mrb[0].mxu0 %v1156
      %v2813 = vpop.f32.mrb[0].mxu0
      %v2814 = vadd.f32 0.0, %v2813
      %v2815 = vpop.f32.mrb[0].mxu0
      %v2816 = vpop.f32.mrb[0].mxu0
      %v2817 = vadd.f32 0.0, %v2816
      %v2818 = vpop.f32.mrb[0].mxu0
      %2819 = vmatprep.mubr.bf16.mxu0 0
      %2820 = vmatmul.mubr.bf16.gmra.mrb[0].mxu0 %v1159
      %v2821 = vpop.f32.mrb[0].mxu0
      %v2822 = vadd.f32 0.0, %v2821
      %v2823 = vpop.f32.mrb[0].mxu0
      %v2824 = vpop.f32.mrb[0].mxu0
      %v2825 = vadd.f32 0.0, %v2824
      %v2826 = vpop.f32.mrb[0].mxu0
      %2827 = vmatprep.mubr.bf16.mxu0 0
      %2828 = vmatmul.mubr.bf16.gmra.mrb[0].mxu0 %v1162
      %v2829 = vpop.f32.mrb[0].mxu0
      %v2830 = vadd.f32 0.0, %v2829
      %v2831 = vpop.f32.mrb[0].mxu0
      %v2832 = vpop.f32.mrb[0].mxu0
      %v2833 = vadd.f32 0.0, %v2832
      %v2834 = vpop.f32.mrb[0].mxu0
      %2835 = vmatprep.mubr.bf16.mxu0 0
      %2836 = vmatmul.mubr.bf16.gmra.mrb[0].mxu0 %v2067
      %v2837 = vpop.f32.mrb[0].mxu0
      %v2838 = vadd.f32 0.0, %v2837
      %v2839 = vpop.f32.mrb[0].mxu0
      %v2840 = vpop.f32.mrb[0].mxu0
      %v2841 = vadd.f32 0.0, %v2840
      %v2842 = vpop.f32.mrb[0].mxu0
      %2843 = vmatprep.mubr.bf16.mxu0 0
      %2844 = vmatmul.mubr.bf16.gmra.mrb[0].mxu0 %v2686
      %v2845 = vpop.f32.mrb[0].mxu0
      %v2846 = vadd.f32 0.0, %v2845
      %v2847 = vpop.f32.mrb[0].mxu0
      %v2848 = vpop.f32.mrb[0].mxu0
      %v2849 = vadd.f32 0.0, %v2848
      %v2850 = vpop.f32.mrb[0].mxu0
      %2851 = vdwg.mxu0
      %v2852 = vadd.f32 %v2640, %v2726
      %v2853 = vadd.f32 %v2641, %v2729
      %v2854 = vadd.f32 %v2642, %v2734
      %v2855 = vadd.f32 %v2643, %v2737
      %v2856 = vadd.f32 %v2644, %v2742
      %v2857 = vadd.f32 %v2645, %v2745
      %v2858 = vadd.f32 %v2646, %v2750
      %v2859 = vadd.f32 %v2647, %v2753
      %v2860 = vadd.f32 %v2648, %v2758
      %v2861 = vadd.f32 %v2649, %v2761
      %v2862 = vadd.f32 %v2650, %v2766
      %v2863 = vadd.f32 %v2651, %v2769
      %v2864 = vadd.f32 %v2652, %v2774
      %v2865 = vadd.f32 %v2653, %v2777
      %v2866 = vadd.f32 %v2654, %v2782
      %v2867 = vadd.f32 %v2655, %v2785
      %v2868 = vadd.f32 %v2656, %v2790
      %v2869 = vadd.f32 %v2657, %v2793
      %v2870 = vadd.f32 %v2658, %v2798
      %v2871 = vadd.f32 %v2659, %v2801
      %v2872 = vadd.f32 %v2660, %v2806
      %v2873 = vadd.f32 %v2661, %v2809
      %v2874 = vadd.f32 %v2662, %v2814
      %v2875 = vadd.f32 %v2663, %v2817
      %v2876 = vadd.f32 %v2664, %v2822
      %v2877 = vadd.f32 %v2665, %v2825
      %v2878 = vadd.f32 %v2666, %v2830
      %v2879 = vadd.f32 %v2667, %v2833
      %v2880 = vadd.f32 %v2668, %v2838
      %v2881 = vadd.f32 %v2669, %v2841
      %v2882 = vadd.f32 %v2670, %v2846
      %v2883 = vadd.f32 %v2671, %v2849
      %v2886 = vrot.slane %v917, 1
      %v2887 = vrot.slane %v918, 1
      %v2888 = vsel %vm1557, %v2886, %v2887
      %s2889 = scalar_lea.vmem %s4, 16
      %v2890 = vld [vmem:[%s2889] sm:$0x3]
      %v2892 = vsel %vm1115, %v2888, 0
      %v2895 = vsel %vm1164, %v2890, 0
      %2897 = vmatprep.subr.bf16.mxu0 0
      %2898 = vmatpush1.bf16.msra.mxu0 %v2895
      %2899 = vmatprep.subr.bf16.mxu0 0
      %2900 = vmatpush1.bf16.msra.mxu0 0
      %2901 = vmatprep.subr.bf16.mxu0 0
      %2902 = vmatpush1.bf16.msra.mxu0 0
      %2903 = vmatprep.subr.bf16.mxu0 0
      %2904 = vmatpush1.bf16.msra.mxu0 0
      %2905 = vmatprep.subr.bf16.mxu0 0
      %2906 = vmatpush1.bf16.msra.mxu0 0
      %2907 = vmatprep.subr.bf16.mxu0 0
      %2908 = vmatpush1.bf16.msra.mxu0 0
      %2909 = vmatprep.subr.bf16.mxu0 0
      %2910 = vmatpush1.bf16.msra.mxu0 0
      %2911 = vmatprep.subr.bf16.mxu0 0
      %2912 = vmatpush1.bf16.msra.mxu0 0
      %2913 = vmatprep.subr.bf16.mxu0 0
      %2914 = vmatpush1.bf16.msra.mxu0 0
      %2915 = vmatprep.subr.bf16.mxu0 0
      %2916 = vmatpush1.bf16.msra.mxu0 0
      %2917 = vmatprep.subr.bf16.mxu0 0
      %2918 = vmatpush1.bf16.msra.mxu0 0
      %2919 = vmatprep.subr.bf16.mxu0 0
      %2920 = vmatpush1.bf16.msra.mxu0 0
      %2921 = vmatprep.subr.bf16.mxu0 0
      %2922 = vmatpush1.bf16.msra.mxu0 0
      %2923 = vmatprep.subr.bf16.mxu0 0
      %2924 = vmatpush1.bf16.msra.mxu0 0
      %2925 = vmatprep.subr.bf16.mxu0 0
      %2926 = vmatpush1.bf16.msra.mxu0 0
      %2927 = vmatprep.subr.bf16.mxu0 0
      %2928 = vmatpush1.bf16.msra.mxu0 0
      %2929 = vmatprep.mubr.bf16.mxu0 0
      %2930 = vmatmul.mubr.bf16.gmra.mrb[0].mxu0 %v1615
      %v2931 = vpop.f32.mrb[0].mxu0
      %v2932 = vadd.f32 0.0, %v2931
      %v2933 = vpop.f32.mrb[0].mxu0
      %v2934 = vpop.f32.mrb[0].mxu0
      %v2935 = vadd.f32 0.0, %v2934
      %v2936 = vpop.f32.mrb[0].mxu0
      %2937 = vmatprep.mubr.bf16.mxu0 0
      %2938 = vmatmul.mubr.bf16.gmra.mrb[0].mxu0 %v1618
      %v2939 = vpop.f32.mrb[0].mxu0
      %v2940 = vadd.f32 0.0, %v2939
      %v2941 = vpop.f32.mrb[0].mxu0
      %v2942 = vpop.f32.mrb[0].mxu0
      %v2943 = vadd.f32 0.0, %v2942
      %v2944 = vpop.f32.mrb[0].mxu0
      %2945 = vmatprep.mubr.bf16.mxu0 0
      %2946 = vmatmul.mubr.bf16.gmra.mrb[0].mxu0 %v1621
      %v2947 = vpop.f32.mrb[0].mxu0
      %v2948 = vadd.f32 0.0, %v2947
      %v2949 = vpop.f32.mrb[0].mxu0
      %v2950 = vpop.f32.mrb[0].mxu0
      %v2951 = vadd.f32 0.0, %v2950
      %v2952 = vpop.f32.mrb[0].mxu0
      %2953 = vmatprep.mubr.bf16.mxu0 0
      %2954 = vmatmul.mubr.bf16.gmra.mrb[0].mxu0 %v1624
      %v2955 = vpop.f32.mrb[0].mxu0
      %v2956 = vadd.f32 0.0, %v2955
      %v2957 = vpop.f32.mrb[0].mxu0
      %v2958 = vpop.f32.mrb[0].mxu0
      %v2959 = vadd.f32 0.0, %v2958
      %v2960 = vpop.f32.mrb[0].mxu0
      %2961 = vmatprep.mubr.bf16.mxu0 0
      %2962 = vmatmul.mubr.bf16.gmra.mrb[0].mxu0 %v1627
      %v2963 = vpop.f32.mrb[0].mxu0
      %v2964 = vadd.f32 0.0, %v2963
      %v2965 = vpop.f32.mrb[0].mxu0
      %v2966 = vpop.f32.mrb[0].mxu0
      %v2967 = vadd.f32 0.0, %v2966
      %v2968 = vpop.f32.mrb[0].mxu0
      %2969 = vmatprep.mubr.bf16.mxu0 0
      %2970 = vmatmul.mubr.bf16.gmra.mrb[0].mxu0 %v1630
      %v2971 = vpop.f32.mrb[0].mxu0
      %v2972 = vadd.f32 0.0, %v2971
      %v2973 = vpop.f32.mrb[0].mxu0
      %v2974 = vpop.f32.mrb[0].mxu0
      %v2975 = vadd.f32 0.0, %v2974
      %v2976 = vpop.f32.mrb[0].mxu0
      %2977 = vmatprep.mubr.bf16.mxu0 0
      %2978 = vmatmul.mubr.bf16.gmra.mrb[0].mxu0 %v1633
      %v2979 = vpop.f32.mrb[0].mxu0
      %v2980 = vadd.f32 0.0, %v2979
      %v2981 = vpop.f32.mrb[0].mxu0
      %v2982 = vpop.f32.mrb[0].mxu0
      %v2983 = vadd.f32 0.0, %v2982
      %v2984 = vpop.f32.mrb[0].mxu0
      %2985 = vmatprep.mubr.bf16.mxu0 0
      %2986 = vmatmul.mubr.bf16.gmra.mrb[0].mxu0 %v1636
      %v2987 = vpop.f32.mrb[0].mxu0
      %v2988 = vadd.f32 0.0, %v2987
      %v2989 = vpop.f32.mrb[0].mxu0
      %v2990 = vpop.f32.mrb[0].mxu0
      %v2991 = vadd.f32 0.0, %v2990
      %v2992 = vpop.f32.mrb[0].mxu0
      %2993 = vmatprep.mubr.bf16.mxu0 0
      %2994 = vmatmul.mubr.bf16.gmra.mrb[0].mxu0 %v1639
      %v2995 = vpop.f32.mrb[0].mxu0
      %v2996 = vadd.f32 0.0, %v2995
      %v2997 = vpop.f32.mrb[0].mxu0
      %v2998 = vpop.f32.mrb[0].mxu0
      %v2999 = vadd.f32 0.0, %v2998
      %v3000 = vpop.f32.mrb[0].mxu0
      %3001 = vmatprep.mubr.bf16.mxu0 0
      %3002 = vmatmul.mubr.bf16.gmra.mrb[0].mxu0 %v1642
      %v3003 = vpop.f32.mrb[0].mxu0
      %v3004 = vadd.f32 0.0, %v3003
      %v3005 = vpop.f32.mrb[0].mxu0
      %v3006 = vpop.f32.mrb[0].mxu0
      %v3007 = vadd.f32 0.0, %v3006
      %v3008 = vpop.f32.mrb[0].mxu0
      %3009 = vmatprep.mubr.bf16.mxu0 0
      %3010 = vmatmul.mubr.bf16.gmra.mrb[0].mxu0 %v1645
      %v3011 = vpop.f32.mrb[0].mxu0
      %v3012 = vadd.f32 0.0, %v3011
      %v3013 = vpop.f32.mrb[0].mxu0
      %v3014 = vpop.f32.mrb[0].mxu0
      %v3015 = vadd.f32 0.0, %v3014
      %v3016 = vpop.f32.mrb[0].mxu0
      %3017 = vmatprep.mubr.bf16.mxu0 0
      %3018 = vmatmul.mubr.bf16.gmra.mrb[0].mxu0 %v1648
      %v3019 = vpop.f32.mrb[0].mxu0
      %v3020 = vadd.f32 0.0, %v3019
      %v3021 = vpop.f32.mrb[0].mxu0
      %v3022 = vpop.f32.mrb[0].mxu0
      %v3023 = vadd.f32 0.0, %v3022
      %v3024 = vpop.f32.mrb[0].mxu0
      %3025 = vmatprep.mubr.bf16.mxu0 0
      %3026 = vmatmul.mubr.bf16.gmra.mrb[0].mxu0 %v1651
      %v3027 = vpop.f32.mrb[0].mxu0
      %v3028 = vadd.f32 0.0, %v3027
      %v3029 = vpop.f32.mrb[0].mxu0
      %v3030 = vpop.f32.mrb[0].mxu0
      %v3031 = vadd.f32 0.0, %v3030
      %v3032 = vpop.f32.mrb[0].mxu0
      %3033 = vmatprep.mubr.bf16.mxu0 0
      %3034 = vmatmul.mubr.bf16.gmra.mrb[0].mxu0 %v1654
      %v3035 = vpop.f32.mrb[0].mxu0
      %v3036 = vadd.f32 0.0, %v3035
      %v3037 = vpop.f32.mrb[0].mxu0
      %v3038 = vpop.f32.mrb[0].mxu0
      %v3039 = vadd.f32 0.0, %v3038
      %v3040 = vpop.f32.mrb[0].mxu0
      %3041 = vmatprep.mubr.bf16.mxu0 0
      %3042 = vmatmul.mubr.bf16.gmra.mrb[0].mxu0 %v2273
      %v3043 = vpop.f32.mrb[0].mxu0
      %v3044 = vadd.f32 0.0, %v3043
      %v3045 = vpop.f32.mrb[0].mxu0
      %v3046 = vpop.f32.mrb[0].mxu0
      %v3047 = vadd.f32 0.0, %v3046
      %v3048 = vpop.f32.mrb[0].mxu0
      %3049 = vmatprep.mubr.bf16.mxu0 0
      %3050 = vmatmul.mubr.bf16.gmra.mrb[0].mxu0 %v2892
      %v3051 = vpop.f32.mrb[0].mxu0
      %v3052 = vadd.f32 0.0, %v3051
      %v3053 = vpop.f32.mrb[0].mxu0
      %v3054 = vpop.f32.mrb[0].mxu0
      %v3055 = vadd.f32 0.0, %v3054
      %v3056 = vpop.f32.mrb[0].mxu0
      %3057 = vdwg.mxu0
      %v3058 = vadd.f32 %v2852, %v2932
      %v3059 = vadd.f32 %v2853, %v2935
      %v3060 = vadd.f32 %v2854, %v2940
      %v3061 = vadd.f32 %v2855, %v2943
      %v3062 = vadd.f32 %v2856, %v2948
      %v3063 = vadd.f32 %v2857, %v2951
      %v3064 = vadd.f32 %v2858, %v2956
      %v3065 = vadd.f32 %v2859, %v2959
      %v3066 = vadd.f32 %v2860, %v2964
      %v3067 = vadd.f32 %v2861, %v2967
      %v3068 = vadd.f32 %v2862, %v2972
      %v3069 = vadd.f32 %v2863, %v2975
      %v3070 = vadd.f32 %v2864, %v2980
      %v3071 = vadd.f32 %v2865, %v2983
      %v3072 = vadd.f32 %v2866, %v2988
      %v3073 = vadd.f32 %v2867, %v2991
      %v3074 = vadd.f32 %v2868, %v2996
      %v3075 = vadd.f32 %v2869, %v2999
      %v3076 = vadd.f32 %v2870, %v3004
      %v3077 = vadd.f32 %v2871, %v3007
      %v3078 = vadd.f32 %v2872, %v3012
      %v3079 = vadd.f32 %v2873, %v3015
      %v3080 = vadd.f32 %v2874, %v3020
      %v3081 = vadd.f32 %v2875, %v3023
      %v3082 = vadd.f32 %v2876, %v3028
      %v3083 = vadd.f32 %v2877, %v3031
      %v3084 = vadd.f32 %v2878, %v3036
      %v3085 = vadd.f32 %v2879, %v3039
      %v3086 = vadd.f32 %v2880, %v3044
      %v3087 = vadd.f32 %v2881, %v3047
      %v3088 = vadd.f32 %v2882, %v3052
      %v3089 = vadd.f32 %v2883, %v3055
      %3090 = vst.msk [vmem:[%s273] sm:$0xff] %vm1115, %v3058
      %3091 = vst.msk [vmem:[%s273 + $0x8] sm:$0xff] %vm1115, %v3059
      %3092 = vst.msk [vmem:[%s273 + $0x10] sm:$0xff] %vm1115, %v3060
      %3093 = vst.msk [vmem:[%s273 + $0x18] sm:$0xff] %vm1115, %v3061
      %3094 = vst.msk [vmem:[%s273 + $0x20] sm:$0xff] %vm1115, %v3062
      %3095 = vst.msk [vmem:[%s273 + $0x28] sm:$0xff] %vm1115, %v3063
      %3096 = vst.msk [vmem:[%s273 + $0x30] sm:$0xff] %vm1115, %v3064
      %3097 = vst.msk [vmem:[%s273 + $0x38] sm:$0xff] %vm1115, %v3065
      %3098 = vst.msk [vmem:[%s273 + $0x40] sm:$0xff] %vm1115, %v3066
      %3099 = vst.msk [vmem:[%s273 + $0x48] sm:$0xff] %vm1115, %v3067
      %3100 = vst.msk [vmem:[%s273 + $0x50] sm:$0xff] %vm1115, %v3068
      %3101 = vst.msk [vmem:[%s273 + $0x58] sm:$0xff] %vm1115, %v3069
      %3102 = vst.msk [vmem:[%s273 + $0x60] sm:$0xff] %vm1115, %v3070
      %3103 = vst.msk [vmem:[%s273 + $0x68] sm:$0xff] %vm1115, %v3071
      %3104 = vst.msk [vmem:[%s273 + $0x70] sm:$0xff] %vm1115, %v3072
      %3105 = vst.msk [vmem:[%s273 + $0x78] sm:$0xff] %vm1115, %v3073
      %3106 = vst.msk [vmem:[%s273 + $0x80] sm:$0xff] %vm1115, %v3074
      %3107 = vst.msk [vmem:[%s273 + $0x88] sm:$0xff] %vm1115, %v3075
      %3108 = vst.msk [vmem:[%s273 + $0x90] sm:$0xff] %vm1115, %v3076
      %3109 = vst.msk [vmem:[%s273 + $0x98] sm:$0xff] %vm1115, %v3077
      %3110 = vst.msk [vmem:[%s273 + $0xa0] sm:$0xff] %vm1115, %v3078
      %3111 = vst.msk [vmem:[%s273 + $0xa8] sm:$0xff] %vm1115, %v3079
      %3112 = vst.msk [vmem:[%s273 + $0xb0] sm:$0xff] %vm1115, %v3080
      %3113 = vst.msk [vmem:[%s273 + $0xb8] sm:$0xff] %vm1115, %v3081
      %3114 = vst.msk [vmem:[%s273 + $0xc0] sm:$0xff] %vm1115, %v3082
      %3115 = vst.msk [vmem:[%s273 + $0xc8] sm:$0xff] %vm1115, %v3083
      %3116 = vst.msk [vmem:[%s273 + $0xd0] sm:$0xff] %vm1115, %v3084
      %3117 = vst.msk [vmem:[%s273 + $0xd8] sm:$0xff] %vm1115, %v3085
      %3118 = vst.msk [vmem:[%s273 + $0xe0] sm:$0xff] %vm1115, %v3086
      %3119 = vst.msk [vmem:[%s273 + $0xe8] sm:$0xff] %vm1115, %v3087
      %3120 = vst.msk [vmem:[%s273 + $0xf0] sm:$0xff] %vm1115, %v3088
      %3121 = vst.msk [vmem:[%s273 + $0xf8] sm:$0xff] %vm1115, %v3089
      %p3122 = scmp.eq.s32.totalorder %s19, 0
      // Predicated region
      $region41: #{_lambda_.5} parent=39 // pred_check
        %p3123 = pneg %p3122
      $region42: #{_lambda_.5} parent=39 // pred_check_branch
        %3125 = sbr.rel (%p3123) target = $region44
      $region43: #{_lambda_.5} parent=39 // pred_region
        %vm3126 = vcmask 24576
        %3127 = vst.msk [vmem:[%s6] sm:$0x1] %vm3126, 0.0
        %3128 = vst.msk [vmem:[%s7] sm:$0x1] %vm3126, 0.0
      $region44: #{_lambda_.5} parent=39 // pred_fallthru
        _
      %v3129 = vld [vmem:[%s6] sm:$0x1]
      %v3130 = vsel %vm1115, %v3058, 0.0
      %v3131 = vsel %vm1115, %v3059, 0.0
      %v3132 = vadd.f32 %v3130, %v3131
      %v3133 = vsel %vm1115, %v3060, 0.0
      %v3134 = vadd.f32 %v3132, %v3133
      %v3135 = vsel %vm1115, %v3061, 0.0
      %v3136 = vadd.f32 %v3134, %v3135
      %v3137 = vsel %vm1115, %v3062, 0.0
      %v3138 = vadd.f32 %v3136, %v3137
      %v3139 = vsel %vm1115, %v3063, 0.0
      %v3140 = vadd.f32 %v3138, %v3139
      %v3141 = vsel %vm1115, %v3064, 0.0
      %v3142 = vadd.f32 %v3140, %v3141
      %v3143 = vsel %vm1115, %v3065, 0.0
      %v3144 = vadd.f32 %v3142, %v3143
      %v3145 = vsel %vm1115, %v3066, 0.0
      %v3146 = vadd.f32 %v3144, %v3145
      %v3147 = vsel %vm1115, %v3067, 0.0
      %v3148 = vadd.f32 %v3146, %v3147
      %v3149 = vsel %vm1115, %v3068, 0.0
      %v3150 = vadd.f32 %v3148, %v3149
      %v3151 = vsel %vm1115, %v3069, 0.0
      %v3152 = vadd.f32 %v3150, %v3151
      %v3153 = vsel %vm1115, %v3070, 0.0
      %v3154 = vadd.f32 %v3152, %v3153
      %v3155 = vsel %vm1115, %v3071, 0.0
      %v3156 = vadd.f32 %v3154, %v3155
      %v3157 = vsel %vm1115, %v3072, 0.0
      %v3158 = vadd.f32 %v3156, %v3157
      %v3159 = vsel %vm1115, %v3073, 0.0
      %v3160 = vadd.f32 %v3158, %v3159
      %v3161 = vsel %vm1115, %v3074, 0.0
      %v3162 = vadd.f32 %v3160, %v3161
      %v3163 = vsel %vm1115, %v3075, 0.0
      %v3164 = vadd.f32 %v3162, %v3163
      %v3165 = vsel %vm1115, %v3076, 0.0
      %v3166 = vadd.f32 %v3164, %v3165
      %v3167 = vsel %vm1115, %v3077, 0.0
      %v3168 = vadd.f32 %v3166, %v3167
      %v3169 = vsel %vm1115, %v3078, 0.0
      %v3170 = vadd.f32 %v3168, %v3169
      %v3171 = vsel %vm1115, %v3079, 0.0
      %v3172 = vadd.f32 %v3170, %v3171
      %v3173 = vsel %vm1115, %v3080, 0.0
      %v3174 = vadd.f32 %v3172, %v3173
      %v3175 = vsel %vm1115, %v3081, 0.0
      %v3176 = vadd.f32 %v3174, %v3175
      %v3177 = vsel %vm1115, %v3082, 0.0
      %v3178 = vadd.f32 %v3176, %v3177
      %v3179 = vsel %vm1115, %v3083, 0.0
      %v3180 = vadd.f32 %v3178, %v3179
      %v3181 = vsel %vm1115, %v3084, 0.0
      %v3182 = vadd.f32 %v3180, %v3181
      %v3183 = vsel %vm1115, %v3085, 0.0
      %v3184 = vadd.f32 %v3182, %v3183
      %v3185 = vsel %vm1115, %v3086, 0.0
      %v3186 = vadd.f32 %v3184, %v3185
      %v3187 = vsel %vm1115, %v3087, 0.0
      %v3188 = vadd.f32 %v3186, %v3187
      %v3189 = vsel %vm1115, %v3088, 0.0
      %v3190 = vadd.f32 %v3188, %v3189
      %v3191 = vsel %vm1115, %v3089, 0.0
      %v3192 = vadd.f32 %v3190, %v3191
      %v3193 = vrot.slane %v3192, 4
      %v3194 = vadd.f32 %v3192, %v3193
      %v3195 = vrot.slane %v3194, 2
      %v3196 = vadd.f32 %v3194, %v3195
      %v3197 = vrot.slane %v3196, 1
      %v3198 = vadd.f32 %v3196, %v3197
      %v3199 = vadd.f32 %v3129, %v3198
      %vm3200 = vcmask 24576
      %3201 = vst.msk [vmem:[%s6] sm:$0x1] %vm3200, %v3199
      %v3202 = vld [vmem:[%s7] sm:$0x1]
      %v3203 = vmul.f32 %v3058, %v3058
      %v3204 = vmul.f32 %v3059, %v3059
      %v3205 = vmul.f32 %v3060, %v3060
      %v3206 = vmul.f32 %v3061, %v3061
      %v3207 = vmul.f32 %v3062, %v3062
      %v3208 = vmul.f32 %v3063, %v3063
      %v3209 = vmul.f32 %v3064, %v3064
      %v3210 = vmul.f32 %v3065, %v3065
      %v3211 = vmul.f32 %v3066, %v3066
      %v3212 = vmul.f32 %v3067, %v3067
      %v3213 = vmul.f32 %v3068, %v3068
      %v3214 = vmul.f32 %v3069, %v3069
      %v3215 = vmul.f32 %v3070, %v3070
      %v3216 = vmul.f32 %v3071, %v3071
      %v3217 = vmul.f32 %v3072, %v3072
      %v3218 = vmul.f32 %v3073, %v3073
      %v3219 = vmul.f32 %v3074, %v3074
      %v3220 = vmul.f32 %v3075, %v3075
      %v3221 = vmul.f32 %v3076, %v3076
      %v3222 = vmul.f32 %v3077, %v3077
      %v3223 = vmul.f32 %v3078, %v3078
      %v3224 = vmul.f32 %v3079, %v3079
      %v3225 = vmul.f32 %v3080, %v3080
      %v3226 = vmul.f32 %v3081, %v3081
      %v3227 = vmul.f32 %v3082, %v3082
      %v3228 = vmul.f32 %v3083, %v3083
      %v3229 = vmul.f32 %v3084, %v3084
      %v3230 = vmul.f32 %v3085, %v3085
      %v3231 = vmul.f32 %v3086, %v3086
      %v3232 = vmul.f32 %v3087, %v3087
      %v3233 = vmul.f32 %v3088, %v3088
      %v3234 = vmul.f32 %v3089, %v3089
      %v3235 = vsel %vm1115, %v3203, 0.0
      %v3236 = vsel %vm1115, %v3204, 0.0
      %v3237 = vadd.f32 %v3235, %v3236
      %v3238 = vsel %vm1115, %v3205, 0.0
      %v3239 = vadd.f32 %v3237, %v3238
      %v3240 = vsel %vm1115, %v3206, 0.0
      %v3241 = vadd.f32 %v3239, %v3240
      %v3242 = vsel %vm1115, %v3207, 0.0
      %v3243 = vadd.f32 %v3241, %v3242
      %v3244 = vsel %vm1115, %v3208, 0.0
      %v3245 = vadd.f32 %v3243, %v3244
      %v3246 = vsel %vm1115, %v3209, 0.0
      %v3247 = vadd.f32 %v3245, %v3246
      %v3248 = vsel %vm1115, %v3210, 0.0
      %v3249 = vadd.f32 %v3247, %v3248
      %v3250 = vsel %vm1115, %v3211, 0.0
      %v3251 = vadd.f32 %v3249, %v3250
      %v3252 = vsel %vm1115, %v3212, 0.0
      %v3253 = vadd.f32 %v3251, %v3252
      %v3254 = vsel %vm1115, %v3213, 0.0
      %v3255 = vadd.f32 %v3253, %v3254
      %v3256 = vsel %vm1115, %v3214, 0.0
      %v3257 = vadd.f32 %v3255, %v3256
      %v3258 = vsel %vm1115, %v3215, 0.0
      %v3259 = vadd.f32 %v3257, %v3258
      %v3260 = vsel %vm1115, %v3216, 0.0
      %v3261 = vadd.f32 %v3259, %v3260
      %v3262 = vsel %vm1115, %v3217, 0.0
      %v3263 = vadd.f32 %v3261, %v3262
      %v3264 = vsel %vm1115, %v3218, 0.0
      %v3265 = vadd.f32 %v3263, %v3264
      %v3266 = vsel %vm1115, %v3219, 0.0
      %v3267 = vadd.f32 %v3265, %v3266
      %v3268 = vsel %vm1115, %v3220, 0.0
      %v3269 = vadd.f32 %v3267, %v3268
      %v3270 = vsel %vm1115, %v3221, 0.0
      %v3271 = vadd.f32 %v3269, %v3270
      %v3272 = vsel %vm1115, %v3222, 0.0
      %v3273 = vadd.f32 %v3271, %v3272
      %v3274 = vsel %vm1115, %v3223, 0.0
      %v3275 = vadd.f32 %v3273, %v3274
      %v3276 = vsel %vm1115, %v3224, 0.0
      %v3277 = vadd.f32 %v3275, %v3276
      %v3278 = vsel %vm1115, %v3225, 0.0
      %v3279 = vadd.f32 %v3277, %v3278
      %v3280 = vsel %vm1115, %v3226, 0.0
      %v3281 = vadd.f32 %v3279, %v3280
      %v3282 = vsel %vm1115, %v3227, 0.0
      %v3283 = vadd.f32 %v3281, %v3282
      %v3284 = vsel %vm1115, %v3228, 0.0
      %v3285 = vadd.f32 %v3283, %v3284
      %v3286 = vsel %vm1115, %v3229, 0.0
      %v3287 = vadd.f32 %v3285, %v3286
      %v3288 = vsel %vm1115, %v3230, 0.0
      %v3289 = vadd.f32 %v3287, %v3288
      %v3290 = vsel %vm1115, %v3231, 0.0
      %v3291 = vadd.f32 %v3289, %v3290
      %v3292 = vsel %vm1115, %v3232, 0.0
      %v3293 = vadd.f32 %v3291, %v3292
      %v3294 = vsel %vm1115, %v3233, 0.0
      %v3295 = vadd.f32 %v3293, %v3294
      %v3296 = vsel %vm1115, %v3234, 0.0
      %v3297 = vadd.f32 %v3295, %v3296
      %v3298 = vrot.slane %v3297, 4
      %v3299 = vadd.f32 %v3297, %v3298
      %v3300 = vrot.slane %v3299, 2
      %v3301 = vadd.f32 %v3299, %v3300
      %v3302 = vrot.slane %v3301, 1
      %v3303 = vadd.f32 %v3301, %v3302
      %v3304 = vadd.f32 %v3202, %v3303
      %3305 = vst.msk [vmem:[%s7] sm:$0x1] %vm3200, %v3304
      %p3306 = scmp.lt.s32.totalorder %s19, 1
      %s3307 = scalar_select %p3306, %s19, 1
      %s3308 = smul.addr %s3307, 32
      %s3309 = smul.addr %s3308, 8
      %s3310 = scalar_lea.vmem %s5, %s3309
      // Predicated region
      $region45: #{_lambda_.5} parent=39 // pred_check
        %p3311 = pneg %p147
      $region46: #{_lambda_.5} parent=39 // pred_check_branch
        %3313 = sbr.rel (%p3311) target = $region48
      $region47: #{_lambda_.5} parent=39 // pred_region
        _
      $region48: #{_lambda_.5} parent=39 // pred_fallthru
        _
      // Predicated region
      $region49: #{_lambda_.5} parent=39 // pred_check
        %p3314 = pneg %p168
      $region50: #{_lambda_.5} parent=39 // pred_check_branch
        %3316 = sbr.rel (%p3314) target = $region52
      $region51: #{_lambda_.5} parent=39 // pred_region
        _
      $region52: #{_lambda_.5} parent=39 // pred_fallthru
        _
      // Predicated region
      $region53: #{_lambda_.5} parent=39 // pred_check
        %p3317 = pneg %p189
      $region54: #{_lambda_.5} parent=39 // pred_check_branch
        %3319 = sbr.rel (%p3317) target = $region56
      $region55: #{_lambda_.5} parent=39 // pred_region
        _
      $region56: #{_lambda_.5} parent=39 // pred_fallthru
        _
      // Predicated region
      $region57: #{_lambda_.5} parent=39 // pred_check
        %p3320 = pneg %p168
      $region58: #{_lambda_.5} parent=39 // pred_check_branch
        %3322 = sbr.rel (%p3320) target = $region60
      $region59: #{_lambda_.5} parent=39 // pred_region
        _
      $region60: #{_lambda_.5} parent=39 // pred_fallthru
        _
      // Predicated region
      $region61: #{_lambda_.5} parent=39 // pred_check
        %p3323 = pneg %p189
      $region62: #{_lambda_.5} parent=39 // pred_check_branch
        %3325 = sbr.rel (%p3323) target = $region64
      $region63: #{_lambda_.5} parent=39 // pred_region
        _
      $region64: #{_lambda_.5} parent=39 // pred_fallthru
        _
    $region40: #{_lambda_.5} parent=5 // pred_fallthru
      _
    %p3326 = scmp.le.s32.totalorder 2, %s14
    // Predicated region
    $region65: #{_lambda_.5} parent=5 // pred_check
      %p3327 = pneg %p3326
    $region66: #{_lambda_.5} parent=5 // pred_check_branch
      %3329 = sbr.rel (%p3327) target = $region68
    $region67: #{_lambda_.5} parent=5 // pred_region
      %s3330 = ssub.s32 %s14, 2
      // Predicated region
      $region69: #{_lambda_.5} parent=67 // pred_check
        %p3331 = pneg %p153
      $region70: #{_lambda_.5} parent=67 // pred_check_branch
        %3333 = sbr.rel (%p3331) target = $region72
      $region71: #{_lambda_.5} parent=67 // pred_region
        %p3334 = scmp.lt.s32.totalorder %s20, 1
        %s3335 = scalar_select %p3334, %s20, 1
        %s3336 = smul.addr %s3335, 32
        %s3337 = smul.addr %s3336, 8
        %s3338 = scalar_lea.vmem %s5, %s3337
      $region72: #{_lambda_.5} parent=67 // pred_fallthru
        _
    $region68: #{_lambda_.5} parent=5 // pred_fallthru
      _
  $region6: #{_lambda_.5} parent=0 // loop_footer
    %s18 = sadd.s32 1, %s14
  $region7: #{_lambda_.5} parent=0 // loop_footer_branch
    %13 = sbr.rel target = $region3
  $region8: #{_lambda_.5} parent=0 // loop_exit
    _

</llo_original>
